<compile_context>
chip_gen: v7x
topology: tpu7x:2x2x1
jax: 0.10.0
libtpu: 0.0.40
codegen_flags: <defaults>
</compile_context>

<pallas_src>
import functools

import jax
import jax.numpy as jnp
from jax.experimental import pallas as pl
from jax.experimental.pallas import tpu as pltpu


def _round_up(x, m):
    return (x + m - 1) // m * m


# ----------------------------------------------------------------------------
# Fused Pallas kernel
# ----------------------------------------------------------------------------
def fused_gru_kernel(n_layers, hp, n_hours_u, n_hours_y, x_ref, *refs):
    """Fused multi-layer GRU recurrence + dense head (single invocation).

    x_ref : (B, T, DP)  batch-first bf16 input, features zero-padded to DP.
    refs  : (wx_0, wh_0, b_0, ..., wx_{L-1}, wh_{L-1}, b_{L-1},
             w_dense, b_dense, o_ref)
            wx_l : (DP or HP, 4*HP) bf16  input-row slabs
                   [r | z | n_input | 0]
            wh_l : (HP, 4*HP)      bf16  hidden-row slabs
                   [r | z | 0 | n_hidden]
            b_l  : (1, 4*HP)       f32   [b_ir+b_hr | b_iz+b_hz | b_in | b_hn]
            w_dense : (HP, O) bf16, b_dense : (1, O) f32
    o_ref : (B, Ty, O) f32
    """
    wd_ref, bd_ref, o_ref = refs[-3], refs[-2], refs[-1]
    B = x_ref.shape[0]
    T = n_hours_u
    sel_start = n_hours_u - n_hours_y - 1   # first time index the head uses

    # ---- layer-0 input projection hoisted out of the recurrence ------------
    wx0_ref, wh0_ref, b0_ref = refs[0], refs[1], refs[2]
    dp = wx0_ref.shape[0]
    x2 = x_ref[...].reshape(B * T, dp)                       # bf16, free reshape
    gi0 = jnp.dot(x2, wx0_ref[...],
                  preferred_element_type=jnp.float32) + b0_ref[...]
    gi0 = gi0.reshape(B, T, 4 * hp)                          # f32, free reshape

    # ---- hoisted per-layer weight values & bias broadcasts -----------------
    whs = [refs[3 * li + 1][...] for li in range(n_layers)]                # bf16
    wxs = [None] + [refs[3 * li][...] for li in range(1, n_layers)]        # bf16
    b_bc = [None] + [jnp.broadcast_to(refs[3 * li + 2][...], (B, 4 * hp))  # f32
                     for li in range(1, n_layers)]

    # Hidden states live entirely as in-kernel values (no HBM traffic).
    hs = [jnp.zeros((B, hp), jnp.float32) for _ in range(n_layers)]
    selected = []

    # Fully unrolled time loop.  h at t = T-1 is never consumed by the head
    # (PyTorch uses out[:, idx-1, :]), so the last step is skipped.
    for t in range(n_hours_u - 1):
        # --- layer 0: only the recurrent dot sits on the serial chain ---
        g = gi0[:, t, :] + jnp.dot(hs[0].astype(jnp.bfloat16), whs[0],
                                   preferred_element_type=jnp.float32)
        rz = jax.nn.sigmoid(g[:, :2 * hp])                   # fused r/z sigmoid
        r, z = rz[:, :hp], rz[:, hp:]
        n = jnp.tanh(g[:, 2 * hp:3 * hp] + r * g[:, 3 * hp:4 * hp])
        hs[0] = n + z * (hs[0] - n)
        inp = hs[0]

        # --- layers 1..L-1: two dots, no concat ---
        for li in range(1, n_layers):
            g = (jnp.dot(inp.astype(jnp.bfloat16), wxs[li],
                         preferred_element_type=jnp.float32)
                 + jnp.dot(hs[li].astype(jnp.bfloat16), whs[li],
                           preferred_element_type=jnp.float32)
                 + b_bc[li])
            rz = jax.nn.sigmoid(g[:, :2 * hp])
            r, z = rz[:, :hp], rz[:, hp:]
            n = jnp.tanh(g[:, 2 * hp:3 * hp] + r * g[:, 3 * hp:4 * hp])
            hs[li] = n + z * (hs[li] - n)
            inp = hs[li]

        if sel_start <= t < sel_start + n_hours_y:
            selected.append(hs[-1])

    # ---- batched dense head: one matmul, one store --------------------------
    hsel = jnp.stack(selected, axis=1)                       # (B, Ty, HP) f32
    hsel2 = hsel.reshape(B * n_hours_y, hp).astype(jnp.bfloat16)
    y = jnp.dot(hsel2, wd_ref[...],
                preferred_element_type=jnp.float32) + bd_ref[...]
    o_ref[...] = y.reshape(B, n_hours_y, o_ref.shape[2]).astype(o_ref.dtype)


# ----------------------------------------------------------------------------
# Wrapper: one pallas_call for the whole forward pass
# ----------------------------------------------------------------------------
@functools.partial(jax.jit, static_argnames=("n_hours_u", "n_hours_y"))
def gru_forward(u, packed, *, n_hours_u, n_hours_y):
    """Reproduces GRU.forward: out,_ = gru(u); dense(out[:, idx-1, :]) for
    idx in range(T - Ty, T); stacked along dim=1 -> (B, Ty, O)."""
    B, T, D = u.shape
    assert T == n_hours_u and 0 < n_hours_y < n_hours_u
    # Skipping the final recurrence step is valid iff the head only consumes
    # hidden states up to t = T-2 (out[:, idx-1, :]).
    sel_start = n_hours_u - n_hours_y - 1
    assert sel_start >= 0 and sel_start + n_hours_y == n_hours_u - 1

    layers = packed["layers"]
    hp = layers[0]["wh"].shape[0]          # lane-padded hidden width
    dp = layers[0]["wx"].shape[0]          # lane-padded input width

    x = u.astype(jnp.bfloat16)
    if dp > D:                             # static (shape-derived) branch
        x = jnp.pad(x, ((0, 0), (0, 0), (0, dp - D)))

    args = [x]
    for layer in layers:
        args += [layer["wx"], layer["wh"], layer["b"]]
    args += [packed["dense_w"], packed["dense_b"]]
    o_dim = packed["dense_w"].shape[1]

    kernel = functools.partial(fused_gru_kernel, len(layers), hp,
                               n_hours_u, n_hours_y)
    return pl.pallas_call(
        kernel,
        out_shape=jax.ShapeDtypeStruct((B, n_hours_y, o_dim), jnp.float32),
        compiler_params=pltpu.CompilerParams(
            vmem_limit_bytes=32 * 1024 * 1024),
    )(*args)


# ----------------------------------------------------------------------------
# Parameter packing (PyTorch layout -> lane-padded, split, bf16 fused layout)
# ----------------------------------------------------------------------------
def pack_params(raw):
    """raw: PyTorch-layout params.  Returns lane-padded packed params.

    Per layer, weights are split into input-row (Wx) and hidden-row (Wh)
    slabs so the kernel never concatenates [x||h]:
      Wx (din_pad, 4*HP):  cols [0:HP)=r_in, [HP:2HP)=z_in, [2HP:3HP)=n_in,
                           [3HP:4HP)=0
      Wh (HP, 4*HP):       cols [0:HP)=r_hid,[HP:2HP)=z_hid,[2HP:3HP)=0,
                           [3HP:4HP)=n_hid
      b  (1, 4*HP):        [b_ir+b_hr | b_iz+b_hz | b_in | b_hn]
    Weights are cast to bf16 (matmuls accumulate in f32); biases stay f32.
    """
    layers_raw = raw["layers"]
    H = layers_raw[0]["w_hh"].shape[1]
    hp = _round_up(H, 128)

    packed_layers = []
    for i, lyr in enumerate(layers_raw):
        w_ih, w_hh = lyr["w_ih"], lyr["w_hh"]      # (3H, din), (3H, H)
        b_ih, b_hh = lyr["b_ih"], lyr["b_hh"]      # (3H,)
        din = w_ih.shape[1]
        din_pad = _round_up(din, 128) if i == 0 else hp

        Wx = jnp.zeros((din_pad, 4 * hp), jnp.float32)
        Wx = Wx.at[:din, 0:H].set(w_ih[0:H].T)                       # r (input)
        Wx = Wx.at[:din, hp:hp + H].set(w_ih[H:2 * H].T)             # z (input)
        Wx = Wx.at[:din, 2 * hp:2 * hp + H].set(w_ih[2 * H:3 * H].T)  # n input

        Wh = jnp.zeros((hp, 4 * hp), jnp.float32)
        Wh = Wh.at[:H, 0:H].set(w_hh[0:H].T)                         # r (hidden)
        Wh = Wh.at[:H, hp:hp + H].set(w_hh[H:2 * H].T)               # z (hidden)
        Wh = Wh.at[:H, 3 * hp:3 * hp + H].set(w_hh[2 * H:3 * H].T)   # n hidden

        bvec = jnp.zeros((1, 4 * hp), jnp.float32)
        bvec = bvec.at[0, 0:H].set(b_ih[0:H] + b_hh[0:H])                  # r
        bvec = bvec.at[0, hp:hp + H].set(b_ih[H:2 * H] + b_hh[H:2 * H])    # z
        bvec = bvec.at[0, 2 * hp:2 * hp + H].set(b_ih[2 * H:3 * H])        # n_in
        bvec = bvec.at[0, 3 * hp:3 * hp + H].set(b_hh[2 * H:3 * H])        # n_hid

        packed_layers.append({"wx": Wx.astype(jnp.bfloat16),
                              "wh": Wh.astype(jnp.bfloat16),
                              "b": bvec})

    O = raw["dense_w"].shape[0]
    Wd = jnp.zeros((hp, O), jnp.float32)
    Wd = Wd.at[:H, :].set(raw["dense_w"].T)
    bd = raw["dense_b"].reshape(1, -1).astype(jnp.float32)
    return {"layers": packed_layers,
            "dense_w": Wd.astype(jnp.bfloat16),
            "dense_b": bd}


# ----------------------------------------------------------------------------
# Deterministic parameter init (PyTorch-style uniform(-1/sqrt(H), 1/sqrt(H)))
# ----------------------------------------------------------------------------
def init_params(key, d_in, hidden, n_layers, d_out):
    bound = 1.0 / float(hidden) ** 0.5
    layers = []
    for layer_idx in range(n_layers):
        din = d_in if layer_idx == 0 else hidden
        key, k1, k2, k3, k4 = jax.random.split(key, 5)
        layers.append({
            "w_ih": jax.random.uniform(k1, (3 * hidden, din), jnp.float32,
                                       -bound, bound),
            "w_hh": jax.random.uniform(k2, (3 * hidden, hidden), jnp.float32,
                                       -bound, bound),
            "b_ih": jax.random.uniform(k3, (3 * hidden,), jnp.float32,
                                       -bound, bound),
            "b_hh": jax.random.uniform(k4, (3 * hidden,), jnp.float32,
                                       -bound, bound),
        })
    key, k5, k6 = jax.random.split(key, 3)
    return {
        "layers": layers,
        "dense_w": jax.random.uniform(k5, (d_out, hidden), jnp.float32,
                                      -bound, bound),
        "dense_b": jax.random.uniform(k6, (d_out,), jnp.float32,
                                      -bound, bound),
    }


# ----------------------------------------------------------------------------
# Pure-JAX f32 reference (RAW PyTorch-layout params; also validates packing)
# ----------------------------------------------------------------------------
def gru_forward_ref(u, raw, *, n_hours_u, n_hours_y):
    x = u.astype(jnp.float32)
    B = x.shape[0]
    for lyr in raw["layers"]:
        H = lyr["w_hh"].shape[1]
        w_ih_t, w_hh_t = lyr["w_ih"].T, lyr["w_hh"].T
        b_ih, b_hh = lyr["b_ih"], lyr["b_hh"]
        h0 = jnp.zeros((B, H), jnp.float32)

        def step(h, x_t, w_ih_t=w_ih_t, w_hh_t=w_hh_t,
                 b_ih=b_ih, b_hh=b_hh, H=H):
            gi = x_t @ w_ih_t + b_ih
            gh = h @ w_hh_t + b_hh
            r = jax.nn.sigmoid(gi[:, :H] + gh[:, :H])
            z = jax.nn.sigmoid(gi[:, H:2 * H] + gh[:, H:2 * H])
            n = jnp.tanh(gi[:, 2 * H:] + r * gh[:, 2 * H:])
            h_new = (1.0 - z) * n + z * h
            return h_new, h_new

        _, out = jax.lax.scan(step, h0, jnp.transpose(x, (1, 0, 2)))
        x = jnp.transpose(out, (1, 0, 2))
    start = n_hours_u - n_hours_y - 1
    h_sel = x[:, start:start + n_hours_y, :]
    return jnp.einsum('bth,ho->bto', h_sel, raw["dense_w"].T) + raw["dense_b"]


# ----------------------------------------------------------------------------
# TODO(synk): train_model / test_model (host-side training/eval loops) are
# intentionally not translated; only the forward pass is a kernel.
# ----------------------------------------------------------------------------
if __name__ == "__main__":
    B = 2
    N_HOURS_U = 16
    N_HOURS_Y = 8
    N_INPUT_UNITS = 10
    N_HIDDEN_LAYERS = 2
    N_HIDDEN_UNITS = 32
    N_OUTPUT_UNITS = 4

    key = jax.random.PRNGKey(0)
    key, k_u, k_p = jax.random.split(key, 3)
    u = jax.random.normal(k_u, (B, N_HOURS_U, N_INPUT_UNITS), jnp.float32)

    raw = init_params(k_p, N_INPUT_UNITS, N_HIDDEN_UNITS,
                      N_HIDDEN_LAYERS, N_OUTPUT_UNITS)
    packed = pack_params(raw)

    out = gru_forward(u, packed, n_hours_u=N_HOURS_U, n_hours_y=N_HOURS_Y)
    out = jax.block_until_ready(out)
    assert out.shape == (B, N_HOURS_Y, N_OUTPUT_UNITS), out.shape

    ref = gru_forward_ref(u, raw, n_hours_u=N_HOURS_U, n_hours_y=N_HOURS_Y)
    ref = jax.block_until_ready(ref)
    max_err = float(jnp.max(jnp.abs(out - ref)))
    # Kernel matmuls use bf16 operands with f32 accumulation (per perf
    # review); the reference is pure f32, so allow bf16-level drift
    # (typically ~1e-2 over the 15-step recurrence at these sizes).
    assert jnp.allclose(out, ref, atol=5e-2, rtol=5e-2), max_err

    print("KERNEL_OK")
</pallas_src>

<mosaic_0001>
module attributes {stable_mosaic.version = 11 : i64} {
  func.func @fused_gru_kernel(%arg0: memref<2x16x128xbf16, #tpu.memory_space<vmem>>, %arg1: memref<128x512xbf16, #tpu.memory_space<vmem>>, %arg2: memref<128x512xbf16, #tpu.memory_space<vmem>>, %arg3: memref<1x512xf32, #tpu.memory_space<vmem>>, %arg4: memref<128x512xbf16, #tpu.memory_space<vmem>>, %arg5: memref<128x512xbf16, #tpu.memory_space<vmem>>, %arg6: memref<1x512xf32, #tpu.memory_space<vmem>>, %arg7: memref<128x4xbf16, #tpu.memory_space<vmem>>, %arg8: memref<1x4xf32, #tpu.memory_space<vmem>>, %arg9: memref<2x8x4xf32, #tpu.memory_space<vmem>>) attributes {dimension_semantics = [], scalar_prefetch = 0 : i64, scratch_operands = 0 : i64, tpu.core_type = #tpu.core_type<tc>} {
    %c0 = arith.constant 0 : index
    %c0_0 = arith.constant 0 : index
    %c0_1 = arith.constant 0 : index
    %0 = vector.load %arg0[%c0, %c0_0, %c0_1] : memref<2x16x128xbf16, #tpu.memory_space<vmem>>, vector<2x16x128xbf16>
    %1 = vector.shape_cast %0 : vector<2x16x128xbf16> to vector<32x128xbf16>
    %c0_2 = arith.constant 0 : index
    %c0_3 = arith.constant 0 : index
    %2 = vector.load %arg1[%c0_2, %c0_3] : memref<128x512xbf16, #tpu.memory_space<vmem>>, vector<128x512xbf16>
    %cst = arith.constant dense<0.000000e+00> : vector<32x512xf32>
    %3 = tpu.matmul %1, %2, %cst {dimension_numbers = #tpu.dot_dimension_numbers<[1], [0], [0], [1], [0, 0, 1, 1], [], []>} : vector<32x128xbf16>, vector<128x512xbf16>, vector<32x512xf32> -> vector<32x512xf32>
    %c0_4 = arith.constant 0 : index
    %c0_5 = arith.constant 0 : index
    %4 = vector.load %arg3[%c0_4, %c0_5] : memref<1x512xf32, #tpu.memory_space<vmem>>, vector<1x512xf32>
    %5 = vector.broadcast %4 : vector<1x512xf32> to vector<32x512xf32>
    %6 = arith.addf %3, %5 : vector<32x512xf32>
    %7 = vector.shape_cast %6 : vector<32x512xf32> to vector<2x16x512xf32>
    %c0_6 = arith.constant 0 : index
    %c0_7 = arith.constant 0 : index
    %8 = vector.load %arg2[%c0_6, %c0_7] : memref<128x512xbf16, #tpu.memory_space<vmem>>, vector<128x512xbf16>
    %c0_8 = arith.constant 0 : index
    %c0_9 = arith.constant 0 : index
    %9 = vector.load %arg5[%c0_8, %c0_9] : memref<128x512xbf16, #tpu.memory_space<vmem>>, vector<128x512xbf16>
    %c0_10 = arith.constant 0 : index
    %c0_11 = arith.constant 0 : index
    %10 = vector.load %arg4[%c0_10, %c0_11] : memref<128x512xbf16, #tpu.memory_space<vmem>>, vector<128x512xbf16>
    %c0_12 = arith.constant 0 : index
    %c0_13 = arith.constant 0 : index
    %11 = vector.load %arg6[%c0_12, %c0_13] : memref<1x512xf32, #tpu.memory_space<vmem>>, vector<1x512xf32>
    %12 = vector.shape_cast %11 : vector<1x512xf32> to vector<1x512xf32>
    %13 = vector.broadcast %12 : vector<1x512xf32> to vector<2x512xf32>
    %cst_14 = arith.constant 0.000000e+00 : f32
    %14 = vector.broadcast %cst_14 : f32 to vector<2x128xf32>
    %cst_15 = arith.constant 0.000000e+00 : f32
    %15 = vector.broadcast %cst_15 : f32 to vector<2x128xf32>
    %16 = vector.extract_strided_slice %7 {offsets = [0, 0, 0], sizes = [2, 1, 512], strides = [1, 1, 1]} : vector<2x16x512xf32> to vector<2x1x512xf32>
    %17 = vector.shape_cast %16 : vector<2x1x512xf32> to vector<2x512xf32>
    %18 = arith.truncf %14 : vector<2x128xf32> to vector<2x128xbf16>
    %cst_16 = arith.constant dense<0.000000e+00> : vector<2x512xf32>
    %19 = tpu.matmul %18, %8, %cst_16 {dimension_numbers = #tpu.dot_dimension_numbers<[1], [0], [0], [1], [0, 0, 1, 1], [], []>} : vector<2x128xbf16>, vector<128x512xbf16>, vector<2x512xf32> -> vector<2x512xf32>
    %20 = arith.addf %17, %19 : vector<2x512xf32>
    %21 = vector.extract_strided_slice %20 {offsets = [0, 0], sizes = [2, 256], strides = [1, 1]} : vector<2x512xf32> to vector<2x256xf32>
    %22 = arith.negf %21 : vector<2x256xf32>
    %23 = math.exp %22 : vector<2x256xf32>
    %cst_17 = arith.constant 1.000000e+00 : f32
    %24 = vector.broadcast %cst_17 : f32 to vector<2x256xf32>
    %25 = arith.addf %24, %23 : vector<2x256xf32>
    %26 = arith.divf %24, %25 : vector<2x256xf32>
    %27 = vector.extract_strided_slice %26 {offsets = [0, 0], sizes = [2, 128], strides = [1, 1]} : vector<2x256xf32> to vector<2x128xf32>
    %28 = vector.extract_strided_slice %26 {offsets = [0, 128], sizes = [2, 128], strides = [1, 1]} : vector<2x256xf32> to vector<2x128xf32>
    %29 = vector.extract_strided_slice %20 {offsets = [0, 256], sizes = [2, 128], strides = [1, 1]} : vector<2x512xf32> to vector<2x128xf32>
    %30 = vector.extract_strided_slice %20 {offsets = [0, 384], sizes = [2, 128], strides = [1, 1]} : vector<2x512xf32> to vector<2x128xf32>
    %31 = arith.mulf %27, %30 : vector<2x128xf32>
    %32 = arith.addf %29, %31 : vector<2x128xf32>
    %33 = math.tanh %32 : vector<2x128xf32>
    %34 = arith.subf %14, %33 : vector<2x128xf32>
    %35 = arith.mulf %28, %34 : vector<2x128xf32>
    %36 = arith.addf %33, %35 : vector<2x128xf32>
    %37 = arith.truncf %36 : vector<2x128xf32> to vector<2x128xbf16>
    %cst_18 = arith.constant dense<0.000000e+00> : vector<2x512xf32>
    %38 = tpu.matmul %37, %10, %cst_18 {dimension_numbers = #tpu.dot_dimension_numbers<[1], [0], [0], [1], [0, 0, 1, 1], [], []>} : vector<2x128xbf16>, vector<128x512xbf16>, vector<2x512xf32> -> vector<2x512xf32>
    %39 = arith.truncf %15 : vector<2x128xf32> to vector<2x128xbf16>
    %cst_19 = arith.constant dense<0.000000e+00> : vector<2x512xf32>
    %40 = tpu.matmul %39, %9, %cst_19 {dimension_numbers = #tpu.dot_dimension_numbers<[1], [0], [0], [1], [0, 0, 1, 1], [], []>} : vector<2x128xbf16>, vector<128x512xbf16>, vector<2x512xf32> -> vector<2x512xf32>
    %41 = arith.addf %38, %40 : vector<2x512xf32>
    %42 = arith.addf %41, %13 : vector<2x512xf32>
    %43 = vector.extract_strided_slice %42 {offsets = [0, 0], sizes = [2, 256], strides = [1, 1]} : vector<2x512xf32> to vector<2x256xf32>
    %44 = arith.negf %43 : vector<2x256xf32>
    %45 = math.exp %44 : vector<2x256xf32>
    %cst_20 = arith.constant 1.000000e+00 : f32
    %46 = vector.broadcast %cst_20 : f32 to vector<2x256xf32>
    %47 = arith.addf %46, %45 : vector<2x256xf32>
    %48 = arith.divf %46, %47 : vector<2x256xf32>
    %49 = vector.extract_strided_slice %48 {offsets = [0, 0], sizes = [2, 128], strides = [1, 1]} : vector<2x256xf32> to vector<2x128xf32>
    %50 = vector.extract_strided_slice %48 {offsets = [0, 128], sizes = [2, 128], strides = [1, 1]} : vector<2x256xf32> to vector<2x128xf32>
    %51 = vector.extract_strided_slice %42 {offsets = [0, 256], sizes = [2, 128], strides = [1, 1]} : vector<2x512xf32> to vector<2x128xf32>
    %52 = vector.extract_strided_slice %42 {offsets = [0, 384], sizes = [2, 128], strides = [1, 1]} : vector<2x512xf32> to vector<2x128xf32>
    %53 = arith.mulf %49, %52 : vector<2x128xf32>
    %54 = arith.addf %51, %53 : vector<2x128xf32>
    %55 = math.tanh %54 : vector<2x128xf32>
    %56 = arith.subf %15, %55 : vector<2x128xf32>
    %57 = arith.mulf %50, %56 : vector<2x128xf32>
    %58 = arith.addf %55, %57 : vector<2x128xf32>
    %59 = vector.extract_strided_slice %7 {offsets = [0, 1, 0], sizes = [2, 1, 512], strides = [1, 1, 1]} : vector<2x16x512xf32> to vector<2x1x512xf32>
    %60 = vector.shape_cast %59 : vector<2x1x512xf32> to vector<2x512xf32>
    %61 = arith.truncf %36 : vector<2x128xf32> to vector<2x128xbf16>
    %cst_21 = arith.constant dense<0.000000e+00> : vector<2x512xf32>
    %62 = tpu.matmul %61, %8, %cst_21 {dimension_numbers = #tpu.dot_dimension_numbers<[1], [0], [0], [1], [0, 0, 1, 1], [], []>} : vector<2x128xbf16>, vector<128x512xbf16>, vector<2x512xf32> -> vector<2x512xf32>
    %63 = arith.addf %60, %62 : vector<2x512xf32>
    %64 = vector.extract_strided_slice %63 {offsets = [0, 0], sizes = [2, 256], strides = [1, 1]} : vector<2x512xf32> to vector<2x256xf32>
    %65 = arith.negf %64 : vector<2x256xf32>
    %66 = math.exp %65 : vector<2x256xf32>
    %cst_22 = arith.constant 1.000000e+00 : f32
    %67 = vector.broadcast %cst_22 : f32 to vector<2x256xf32>
    %68 = arith.addf %67, %66 : vector<2x256xf32>
    %69 = arith.divf %67, %68 : vector<2x256xf32>
    %70 = vector.extract_strided_slice %69 {offsets = [0, 0], sizes = [2, 128], strides = [1, 1]} : vector<2x256xf32> to vector<2x128xf32>
    %71 = vector.extract_strided_slice %69 {offsets = [0, 128], sizes = [2, 128], strides = [1, 1]} : vector<2x256xf32> to vector<2x128xf32>
    %72 = vector.extract_strided_slice %63 {offsets = [0, 256], sizes = [2, 128], strides = [1, 1]} : vector<2x512xf32> to vector<2x128xf32>
    %73 = vector.extract_strided_slice %63 {offsets = [0, 384], sizes = [2, 128], strides = [1, 1]} : vector<2x512xf32> to vector<2x128xf32>
    %74 = arith.mulf %70, %73 : vector<2x128xf32>
    %75 = arith.addf %72, %74 : vector<2x128xf32>
    %76 = math.tanh %75 : vector<2x128xf32>
    %77 = arith.subf %36, %76 : vector<2x128xf32>
    %78 = arith.mulf %71, %77 : vector<2x128xf32>
    %79 = arith.addf %76, %78 : vector<2x128xf32>
    %80 = arith.truncf %79 : vector<2x128xf32> to vector<2x128xbf16>
    %cst_23 = arith.constant dense<0.000000e+00> : vector<2x512xf32>
    %81 = tpu.matmul %80, %10, %cst_23 {dimension_numbers = #tpu.dot_dimension_numbers<[1], [0], [0], [1], [0, 0, 1, 1], [], []>} : vector<2x128xbf16>, vector<128x512xbf16>, vector<2x512xf32> -> vector<2x512xf32>
    %82 = arith.truncf %58 : vector<2x128xf32> to vector<2x128xbf16>
    %cst_24 = arith.constant dense<0.000000e+00> : vector<2x512xf32>
    %83 = tpu.matmul %82, %9, %cst_24 {dimension_numbers = #tpu.dot_dimension_numbers<[1], [0], [0], [1], [0, 0, 1, 1], [], []>} : vector<2x128xbf16>, vector<128x512xbf16>, vector<2x512xf32> -> vector<2x512xf32>
    %84 = arith.addf %81, %83 : vector<2x512xf32>
    %85 = arith.addf %84, %13 : vector<2x512xf32>
    %86 = vector.extract_strided_slice %85 {offsets = [0, 0], sizes = [2, 256], strides = [1, 1]} : vector<2x512xf32> to vector<2x256xf32>
    %87 = arith.negf %86 : vector<2x256xf32>
    %88 = math.exp %87 : vector<2x256xf32>
    %cst_25 = arith.constant 1.000000e+00 : f32
    %89 = vector.broadcast %cst_25 : f32 to vector<2x256xf32>
    %90 = arith.addf %89, %88 : vector<2x256xf32>
    %91 = arith.divf %89, %90 : vector<2x256xf32>
    %92 = vector.extract_strided_slice %91 {offsets = [0, 0], sizes = [2, 128], strides = [1, 1]} : vector<2x256xf32> to vector<2x128xf32>
    %93 = vector.extract_strided_slice %91 {offsets = [0, 128], sizes = [2, 128], strides = [1, 1]} : vector<2x256xf32> to vector<2x128xf32>
    %94 = vector.extract_strided_slice %85 {offsets = [0, 256], sizes = [2, 128], strides = [1, 1]} : vector<2x512xf32> to vector<2x128xf32>
    %95 = vector.extract_strided_slice %85 {offsets = [0, 384], sizes = [2, 128], strides = [1, 1]} : vector<2x512xf32> to vector<2x128xf32>
    %96 = arith.mulf %92, %95 : vector<2x128xf32>
    %97 = arith.addf %94, %96 : vector<2x128xf32>
    %98 = math.tanh %97 : vector<2x128xf32>
    %99 = arith.subf %58, %98 : vector<2x128xf32>
    %100 = arith.mulf %93, %99 : vector<2x128xf32>
    %101 = arith.addf %98, %100 : vector<2x128xf32>
    %102 = vector.extract_strided_slice %7 {offsets = [0, 2, 0], sizes = [2, 1, 512], strides = [1, 1, 1]} : vector<2x16x512xf32> to vector<2x1x512xf32>
    %103 = vector.shape_cast %102 : vector<2x1x512xf32> to vector<2x512xf32>
    %104 = arith.truncf %79 : vector<2x128xf32> to vector<2x128xbf16>
    %cst_26 = arith.constant dense<0.000000e+00> : vector<2x512xf32>
    %105 = tpu.matmul %104, %8, %cst_26 {dimension_numbers = #tpu.dot_dimension_numbers<[1], [0], [0], [1], [0, 0, 1, 1], [], []>} : vector<2x128xbf16>, vector<128x512xbf16>, vector<2x512xf32> -> vector<2x512xf32>
    %106 = arith.addf %103, %105 : vector<2x512xf32>
    %107 = vector.extract_strided_slice %106 {offsets = [0, 0], sizes = [2, 256], strides = [1, 1]} : vector<2x512xf32> to vector<2x256xf32>
    %108 = arith.negf %107 : vector<2x256xf32>
    %109 = math.exp %108 : vector<2x256xf32>
    %cst_27 = arith.constant 1.000000e+00 : f32
    %110 = vector.broadcast %cst_27 : f32 to vector<2x256xf32>
    %111 = arith.addf %110, %109 : vector<2x256xf32>
    %112 = arith.divf %110, %111 : vector<2x256xf32>
    %113 = vector.extract_strided_slice %112 {offsets = [0, 0], sizes = [2, 128], strides = [1, 1]} : vector<2x256xf32> to vector<2x128xf32>
    %114 = vector.extract_strided_slice %112 {offsets = [0, 128], sizes = [2, 128], strides = [1, 1]} : vector<2x256xf32> to vector<2x128xf32>
    %115 = vector.extract_strided_slice %106 {offsets = [0, 256], sizes = [2, 128], strides = [1, 1]} : vector<2x512xf32> to vector<2x128xf32>
    %116 = vector.extract_strided_slice %106 {offsets = [0, 384], sizes = [2, 128], strides = [1, 1]} : vector<2x512xf32> to vector<2x128xf32>
    %117 = arith.mulf %113, %116 : vector<2x128xf32>
    %118 = arith.addf %115, %117 : vector<2x128xf32>
    %119 = math.tanh %118 : vector<2x128xf32>
    %120 = arith.subf %79, %119 : vector<2x128xf32>
    %121 = arith.mulf %114, %120 : vector<2x128xf32>
    %122 = arith.addf %119, %121 : vector<2x128xf32>
    %123 = arith.truncf %122 : vector<2x128xf32> to vector<2x128xbf16>
    %cst_28 = arith.constant dense<0.000000e+00> : vector<2x512xf32>
    %124 = tpu.matmul %123, %10, %cst_28 {dimension_numbers = #tpu.dot_dimension_numbers<[1], [0], [0], [1], [0, 0, 1, 1], [], []>} : vector<2x128xbf16>, vector<128x512xbf16>, vector<2x512xf32> -> vector<2x512xf32>
    %125 = arith.truncf %101 : vector<2x128xf32> to vector<2x128xbf16>
    %cst_29 = arith.constant dense<0.000000e+00> : vector<2x512xf32>
    %126 = tpu.matmul %125, %9, %cst_29 {dimension_numbers = #tpu.dot_dimension_numbers<[1], [0], [0], [1], [0, 0, 1, 1], [], []>} : vector<2x128xbf16>, vector<128x512xbf16>, vector<2x512xf32> -> vector<2x512xf32>
    %127 = arith.addf %124, %126 : vector<2x512xf32>
    %128 = arith.addf %127, %13 : vector<2x512xf32>
    %129 = vector.extract_strided_slice %128 {offsets = [0, 0], sizes = [2, 256], strides = [1, 1]} : vector<2x512xf32> to vector<2x256xf32>
    %130 = arith.negf %129 : vector<2x256xf32>
    %131 = math.exp %130 : vector<2x256xf32>
    %cst_30 = arith.constant 1.000000e+00 : f32
    %132 = vector.broadcast %cst_30 : f32 to vector<2x256xf32>
    %133 = arith.addf %132, %131 : vector<2x256xf32>
    %134 = arith.divf %132, %133 : vector<2x256xf32>
    %135 = vector.extract_strided_slice %134 {offsets = [0, 0], sizes = [2, 128], strides = [1, 1]} : vector<2x256xf32> to vector<2x128xf32>
    %136 = vector.extract_strided_slice %134 {offsets = [0, 128], sizes = [2, 128], strides = [1, 1]} : vector<2x256xf32> to vector<2x128xf32>
    %137 = vector.extract_strided_slice %128 {offsets = [0, 256], sizes = [2, 128], strides = [1, 1]} : vector<2x512xf32> to vector<2x128xf32>
    %138 = vector.extract_strided_slice %128 {offsets = [0, 384], sizes = [2, 128], strides = [1, 1]} : vector<2x512xf32> to vector<2x128xf32>
    %139 = arith.mulf %135, %138 : vector<2x128xf32>
    %140 = arith.addf %137, %139 : vector<2x128xf32>
    %141 = math.tanh %140 : vector<2x128xf32>
    %142 = arith.subf %101, %141 : vector<2x128xf32>
    %143 = arith.mulf %136, %142 : vector<2x128xf32>
    %144 = arith.addf %141, %143 : vector<2x128xf32>
    %145 = vector.extract_strided_slice %7 {offsets = [0, 3, 0], sizes = [2, 1, 512], strides = [1, 1, 1]} : vector<2x16x512xf32> to vector<2x1x512xf32>
    %146 = vector.shape_cast %145 : vector<2x1x512xf32> to vector<2x512xf32>
    %147 = arith.truncf %122 : vector<2x128xf32> to vector<2x128xbf16>
    %cst_31 = arith.constant dense<0.000000e+00> : vector<2x512xf32>
    %148 = tpu.matmul %147, %8, %cst_31 {dimension_numbers = #tpu.dot_dimension_numbers<[1], [0], [0], [1], [0, 0, 1, 1], [], []>} : vector<2x128xbf16>, vector<128x512xbf16>, vector<2x512xf32> -> vector<2x512xf32>
    %149 = arith.addf %146, %148 : vector<2x512xf32>
    %150 = vector.extract_strided_slice %149 {offsets = [0, 0], sizes = [2, 256], strides = [1, 1]} : vector<2x512xf32> to vector<2x256xf32>
    %151 = arith.negf %150 : vector<2x256xf32>
    %152 = math.exp %151 : vector<2x256xf32>
    %cst_32 = arith.constant 1.000000e+00 : f32
    %153 = vector.broadcast %cst_32 : f32 to vector<2x256xf32>
    %154 = arith.addf %153, %152 : vector<2x256xf32>
    %155 = arith.divf %153, %154 : vector<2x256xf32>
    %156 = vector.extract_strided_slice %155 {offsets = [0, 0], sizes = [2, 128], strides = [1, 1]} : vector<2x256xf32> to vector<2x128xf32>
    %157 = vector.extract_strided_slice %155 {offsets = [0, 128], sizes = [2, 128], strides = [1, 1]} : vector<2x256xf32> to vector<2x128xf32>
    %158 = vector.extract_strided_slice %149 {offsets = [0, 256], sizes = [2, 128], strides = [1, 1]} : vector<2x512xf32> to vector<2x128xf32>
    %159 = vector.extract_strided_slice %149 {offsets = [0, 384], sizes = [2, 128], strides = [1, 1]} : vector<2x512xf32> to vector<2x128xf32>
    %160 = arith.mulf %156, %159 : vector<2x128xf32>
    %161 = arith.addf %158, %160 : vector<2x128xf32>
    %162 = math.tanh %161 : vector<2x128xf32>
    %163 = arith.subf %122, %162 : vector<2x128xf32>
    %164 = arith.mulf %157, %163 : vector<2x128xf32>
    %165 = arith.addf %162, %164 : vector<2x128xf32>
    %166 = arith.truncf %165 : vector<2x128xf32> to vector<2x128xbf16>
    %cst_33 = arith.constant dense<0.000000e+00> : vector<2x512xf32>
    %167 = tpu.matmul %166, %10, %cst_33 {dimension_numbers = #tpu.dot_dimension_numbers<[1], [0], [0], [1], [0, 0, 1, 1], [], []>} : vector<2x128xbf16>, vector<128x512xbf16>, vector<2x512xf32> -> vector<2x512xf32>
    %168 = arith.truncf %144 : vector<2x128xf32> to vector<2x128xbf16>
    %cst_34 = arith.constant dense<0.000000e+00> : vector<2x512xf32>
    %169 = tpu.matmul %168, %9, %cst_34 {dimension_numbers = #tpu.dot_dimension_numbers<[1], [0], [0], [1], [0, 0, 1, 1], [], []>} : vector<2x128xbf16>, vector<128x512xbf16>, vector<2x512xf32> -> vector<2x512xf32>
    %170 = arith.addf %167, %169 : vector<2x512xf32>
    %171 = arith.addf %170, %13 : vector<2x512xf32>
    %172 = vector.extract_strided_slice %171 {offsets = [0, 0], sizes = [2, 256], strides = [1, 1]} : vector<2x512xf32> to vector<2x256xf32>
    %173 = arith.negf %172 : vector<2x256xf32>
    %174 = math.exp %173 : vector<2x256xf32>
    %cst_35 = arith.constant 1.000000e+00 : f32
    %175 = vector.broadcast %cst_35 : f32 to vector<2x256xf32>
    %176 = arith.addf %175, %174 : vector<2x256xf32>
    %177 = arith.divf %175, %176 : vector<2x256xf32>
    %178 = vector.extract_strided_slice %177 {offsets = [0, 0], sizes = [2, 128], strides = [1, 1]} : vector<2x256xf32> to vector<2x128xf32>
    %179 = vector.extract_strided_slice %177 {offsets = [0, 128], sizes = [2, 128], strides = [1, 1]} : vector<2x256xf32> to vector<2x128xf32>
    %180 = vector.extract_strided_slice %171 {offsets = [0, 256], sizes = [2, 128], strides = [1, 1]} : vector<2x512xf32> to vector<2x128xf32>
    %181 = vector.extract_strided_slice %171 {offsets = [0, 384], sizes = [2, 128], strides = [1, 1]} : vector<2x512xf32> to vector<2x128xf32>
    %182 = arith.mulf %178, %181 : vector<2x128xf32>
    %183 = arith.addf %180, %182 : vector<2x128xf32>
    %184 = math.tanh %183 : vector<2x128xf32>
    %185 = arith.subf %144, %184 : vector<2x128xf32>
    %186 = arith.mulf %179, %185 : vector<2x128xf32>
    %187 = arith.addf %184, %186 : vector<2x128xf32>
    %188 = vector.extract_strided_slice %7 {offsets = [0, 4, 0], sizes = [2, 1, 512], strides = [1, 1, 1]} : vector<2x16x512xf32> to vector<2x1x512xf32>
    %189 = vector.shape_cast %188 : vector<2x1x512xf32> to vector<2x512xf32>
    %190 = arith.truncf %165 : vector<2x128xf32> to vector<2x128xbf16>
    %cst_36 = arith.constant dense<0.000000e+00> : vector<2x512xf32>
    %191 = tpu.matmul %190, %8, %cst_36 {dimension_numbers = #tpu.dot_dimension_numbers<[1], [0], [0], [1], [0, 0, 1, 1], [], []>} : vector<2x128xbf16>, vector<128x512xbf16>, vector<2x512xf32> -> vector<2x512xf32>
    %192 = arith.addf %189, %191 : vector<2x512xf32>
    %193 = vector.extract_strided_slice %192 {offsets = [0, 0], sizes = [2, 256], strides = [1, 1]} : vector<2x512xf32> to vector<2x256xf32>
    %194 = arith.negf %193 : vector<2x256xf32>
    %195 = math.exp %194 : vector<2x256xf32>
    %cst_37 = arith.constant 1.000000e+00 : f32
    %196 = vector.broadcast %cst_37 : f32 to vector<2x256xf32>
    %197 = arith.addf %196, %195 : vector<2x256xf32>
    %198 = arith.divf %196, %197 : vector<2x256xf32>
    %199 = vector.extract_strided_slice %198 {offsets = [0, 0], sizes = [2, 128], strides = [1, 1]} : vector<2x256xf32> to vector<2x128xf32>
    %200 = vector.extract_strided_slice %198 {offsets = [0, 128], sizes = [2, 128], strides = [1, 1]} : vector<2x256xf32> to vector<2x128xf32>
    %201 = vector.extract_strided_slice %192 {offsets = [0, 256], sizes = [2, 128], strides = [1, 1]} : vector<2x512xf32> to vector<2x128xf32>
    %202 = vector.extract_strided_slice %192 {offsets = [0, 384], sizes = [2, 128], strides = [1, 1]} : vector<2x512xf32> to vector<2x128xf32>
    %203 = arith.mulf %199, %202 : vector<2x128xf32>
    %204 = arith.addf %201, %203 : vector<2x128xf32>
    %205 = math.tanh %204 : vector<2x128xf32>
    %206 = arith.subf %165, %205 : vector<2x128xf32>
    %207 = arith.mulf %200, %206 : vector<2x128xf32>
    %208 = arith.addf %205, %207 : vector<2x128xf32>
    %209 = arith.truncf %208 : vector<2x128xf32> to vector<2x128xbf16>
    %cst_38 = arith.constant dense<0.000000e+00> : vector<2x512xf32>
    %210 = tpu.matmul %209, %10, %cst_38 {dimension_numbers = #tpu.dot_dimension_numbers<[1], [0], [0], [1], [0, 0, 1, 1], [], []>} : vector<2x128xbf16>, vector<128x512xbf16>, vector<2x512xf32> -> vector<2x512xf32>
    %211 = arith.truncf %187 : vector<2x128xf32> to vector<2x128xbf16>
    %cst_39 = arith.constant dense<0.000000e+00> : vector<2x512xf32>
    %212 = tpu.matmul %211, %9, %cst_39 {dimension_numbers = #tpu.dot_dimension_numbers<[1], [0], [0], [1], [0, 0, 1, 1], [], []>} : vector<2x128xbf16>, vector<128x512xbf16>, vector<2x512xf32> -> vector<2x512xf32>
    %213 = arith.addf %210, %212 : vector<2x512xf32>
    %214 = arith.addf %213, %13 : vector<2x512xf32>
    %215 = vector.extract_strided_slice %214 {offsets = [0, 0], sizes = [2, 256], strides = [1, 1]} : vector<2x512xf32> to vector<2x256xf32>
    %216 = arith.negf %215 : vector<2x256xf32>
    %217 = math.exp %216 : vector<2x256xf32>
    %cst_40 = arith.constant 1.000000e+00 : f32
    %218 = vector.broadcast %cst_40 : f32 to vector<2x256xf32>
    %219 = arith.addf %218, %217 : vector<2x256xf32>
    %220 = arith.divf %218, %219 : vector<2x256xf32>
    %221 = vector.extract_strided_slice %220 {offsets = [0, 0], sizes = [2, 128], strides = [1, 1]} : vector<2x256xf32> to vector<2x128xf32>
    %222 = vector.extract_strided_slice %220 {offsets = [0, 128], sizes = [2, 128], strides = [1, 1]} : vector<2x256xf32> to vector<2x128xf32>
    %223 = vector.extract_strided_slice %214 {offsets = [0, 256], sizes = [2, 128], strides = [1, 1]} : vector<2x512xf32> to vector<2x128xf32>
    %224 = vector.extract_strided_slice %214 {offsets = [0, 384], sizes = [2, 128], strides = [1, 1]} : vector<2x512xf32> to vector<2x128xf32>
    %225 = arith.mulf %221, %224 : vector<2x128xf32>
    %226 = arith.addf %223, %225 : vector<2x128xf32>
    %227 = math.tanh %226 : vector<2x128xf32>
    %228 = arith.subf %187, %227 : vector<2x128xf32>
    %229 = arith.mulf %222, %228 : vector<2x128xf32>
    %230 = arith.addf %227, %229 : vector<2x128xf32>
    %231 = vector.extract_strided_slice %7 {offsets = [0, 5, 0], sizes = [2, 1, 512], strides = [1, 1, 1]} : vector<2x16x512xf32> to vector<2x1x512xf32>
    %232 = vector.shape_cast %231 : vector<2x1x512xf32> to vector<2x512xf32>
    %233 = arith.truncf %208 : vector<2x128xf32> to vector<2x128xbf16>
    %cst_41 = arith.constant dense<0.000000e+00> : vector<2x512xf32>
    %234 = tpu.matmul %233, %8, %cst_41 {dimension_numbers = #tpu.dot_dimension_numbers<[1], [0], [0], [1], [0, 0, 1, 1], [], []>} : vector<2x128xbf16>, vector<128x512xbf16>, vector<2x512xf32> -> vector<2x512xf32>
    %235 = arith.addf %232, %234 : vector<2x512xf32>
    %236 = vector.extract_strided_slice %235 {offsets = [0, 0], sizes = [2, 256], strides = [1, 1]} : vector<2x512xf32> to vector<2x256xf32>
    %237 = arith.negf %236 : vector<2x256xf32>
    %238 = math.exp %237 : vector<2x256xf32>
    %cst_42 = arith.constant 1.000000e+00 : f32
    %239 = vector.broadcast %cst_42 : f32 to vector<2x256xf32>
    %240 = arith.addf %239, %238 : vector<2x256xf32>
    %241 = arith.divf %239, %240 : vector<2x256xf32>
    %242 = vector.extract_strided_slice %241 {offsets = [0, 0], sizes = [2, 128], strides = [1, 1]} : vector<2x256xf32> to vector<2x128xf32>
    %243 = vector.extract_strided_slice %241 {offsets = [0, 128], sizes = [2, 128], strides = [1, 1]} : vector<2x256xf32> to vector<2x128xf32>
    %244 = vector.extract_strided_slice %235 {offsets = [0, 256], sizes = [2, 128], strides = [1, 1]} : vector<2x512xf32> to vector<2x128xf32>
    %245 = vector.extract_strided_slice %235 {offsets = [0, 384], sizes = [2, 128], strides = [1, 1]} : vector<2x512xf32> to vector<2x128xf32>
    %246 = arith.mulf %242, %245 : vector<2x128xf32>
    %247 = arith.addf %244, %246 : vector<2x128xf32>
    %248 = math.tanh %247 : vector<2x128xf32>
    %249 = arith.subf %208, %248 : vector<2x128xf32>
    %250 = arith.mulf %243, %249 : vector<2x128xf32>
    %251 = arith.addf %248, %250 : vector<2x128xf32>
    %252 = arith.truncf %251 : vector<2x128xf32> to vector<2x128xbf16>
    %cst_43 = arith.constant dense<0.000000e+00> : vector<2x512xf32>
    %253 = tpu.matmul %252, %10, %cst_43 {dimension_numbers = #tpu.dot_dimension_numbers<[1], [0], [0], [1], [0, 0, 1, 1], [], []>} : vector<2x128xbf16>, vector<128x512xbf16>, vector<2x512xf32> -> vector<2x512xf32>
    %254 = arith.truncf %230 : vector<2x128xf32> to vector<2x128xbf16>
    %cst_44 = arith.constant dense<0.000000e+00> : vector<2x512xf32>
    %255 = tpu.matmul %254, %9, %cst_44 {dimension_numbers = #tpu.dot_dimension_numbers<[1], [0], [0], [1], [0, 0, 1, 1], [], []>} : vector<2x128xbf16>, vector<128x512xbf16>, vector<2x512xf32> -> vector<2x512xf32>
    %256 = arith.addf %253, %255 : vector<2x512xf32>
    %257 = arith.addf %256, %13 : vector<2x512xf32>
    %258 = vector.extract_strided_slice %257 {offsets = [0, 0], sizes = [2, 256], strides = [1, 1]} : vector<2x512xf32> to vector<2x256xf32>
    %259 = arith.negf %258 : vector<2x256xf32>
    %260 = math.exp %259 : vector<2x256xf32>
    %cst_45 = arith.constant 1.000000e+00 : f32
    %261 = vector.broadcast %cst_45 : f32 to vector<2x256xf32>
    %262 = arith.addf %261, %260 : vector<2x256xf32>
    %263 = arith.divf %261, %262 : vector<2x256xf32>
    %264 = vector.extract_strided_slice %263 {offsets = [0, 0], sizes = [2, 128], strides = [1, 1]} : vector<2x256xf32> to vector<2x128xf32>
    %265 = vector.extract_strided_slice %263 {offsets = [0, 128], sizes = [2, 128], strides = [1, 1]} : vector<2x256xf32> to vector<2x128xf32>
    %266 = vector.extract_strided_slice %257 {offsets = [0, 256], sizes = [2, 128], strides = [1, 1]} : vector<2x512xf32> to vector<2x128xf32>
    %267 = vector.extract_strided_slice %257 {offsets = [0, 384], sizes = [2, 128], strides = [1, 1]} : vector<2x512xf32> to vector<2x128xf32>
    %268 = arith.mulf %264, %267 : vector<2x128xf32>
    %269 = arith.addf %266, %268 : vector<2x128xf32>
    %270 = math.tanh %269 : vector<2x128xf32>
    %271 = arith.subf %230, %270 : vector<2x128xf32>
    %272 = arith.mulf %265, %271 : vector<2x128xf32>
    %273 = arith.addf %270, %272 : vector<2x128xf32>
    %274 = vector.extract_strided_slice %7 {offsets = [0, 6, 0], sizes = [2, 1, 512], strides = [1, 1, 1]} : vector<2x16x512xf32> to vector<2x1x512xf32>
    %275 = vector.shape_cast %274 : vector<2x1x512xf32> to vector<2x512xf32>
    %276 = arith.truncf %251 : vector<2x128xf32> to vector<2x128xbf16>
    %cst_46 = arith.constant dense<0.000000e+00> : vector<2x512xf32>
    %277 = tpu.matmul %276, %8, %cst_46 {dimension_numbers = #tpu.dot_dimension_numbers<[1], [0], [0], [1], [0, 0, 1, 1], [], []>} : vector<2x128xbf16>, vector<128x512xbf16>, vector<2x512xf32> -> vector<2x512xf32>
    %278 = arith.addf %275, %277 : vector<2x512xf32>
    %279 = vector.extract_strided_slice %278 {offsets = [0, 0], sizes = [2, 256], strides = [1, 1]} : vector<2x512xf32> to vector<2x256xf32>
    %280 = arith.negf %279 : vector<2x256xf32>
    %281 = math.exp %280 : vector<2x256xf32>
    %cst_47 = arith.constant 1.000000e+00 : f32
    %282 = vector.broadcast %cst_47 : f32 to vector<2x256xf32>
    %283 = arith.addf %282, %281 : vector<2x256xf32>
    %284 = arith.divf %282, %283 : vector<2x256xf32>
    %285 = vector.extract_strided_slice %284 {offsets = [0, 0], sizes = [2, 128], strides = [1, 1]} : vector<2x256xf32> to vector<2x128xf32>
    %286 = vector.extract_strided_slice %284 {offsets = [0, 128], sizes = [2, 128], strides = [1, 1]} : vector<2x256xf32> to vector<2x128xf32>
    %287 = vector.extract_strided_slice %278 {offsets = [0, 256], sizes = [2, 128], strides = [1, 1]} : vector<2x512xf32> to vector<2x128xf32>
    %288 = vector.extract_strided_slice %278 {offsets = [0, 384], sizes = [2, 128], strides = [1, 1]} : vector<2x512xf32> to vector<2x128xf32>
    %289 = arith.mulf %285, %288 : vector<2x128xf32>
    %290 = arith.addf %287, %289 : vector<2x128xf32>
    %291 = math.tanh %290 : vector<2x128xf32>
    %292 = arith.subf %251, %291 : vector<2x128xf32>
    %293 = arith.mulf %286, %292 : vector<2x128xf32>
    %294 = arith.addf %291, %293 : vector<2x128xf32>
    %295 = arith.truncf %294 : vector<2x128xf32> to vector<2x128xbf16>
    %cst_48 = arith.constant dense<0.000000e+00> : vector<2x512xf32>
    %296 = tpu.matmul %295, %10, %cst_48 {dimension_numbers = #tpu.dot_dimension_numbers<[1], [0], [0], [1], [0, 0, 1, 1], [], []>} : vector<2x128xbf16>, vector<128x512xbf16>, vector<2x512xf32> -> vector<2x512xf32>
    %297 = arith.truncf %273 : vector<2x128xf32> to vector<2x128xbf16>
    %cst_49 = arith.constant dense<0.000000e+00> : vector<2x512xf32>
    %298 = tpu.matmul %297, %9, %cst_49 {dimension_numbers = #tpu.dot_dimension_numbers<[1], [0], [0], [1], [0, 0, 1, 1], [], []>} : vector<2x128xbf16>, vector<128x512xbf16>, vector<2x512xf32> -> vector<2x512xf32>
    %299 = arith.addf %296, %298 : vector<2x512xf32>
    %300 = arith.addf %299, %13 : vector<2x512xf32>
    %301 = vector.extract_strided_slice %300 {offsets = [0, 0], sizes = [2, 256], strides = [1, 1]} : vector<2x512xf32> to vector<2x256xf32>
    %302 = arith.negf %301 : vector<2x256xf32>
    %303 = math.exp %302 : vector<2x256xf32>
    %cst_50 = arith.constant 1.000000e+00 : f32
    %304 = vector.broadcast %cst_50 : f32 to vector<2x256xf32>
    %305 = arith.addf %304, %303 : vector<2x256xf32>
    %306 = arith.divf %304, %305 : vector<2x256xf32>
    %307 = vector.extract_strided_slice %306 {offsets = [0, 0], sizes = [2, 128], strides = [1, 1]} : vector<2x256xf32> to vector<2x128xf32>
    %308 = vector.extract_strided_slice %306 {offsets = [0, 128], sizes = [2, 128], strides = [1, 1]} : vector<2x256xf32> to vector<2x128xf32>
    %309 = vector.extract_strided_slice %300 {offsets = [0, 256], sizes = [2, 128], strides = [1, 1]} : vector<2x512xf32> to vector<2x128xf32>
    %310 = vector.extract_strided_slice %300 {offsets = [0, 384], sizes = [2, 128], strides = [1, 1]} : vector<2x512xf32> to vector<2x128xf32>
    %311 = arith.mulf %307, %310 : vector<2x128xf32>
    %312 = arith.addf %309, %311 : vector<2x128xf32>
    %313 = math.tanh %312 : vector<2x128xf32>
    %314 = arith.subf %273, %313 : vector<2x128xf32>
    %315 = arith.mulf %308, %314 : vector<2x128xf32>
    %316 = arith.addf %313, %315 : vector<2x128xf32>
    %317 = vector.extract_strided_slice %7 {offsets = [0, 7, 0], sizes = [2, 1, 512], strides = [1, 1, 1]} : vector<2x16x512xf32> to vector<2x1x512xf32>
    %318 = vector.shape_cast %317 : vector<2x1x512xf32> to vector<2x512xf32>
    %319 = arith.truncf %294 : vector<2x128xf32> to vector<2x128xbf16>
    %cst_51 = arith.constant dense<0.000000e+00> : vector<2x512xf32>
    %320 = tpu.matmul %319, %8, %cst_51 {dimension_numbers = #tpu.dot_dimension_numbers<[1], [0], [0], [1], [0, 0, 1, 1], [], []>} : vector<2x128xbf16>, vector<128x512xbf16>, vector<2x512xf32> -> vector<2x512xf32>
    %321 = arith.addf %318, %320 : vector<2x512xf32>
    %322 = vector.extract_strided_slice %321 {offsets = [0, 0], sizes = [2, 256], strides = [1, 1]} : vector<2x512xf32> to vector<2x256xf32>
    %323 = arith.negf %322 : vector<2x256xf32>
    %324 = math.exp %323 : vector<2x256xf32>
    %cst_52 = arith.constant 1.000000e+00 : f32
    %325 = vector.broadcast %cst_52 : f32 to vector<2x256xf32>
    %326 = arith.addf %325, %324 : vector<2x256xf32>
    %327 = arith.divf %325, %326 : vector<2x256xf32>
    %328 = vector.extract_strided_slice %327 {offsets = [0, 0], sizes = [2, 128], strides = [1, 1]} : vector<2x256xf32> to vector<2x128xf32>
    %329 = vector.extract_strided_slice %327 {offsets = [0, 128], sizes = [2, 128], strides = [1, 1]} : vector<2x256xf32> to vector<2x128xf32>
    %330 = vector.extract_strided_slice %321 {offsets = [0, 256], sizes = [2, 128], strides = [1, 1]} : vector<2x512xf32> to vector<2x128xf32>
    %331 = vector.extract_strided_slice %321 {offsets = [0, 384], sizes = [2, 128], strides = [1, 1]} : vector<2x512xf32> to vector<2x128xf32>
    %332 = arith.mulf %328, %331 : vector<2x128xf32>
    %333 = arith.addf %330, %332 : vector<2x128xf32>
    %334 = math.tanh %333 : vector<2x128xf32>
    %335 = arith.subf %294, %334 : vector<2x128xf32>
    %336 = arith.mulf %329, %335 : vector<2x128xf32>
    %337 = arith.addf %334, %336 : vector<2x128xf32>
    %338 = arith.truncf %337 : vector<2x128xf32> to vector<2x128xbf16>
    %cst_53 = arith.constant dense<0.000000e+00> : vector<2x512xf32>
    %339 = tpu.matmul %338, %10, %cst_53 {dimension_numbers = #tpu.dot_dimension_numbers<[1], [0], [0], [1], [0, 0, 1, 1], [], []>} : vector<2x128xbf16>, vector<128x512xbf16>, vector<2x512xf32> -> vector<2x512xf32>
    %340 = arith.truncf %316 : vector<2x128xf32> to vector<2x128xbf16>
    %cst_54 = arith.constant dense<0.000000e+00> : vector<2x512xf32>
    %341 = tpu.matmul %340, %9, %cst_54 {dimension_numbers = #tpu.dot_dimension_numbers<[1], [0], [0], [1], [0, 0, 1, 1], [], []>} : vector<2x128xbf16>, vector<128x512xbf16>, vector<2x512xf32> -> vector<2x512xf32>
    %342 = arith.addf %339, %341 : vector<2x512xf32>
    %343 = arith.addf %342, %13 : vector<2x512xf32>
    %344 = vector.extract_strided_slice %343 {offsets = [0, 0], sizes = [2, 256], strides = [1, 1]} : vector<2x512xf32> to vector<2x256xf32>
    %345 = arith.negf %344 : vector<2x256xf32>
    %346 = math.exp %345 : vector<2x256xf32>
    %cst_55 = arith.constant 1.000000e+00 : f32
    %347 = vector.broadcast %cst_55 : f32 to vector<2x256xf32>
    %348 = arith.addf %347, %346 : vector<2x256xf32>
    %349 = arith.divf %347, %348 : vector<2x256xf32>
    %350 = vector.extract_strided_slice %349 {offsets = [0, 0], sizes = [2, 128], strides = [1, 1]} : vector<2x256xf32> to vector<2x128xf32>
    %351 = vector.extract_strided_slice %349 {offsets = [0, 128], sizes = [2, 128], strides = [1, 1]} : vector<2x256xf32> to vector<2x128xf32>
    %352 = vector.extract_strided_slice %343 {offsets = [0, 256], sizes = [2, 128], strides = [1, 1]} : vector<2x512xf32> to vector<2x128xf32>
    %353 = vector.extract_strided_slice %343 {offsets = [0, 384], sizes = [2, 128], strides = [1, 1]} : vector<2x512xf32> to vector<2x128xf32>
    %354 = arith.mulf %350, %353 : vector<2x128xf32>
    %355 = arith.addf %352, %354 : vector<2x128xf32>
    %356 = math.tanh %355 : vector<2x128xf32>
    %357 = arith.subf %316, %356 : vector<2x128xf32>
    %358 = arith.mulf %351, %357 : vector<2x128xf32>
    %359 = arith.addf %356, %358 : vector<2x128xf32>
    %360 = vector.extract_strided_slice %7 {offsets = [0, 8, 0], sizes = [2, 1, 512], strides = [1, 1, 1]} : vector<2x16x512xf32> to vector<2x1x512xf32>
    %361 = vector.shape_cast %360 : vector<2x1x512xf32> to vector<2x512xf32>
    %362 = arith.truncf %337 : vector<2x128xf32> to vector<2x128xbf16>
    %cst_56 = arith.constant dense<0.000000e+00> : vector<2x512xf32>
    %363 = tpu.matmul %362, %8, %cst_56 {dimension_numbers = #tpu.dot_dimension_numbers<[1], [0], [0], [1], [0, 0, 1, 1], [], []>} : vector<2x128xbf16>, vector<128x512xbf16>, vector<2x512xf32> -> vector<2x512xf32>
    %364 = arith.addf %361, %363 : vector<2x512xf32>
    %365 = vector.extract_strided_slice %364 {offsets = [0, 0], sizes = [2, 256], strides = [1, 1]} : vector<2x512xf32> to vector<2x256xf32>
    %366 = arith.negf %365 : vector<2x256xf32>
    %367 = math.exp %366 : vector<2x256xf32>
    %cst_57 = arith.constant 1.000000e+00 : f32
    %368 = vector.broadcast %cst_57 : f32 to vector<2x256xf32>
    %369 = arith.addf %368, %367 : vector<2x256xf32>
    %370 = arith.divf %368, %369 : vector<2x256xf32>
    %371 = vector.extract_strided_slice %370 {offsets = [0, 0], sizes = [2, 128], strides = [1, 1]} : vector<2x256xf32> to vector<2x128xf32>
    %372 = vector.extract_strided_slice %370 {offsets = [0, 128], sizes = [2, 128], strides = [1, 1]} : vector<2x256xf32> to vector<2x128xf32>
    %373 = vector.extract_strided_slice %364 {offsets = [0, 256], sizes = [2, 128], strides = [1, 1]} : vector<2x512xf32> to vector<2x128xf32>
    %374 = vector.extract_strided_slice %364 {offsets = [0, 384], sizes = [2, 128], strides = [1, 1]} : vector<2x512xf32> to vector<2x128xf32>
    %375 = arith.mulf %371, %374 : vector<2x128xf32>
    %376 = arith.addf %373, %375 : vector<2x128xf32>
    %377 = math.tanh %376 : vector<2x128xf32>
    %378 = arith.subf %337, %377 : vector<2x128xf32>
    %379 = arith.mulf %372, %378 : vector<2x128xf32>
    %380 = arith.addf %377, %379 : vector<2x128xf32>
    %381 = arith.truncf %380 : vector<2x128xf32> to vector<2x128xbf16>
    %cst_58 = arith.constant dense<0.000000e+00> : vector<2x512xf32>
    %382 = tpu.matmul %381, %10, %cst_58 {dimension_numbers = #tpu.dot_dimension_numbers<[1], [0], [0], [1], [0, 0, 1, 1], [], []>} : vector<2x128xbf16>, vector<128x512xbf16>, vector<2x512xf32> -> vector<2x512xf32>
    %383 = arith.truncf %359 : vector<2x128xf32> to vector<2x128xbf16>
    %cst_59 = arith.constant dense<0.000000e+00> : vector<2x512xf32>
    %384 = tpu.matmul %383, %9, %cst_59 {dimension_numbers = #tpu.dot_dimension_numbers<[1], [0], [0], [1], [0, 0, 1, 1], [], []>} : vector<2x128xbf16>, vector<128x512xbf16>, vector<2x512xf32> -> vector<2x512xf32>
    %385 = arith.addf %382, %384 : vector<2x512xf32>
    %386 = arith.addf %385, %13 : vector<2x512xf32>
    %387 = vector.extract_strided_slice %386 {offsets = [0, 0], sizes = [2, 256], strides = [1, 1]} : vector<2x512xf32> to vector<2x256xf32>
    %388 = arith.negf %387 : vector<2x256xf32>
    %389 = math.exp %388 : vector<2x256xf32>
    %cst_60 = arith.constant 1.000000e+00 : f32
    %390 = vector.broadcast %cst_60 : f32 to vector<2x256xf32>
    %391 = arith.addf %390, %389 : vector<2x256xf32>
    %392 = arith.divf %390, %391 : vector<2x256xf32>
    %393 = vector.extract_strided_slice %392 {offsets = [0, 0], sizes = [2, 128], strides = [1, 1]} : vector<2x256xf32> to vector<2x128xf32>
    %394 = vector.extract_strided_slice %392 {offsets = [0, 128], sizes = [2, 128], strides = [1, 1]} : vector<2x256xf32> to vector<2x128xf32>
    %395 = vector.extract_strided_slice %386 {offsets = [0, 256], sizes = [2, 128], strides = [1, 1]} : vector<2x512xf32> to vector<2x128xf32>
    %396 = vector.extract_strided_slice %386 {offsets = [0, 384], sizes = [2, 128], strides = [1, 1]} : vector<2x512xf32> to vector<2x128xf32>
    %397 = arith.mulf %393, %396 : vector<2x128xf32>
    %398 = arith.addf %395, %397 : vector<2x128xf32>
    %399 = math.tanh %398 : vector<2x128xf32>
    %400 = arith.subf %359, %399 : vector<2x128xf32>
    %401 = arith.mulf %394, %400 : vector<2x128xf32>
    %402 = arith.addf %399, %401 : vector<2x128xf32>
    %403 = vector.extract_strided_slice %7 {offsets = [0, 9, 0], sizes = [2, 1, 512], strides = [1, 1, 1]} : vector<2x16x512xf32> to vector<2x1x512xf32>
    %404 = vector.shape_cast %403 : vector<2x1x512xf32> to vector<2x512xf32>
    %405 = arith.truncf %380 : vector<2x128xf32> to vector<2x128xbf16>
    %cst_61 = arith.constant dense<0.000000e+00> : vector<2x512xf32>
    %406 = tpu.matmul %405, %8, %cst_61 {dimension_numbers = #tpu.dot_dimension_numbers<[1], [0], [0], [1], [0, 0, 1, 1], [], []>} : vector<2x128xbf16>, vector<128x512xbf16>, vector<2x512xf32> -> vector<2x512xf32>
    %407 = arith.addf %404, %406 : vector<2x512xf32>
    %408 = vector.extract_strided_slice %407 {offsets = [0, 0], sizes = [2, 256], strides = [1, 1]} : vector<2x512xf32> to vector<2x256xf32>
    %409 = arith.negf %408 : vector<2x256xf32>
    %410 = math.exp %409 : vector<2x256xf32>
    %cst_62 = arith.constant 1.000000e+00 : f32
    %411 = vector.broadcast %cst_62 : f32 to vector<2x256xf32>
    %412 = arith.addf %411, %410 : vector<2x256xf32>
    %413 = arith.divf %411, %412 : vector<2x256xf32>
    %414 = vector.extract_strided_slice %413 {offsets = [0, 0], sizes = [2, 128], strides = [1, 1]} : vector<2x256xf32> to vector<2x128xf32>
    %415 = vector.extract_strided_slice %413 {offsets = [0, 128], sizes = [2, 128], strides = [1, 1]} : vector<2x256xf32> to vector<2x128xf32>
    %416 = vector.extract_strided_slice %407 {offsets = [0, 256], sizes = [2, 128], strides = [1, 1]} : vector<2x512xf32> to vector<2x128xf32>
    %417 = vector.extract_strided_slice %407 {offsets = [0, 384], sizes = [2, 128], strides = [1, 1]} : vector<2x512xf32> to vector<2x128xf32>
    %418 = arith.mulf %414, %417 : vector<2x128xf32>
    %419 = arith.addf %416, %418 : vector<2x128xf32>
    %420 = math.tanh %419 : vector<2x128xf32>
    %421 = arith.subf %380, %420 : vector<2x128xf32>
    %422 = arith.mulf %415, %421 : vector<2x128xf32>
    %423 = arith.addf %420, %422 : vector<2x128xf32>
    %424 = arith.truncf %423 : vector<2x128xf32> to vector<2x128xbf16>
    %cst_63 = arith.constant dense<0.000000e+00> : vector<2x512xf32>
    %425 = tpu.matmul %424, %10, %cst_63 {dimension_numbers = #tpu.dot_dimension_numbers<[1], [0], [0], [1], [0, 0, 1, 1], [], []>} : vector<2x128xbf16>, vector<128x512xbf16>, vector<2x512xf32> -> vector<2x512xf32>
    %426 = arith.truncf %402 : vector<2x128xf32> to vector<2x128xbf16>
    %cst_64 = arith.constant dense<0.000000e+00> : vector<2x512xf32>
    %427 = tpu.matmul %426, %9, %cst_64 {dimension_numbers = #tpu.dot_dimension_numbers<[1], [0], [0], [1], [0, 0, 1, 1], [], []>} : vector<2x128xbf16>, vector<128x512xbf16>, vector<2x512xf32> -> vector<2x512xf32>
    %428 = arith.addf %425, %427 : vector<2x512xf32>
    %429 = arith.addf %428, %13 : vector<2x512xf32>
    %430 = vector.extract_strided_slice %429 {offsets = [0, 0], sizes = [2, 256], strides = [1, 1]} : vector<2x512xf32> to vector<2x256xf32>
    %431 = arith.negf %430 : vector<2x256xf32>
    %432 = math.exp %431 : vector<2x256xf32>
    %cst_65 = arith.constant 1.000000e+00 : f32
    %433 = vector.broadcast %cst_65 : f32 to vector<2x256xf32>
    %434 = arith.addf %433, %432 : vector<2x256xf32>
    %435 = arith.divf %433, %434 : vector<2x256xf32>
    %436 = vector.extract_strided_slice %435 {offsets = [0, 0], sizes = [2, 128], strides = [1, 1]} : vector<2x256xf32> to vector<2x128xf32>
    %437 = vector.extract_strided_slice %435 {offsets = [0, 128], sizes = [2, 128], strides = [1, 1]} : vector<2x256xf32> to vector<2x128xf32>
    %438 = vector.extract_strided_slice %429 {offsets = [0, 256], sizes = [2, 128], strides = [1, 1]} : vector<2x512xf32> to vector<2x128xf32>
    %439 = vector.extract_strided_slice %429 {offsets = [0, 384], sizes = [2, 128], strides = [1, 1]} : vector<2x512xf32> to vector<2x128xf32>
    %440 = arith.mulf %436, %439 : vector<2x128xf32>
    %441 = arith.addf %438, %440 : vector<2x128xf32>
    %442 = math.tanh %441 : vector<2x128xf32>
    %443 = arith.subf %402, %442 : vector<2x128xf32>
    %444 = arith.mulf %437, %443 : vector<2x128xf32>
    %445 = arith.addf %442, %444 : vector<2x128xf32>
    %446 = vector.extract_strided_slice %7 {offsets = [0, 10, 0], sizes = [2, 1, 512], strides = [1, 1, 1]} : vector<2x16x512xf32> to vector<2x1x512xf32>
    %447 = vector.shape_cast %446 : vector<2x1x512xf32> to vector<2x512xf32>
    %448 = arith.truncf %423 : vector<2x128xf32> to vector<2x128xbf16>
    %cst_66 = arith.constant dense<0.000000e+00> : vector<2x512xf32>
    %449 = tpu.matmul %448, %8, %cst_66 {dimension_numbers = #tpu.dot_dimension_numbers<[1], [0], [0], [1], [0, 0, 1, 1], [], []>} : vector<2x128xbf16>, vector<128x512xbf16>, vector<2x512xf32> -> vector<2x512xf32>
    %450 = arith.addf %447, %449 : vector<2x512xf32>
    %451 = vector.extract_strided_slice %450 {offsets = [0, 0], sizes = [2, 256], strides = [1, 1]} : vector<2x512xf32> to vector<2x256xf32>
    %452 = arith.negf %451 : vector<2x256xf32>
    %453 = math.exp %452 : vector<2x256xf32>
    %cst_67 = arith.constant 1.000000e+00 : f32
    %454 = vector.broadcast %cst_67 : f32 to vector<2x256xf32>
    %455 = arith.addf %454, %453 : vector<2x256xf32>
    %456 = arith.divf %454, %455 : vector<2x256xf32>
    %457 = vector.extract_strided_slice %456 {offsets = [0, 0], sizes = [2, 128], strides = [1, 1]} : vector<2x256xf32> to vector<2x128xf32>
    %458 = vector.extract_strided_slice %456 {offsets = [0, 128], sizes = [2, 128], strides = [1, 1]} : vector<2x256xf32> to vector<2x128xf32>
    %459 = vector.extract_strided_slice %450 {offsets = [0, 256], sizes = [2, 128], strides = [1, 1]} : vector<2x512xf32> to vector<2x128xf32>
    %460 = vector.extract_strided_slice %450 {offsets = [0, 384], sizes = [2, 128], strides = [1, 1]} : vector<2x512xf32> to vector<2x128xf32>
    %461 = arith.mulf %457, %460 : vector<2x128xf32>
    %462 = arith.addf %459, %461 : vector<2x128xf32>
    %463 = math.tanh %462 : vector<2x128xf32>
    %464 = arith.subf %423, %463 : vector<2x128xf32>
    %465 = arith.mulf %458, %464 : vector<2x128xf32>
    %466 = arith.addf %463, %465 : vector<2x128xf32>
    %467 = arith.truncf %466 : vector<2x128xf32> to vector<2x128xbf16>
    %cst_68 = arith.constant dense<0.000000e+00> : vector<2x512xf32>
    %468 = tpu.matmul %467, %10, %cst_68 {dimension_numbers = #tpu.dot_dimension_numbers<[1], [0], [0], [1], [0, 0, 1, 1], [], []>} : vector<2x128xbf16>, vector<128x512xbf16>, vector<2x512xf32> -> vector<2x512xf32>
    %469 = arith.truncf %445 : vector<2x128xf32> to vector<2x128xbf16>
    %cst_69 = arith.constant dense<0.000000e+00> : vector<2x512xf32>
    %470 = tpu.matmul %469, %9, %cst_69 {dimension_numbers = #tpu.dot_dimension_numbers<[1], [0], [0], [1], [0, 0, 1, 1], [], []>} : vector<2x128xbf16>, vector<128x512xbf16>, vector<2x512xf32> -> vector<2x512xf32>
    %471 = arith.addf %468, %470 : vector<2x512xf32>
    %472 = arith.addf %471, %13 : vector<2x512xf32>
    %473 = vector.extract_strided_slice %472 {offsets = [0, 0], sizes = [2, 256], strides = [1, 1]} : vector<2x512xf32> to vector<2x256xf32>
    %474 = arith.negf %473 : vector<2x256xf32>
    %475 = math.exp %474 : vector<2x256xf32>
    %cst_70 = arith.constant 1.000000e+00 : f32
    %476 = vector.broadcast %cst_70 : f32 to vector<2x256xf32>
    %477 = arith.addf %476, %475 : vector<2x256xf32>
    %478 = arith.divf %476, %477 : vector<2x256xf32>
    %479 = vector.extract_strided_slice %478 {offsets = [0, 0], sizes = [2, 128], strides = [1, 1]} : vector<2x256xf32> to vector<2x128xf32>
    %480 = vector.extract_strided_slice %478 {offsets = [0, 128], sizes = [2, 128], strides = [1, 1]} : vector<2x256xf32> to vector<2x128xf32>
    %481 = vector.extract_strided_slice %472 {offsets = [0, 256], sizes = [2, 128], strides = [1, 1]} : vector<2x512xf32> to vector<2x128xf32>
    %482 = vector.extract_strided_slice %472 {offsets = [0, 384], sizes = [2, 128], strides = [1, 1]} : vector<2x512xf32> to vector<2x128xf32>
    %483 = arith.mulf %479, %482 : vector<2x128xf32>
    %484 = arith.addf %481, %483 : vector<2x128xf32>
    %485 = math.tanh %484 : vector<2x128xf32>
    %486 = arith.subf %445, %485 : vector<2x128xf32>
    %487 = arith.mulf %480, %486 : vector<2x128xf32>
    %488 = arith.addf %485, %487 : vector<2x128xf32>
    %489 = vector.extract_strided_slice %7 {offsets = [0, 11, 0], sizes = [2, 1, 512], strides = [1, 1, 1]} : vector<2x16x512xf32> to vector<2x1x512xf32>
    %490 = vector.shape_cast %489 : vector<2x1x512xf32> to vector<2x512xf32>
    %491 = arith.truncf %466 : vector<2x128xf32> to vector<2x128xbf16>
    %cst_71 = arith.constant dense<0.000000e+00> : vector<2x512xf32>
    %492 = tpu.matmul %491, %8, %cst_71 {dimension_numbers = #tpu.dot_dimension_numbers<[1], [0], [0], [1], [0, 0, 1, 1], [], []>} : vector<2x128xbf16>, vector<128x512xbf16>, vector<2x512xf32> -> vector<2x512xf32>
    %493 = arith.addf %490, %492 : vector<2x512xf32>
    %494 = vector.extract_strided_slice %493 {offsets = [0, 0], sizes = [2, 256], strides = [1, 1]} : vector<2x512xf32> to vector<2x256xf32>
    %495 = arith.negf %494 : vector<2x256xf32>
    %496 = math.exp %495 : vector<2x256xf32>
    %cst_72 = arith.constant 1.000000e+00 : f32
    %497 = vector.broadcast %cst_72 : f32 to vector<2x256xf32>
    %498 = arith.addf %497, %496 : vector<2x256xf32>
    %499 = arith.divf %497, %498 : vector<2x256xf32>
    %500 = vector.extract_strided_slice %499 {offsets = [0, 0], sizes = [2, 128], strides = [1, 1]} : vector<2x256xf32> to vector<2x128xf32>
    %501 = vector.extract_strided_slice %499 {offsets = [0, 128], sizes = [2, 128], strides = [1, 1]} : vector<2x256xf32> to vector<2x128xf32>
    %502 = vector.extract_strided_slice %493 {offsets = [0, 256], sizes = [2, 128], strides = [1, 1]} : vector<2x512xf32> to vector<2x128xf32>
    %503 = vector.extract_strided_slice %493 {offsets = [0, 384], sizes = [2, 128], strides = [1, 1]} : vector<2x512xf32> to vector<2x128xf32>
    %504 = arith.mulf %500, %503 : vector<2x128xf32>
    %505 = arith.addf %502, %504 : vector<2x128xf32>
    %506 = math.tanh %505 : vector<2x128xf32>
    %507 = arith.subf %466, %506 : vector<2x128xf32>
    %508 = arith.mulf %501, %507 : vector<2x128xf32>
    %509 = arith.addf %506, %508 : vector<2x128xf32>
    %510 = arith.truncf %509 : vector<2x128xf32> to vector<2x128xbf16>
    %cst_73 = arith.constant dense<0.000000e+00> : vector<2x512xf32>
    %511 = tpu.matmul %510, %10, %cst_73 {dimension_numbers = #tpu.dot_dimension_numbers<[1], [0], [0], [1], [0, 0, 1, 1], [], []>} : vector<2x128xbf16>, vector<128x512xbf16>, vector<2x512xf32> -> vector<2x512xf32>
    %512 = arith.truncf %488 : vector<2x128xf32> to vector<2x128xbf16>
    %cst_74 = arith.constant dense<0.000000e+00> : vector<2x512xf32>
    %513 = tpu.matmul %512, %9, %cst_74 {dimension_numbers = #tpu.dot_dimension_numbers<[1], [0], [0], [1], [0, 0, 1, 1], [], []>} : vector<2x128xbf16>, vector<128x512xbf16>, vector<2x512xf32> -> vector<2x512xf32>
    %514 = arith.addf %511, %513 : vector<2x512xf32>
    %515 = arith.addf %514, %13 : vector<2x512xf32>
    %516 = vector.extract_strided_slice %515 {offsets = [0, 0], sizes = [2, 256], strides = [1, 1]} : vector<2x512xf32> to vector<2x256xf32>
    %517 = arith.negf %516 : vector<2x256xf32>
    %518 = math.exp %517 : vector<2x256xf32>
    %cst_75 = arith.constant 1.000000e+00 : f32
    %519 = vector.broadcast %cst_75 : f32 to vector<2x256xf32>
    %520 = arith.addf %519, %518 : vector<2x256xf32>
    %521 = arith.divf %519, %520 : vector<2x256xf32>
    %522 = vector.extract_strided_slice %521 {offsets = [0, 0], sizes = [2, 128], strides = [1, 1]} : vector<2x256xf32> to vector<2x128xf32>
    %523 = vector.extract_strided_slice %521 {offsets = [0, 128], sizes = [2, 128], strides = [1, 1]} : vector<2x256xf32> to vector<2x128xf32>
    %524 = vector.extract_strided_slice %515 {offsets = [0, 256], sizes = [2, 128], strides = [1, 1]} : vector<2x512xf32> to vector<2x128xf32>
    %525 = vector.extract_strided_slice %515 {offsets = [0, 384], sizes = [2, 128], strides = [1, 1]} : vector<2x512xf32> to vector<2x128xf32>
    %526 = arith.mulf %522, %525 : vector<2x128xf32>
    %527 = arith.addf %524, %526 : vector<2x128xf32>
    %528 = math.tanh %527 : vector<2x128xf32>
    %529 = arith.subf %488, %528 : vector<2x128xf32>
    %530 = arith.mulf %523, %529 : vector<2x128xf32>
    %531 = arith.addf %528, %530 : vector<2x128xf32>
    %532 = vector.extract_strided_slice %7 {offsets = [0, 12, 0], sizes = [2, 1, 512], strides = [1, 1, 1]} : vector<2x16x512xf32> to vector<2x1x512xf32>
    %533 = vector.shape_cast %532 : vector<2x1x512xf32> to vector<2x512xf32>
    %534 = arith.truncf %509 : vector<2x128xf32> to vector<2x128xbf16>
    %cst_76 = arith.constant dense<0.000000e+00> : vector<2x512xf32>
    %535 = tpu.matmul %534, %8, %cst_76 {dimension_numbers = #tpu.dot_dimension_numbers<[1], [0], [0], [1], [0, 0, 1, 1], [], []>} : vector<2x128xbf16>, vector<128x512xbf16>, vector<2x512xf32> -> vector<2x512xf32>
    %536 = arith.addf %533, %535 : vector<2x512xf32>
    %537 = vector.extract_strided_slice %536 {offsets = [0, 0], sizes = [2, 256], strides = [1, 1]} : vector<2x512xf32> to vector<2x256xf32>
    %538 = arith.negf %537 : vector<2x256xf32>
    %539 = math.exp %538 : vector<2x256xf32>
    %cst_77 = arith.constant 1.000000e+00 : f32
    %540 = vector.broadcast %cst_77 : f32 to vector<2x256xf32>
    %541 = arith.addf %540, %539 : vector<2x256xf32>
    %542 = arith.divf %540, %541 : vector<2x256xf32>
    %543 = vector.extract_strided_slice %542 {offsets = [0, 0], sizes = [2, 128], strides = [1, 1]} : vector<2x256xf32> to vector<2x128xf32>
    %544 = vector.extract_strided_slice %542 {offsets = [0, 128], sizes = [2, 128], strides = [1, 1]} : vector<2x256xf32> to vector<2x128xf32>
    %545 = vector.extract_strided_slice %536 {offsets = [0, 256], sizes = [2, 128], strides = [1, 1]} : vector<2x512xf32> to vector<2x128xf32>
    %546 = vector.extract_strided_slice %536 {offsets = [0, 384], sizes = [2, 128], strides = [1, 1]} : vector<2x512xf32> to vector<2x128xf32>
    %547 = arith.mulf %543, %546 : vector<2x128xf32>
    %548 = arith.addf %545, %547 : vector<2x128xf32>
    %549 = math.tanh %548 : vector<2x128xf32>
    %550 = arith.subf %509, %549 : vector<2x128xf32>
    %551 = arith.mulf %544, %550 : vector<2x128xf32>
    %552 = arith.addf %549, %551 : vector<2x128xf32>
    %553 = arith.truncf %552 : vector<2x128xf32> to vector<2x128xbf16>
    %cst_78 = arith.constant dense<0.000000e+00> : vector<2x512xf32>
    %554 = tpu.matmul %553, %10, %cst_78 {dimension_numbers = #tpu.dot_dimension_numbers<[1], [0], [0], [1], [0, 0, 1, 1], [], []>} : vector<2x128xbf16>, vector<128x512xbf16>, vector<2x512xf32> -> vector<2x512xf32>
    %555 = arith.truncf %531 : vector<2x128xf32> to vector<2x128xbf16>
    %cst_79 = arith.constant dense<0.000000e+00> : vector<2x512xf32>
    %556 = tpu.matmul %555, %9, %cst_79 {dimension_numbers = #tpu.dot_dimension_numbers<[1], [0], [0], [1], [0, 0, 1, 1], [], []>} : vector<2x128xbf16>, vector<128x512xbf16>, vector<2x512xf32> -> vector<2x512xf32>
    %557 = arith.addf %554, %556 : vector<2x512xf32>
    %558 = arith.addf %557, %13 : vector<2x512xf32>
    %559 = vector.extract_strided_slice %558 {offsets = [0, 0], sizes = [2, 256], strides = [1, 1]} : vector<2x512xf32> to vector<2x256xf32>
    %560 = arith.negf %559 : vector<2x256xf32>
    %561 = math.exp %560 : vector<2x256xf32>
    %cst_80 = arith.constant 1.000000e+00 : f32
    %562 = vector.broadcast %cst_80 : f32 to vector<2x256xf32>
    %563 = arith.addf %562, %561 : vector<2x256xf32>
    %564 = arith.divf %562, %563 : vector<2x256xf32>
    %565 = vector.extract_strided_slice %564 {offsets = [0, 0], sizes = [2, 128], strides = [1, 1]} : vector<2x256xf32> to vector<2x128xf32>
    %566 = vector.extract_strided_slice %564 {offsets = [0, 128], sizes = [2, 128], strides = [1, 1]} : vector<2x256xf32> to vector<2x128xf32>
    %567 = vector.extract_strided_slice %558 {offsets = [0, 256], sizes = [2, 128], strides = [1, 1]} : vector<2x512xf32> to vector<2x128xf32>
    %568 = vector.extract_strided_slice %558 {offsets = [0, 384], sizes = [2, 128], strides = [1, 1]} : vector<2x512xf32> to vector<2x128xf32>
    %569 = arith.mulf %565, %568 : vector<2x128xf32>
    %570 = arith.addf %567, %569 : vector<2x128xf32>
    %571 = math.tanh %570 : vector<2x128xf32>
    %572 = arith.subf %531, %571 : vector<2x128xf32>
    %573 = arith.mulf %566, %572 : vector<2x128xf32>
    %574 = arith.addf %571, %573 : vector<2x128xf32>
    %575 = vector.extract_strided_slice %7 {offsets = [0, 13, 0], sizes = [2, 1, 512], strides = [1, 1, 1]} : vector<2x16x512xf32> to vector<2x1x512xf32>
    %576 = vector.shape_cast %575 : vector<2x1x512xf32> to vector<2x512xf32>
    %577 = arith.truncf %552 : vector<2x128xf32> to vector<2x128xbf16>
    %cst_81 = arith.constant dense<0.000000e+00> : vector<2x512xf32>
    %578 = tpu.matmul %577, %8, %cst_81 {dimension_numbers = #tpu.dot_dimension_numbers<[1], [0], [0], [1], [0, 0, 1, 1], [], []>} : vector<2x128xbf16>, vector<128x512xbf16>, vector<2x512xf32> -> vector<2x512xf32>
    %579 = arith.addf %576, %578 : vector<2x512xf32>
    %580 = vector.extract_strided_slice %579 {offsets = [0, 0], sizes = [2, 256], strides = [1, 1]} : vector<2x512xf32> to vector<2x256xf32>
    %581 = arith.negf %580 : vector<2x256xf32>
    %582 = math.exp %581 : vector<2x256xf32>
    %cst_82 = arith.constant 1.000000e+00 : f32
    %583 = vector.broadcast %cst_82 : f32 to vector<2x256xf32>
    %584 = arith.addf %583, %582 : vector<2x256xf32>
    %585 = arith.divf %583, %584 : vector<2x256xf32>
    %586 = vector.extract_strided_slice %585 {offsets = [0, 0], sizes = [2, 128], strides = [1, 1]} : vector<2x256xf32> to vector<2x128xf32>
    %587 = vector.extract_strided_slice %585 {offsets = [0, 128], sizes = [2, 128], strides = [1, 1]} : vector<2x256xf32> to vector<2x128xf32>
    %588 = vector.extract_strided_slice %579 {offsets = [0, 256], sizes = [2, 128], strides = [1, 1]} : vector<2x512xf32> to vector<2x128xf32>
    %589 = vector.extract_strided_slice %579 {offsets = [0, 384], sizes = [2, 128], strides = [1, 1]} : vector<2x512xf32> to vector<2x128xf32>
    %590 = arith.mulf %586, %589 : vector<2x128xf32>
    %591 = arith.addf %588, %590 : vector<2x128xf32>
    %592 = math.tanh %591 : vector<2x128xf32>
    %593 = arith.subf %552, %592 : vector<2x128xf32>
    %594 = arith.mulf %587, %593 : vector<2x128xf32>
    %595 = arith.addf %592, %594 : vector<2x128xf32>
    %596 = arith.truncf %595 : vector<2x128xf32> to vector<2x128xbf16>
    %cst_83 = arith.constant dense<0.000000e+00> : vector<2x512xf32>
    %597 = tpu.matmul %596, %10, %cst_83 {dimension_numbers = #tpu.dot_dimension_numbers<[1], [0], [0], [1], [0, 0, 1, 1], [], []>} : vector<2x128xbf16>, vector<128x512xbf16>, vector<2x512xf32> -> vector<2x512xf32>
    %598 = arith.truncf %574 : vector<2x128xf32> to vector<2x128xbf16>
    %cst_84 = arith.constant dense<0.000000e+00> : vector<2x512xf32>
    %599 = tpu.matmul %598, %9, %cst_84 {dimension_numbers = #tpu.dot_dimension_numbers<[1], [0], [0], [1], [0, 0, 1, 1], [], []>} : vector<2x128xbf16>, vector<128x512xbf16>, vector<2x512xf32> -> vector<2x512xf32>
    %600 = arith.addf %597, %599 : vector<2x512xf32>
    %601 = arith.addf %600, %13 : vector<2x512xf32>
    %602 = vector.extract_strided_slice %601 {offsets = [0, 0], sizes = [2, 256], strides = [1, 1]} : vector<2x512xf32> to vector<2x256xf32>
    %603 = arith.negf %602 : vector<2x256xf32>
    %604 = math.exp %603 : vector<2x256xf32>
    %cst_85 = arith.constant 1.000000e+00 : f32
    %605 = vector.broadcast %cst_85 : f32 to vector<2x256xf32>
    %606 = arith.addf %605, %604 : vector<2x256xf32>
    %607 = arith.divf %605, %606 : vector<2x256xf32>
    %608 = vector.extract_strided_slice %607 {offsets = [0, 0], sizes = [2, 128], strides = [1, 1]} : vector<2x256xf32> to vector<2x128xf32>
    %609 = vector.extract_strided_slice %607 {offsets = [0, 128], sizes = [2, 128], strides = [1, 1]} : vector<2x256xf32> to vector<2x128xf32>
    %610 = vector.extract_strided_slice %601 {offsets = [0, 256], sizes = [2, 128], strides = [1, 1]} : vector<2x512xf32> to vector<2x128xf32>
    %611 = vector.extract_strided_slice %601 {offsets = [0, 384], sizes = [2, 128], strides = [1, 1]} : vector<2x512xf32> to vector<2x128xf32>
    %612 = arith.mulf %608, %611 : vector<2x128xf32>
    %613 = arith.addf %610, %612 : vector<2x128xf32>
    %614 = math.tanh %613 : vector<2x128xf32>
    %615 = arith.subf %574, %614 : vector<2x128xf32>
    %616 = arith.mulf %609, %615 : vector<2x128xf32>
    %617 = arith.addf %614, %616 : vector<2x128xf32>
    %618 = vector.extract_strided_slice %7 {offsets = [0, 14, 0], sizes = [2, 1, 512], strides = [1, 1, 1]} : vector<2x16x512xf32> to vector<2x1x512xf32>
    %619 = vector.shape_cast %618 : vector<2x1x512xf32> to vector<2x512xf32>
    %620 = arith.truncf %595 : vector<2x128xf32> to vector<2x128xbf16>
    %cst_86 = arith.constant dense<0.000000e+00> : vector<2x512xf32>
    %621 = tpu.matmul %620, %8, %cst_86 {dimension_numbers = #tpu.dot_dimension_numbers<[1], [0], [0], [1], [0, 0, 1, 1], [], []>} : vector<2x128xbf16>, vector<128x512xbf16>, vector<2x512xf32> -> vector<2x512xf32>
    %622 = arith.addf %619, %621 : vector<2x512xf32>
    %623 = vector.extract_strided_slice %622 {offsets = [0, 0], sizes = [2, 256], strides = [1, 1]} : vector<2x512xf32> to vector<2x256xf32>
    %624 = arith.negf %623 : vector<2x256xf32>
    %625 = math.exp %624 : vector<2x256xf32>
    %cst_87 = arith.constant 1.000000e+00 : f32
    %626 = vector.broadcast %cst_87 : f32 to vector<2x256xf32>
    %627 = arith.addf %626, %625 : vector<2x256xf32>
    %628 = arith.divf %626, %627 : vector<2x256xf32>
    %629 = vector.extract_strided_slice %628 {offsets = [0, 0], sizes = [2, 128], strides = [1, 1]} : vector<2x256xf32> to vector<2x128xf32>
    %630 = vector.extract_strided_slice %628 {offsets = [0, 128], sizes = [2, 128], strides = [1, 1]} : vector<2x256xf32> to vector<2x128xf32>
    %631 = vector.extract_strided_slice %622 {offsets = [0, 256], sizes = [2, 128], strides = [1, 1]} : vector<2x512xf32> to vector<2x128xf32>
    %632 = vector.extract_strided_slice %622 {offsets = [0, 384], sizes = [2, 128], strides = [1, 1]} : vector<2x512xf32> to vector<2x128xf32>
    %633 = arith.mulf %629, %632 : vector<2x128xf32>
    %634 = arith.addf %631, %633 : vector<2x128xf32>
    %635 = math.tanh %634 : vector<2x128xf32>
    %636 = arith.subf %595, %635 : vector<2x128xf32>
    %637 = arith.mulf %630, %636 : vector<2x128xf32>
    %638 = arith.addf %635, %637 : vector<2x128xf32>
    %639 = arith.truncf %638 : vector<2x128xf32> to vector<2x128xbf16>
    %cst_88 = arith.constant dense<0.000000e+00> : vector<2x512xf32>
    %640 = tpu.matmul %639, %10, %cst_88 {dimension_numbers = #tpu.dot_dimension_numbers<[1], [0], [0], [1], [0, 0, 1, 1], [], []>} : vector<2x128xbf16>, vector<128x512xbf16>, vector<2x512xf32> -> vector<2x512xf32>
    %641 = arith.truncf %617 : vector<2x128xf32> to vector<2x128xbf16>
    %cst_89 = arith.constant dense<0.000000e+00> : vector<2x512xf32>
    %642 = tpu.matmul %641, %9, %cst_89 {dimension_numbers = #tpu.dot_dimension_numbers<[1], [0], [0], [1], [0, 0, 1, 1], [], []>} : vector<2x128xbf16>, vector<128x512xbf16>, vector<2x512xf32> -> vector<2x512xf32>
    %643 = arith.addf %640, %642 : vector<2x512xf32>
    %644 = arith.addf %643, %13 : vector<2x512xf32>
    %645 = vector.extract_strided_slice %644 {offsets = [0, 0], sizes = [2, 256], strides = [1, 1]} : vector<2x512xf32> to vector<2x256xf32>
    %646 = arith.negf %645 : vector<2x256xf32>
    %647 = math.exp %646 : vector<2x256xf32>
    %cst_90 = arith.constant 1.000000e+00 : f32
    %648 = vector.broadcast %cst_90 : f32 to vector<2x256xf32>
    %649 = arith.addf %648, %647 : vector<2x256xf32>
    %650 = arith.divf %648, %649 : vector<2x256xf32>
    %651 = vector.extract_strided_slice %650 {offsets = [0, 0], sizes = [2, 128], strides = [1, 1]} : vector<2x256xf32> to vector<2x128xf32>
    %652 = vector.extract_strided_slice %650 {offsets = [0, 128], sizes = [2, 128], strides = [1, 1]} : vector<2x256xf32> to vector<2x128xf32>
    %653 = vector.extract_strided_slice %644 {offsets = [0, 256], sizes = [2, 128], strides = [1, 1]} : vector<2x512xf32> to vector<2x128xf32>
    %654 = vector.extract_strided_slice %644 {offsets = [0, 384], sizes = [2, 128], strides = [1, 1]} : vector<2x512xf32> to vector<2x128xf32>
    %655 = arith.mulf %651, %654 : vector<2x128xf32>
    %656 = arith.addf %653, %655 : vector<2x128xf32>
    %657 = math.tanh %656 : vector<2x128xf32>
    %658 = arith.subf %617, %657 : vector<2x128xf32>
    %659 = arith.mulf %652, %658 : vector<2x128xf32>
    %660 = arith.addf %657, %659 : vector<2x128xf32>
    %661 = vector.shape_cast %359 : vector<2x128xf32> to vector<2x1x128xf32>
    %662 = vector.shape_cast %402 : vector<2x128xf32> to vector<2x1x128xf32>
    %663 = vector.shape_cast %445 : vector<2x128xf32> to vector<2x1x128xf32>
    %664 = vector.shape_cast %488 : vector<2x128xf32> to vector<2x1x128xf32>
    %665 = vector.shape_cast %531 : vector<2x128xf32> to vector<2x1x128xf32>
    %666 = vector.shape_cast %574 : vector<2x128xf32> to vector<2x1x128xf32>
    %667 = vector.shape_cast %617 : vector<2x128xf32> to vector<2x1x128xf32>
    %668 = vector.shape_cast %660 : vector<2x128xf32> to vector<2x1x128xf32>
    %669 = tpu.concatenate %661, %662, %663, %664, %665, %666, %667, %668 in 1 : vector<2x1x128xf32>, vector<2x1x128xf32>, vector<2x1x128xf32>, vector<2x1x128xf32>, vector<2x1x128xf32>, vector<2x1x128xf32>, vector<2x1x128xf32>, vector<2x1x128xf32> -> vector<2x8x128xf32>
    %670 = vector.shape_cast %669 : vector<2x8x128xf32> to vector<16x128xf32>
    %671 = arith.truncf %670 : vector<16x128xf32> to vector<16x128xbf16>
    %c0_91 = arith.constant 0 : index
    %c0_92 = arith.constant 0 : index
    %672 = vector.load %arg7[%c0_91, %c0_92] : memref<128x4xbf16, #tpu.memory_space<vmem>>, vector<128x4xbf16>
    %cst_93 = arith.constant dense<0.000000e+00> : vector<16x4xf32>
    %673 = tpu.matmul %671, %672, %cst_93 {dimension_numbers = #tpu.dot_dimension_numbers<[1], [0], [0], [1], [0, 0, 1, 1], [], []>} : vector<16x128xbf16>, vector<128x4xbf16>, vector<16x4xf32> -> vector<16x4xf32>
    %c0_94 = arith.constant 0 : index
    %c0_95 = arith.constant 0 : index
    %674 = vector.load %arg8[%c0_94, %c0_95] : memref<1x4xf32, #tpu.memory_space<vmem>>, vector<1x4xf32>
    %675 = vector.broadcast %674 : vector<1x4xf32> to vector<16x4xf32>
    %676 = arith.addf %673, %675 : vector<16x4xf32>
    %677 = vector.shape_cast %676 : vector<16x4xf32> to vector<2x8x4xf32>
    %c0_96 = arith.constant 0 : index
    %c0_97 = arith.constant 0 : index
    %c0_98 = arith.constant 0 : index
    %678 = vector.load %arg9[%c0_96, %c0_97, %c0_98] : memref<2x8x4xf32, #tpu.memory_space<vmem>>, vector<2x8x4xf32>
    tpu.vector_store %arg9[%c0_96, %c0_97, %c0_98], %677 {strides = array<i32>} : memref<2x8x4xf32, #tpu.memory_space<vmem>>, vector<2x8x4xf32>,
    return
  }
}

</mosaic_0001>

<llo_original>
// kernel: gru_forward.1
$region0: #{gru_forward.1}
  #allocation0 [shape = 'u32[]', space=smem, size = 0x4, offset = 0x4, fixed_abs, tag = 'smem constant byte address 0x4 - core index']
  #allocation1 [shape = 'u32[144,128]{1,0:T(1,128)}', space=vmem, size = 0x12000, scoped, tag = 'internal scratch']
  %s0 = inlined_call_operand.vmem [shape: bf16[2,16,128], index: 0, kind: input, shape index: {}]
  %s1 = inlined_call_operand.hbm [shape: bf16[128,512], index: 1, kind: input, shape index: {}]
  %s2 = inlined_call_operand.hbm [shape: bf16[128,512], index: 2, kind: input, shape index: {}]
  %s3 = inlined_call_operand.vmem [shape: f32[1,512], index: 3, kind: input, shape index: {}]
  %s4 = inlined_call_operand.hbm [shape: bf16[128,512], index: 4, kind: input, shape index: {}]
  %s5 = inlined_call_operand.hbm [shape: bf16[128,512], index: 5, kind: input, shape index: {}]
  %s6 = inlined_call_operand.vmem [shape: f32[1,512], index: 6, kind: input, shape index: {}]
  %s7 = inlined_call_operand.vmem [shape: bf16[128,4], index: 7, kind: input, shape index: {}]
  %s8 = inlined_call_operand.vmem [shape: f32[1,4], index: 8, kind: input, shape index: {}]
  %s9 = inlined_call_operand.vmem [shape: f32[2,8,4], index: 9, kind: output, shape index: {}]
  %s10 = sld [smem:[#allocation0]]
  $region62: #{gru_forward.1} parent=0
    _
  %s12 = ssub.s32 1, %s10
  %s13 = scalar_select 0, %s12, %s10
  $region1: #{gru_forward.1} parent=0
    #allocation2 [shape = 'u8[131072]{0}', space=vmem, size = 0x20000, scoped, tag = 'input window, operand 1, single buffered']
    #allocation3 [shape = 's32[1]{0}', space=sflag, size = 0x4, scoped, tag = 'scoped memory for gru_forward.1']
    #allocation4 [shape = 'u8[131072]{0}', space=vmem, size = 0x20000, scoped, tag = 'input window, operand 2, single buffered']
    #allocation5 [shape = 's32[1]{0}', space=sflag, size = 0x4, scoped, tag = 'scoped memory for gru_forward.1']
    #allocation6 [shape = 'u8[131072]{0}', space=vmem, size = 0x20000, scoped, tag = 'input window, operand 4, single buffered']
    #allocation7 [shape = 'u8[131072]{0}', space=vmem, size = 0x20000, scoped, tag = 'input window, operand 5, single buffered']
    #allocation8 [shape = 's32[1]{0}', space=sflag, size = 0x4, scoped, tag = 'scoped memory for gru_forward.1']
    %14 = vsyncpa [#allocation3], 0
    %15 = vsyncpa [#allocation5], 0
    %16 = vsyncpa [#allocation8], 0
    // Predicated region
    $region2: #{gru_forward.1} parent=1 // pred_check
      _
    $region3: #{gru_forward.1} parent=1 // pred_check_branch
      %18 = sbr.rel (0) target = $region5
    $region4: #{gru_forward.1} parent=1 // pred_region
      _
    $region5: #{gru_forward.1} parent=1 // pred_fallthru
      _
    // Predicated region
    $region6: #{gru_forward.1} parent=1 // pred_check
      _
    $region7: #{gru_forward.1} parent=1 // pred_check_branch
      %20 = sbr.rel (0) target = $region9
    $region8: #{gru_forward.1} parent=1 // pred_region
      %s22 = ssub.s32 4096, 4096
      %23 = vsyncadd [#allocation3], %s22
      %s24 = sshll.u32 [#allocation2], 4
      %s25 = int_to_ptr.vmem [resolvable:$true] %s24
      %30 = dma.hbm_to_vmem [thread:$0]  %s1, 4096, %s25, [#allocation3], 256, 256, 16
    $region9: #{gru_forward.1} parent=1 // pred_fallthru
      _
    // Predicated region
    $region10: #{gru_forward.1} parent=1 // pred_check
      _
    $region11: #{gru_forward.1} parent=1 // pred_check_branch
      %32 = sbr.rel (0) target = $region13
    $region12: #{gru_forward.1} parent=1 // pred_region
      %s34 = ssub.s32 4096, 4096
      %35 = vsyncadd [#allocation5], %s34
      %s36 = sshll.u32 [#allocation4], 4
      %s37 = int_to_ptr.vmem [resolvable:$true] %s36
      %42 = dma.hbm_to_vmem [thread:$0]  %s2, 4096, %s37, [#allocation5], 256, 256, 16
    $region13: #{gru_forward.1} parent=1 // pred_fallthru
      _
    // Predicated region
    $region14: #{gru_forward.1} parent=1 // pred_check
      _
    $region15: #{gru_forward.1} parent=1 // pred_check_branch
      %44 = sbr.rel (0) target = $region17
    $region16: #{gru_forward.1} parent=1 // pred_region
      _
    $region17: #{gru_forward.1} parent=1 // pred_fallthru
      _
    // Predicated region
    $region18: #{gru_forward.1} parent=1 // pred_check
      _
    $region19: #{gru_forward.1} parent=1 // pred_check_branch
      %46 = sbr.rel (0) target = $region21
    $region20: #{gru_forward.1} parent=1 // pred_region
      %s48 = ssub.s32 4096, 4096
      %49 = vsyncadd [#allocation5], %s48
      %s50 = sshll.u32 [#allocation6], 4
      %s51 = int_to_ptr.vmem [resolvable:$true] %s50
      %56 = dma.hbm_to_vmem [thread:$0]  %s4, 4096, %s51, [#allocation5], 256, 256, 16
    $region21: #{gru_forward.1} parent=1 // pred_fallthru
      _
    // Predicated region
    $region22: #{gru_forward.1} parent=1 // pred_check
      _
    $region23: #{gru_forward.1} parent=1 // pred_check_branch
      %58 = sbr.rel (0) target = $region25
    $region24: #{gru_forward.1} parent=1 // pred_region
      %s60 = ssub.s32 4096, 4096
      %61 = vsyncadd [#allocation8], %s60
      %s62 = sshll.u32 [#allocation7], 4
      %s63 = int_to_ptr.vmem [resolvable:$true] %s62
      %68 = dma.hbm_to_vmem [thread:$0]  %s5, 4096, %s63, [#allocation8], 256, 256, 16
    $region25: #{gru_forward.1} parent=1 // pred_fallthru
      _
    // Predicated region
    $region26: #{gru_forward.1} parent=1 // pred_check
      _
    $region27: #{gru_forward.1} parent=1 // pred_check_branch
      %70 = sbr.rel (0) target = $region29
    $region28: #{gru_forward.1} parent=1 // pred_region
      _
    $region29: #{gru_forward.1} parent=1 // pred_fallthru
      _
    // Predicated region
    $region30: #{gru_forward.1} parent=1 // pred_check
      _
    $region31: #{gru_forward.1} parent=1 // pred_check_branch
      %72 = sbr.rel (0) target = $region33
    $region32: #{gru_forward.1} parent=1 // pred_region
      _
    $region33: #{gru_forward.1} parent=1 // pred_fallthru
      _
    // Predicated region
    $region34: #{gru_forward.1} parent=1 // pred_check
      _
    $region35: #{gru_forward.1} parent=1 // pred_check_branch
      %74 = sbr.rel (0) target = $region37
    $region36: #{gru_forward.1} parent=1 // pred_region
      _
    $region37: #{gru_forward.1} parent=1 // pred_fallthru
      _
    // Predicated region
    $region38: #{gru_forward.1} parent=1 // pred_check
      _
    $region39: #{gru_forward.1} parent=1 // pred_check_branch
      %76 = sbr.rel (0) target = $region41
    $region40: #{gru_forward.1} parent=1 // pred_region
      %77 = dma.done [#allocation3], 4096
    $region41: #{gru_forward.1} parent=1 // pred_fallthru
      _
    // Predicated region
    $region42: #{gru_forward.1} parent=1 // pred_check
      _
    $region43: #{gru_forward.1} parent=1 // pred_check_branch
      %79 = sbr.rel (0) target = $region45
    $region44: #{gru_forward.1} parent=1 // pred_region
      %80 = dma.done [#allocation5], 4096
    $region45: #{gru_forward.1} parent=1 // pred_fallthru
      _
    // Predicated region
    $region46: #{gru_forward.1} parent=1 // pred_check
      _
    $region47: #{gru_forward.1} parent=1 // pred_check_branch
      %82 = sbr.rel (0) target = $region49
    $region48: #{gru_forward.1} parent=1 // pred_region
      %83 = dma.done [#allocation5], 4096
    $region49: #{gru_forward.1} parent=1 // pred_fallthru
      _
    // Predicated region
    $region50: #{gru_forward.1} parent=1 // pred_check
      _
    $region51: #{gru_forward.1} parent=1 // pred_check_branch
      %85 = sbr.rel (0) target = $region53
    $region52: #{gru_forward.1} parent=1 // pred_region
      %86 = dma.done [#allocation8], 4096
    $region53: #{gru_forward.1} parent=1 // pred_fallthru
      _
    %v88 = vld [vmem:[%s0] sm:$0xf]
    %v89 = vld [vmem:[%s0 + $0x4] sm:$0xf]
    %v90 = vld [vmem:[%s0 + $0x8] sm:$0xf]
    %v91 = vld [vmem:[%s0 + $0xc] sm:$0xf]
    %v92 = vld [vmem:[#allocation2] sm:$0xff]
    %v93 = vld [vmem:[#allocation2 + $0x8] sm:$0xff]
    %v94 = vld [vmem:[#allocation2 + $0x10] sm:$0xff]
    %v95 = vld [vmem:[#allocation2 + $0x18] sm:$0xff]
    %v96 = vld [vmem:[#allocation2 + $0x20] sm:$0xff]
    %v97 = vld [vmem:[#allocation2 + $0x28] sm:$0xff]
    %v98 = vld [vmem:[#allocation2 + $0x30] sm:$0xff]
    %v99 = vld [vmem:[#allocation2 + $0x38] sm:$0xff]
    %v100 = vld [vmem:[#allocation2 + $0x40] sm:$0xff]
    %v101 = vld [vmem:[#allocation2 + $0x48] sm:$0xff]
    %v102 = vld [vmem:[#allocation2 + $0x50] sm:$0xff]
    %v103 = vld [vmem:[#allocation2 + $0x58] sm:$0xff]
    %v104 = vld [vmem:[#allocation2 + $0x60] sm:$0xff]
    %v105 = vld [vmem:[#allocation2 + $0x68] sm:$0xff]
    %v106 = vld [vmem:[#allocation2 + $0x70] sm:$0xff]
    %v107 = vld [vmem:[#allocation2 + $0x78] sm:$0xff]
    %v108 = vld [vmem:[#allocation2 + $0x80] sm:$0xff]
    %v109 = vld [vmem:[#allocation2 + $0x88] sm:$0xff]
    %v110 = vld [vmem:[#allocation2 + $0x90] sm:$0xff]
    %v111 = vld [vmem:[#allocation2 + $0x98] sm:$0xff]
    %v112 = vld [vmem:[#allocation2 + $0xa0] sm:$0xff]
    %v113 = vld [vmem:[#allocation2 + $0xa8] sm:$0xff]
    %v114 = vld [vmem:[#allocation2 + $0xb0] sm:$0xff]
    %v115 = vld [vmem:[#allocation2 + $0xb8] sm:$0xff]
    %v116 = vld [vmem:[#allocation2 + $0xc0] sm:$0xff]
    %v117 = vld [vmem:[#allocation2 + $0xc8] sm:$0xff]
    %v118 = vld [vmem:[#allocation2 + $0xd0] sm:$0xff]
    %v119 = vld [vmem:[#allocation2 + $0xd8] sm:$0xff]
    %v120 = vld [vmem:[#allocation2 + $0xe0] sm:$0xff]
    %v121 = vld [vmem:[#allocation2 + $0xe8] sm:$0xff]
    %v122 = vld [vmem:[#allocation2 + $0xf0] sm:$0xff]
    %v123 = vld [vmem:[#allocation2 + $0xf8] sm:$0xff]
    %v124 = vld [vmem:[%s3] sm:$0xf]
    %v126 = vlaneseq
    %v127 = vshrl.u32 %v126, 7
    %v128 = vsub.s32 0, %v127
    %v129 = vrot.slane %v124, %v128
    %v130 = vlaneseq
    %v131 = vshrl.u32 %v130, 7
    %v132 = vsub.s32 1, %v131
    %v133 = vrot.slane %v124, %v132
    %v134 = vlaneseq
    %v135 = vshrl.u32 %v134, 7
    %v136 = vsub.s32 2, %v135
    %v137 = vrot.slane %v124, %v136
    %v138 = vlaneseq
    %v139 = vshrl.u32 %v138, 7
    %v140 = vsub.s32 3, %v139
    %v141 = vrot.slane %v124, %v140
    %v150 = vunpack.c.l.b16 %v88
    %v151 = vunpack.c.l.b16 %v89
    %v152 = vunpack.c.l.b16 %v90
    %v153 = vunpack.c.l.b16 %v91
    %v154 = vpack.c.b16 %v151, %v150
    %v155 = vpack.c.b16 %v153, %v152
    %v190 = vunpack.c.l.b16 %v92
    %v191 = vunpack.c.h.b16 %v92
    %v192 = vunpack.c.l.b16 %v93
    %v193 = vunpack.c.h.b16 %v93
    %v194 = vunpack.c.l.b16 %v94
    %v195 = vunpack.c.h.b16 %v94
    %v196 = vunpack.c.l.b16 %v95
    %v197 = vunpack.c.h.b16 %v95
    %v198 = vunpack.c.l.b16 %v96
    %v199 = vunpack.c.h.b16 %v96
    %v200 = vunpack.c.l.b16 %v97
    %v201 = vunpack.c.h.b16 %v97
    %v202 = vunpack.c.l.b16 %v98
    %v203 = vunpack.c.h.b16 %v98
    %v204 = vunpack.c.l.b16 %v99
    %v205 = vunpack.c.h.b16 %v99
    %v206 = vunpack.c.l.b16 %v100
    %v207 = vunpack.c.h.b16 %v100
    %v208 = vunpack.c.l.b16 %v101
    %v209 = vunpack.c.h.b16 %v101
    %v210 = vunpack.c.l.b16 %v102
    %v211 = vunpack.c.h.b16 %v102
    %v212 = vunpack.c.l.b16 %v103
    %v213 = vunpack.c.h.b16 %v103
    %v214 = vunpack.c.l.b16 %v104
    %v215 = vunpack.c.h.b16 %v104
    %v216 = vunpack.c.l.b16 %v105
    %v217 = vunpack.c.h.b16 %v105
    %v218 = vunpack.c.l.b16 %v106
    %v219 = vunpack.c.h.b16 %v106
    %v220 = vunpack.c.l.b16 %v107
    %v221 = vunpack.c.h.b16 %v107
    %v222 = vunpack.c.l.b16 %v108
    %v223 = vunpack.c.h.b16 %v108
    %v224 = vunpack.c.l.b16 %v109
    %v225 = vunpack.c.h.b16 %v109
    %v226 = vunpack.c.l.b16 %v110
    %v227 = vunpack.c.h.b16 %v110
    %v228 = vunpack.c.l.b16 %v111
    %v229 = vunpack.c.h.b16 %v111
    %v230 = vunpack.c.l.b16 %v112
    %v231 = vunpack.c.h.b16 %v112
    %v232 = vunpack.c.l.b16 %v113
    %v233 = vunpack.c.h.b16 %v113
    %v234 = vunpack.c.l.b16 %v114
    %v235 = vunpack.c.h.b16 %v114
    %v236 = vunpack.c.l.b16 %v115
    %v237 = vunpack.c.h.b16 %v115
    %v238 = vunpack.c.l.b16 %v116
    %v239 = vunpack.c.h.b16 %v116
    %v240 = vunpack.c.l.b16 %v117
    %v241 = vunpack.c.h.b16 %v117
    %v242 = vunpack.c.l.b16 %v118
    %v243 = vunpack.c.h.b16 %v118
    %v244 = vunpack.c.l.b16 %v119
    %v245 = vunpack.c.h.b16 %v119
    %v246 = vunpack.c.l.b16 %v120
    %v247 = vunpack.c.h.b16 %v120
    %v248 = vunpack.c.l.b16 %v121
    %v249 = vunpack.c.h.b16 %v121
    %v250 = vunpack.c.l.b16 %v122
    %v251 = vunpack.c.h.b16 %v122
    %v252 = vunpack.c.l.b16 %v123
    %v253 = vunpack.c.h.b16 %v123
    %v254 = vpack.c.b16 %v194, %v190
    %v255 = vpack.c.b16 %v195, %v191
    %v256 = vpack.c.b16 %v196, %v192
    %v257 = vpack.c.b16 %v197, %v193
    %v258 = vpack.c.b16 %v202, %v198
    %v259 = vpack.c.b16 %v203, %v199
    %v260 = vpack.c.b16 %v204, %v200
    %v261 = vpack.c.b16 %v205, %v201
    %v262 = vpack.c.b16 %v210, %v206
    %v263 = vpack.c.b16 %v211, %v207
    %v264 = vpack.c.b16 %v212, %v208
    %v265 = vpack.c.b16 %v213, %v209
    %v266 = vpack.c.b16 %v218, %v214
    %v267 = vpack.c.b16 %v219, %v215
    %v268 = vpack.c.b16 %v220, %v216
    %v269 = vpack.c.b16 %v221, %v217
    %v270 = vpack.c.b16 %v226, %v222
    %v271 = vpack.c.b16 %v227, %v223
    %v272 = vpack.c.b16 %v228, %v224
    %v273 = vpack.c.b16 %v229, %v225
    %v274 = vpack.c.b16 %v234, %v230
    %v275 = vpack.c.b16 %v235, %v231
    %v276 = vpack.c.b16 %v236, %v232
    %v277 = vpack.c.b16 %v237, %v233
    %v278 = vpack.c.b16 %v242, %v238
    %v279 = vpack.c.b16 %v243, %v239
    %v280 = vpack.c.b16 %v244, %v240
    %v281 = vpack.c.b16 %v245, %v241
    %v282 = vpack.c.b16 %v250, %v246
    %v283 = vpack.c.b16 %v251, %v247
    %v284 = vpack.c.b16 %v252, %v248
    %v285 = vpack.c.b16 %v253, %v249
    %318 = vmatprep.subr.bf16.mxu0 %v255
    %319 = vmatpush1.bf16.msra.mxu0 %v254
    %320 = vmatprep.subr.bf16.mxu0 %v259
    %321 = vmatpush1.bf16.msra.mxu0 %v258
    %322 = vmatprep.subr.bf16.mxu0 %v263
    %323 = vmatpush1.bf16.msra.mxu0 %v262
    %324 = vmatprep.subr.bf16.mxu0 %v267
    %325 = vmatpush1.bf16.msra.mxu0 %v266
    %326 = vmatprep.subr.bf16.mxu0 %v271
    %327 = vmatpush1.bf16.msra.mxu0 %v270
    %328 = vmatprep.subr.bf16.mxu0 %v275
    %329 = vmatpush1.bf16.msra.mxu0 %v274
    %330 = vmatprep.subr.bf16.mxu0 %v279
    %331 = vmatpush1.bf16.msra.mxu0 %v278
    %332 = vmatprep.subr.bf16.mxu0 %v283
    %333 = vmatpush1.bf16.msra.mxu0 %v282
    %334 = vmatprep.subr.bf16.mxu0 0
    %335 = vmatpush1.bf16.msra.mxu0 0
    %336 = vmatprep.subr.bf16.mxu0 0
    %337 = vmatpush1.bf16.msra.mxu0 0
    %338 = vmatprep.subr.bf16.mxu0 0
    %339 = vmatpush1.bf16.msra.mxu0 0
    %340 = vmatprep.subr.bf16.mxu0 0
    %341 = vmatpush1.bf16.msra.mxu0 0
    %342 = vmatprep.subr.bf16.mxu0 0
    %343 = vmatpush1.bf16.msra.mxu0 0
    %344 = vmatprep.subr.bf16.mxu0 0
    %345 = vmatpush1.bf16.msra.mxu0 0
    %346 = vmatprep.subr.bf16.mxu0 0
    %347 = vmatpush1.bf16.msra.mxu0 0
    %348 = vmatprep.subr.bf16.mxu0 0
    %349 = vmatpush1.bf16.msra.mxu0 0
    %350 = vmatprep.mubr.bf16.mxu0 0
    %351 = vmatmul.mubr.bf16.gmra.mrb[0].mxu0 %v154
    %v352 = vpop.f32.mrb[0].mxu0
    %v353 = vadd.f32 %v129, %v352
    %v354 = vpop.f32.mrb[0].mxu0
    %v355 = vadd.f32 %v133, %v354
    %v356 = vpop.f32.mrb[0].mxu0
    %v357 = vadd.f32 %v129, %v356
    %v358 = vpop.f32.mrb[0].mxu0
    %v359 = vadd.f32 %v133, %v358
    %360 = vmatprep.mubr.bf16.mxu0 0
    %361 = vmatmul.mubr.bf16.gmra.mrb[0].mxu0 %v155
    %v362 = vpop.f32.mrb[0].mxu0
    %v363 = vadd.f32 %v129, %v362
    %v364 = vpop.f32.mrb[0].mxu0
    %v365 = vadd.f32 %v133, %v364
    %v366 = vpop.f32.mrb[0].mxu0
    %v367 = vadd.f32 %v129, %v366
    %v368 = vpop.f32.mrb[0].mxu0
    %v369 = vadd.f32 %v133, %v368
    %370 = vdwg.mxu0
    %371 = vmatprep.subr.bf16.mxu0 %v257
    %372 = vmatpush1.bf16.msra.mxu0 %v256
    %373 = vmatprep.subr.bf16.mxu0 %v261
    %374 = vmatpush1.bf16.msra.mxu0 %v260
    %375 = vmatprep.subr.bf16.mxu0 %v265
    %376 = vmatpush1.bf16.msra.mxu0 %v264
    %377 = vmatprep.subr.bf16.mxu0 %v269
    %378 = vmatpush1.bf16.msra.mxu0 %v268
    %379 = vmatprep.subr.bf16.mxu0 %v273
    %380 = vmatpush1.bf16.msra.mxu0 %v272
    %381 = vmatprep.subr.bf16.mxu0 %v277
    %382 = vmatpush1.bf16.msra.mxu0 %v276
    %383 = vmatprep.subr.bf16.mxu0 %v281
    %384 = vmatpush1.bf16.msra.mxu0 %v280
    %385 = vmatprep.subr.bf16.mxu0 %v285
    %386 = vmatpush1.bf16.msra.mxu0 %v284
    %387 = vmatprep.subr.bf16.mxu0 0
    %388 = vmatpush1.bf16.msra.mxu0 0
    %389 = vmatprep.subr.bf16.mxu0 0
    %390 = vmatpush1.bf16.msra.mxu0 0
    %391 = vmatprep.subr.bf16.mxu0 0
    %392 = vmatpush1.bf16.msra.mxu0 0
    %393 = vmatprep.subr.bf16.mxu0 0
    %394 = vmatpush1.bf16.msra.mxu0 0
    %395 = vmatprep.subr.bf16.mxu0 0
    %396 = vmatpush1.bf16.msra.mxu0 0
    %397 = vmatprep.subr.bf16.mxu0 0
    %398 = vmatpush1.bf16.msra.mxu0 0
    %399 = vmatprep.subr.bf16.mxu0 0
    %400 = vmatpush1.bf16.msra.mxu0 0
    %401 = vmatprep.subr.bf16.mxu0 0
    %402 = vmatpush1.bf16.msra.mxu0 0
    %403 = vmatprep.mubr.bf16.mxu0 0
    %404 = vmatmul.mubr.bf16.gmra.mrb[0].mxu0 %v154
    %v405 = vpop.f32.mrb[0].mxu0
    %v406 = vadd.f32 %v137, %v405
    %v407 = vpop.f32.mrb[0].mxu0
    %v408 = vadd.f32 %v141, %v407
    %v409 = vpop.f32.mrb[0].mxu0
    %v410 = vadd.f32 %v137, %v409
    %v411 = vpop.f32.mrb[0].mxu0
    %v412 = vadd.f32 %v141, %v411
    %413 = vmatprep.mubr.bf16.mxu0 0
    %414 = vmatmul.mubr.bf16.gmra.mrb[0].mxu0 %v155
    %v415 = vpop.f32.mrb[0].mxu0
    %v416 = vadd.f32 %v137, %v415
    %v417 = vpop.f32.mrb[0].mxu0
    %v418 = vadd.f32 %v141, %v417
    %v419 = vpop.f32.mrb[0].mxu0
    %v420 = vadd.f32 %v137, %v419
    %v421 = vpop.f32.mrb[0].mxu0
    %v422 = vadd.f32 %v141, %v421
    %423 = vdwg.mxu0
    %v424 = vld [vmem:[#allocation4] sm:$0xff]
    %v425 = vld [vmem:[#allocation4 + $0x8] sm:$0xff]
    %v426 = vld [vmem:[#allocation4 + $0x10] sm:$0xff]
    %v427 = vld [vmem:[#allocation4 + $0x18] sm:$0xff]
    %v428 = vld [vmem:[#allocation4 + $0x20] sm:$0xff]
    %v429 = vld [vmem:[#allocation4 + $0x28] sm:$0xff]
    %v430 = vld [vmem:[#allocation4 + $0x30] sm:$0xff]
    %v431 = vld [vmem:[#allocation4 + $0x38] sm:$0xff]
    %v432 = vld [vmem:[#allocation4 + $0x40] sm:$0xff]
    %v433 = vld [vmem:[#allocation4 + $0x48] sm:$0xff]
    %v434 = vld [vmem:[#allocation4 + $0x50] sm:$0xff]
    %v435 = vld [vmem:[#allocation4 + $0x58] sm:$0xff]
    %v436 = vld [vmem:[#allocation4 + $0x60] sm:$0xff]
    %v437 = vld [vmem:[#allocation4 + $0x68] sm:$0xff]
    %v438 = vld [vmem:[#allocation4 + $0x70] sm:$0xff]
    %v439 = vld [vmem:[#allocation4 + $0x78] sm:$0xff]
    %v440 = vld [vmem:[#allocation4 + $0x80] sm:$0xff]
    %v441 = vld [vmem:[#allocation4 + $0x88] sm:$0xff]
    %v442 = vld [vmem:[#allocation4 + $0x90] sm:$0xff]
    %v443 = vld [vmem:[#allocation4 + $0x98] sm:$0xff]
    %v444 = vld [vmem:[#allocation4 + $0xa0] sm:$0xff]
    %v445 = vld [vmem:[#allocation4 + $0xa8] sm:$0xff]
    %v446 = vld [vmem:[#allocation4 + $0xb0] sm:$0xff]
    %v447 = vld [vmem:[#allocation4 + $0xb8] sm:$0xff]
    %v448 = vld [vmem:[#allocation4 + $0xc0] sm:$0xff]
    %v449 = vld [vmem:[#allocation4 + $0xc8] sm:$0xff]
    %v450 = vld [vmem:[#allocation4 + $0xd0] sm:$0xff]
    %v451 = vld [vmem:[#allocation4 + $0xd8] sm:$0xff]
    %v452 = vld [vmem:[#allocation4 + $0xe0] sm:$0xff]
    %v453 = vld [vmem:[#allocation4 + $0xe8] sm:$0xff]
    %v454 = vld [vmem:[#allocation4 + $0xf0] sm:$0xff]
    %v455 = vld [vmem:[#allocation4 + $0xf8] sm:$0xff]
    %v456 = vld [vmem:[#allocation7] sm:$0xff]
    %v457 = vld [vmem:[#allocation7 + $0x8] sm:$0xff]
    %v458 = vld [vmem:[#allocation7 + $0x10] sm:$0xff]
    %v459 = vld [vmem:[#allocation7 + $0x18] sm:$0xff]
    %v460 = vld [vmem:[#allocation7 + $0x20] sm:$0xff]
    %v461 = vld [vmem:[#allocation7 + $0x28] sm:$0xff]
    %v462 = vld [vmem:[#allocation7 + $0x30] sm:$0xff]
    %v463 = vld [vmem:[#allocation7 + $0x38] sm:$0xff]
    %v464 = vld [vmem:[#allocation7 + $0x40] sm:$0xff]
    %v465 = vld [vmem:[#allocation7 + $0x48] sm:$0xff]
    %v466 = vld [vmem:[#allocation7 + $0x50] sm:$0xff]
    %v467 = vld [vmem:[#allocation7 + $0x58] sm:$0xff]
    %v468 = vld [vmem:[#allocation7 + $0x60] sm:$0xff]
    %v469 = vld [vmem:[#allocation7 + $0x68] sm:$0xff]
    %v470 = vld [vmem:[#allocation7 + $0x70] sm:$0xff]
    %v471 = vld [vmem:[#allocation7 + $0x78] sm:$0xff]
    %v472 = vld [vmem:[#allocation7 + $0x80] sm:$0xff]
    %v473 = vld [vmem:[#allocation7 + $0x88] sm:$0xff]
    %v474 = vld [vmem:[#allocation7 + $0x90] sm:$0xff]
    %v475 = vld [vmem:[#allocation7 + $0x98] sm:$0xff]
    %v476 = vld [vmem:[#allocation7 + $0xa0] sm:$0xff]
    %v477 = vld [vmem:[#allocation7 + $0xa8] sm:$0xff]
    %v478 = vld [vmem:[#allocation7 + $0xb0] sm:$0xff]
    %v479 = vld [vmem:[#allocation7 + $0xb8] sm:$0xff]
    %v480 = vld [vmem:[#allocation7 + $0xc0] sm:$0xff]
    %v481 = vld [vmem:[#allocation7 + $0xc8] sm:$0xff]
    %v482 = vld [vmem:[#allocation7 + $0xd0] sm:$0xff]
    %v483 = vld [vmem:[#allocation7 + $0xd8] sm:$0xff]
    %v484 = vld [vmem:[#allocation7 + $0xe0] sm:$0xff]
    %v485 = vld [vmem:[#allocation7 + $0xe8] sm:$0xff]
    %v486 = vld [vmem:[#allocation7 + $0xf0] sm:$0xff]
    %v487 = vld [vmem:[#allocation7 + $0xf8] sm:$0xff]
    %v488 = vld [vmem:[#allocation6] sm:$0xff]
    %v489 = vld [vmem:[#allocation6 + $0x8] sm:$0xff]
    %v490 = vld [vmem:[#allocation6 + $0x10] sm:$0xff]
    %v491 = vld [vmem:[#allocation6 + $0x18] sm:$0xff]
    %v492 = vld [vmem:[#allocation6 + $0x20] sm:$0xff]
    %v493 = vld [vmem:[#allocation6 + $0x28] sm:$0xff]
    %v494 = vld [vmem:[#allocation6 + $0x30] sm:$0xff]
    %v495 = vld [vmem:[#allocation6 + $0x38] sm:$0xff]
    %v496 = vld [vmem:[#allocation6 + $0x40] sm:$0xff]
    %v497 = vld [vmem:[#allocation6 + $0x48] sm:$0xff]
    %v498 = vld [vmem:[#allocation6 + $0x50] sm:$0xff]
    %v499 = vld [vmem:[#allocation6 + $0x58] sm:$0xff]
    %v500 = vld [vmem:[#allocation6 + $0x60] sm:$0xff]
    %v501 = vld [vmem:[#allocation6 + $0x68] sm:$0xff]
    %v502 = vld [vmem:[#allocation6 + $0x70] sm:$0xff]
    %v503 = vld [vmem:[#allocation6 + $0x78] sm:$0xff]
    %v504 = vld [vmem:[#allocation6 + $0x80] sm:$0xff]
    %v505 = vld [vmem:[#allocation6 + $0x88] sm:$0xff]
    %v506 = vld [vmem:[#allocation6 + $0x90] sm:$0xff]
    %v507 = vld [vmem:[#allocation6 + $0x98] sm:$0xff]
    %v508 = vld [vmem:[#allocation6 + $0xa0] sm:$0xff]
    %v509 = vld [vmem:[#allocation6 + $0xa8] sm:$0xff]
    %v510 = vld [vmem:[#allocation6 + $0xb0] sm:$0xff]
    %v511 = vld [vmem:[#allocation6 + $0xb8] sm:$0xff]
    %v512 = vld [vmem:[#allocation6 + $0xc0] sm:$0xff]
    %v513 = vld [vmem:[#allocation6 + $0xc8] sm:$0xff]
    %v514 = vld [vmem:[#allocation6 + $0xd0] sm:$0xff]
    %v515 = vld [vmem:[#allocation6 + $0xd8] sm:$0xff]
    %v516 = vld [vmem:[#allocation6 + $0xe0] sm:$0xff]
    %v517 = vld [vmem:[#allocation6 + $0xe8] sm:$0xff]
    %v518 = vld [vmem:[#allocation6 + $0xf0] sm:$0xff]
    %v519 = vld [vmem:[#allocation6 + $0xf8] sm:$0xff]
    %v520 = vld [vmem:[%s6] sm:$0xf]
    %v522 = vlaneseq
    %v523 = vshrl.u32 %v522, 7
    %v524 = vsub.s32 0, %v523
    %v525 = vrot.slane %v520, %v524
    %v526 = vlaneseq
    %v527 = vshrl.u32 %v526, 7
    %v528 = vsub.s32 1, %v527
    %v529 = vrot.slane %v520, %v528
    %v530 = vlaneseq
    %v531 = vshrl.u32 %v530, 7
    %v532 = vsub.s32 2, %v531
    %v533 = vrot.slane %v520, %v532
    %v534 = vlaneseq
    %v535 = vshrl.u32 %v534, 7
    %v536 = vsub.s32 3, %v535
    %v537 = vrot.slane %v520, %v536
    %v574 = vunpack.c.l.b16 %v424
    %v575 = vunpack.c.h.b16 %v424
    %v576 = vunpack.c.l.b16 %v425
    %v577 = vunpack.c.h.b16 %v425
    %v578 = vunpack.c.l.b16 %v426
    %v579 = vunpack.c.h.b16 %v426
    %v580 = vunpack.c.l.b16 %v427
    %v581 = vunpack.c.h.b16 %v427
    %v582 = vunpack.c.l.b16 %v428
    %v583 = vunpack.c.h.b16 %v428
    %v584 = vunpack.c.l.b16 %v429
    %v585 = vunpack.c.h.b16 %v429
    %v586 = vunpack.c.l.b16 %v430
    %v587 = vunpack.c.h.b16 %v430
    %v588 = vunpack.c.l.b16 %v431
    %v589 = vunpack.c.h.b16 %v431
    %v590 = vunpack.c.l.b16 %v432
    %v591 = vunpack.c.h.b16 %v432
    %v592 = vunpack.c.l.b16 %v433
    %v593 = vunpack.c.h.b16 %v433
    %v594 = vunpack.c.l.b16 %v434
    %v595 = vunpack.c.h.b16 %v434
    %v596 = vunpack.c.l.b16 %v435
    %v597 = vunpack.c.h.b16 %v435
    %v598 = vunpack.c.l.b16 %v436
    %v599 = vunpack.c.h.b16 %v436
    %v600 = vunpack.c.l.b16 %v437
    %v601 = vunpack.c.h.b16 %v437
    %v602 = vunpack.c.l.b16 %v438
    %v603 = vunpack.c.h.b16 %v438
    %v604 = vunpack.c.l.b16 %v439
    %v605 = vunpack.c.h.b16 %v439
    %v606 = vunpack.c.l.b16 %v440
    %v607 = vunpack.c.h.b16 %v440
    %v608 = vunpack.c.l.b16 %v441
    %v609 = vunpack.c.h.b16 %v441
    %v610 = vunpack.c.l.b16 %v442
    %v611 = vunpack.c.h.b16 %v442
    %v612 = vunpack.c.l.b16 %v443
    %v613 = vunpack.c.h.b16 %v443
    %v614 = vunpack.c.l.b16 %v444
    %v615 = vunpack.c.h.b16 %v444
    %v616 = vunpack.c.l.b16 %v445
    %v617 = vunpack.c.h.b16 %v445
    %v618 = vunpack.c.l.b16 %v446
    %v619 = vunpack.c.h.b16 %v446
    %v620 = vunpack.c.l.b16 %v447
    %v621 = vunpack.c.h.b16 %v447
    %v622 = vunpack.c.l.b16 %v448
    %v623 = vunpack.c.h.b16 %v448
    %v624 = vunpack.c.l.b16 %v449
    %v625 = vunpack.c.h.b16 %v449
    %v626 = vunpack.c.l.b16 %v450
    %v627 = vunpack.c.h.b16 %v450
    %v628 = vunpack.c.l.b16 %v451
    %v629 = vunpack.c.h.b16 %v451
    %v630 = vunpack.c.l.b16 %v452
    %v631 = vunpack.c.h.b16 %v452
    %v632 = vunpack.c.l.b16 %v453
    %v633 = vunpack.c.h.b16 %v453
    %v634 = vunpack.c.l.b16 %v454
    %v635 = vunpack.c.h.b16 %v454
    %v636 = vunpack.c.l.b16 %v455
    %v637 = vunpack.c.h.b16 %v455
    %v638 = vpack.c.b16 %v578, %v574
    %v639 = vpack.c.b16 %v579, %v575
    %v640 = vpack.c.b16 %v580, %v576
    %v641 = vpack.c.b16 %v581, %v577
    %v642 = vpack.c.b16 %v586, %v582
    %v643 = vpack.c.b16 %v587, %v583
    %v644 = vpack.c.b16 %v588, %v584
    %v645 = vpack.c.b16 %v589, %v585
    %v646 = vpack.c.b16 %v594, %v590
    %v647 = vpack.c.b16 %v595, %v591
    %v648 = vpack.c.b16 %v596, %v592
    %v649 = vpack.c.b16 %v597, %v593
    %v650 = vpack.c.b16 %v602, %v598
    %v651 = vpack.c.b16 %v603, %v599
    %v652 = vpack.c.b16 %v604, %v600
    %v653 = vpack.c.b16 %v605, %v601
    %v654 = vpack.c.b16 %v610, %v606
    %v655 = vpack.c.b16 %v611, %v607
    %v656 = vpack.c.b16 %v612, %v608
    %v657 = vpack.c.b16 %v613, %v609
    %v658 = vpack.c.b16 %v618, %v614
    %v659 = vpack.c.b16 %v619, %v615
    %v660 = vpack.c.b16 %v620, %v616
    %v661 = vpack.c.b16 %v621, %v617
    %v662 = vpack.c.b16 %v626, %v622
    %v663 = vpack.c.b16 %v627, %v623
    %v664 = vpack.c.b16 %v628, %v624
    %v665 = vpack.c.b16 %v629, %v625
    %v666 = vpack.c.b16 %v634, %v630
    %v667 = vpack.c.b16 %v635, %v631
    %v668 = vpack.c.b16 %v636, %v632
    %v669 = vpack.c.b16 %v637, %v633
    %702 = vmatprep.subr.bf16.mxu0 %v639
    %703 = vmatpush1.bf16.msra.mxu0 %v638
    %704 = vmatprep.subr.bf16.mxu0 %v643
    %705 = vmatpush1.bf16.msra.mxu0 %v642
    %706 = vmatprep.subr.bf16.mxu0 %v647
    %707 = vmatpush1.bf16.msra.mxu0 %v646
    %708 = vmatprep.subr.bf16.mxu0 %v651
    %709 = vmatpush1.bf16.msra.mxu0 %v650
    %710 = vmatprep.subr.bf16.mxu0 %v655
    %711 = vmatpush1.bf16.msra.mxu0 %v654
    %712 = vmatprep.subr.bf16.mxu0 %v659
    %713 = vmatpush1.bf16.msra.mxu0 %v658
    %714 = vmatprep.subr.bf16.mxu0 %v663
    %715 = vmatpush1.bf16.msra.mxu0 %v662
    %716 = vmatprep.subr.bf16.mxu0 %v667
    %717 = vmatpush1.bf16.msra.mxu0 %v666
    %718 = vmatprep.subr.bf16.mxu0 0
    %719 = vmatpush1.bf16.msra.mxu0 0
    %720 = vmatprep.subr.bf16.mxu0 0
    %721 = vmatpush1.bf16.msra.mxu0 0
    %722 = vmatprep.subr.bf16.mxu0 0
    %723 = vmatpush1.bf16.msra.mxu0 0
    %724 = vmatprep.subr.bf16.mxu0 0
    %725 = vmatpush1.bf16.msra.mxu0 0
    %726 = vmatprep.subr.bf16.mxu0 0
    %727 = vmatpush1.bf16.msra.mxu0 0
    %728 = vmatprep.subr.bf16.mxu0 0
    %729 = vmatpush1.bf16.msra.mxu0 0
    %730 = vmatprep.subr.bf16.mxu0 0
    %731 = vmatpush1.bf16.msra.mxu0 0
    %732 = vmatprep.subr.bf16.mxu0 0
    %733 = vmatpush1.bf16.msra.mxu0 0
    %734 = vmatprep.mubr.bf16.mxu0 0
    %735 = vmatmul.mubr.bf16.gmra.mrb[0].mxu0 0
    %v736 = vpop.f32.mrb[0].mxu0
    %v737 = vadd.f32 0.0, %v736
    %v738 = vpop.f32.mrb[0].mxu0
    %v739 = vadd.f32 0.0, %v738
    %v740 = vpop.f32.mrb[0].mxu0
    %v741 = vpop.f32.mrb[0].mxu0
    %742 = vdwg.mxu0
    %743 = vmatprep.subr.bf16.mxu0 %v641
    %744 = vmatpush1.bf16.msra.mxu0 %v640
    %745 = vmatprep.subr.bf16.mxu0 %v645
    %746 = vmatpush1.bf16.msra.mxu0 %v644
    %747 = vmatprep.subr.bf16.mxu0 %v649
    %748 = vmatpush1.bf16.msra.mxu0 %v648
    %749 = vmatprep.subr.bf16.mxu0 %v653
    %750 = vmatpush1.bf16.msra.mxu0 %v652
    %751 = vmatprep.subr.bf16.mxu0 %v657
    %752 = vmatpush1.bf16.msra.mxu0 %v656
    %753 = vmatprep.subr.bf16.mxu0 %v661
    %754 = vmatpush1.bf16.msra.mxu0 %v660
    %755 = vmatprep.subr.bf16.mxu0 %v665
    %756 = vmatpush1.bf16.msra.mxu0 %v664
    %757 = vmatprep.subr.bf16.mxu0 %v669
    %758 = vmatpush1.bf16.msra.mxu0 %v668
    %759 = vmatprep.subr.bf16.mxu0 0
    %760 = vmatpush1.bf16.msra.mxu0 0
    %761 = vmatprep.subr.bf16.mxu0 0
    %762 = vmatpush1.bf16.msra.mxu0 0
    %763 = vmatprep.subr.bf16.mxu0 0
    %764 = vmatpush1.bf16.msra.mxu0 0
    %765 = vmatprep.subr.bf16.mxu0 0
    %766 = vmatpush1.bf16.msra.mxu0 0
    %767 = vmatprep.subr.bf16.mxu0 0
    %768 = vmatpush1.bf16.msra.mxu0 0
    %769 = vmatprep.subr.bf16.mxu0 0
    %770 = vmatpush1.bf16.msra.mxu0 0
    %771 = vmatprep.subr.bf16.mxu0 0
    %772 = vmatpush1.bf16.msra.mxu0 0
    %773 = vmatprep.subr.bf16.mxu0 0
    %774 = vmatpush1.bf16.msra.mxu0 0
    %775 = vmatprep.mubr.bf16.mxu0 0
    %776 = vmatmul.mubr.bf16.gmra.mrb[0].mxu0 0
    %v777 = vpop.f32.mrb[0].mxu0
    %v778 = vadd.f32 0.0, %v777
    %v779 = vpop.f32.mrb[0].mxu0
    %v780 = vadd.f32 0.0, %v779
    %v781 = vpop.f32.mrb[0].mxu0
    %v782 = vpop.f32.mrb[0].mxu0
    %783 = vdwg.mxu0
    %v788 = vrot.slane %v737, 1
    %v789 = vrot.slane %v739, 1
    %v790 = vrot.slane %v778, 1
    %v791 = vrot.slane %v780, 1
    %v800 = vadd.f32 %v353, %v737
    %v801 = vadd.f32 %v355, %v739
    %v802 = vadd.f32 %v406, %v778
    %v803 = vadd.f32 %v408, %v780
    %v804 = vadd.f32 %v363, %v788
    %v805 = vadd.f32 %v365, %v789
    %v806 = vadd.f32 %v416, %v790
    %v807 = vadd.f32 %v418, %v791
    %v808 = vxor.u32 %v800, 2147483648
    %v809 = vxor.u32 %v801, 2147483648
    %v810 = vxor.u32 %v804, 2147483648
    %v811 = vxor.u32 %v805, 2147483648
    %v812 = vmul.f32 %v808, 1.442695
    %v813 = vpow.pop %v812
    %v814 = vmul.f32 %v809, 1.442695
    %v815 = vpow.pop %v814
    %v816 = vmul.f32 %v810, 1.442695
    %v817 = vpow.pop %v816
    %v818 = vmul.f32 %v811, 1.442695
    %v819 = vpow.pop %v818
    %v820 = vadd.f32 %v813, 1.0
    %v821 = vadd.f32 %v815, 1.0
    %v822 = vadd.f32 %v817, 1.0
    %v823 = vadd.f32 %v819, 1.0
    %v824 = vrcp.pop %v820
    %v825 = vmul.f32 1.0, %v824
    %v826 = vrcp.pop %v821
    %v827 = vmul.f32 1.0, %v826
    %v828 = vrcp.pop %v822
    %v829 = vmul.f32 1.0, %v828
    %v830 = vrcp.pop %v823
    %v831 = vmul.f32 1.0, %v830
    %v832 = vmul.f32 %v825, %v803
    %v833 = vmul.f32 %v829, %v807
    %v834 = vadd.f32 %v802, %v832
    %v835 = vadd.f32 %v806, %v833
    %v836 = vtanh.pop %v834
    %v837 = vtanh.pop %v835
    %v838 = vsub.f32 0.0, %v836
    %v839 = vsub.f32 0.0, %v837
    %v840 = vmul.f32 %v827, %v838
    %v841 = vmul.f32 %v831, %v839
    %v842 = vadd.f32 %v836, %v840
    %v843 = vadd.f32 %v837, %v841
    %v844 = vpack.c.bf16 %v842, %v842
    %v845 = vpack.c.bf16 %v843, %v843
    %v878 = vunpack.c.l.b16 %v456
    %v879 = vunpack.c.h.b16 %v456
    %v880 = vunpack.c.l.b16 %v457
    %v881 = vunpack.c.h.b16 %v457
    %v882 = vunpack.c.l.b16 %v458
    %v883 = vunpack.c.h.b16 %v458
    %v884 = vunpack.c.l.b16 %v459
    %v885 = vunpack.c.h.b16 %v459
    %v886 = vunpack.c.l.b16 %v460
    %v887 = vunpack.c.h.b16 %v460
    %v888 = vunpack.c.l.b16 %v461
    %v889 = vunpack.c.h.b16 %v461
    %v890 = vunpack.c.l.b16 %v462
    %v891 = vunpack.c.h.b16 %v462
    %v892 = vunpack.c.l.b16 %v463
    %v893 = vunpack.c.h.b16 %v463
    %v894 = vunpack.c.l.b16 %v464
    %v895 = vunpack.c.h.b16 %v464
    %v896 = vunpack.c.l.b16 %v465
    %v897 = vunpack.c.h.b16 %v465
    %v898 = vunpack.c.l.b16 %v466
    %v899 = vunpack.c.h.b16 %v466
    %v900 = vunpack.c.l.b16 %v467
    %v901 = vunpack.c.h.b16 %v467
    %v902 = vunpack.c.l.b16 %v468
    %v903 = vunpack.c.h.b16 %v468
    %v904 = vunpack.c.l.b16 %v469
    %v905 = vunpack.c.h.b16 %v469
    %v906 = vunpack.c.l.b16 %v470
    %v907 = vunpack.c.h.b16 %v470
    %v908 = vunpack.c.l.b16 %v471
    %v909 = vunpack.c.h.b16 %v471
    %v910 = vunpack.c.l.b16 %v472
    %v911 = vunpack.c.h.b16 %v472
    %v912 = vunpack.c.l.b16 %v473
    %v913 = vunpack.c.h.b16 %v473
    %v914 = vunpack.c.l.b16 %v474
    %v915 = vunpack.c.h.b16 %v474
    %v916 = vunpack.c.l.b16 %v475
    %v917 = vunpack.c.h.b16 %v475
    %v918 = vunpack.c.l.b16 %v476
    %v919 = vunpack.c.h.b16 %v476
    %v920 = vunpack.c.l.b16 %v477
    %v921 = vunpack.c.h.b16 %v477
    %v922 = vunpack.c.l.b16 %v478
    %v923 = vunpack.c.h.b16 %v478
    %v924 = vunpack.c.l.b16 %v479
    %v925 = vunpack.c.h.b16 %v479
    %v926 = vunpack.c.l.b16 %v480
    %v927 = vunpack.c.h.b16 %v480
    %v928 = vunpack.c.l.b16 %v481
    %v929 = vunpack.c.h.b16 %v481
    %v930 = vunpack.c.l.b16 %v482
    %v931 = vunpack.c.h.b16 %v482
    %v932 = vunpack.c.l.b16 %v483
    %v933 = vunpack.c.h.b16 %v483
    %v934 = vunpack.c.l.b16 %v484
    %v935 = vunpack.c.h.b16 %v484
    %v936 = vunpack.c.l.b16 %v485
    %v937 = vunpack.c.h.b16 %v485
    %v938 = vunpack.c.l.b16 %v486
    %v939 = vunpack.c.h.b16 %v486
    %v940 = vunpack.c.l.b16 %v487
    %v941 = vunpack.c.h.b16 %v487
    %v942 = vpack.c.b16 %v882, %v878
    %v943 = vpack.c.b16 %v883, %v879
    %v944 = vpack.c.b16 %v884, %v880
    %v945 = vpack.c.b16 %v885, %v881
    %v946 = vpack.c.b16 %v890, %v886
    %v947 = vpack.c.b16 %v891, %v887
    %v948 = vpack.c.b16 %v892, %v888
    %v949 = vpack.c.b16 %v893, %v889
    %v950 = vpack.c.b16 %v898, %v894
    %v951 = vpack.c.b16 %v899, %v895
    %v952 = vpack.c.b16 %v900, %v896
    %v953 = vpack.c.b16 %v901, %v897
    %v954 = vpack.c.b16 %v906, %v902
    %v955 = vpack.c.b16 %v907, %v903
    %v956 = vpack.c.b16 %v908, %v904
    %v957 = vpack.c.b16 %v909, %v905
    %v958 = vpack.c.b16 %v914, %v910
    %v959 = vpack.c.b16 %v915, %v911
    %v960 = vpack.c.b16 %v916, %v912
    %v961 = vpack.c.b16 %v917, %v913
    %v962 = vpack.c.b16 %v922, %v918
    %v963 = vpack.c.b16 %v923, %v919
    %v964 = vpack.c.b16 %v924, %v920
    %v965 = vpack.c.b16 %v925, %v921
    %v966 = vpack.c.b16 %v930, %v926
    %v967 = vpack.c.b16 %v931, %v927
    %v968 = vpack.c.b16 %v932, %v928
    %v969 = vpack.c.b16 %v933, %v929
    %v970 = vpack.c.b16 %v938, %v934
    %v971 = vpack.c.b16 %v939, %v935
    %v972 = vpack.c.b16 %v940, %v936
    %v973 = vpack.c.b16 %v941, %v937
    %1006 = vmatprep.subr.bf16.mxu0 %v943
    %1007 = vmatpush1.bf16.msra.mxu0 %v942
    %1008 = vmatprep.subr.bf16.mxu0 %v947
    %1009 = vmatpush1.bf16.msra.mxu0 %v946
    %1010 = vmatprep.subr.bf16.mxu0 %v951
    %1011 = vmatpush1.bf16.msra.mxu0 %v950
    %1012 = vmatprep.subr.bf16.mxu0 %v955
    %1013 = vmatpush1.bf16.msra.mxu0 %v954
    %1014 = vmatprep.subr.bf16.mxu0 %v959
    %1015 = vmatpush1.bf16.msra.mxu0 %v958
    %1016 = vmatprep.subr.bf16.mxu0 %v963
    %1017 = vmatpush1.bf16.msra.mxu0 %v962
    %1018 = vmatprep.subr.bf16.mxu0 %v967
    %1019 = vmatpush1.bf16.msra.mxu0 %v966
    %1020 = vmatprep.subr.bf16.mxu0 %v971
    %1021 = vmatpush1.bf16.msra.mxu0 %v970
    %1022 = vmatprep.subr.bf16.mxu0 0
    %1023 = vmatpush1.bf16.msra.mxu0 0
    %1024 = vmatprep.subr.bf16.mxu0 0
    %1025 = vmatpush1.bf16.msra.mxu0 0
    %1026 = vmatprep.subr.bf16.mxu0 0
    %1027 = vmatpush1.bf16.msra.mxu0 0
    %1028 = vmatprep.subr.bf16.mxu0 0
    %1029 = vmatpush1.bf16.msra.mxu0 0
    %1030 = vmatprep.subr.bf16.mxu0 0
    %1031 = vmatpush1.bf16.msra.mxu0 0
    %1032 = vmatprep.subr.bf16.mxu0 0
    %1033 = vmatpush1.bf16.msra.mxu0 0
    %1034 = vmatprep.subr.bf16.mxu0 0
    %1035 = vmatpush1.bf16.msra.mxu0 0
    %1036 = vmatprep.subr.bf16.mxu0 0
    %1037 = vmatpush1.bf16.msra.mxu0 0
    %1038 = vmatprep.mubr.bf16.mxu0 0
    %1039 = vmatmul.mubr.bf16.gmra.mrb[0].mxu0 0
    %v1040 = vpop.f32.mrb[0].mxu0
    %v1041 = vadd.f32 0.0, %v1040
    %v1042 = vpop.f32.mrb[0].mxu0
    %v1043 = vadd.f32 0.0, %v1042
    %v1044 = vpop.f32.mrb[0].mxu0
    %v1045 = vpop.f32.mrb[0].mxu0
    %1046 = vdwg.mxu0
    %1047 = vmatprep.subr.bf16.mxu0 %v945
    %1048 = vmatpush1.bf16.msra.mxu0 %v944
    %1049 = vmatprep.subr.bf16.mxu0 %v949
    %1050 = vmatpush1.bf16.msra.mxu0 %v948
    %1051 = vmatprep.subr.bf16.mxu0 %v953
    %1052 = vmatpush1.bf16.msra.mxu0 %v952
    %1053 = vmatprep.subr.bf16.mxu0 %v957
    %1054 = vmatpush1.bf16.msra.mxu0 %v956
    %1055 = vmatprep.subr.bf16.mxu0 %v961
    %1056 = vmatpush1.bf16.msra.mxu0 %v960
    %1057 = vmatprep.subr.bf16.mxu0 %v965
    %1058 = vmatpush1.bf16.msra.mxu0 %v964
    %1059 = vmatprep.subr.bf16.mxu0 %v969
    %1060 = vmatpush1.bf16.msra.mxu0 %v968
    %1061 = vmatprep.subr.bf16.mxu0 %v973
    %1062 = vmatpush1.bf16.msra.mxu0 %v972
    %1063 = vmatprep.subr.bf16.mxu0 0
    %1064 = vmatpush1.bf16.msra.mxu0 0
    %1065 = vmatprep.subr.bf16.mxu0 0
    %1066 = vmatpush1.bf16.msra.mxu0 0
    %1067 = vmatprep.subr.bf16.mxu0 0
    %1068 = vmatpush1.bf16.msra.mxu0 0
    %1069 = vmatprep.subr.bf16.mxu0 0
    %1070 = vmatpush1.bf16.msra.mxu0 0
    %1071 = vmatprep.subr.bf16.mxu0 0
    %1072 = vmatpush1.bf16.msra.mxu0 0
    %1073 = vmatprep.subr.bf16.mxu0 0
    %1074 = vmatpush1.bf16.msra.mxu0 0
    %1075 = vmatprep.subr.bf16.mxu0 0
    %1076 = vmatpush1.bf16.msra.mxu0 0
    %1077 = vmatprep.subr.bf16.mxu0 0
    %1078 = vmatpush1.bf16.msra.mxu0 0
    %1079 = vmatprep.mubr.bf16.mxu0 0
    %1080 = vmatmul.mubr.bf16.gmra.mrb[0].mxu0 0
    %v1081 = vpop.f32.mrb[0].mxu0
    %v1082 = vadd.f32 0.0, %v1081
    %v1083 = vpop.f32.mrb[0].mxu0
    %v1084 = vadd.f32 0.0, %v1083
    %v1085 = vpop.f32.mrb[0].mxu0
    %v1086 = vpop.f32.mrb[0].mxu0
    %1087 = vdwg.mxu0
    %v1090 = vunpack.c.l.b16 %v844
    %v1091 = vunpack.c.l.b16 %v845
    %v1092 = vrot.slane %v1091, 7
    %vm1093 = vcmask 1041409
    %v1094 = vsel %vm1093, %v1092, %v1090
    %v1095 = vpack.c.b16 %v1094, %v1094
    %v1129 = vunpack.c.l.b16 %v488
    %v1130 = vunpack.c.h.b16 %v488
    %v1131 = vunpack.c.l.b16 %v489
    %v1132 = vunpack.c.h.b16 %v489
    %v1133 = vunpack.c.l.b16 %v490
    %v1134 = vunpack.c.h.b16 %v490
    %v1135 = vunpack.c.l.b16 %v491
    %v1136 = vunpack.c.h.b16 %v491
    %v1137 = vunpack.c.l.b16 %v492
    %v1138 = vunpack.c.h.b16 %v492
    %v1139 = vunpack.c.l.b16 %v493
    %v1140 = vunpack.c.h.b16 %v493
    %v1141 = vunpack.c.l.b16 %v494
    %v1142 = vunpack.c.h.b16 %v494
    %v1143 = vunpack.c.l.b16 %v495
    %v1144 = vunpack.c.h.b16 %v495
    %v1145 = vunpack.c.l.b16 %v496
    %v1146 = vunpack.c.h.b16 %v496
    %v1147 = vunpack.c.l.b16 %v497
    %v1148 = vunpack.c.h.b16 %v497
    %v1149 = vunpack.c.l.b16 %v498
    %v1150 = vunpack.c.h.b16 %v498
    %v1151 = vunpack.c.l.b16 %v499
    %v1152 = vunpack.c.h.b16 %v499
    %v1153 = vunpack.c.l.b16 %v500
    %v1154 = vunpack.c.h.b16 %v500
    %v1155 = vunpack.c.l.b16 %v501
    %v1156 = vunpack.c.h.b16 %v501
    %v1157 = vunpack.c.l.b16 %v502
    %v1158 = vunpack.c.h.b16 %v502
    %v1159 = vunpack.c.l.b16 %v503
    %v1160 = vunpack.c.h.b16 %v503
    %v1161 = vunpack.c.l.b16 %v504
    %v1162 = vunpack.c.h.b16 %v504
    %v1163 = vunpack.c.l.b16 %v505
    %v1164 = vunpack.c.h.b16 %v505
    %v1165 = vunpack.c.l.b16 %v506
    %v1166 = vunpack.c.h.b16 %v506
    %v1167 = vunpack.c.l.b16 %v507
    %v1168 = vunpack.c.h.b16 %v507
    %v1169 = vunpack.c.l.b16 %v508
    %v1170 = vunpack.c.h.b16 %v508
    %v1171 = vunpack.c.l.b16 %v509
    %v1172 = vunpack.c.h.b16 %v509
    %v1173 = vunpack.c.l.b16 %v510
    %v1174 = vunpack.c.h.b16 %v510
    %v1175 = vunpack.c.l.b16 %v511
    %v1176 = vunpack.c.h.b16 %v511
    %v1177 = vunpack.c.l.b16 %v512
    %v1178 = vunpack.c.h.b16 %v512
    %v1179 = vunpack.c.l.b16 %v513
    %v1180 = vunpack.c.h.b16 %v513
    %v1181 = vunpack.c.l.b16 %v514
    %v1182 = vunpack.c.h.b16 %v514
    %v1183 = vunpack.c.l.b16 %v515
    %v1184 = vunpack.c.h.b16 %v515
    %v1185 = vunpack.c.l.b16 %v516
    %v1186 = vunpack.c.h.b16 %v516
    %v1187 = vunpack.c.l.b16 %v517
    %v1188 = vunpack.c.h.b16 %v517
    %v1189 = vunpack.c.l.b16 %v518
    %v1190 = vunpack.c.h.b16 %v518
    %v1191 = vunpack.c.l.b16 %v519
    %v1192 = vunpack.c.h.b16 %v519
    %v1193 = vpack.c.b16 %v1133, %v1129
    %v1194 = vpack.c.b16 %v1134, %v1130
    %v1195 = vpack.c.b16 %v1135, %v1131
    %v1196 = vpack.c.b16 %v1136, %v1132
    %v1197 = vpack.c.b16 %v1141, %v1137
    %v1198 = vpack.c.b16 %v1142, %v1138
    %v1199 = vpack.c.b16 %v1143, %v1139
    %v1200 = vpack.c.b16 %v1144, %v1140
    %v1201 = vpack.c.b16 %v1149, %v1145
    %v1202 = vpack.c.b16 %v1150, %v1146
    %v1203 = vpack.c.b16 %v1151, %v1147
    %v1204 = vpack.c.b16 %v1152, %v1148
    %v1205 = vpack.c.b16 %v1157, %v1153
    %v1206 = vpack.c.b16 %v1158, %v1154
    %v1207 = vpack.c.b16 %v1159, %v1155
    %v1208 = vpack.c.b16 %v1160, %v1156
    %v1209 = vpack.c.b16 %v1165, %v1161
    %v1210 = vpack.c.b16 %v1166, %v1162
    %v1211 = vpack.c.b16 %v1167, %v1163
    %v1212 = vpack.c.b16 %v1168, %v1164
    %v1213 = vpack.c.b16 %v1173, %v1169
    %v1214 = vpack.c.b16 %v1174, %v1170
    %v1215 = vpack.c.b16 %v1175, %v1171
    %v1216 = vpack.c.b16 %v1176, %v1172
    %v1217 = vpack.c.b16 %v1181, %v1177
    %v1218 = vpack.c.b16 %v1182, %v1178
    %v1219 = vpack.c.b16 %v1183, %v1179
    %v1220 = vpack.c.b16 %v1184, %v1180
    %v1221 = vpack.c.b16 %v1189, %v1185
    %v1222 = vpack.c.b16 %v1190, %v1186
    %v1223 = vpack.c.b16 %v1191, %v1187
    %v1224 = vpack.c.b16 %v1192, %v1188
    %1257 = vmatprep.subr.bf16.mxu0 %v1194
    %1258 = vmatpush1.bf16.msra.mxu0 %v1193
    %1259 = vmatprep.subr.bf16.mxu0 %v1198
    %1260 = vmatpush1.bf16.msra.mxu0 %v1197
    %1261 = vmatprep.subr.bf16.mxu0 %v1202
    %1262 = vmatpush1.bf16.msra.mxu0 %v1201
    %1263 = vmatprep.subr.bf16.mxu0 %v1206
    %1264 = vmatpush1.bf16.msra.mxu0 %v1205
    %1265 = vmatprep.subr.bf16.mxu0 %v1210
    %1266 = vmatpush1.bf16.msra.mxu0 %v1209
    %1267 = vmatprep.subr.bf16.mxu0 %v1214
    %1268 = vmatpush1.bf16.msra.mxu0 %v1213
    %1269 = vmatprep.subr.bf16.mxu0 %v1218
    %1270 = vmatpush1.bf16.msra.mxu0 %v1217
    %1271 = vmatprep.subr.bf16.mxu0 %v1222
    %1272 = vmatpush1.bf16.msra.mxu0 %v1221
    %1273 = vmatprep.subr.bf16.mxu0 0
    %1274 = vmatpush1.bf16.msra.mxu0 0
    %1275 = vmatprep.subr.bf16.mxu0 0
    %1276 = vmatpush1.bf16.msra.mxu0 0
    %1277 = vmatprep.subr.bf16.mxu0 0
    %1278 = vmatpush1.bf16.msra.mxu0 0
    %1279 = vmatprep.subr.bf16.mxu0 0
    %1280 = vmatpush1.bf16.msra.mxu0 0
    %1281 = vmatprep.subr.bf16.mxu0 0
    %1282 = vmatpush1.bf16.msra.mxu0 0
    %1283 = vmatprep.subr.bf16.mxu0 0
    %1284 = vmatpush1.bf16.msra.mxu0 0
    %1285 = vmatprep.subr.bf16.mxu0 0
    %1286 = vmatpush1.bf16.msra.mxu0 0
    %1287 = vmatprep.subr.bf16.mxu0 0
    %1288 = vmatpush1.bf16.msra.mxu0 0
    %1289 = vmatprep.mubr.bf16.mxu0 0
    %1290 = vmatmul.mubr.bf16.gmra.mrb[0].mxu0 %v1095
    %v1291 = vpop.f32.mrb[0].mxu0
    %v1292 = vadd.f32 %v1041, %v1291
    %v1293 = vpop.f32.mrb[0].mxu0
    %v1294 = vadd.f32 %v1043, %v1293
    %v1295 = vpop.f32.mrb[0].mxu0
    %v1296 = vpop.f32.mrb[0].mxu0
    %1297 = vdwg.mxu0
    %1298 = vmatprep.subr.bf16.mxu0 %v1196
    %1299 = vmatpush1.bf16.msra.mxu0 %v1195
    %1300 = vmatprep.subr.bf16.mxu0 %v1200
    %1301 = vmatpush1.bf16.msra.mxu0 %v1199
    %1302 = vmatprep.subr.bf16.mxu0 %v1204
    %1303 = vmatpush1.bf16.msra.mxu0 %v1203
    %1304 = vmatprep.subr.bf16.mxu0 %v1208
    %1305 = vmatpush1.bf16.msra.mxu0 %v1207
    %1306 = vmatprep.subr.bf16.mxu0 %v1212
    %1307 = vmatpush1.bf16.msra.mxu0 %v1211
    %1308 = vmatprep.subr.bf16.mxu0 %v1216
    %1309 = vmatpush1.bf16.msra.mxu0 %v1215
    %1310 = vmatprep.subr.bf16.mxu0 %v1220
    %1311 = vmatpush1.bf16.msra.mxu0 %v1219
    %1312 = vmatprep.subr.bf16.mxu0 %v1224
    %1313 = vmatpush1.bf16.msra.mxu0 %v1223
    %1314 = vmatprep.subr.bf16.mxu0 0
    %1315 = vmatpush1.bf16.msra.mxu0 0
    %1316 = vmatprep.subr.bf16.mxu0 0
    %1317 = vmatpush1.bf16.msra.mxu0 0
    %1318 = vmatprep.subr.bf16.mxu0 0
    %1319 = vmatpush1.bf16.msra.mxu0 0
    %1320 = vmatprep.subr.bf16.mxu0 0
    %1321 = vmatpush1.bf16.msra.mxu0 0
    %1322 = vmatprep.subr.bf16.mxu0 0
    %1323 = vmatpush1.bf16.msra.mxu0 0
    %1324 = vmatprep.subr.bf16.mxu0 0
    %1325 = vmatpush1.bf16.msra.mxu0 0
    %1326 = vmatprep.subr.bf16.mxu0 0
    %1327 = vmatpush1.bf16.msra.mxu0 0
    %1328 = vmatprep.subr.bf16.mxu0 0
    %1329 = vmatpush1.bf16.msra.mxu0 0
    %1330 = vmatprep.mubr.bf16.mxu0 0
    %1331 = vmatmul.mubr.bf16.gmra.mrb[0].mxu0 %v1095
    %v1332 = vpop.f32.mrb[0].mxu0
    %v1333 = vadd.f32 %v1082, %v1332
    %v1334 = vpop.f32.mrb[0].mxu0
    %v1335 = vadd.f32 %v1084, %v1334
    %v1336 = vpop.f32.mrb[0].mxu0
    %v1337 = vpop.f32.mrb[0].mxu0
    %1338 = vdwg.mxu0
    %v1339 = vadd.f32 %v1292, %v525
    %v1340 = vadd.f32 %v1294, %v529
    %v1341 = vadd.f32 %v1333, %v533
    %v1342 = vadd.f32 %v1335, %v537
    %v1343 = vxor.u32 %v1339, 2147483648
    %v1344 = vxor.u32 %v1340, 2147483648
    %v1345 = vmul.f32 %v1343, 1.442695
    %v1346 = vpow.pop %v1345
    %v1347 = vmul.f32 %v1344, 1.442695
    %v1348 = vpow.pop %v1347
    %v1349 = vadd.f32 %v1346, 1.0
    %v1350 = vadd.f32 %v1348, 1.0
    %v1351 = vrcp.pop %v1349
    %v1352 = vmul.f32 1.0, %v1351
    %v1353 = vrcp.pop %v1350
    %v1354 = vmul.f32 1.0, %v1353
    %v1355 = vmul.f32 %v1352, %v1342
    %v1356 = vadd.f32 %v1341, %v1355
    %v1357 = vtanh.pop %v1356
    %v1358 = vsub.f32 0.0, %v1357
    %v1359 = vmul.f32 %v1354, %v1358
    %v1360 = vadd.f32 %v1357, %v1359
    %1361 = vmatprep.subr.bf16.mxu0 %v639
    %1362 = vmatpush1.bf16.msra.mxu0 %v638
    %1363 = vmatprep.subr.bf16.mxu0 %v643
    %1364 = vmatpush1.bf16.msra.mxu0 %v642
    %1365 = vmatprep.subr.bf16.mxu0 %v647
    %1366 = vmatpush1.bf16.msra.mxu0 %v646
    %1367 = vmatprep.subr.bf16.mxu0 %v651
    %1368 = vmatpush1.bf16.msra.mxu0 %v650
    %1369 = vmatprep.subr.bf16.mxu0 %v655
    %1370 = vmatpush1.bf16.msra.mxu0 %v654
    %1371 = vmatprep.subr.bf16.mxu0 %v659
    %1372 = vmatpush1.bf16.msra.mxu0 %v658
    %1373 = vmatprep.subr.bf16.mxu0 %v663
    %1374 = vmatpush1.bf16.msra.mxu0 %v662
    %1375 = vmatprep.subr.bf16.mxu0 %v667
    %1376 = vmatpush1.bf16.msra.mxu0 %v666
    %1377 = vmatprep.subr.bf16.mxu0 0
    %1378 = vmatpush1.bf16.msra.mxu0 0
    %1379 = vmatprep.subr.bf16.mxu0 0
    %1380 = vmatpush1.bf16.msra.mxu0 0
    %1381 = vmatprep.subr.bf16.mxu0 0
    %1382 = vmatpush1.bf16.msra.mxu0 0
    %1383 = vmatprep.subr.bf16.mxu0 0
    %1384 = vmatpush1.bf16.msra.mxu0 0
    %1385 = vmatprep.subr.bf16.mxu0 0
    %1386 = vmatpush1.bf16.msra.mxu0 0
    %1387 = vmatprep.subr.bf16.mxu0 0
    %1388 = vmatpush1.bf16.msra.mxu0 0
    %1389 = vmatprep.subr.bf16.mxu0 0
    %1390 = vmatpush1.bf16.msra.mxu0 0
    %1391 = vmatprep.subr.bf16.mxu0 0
    %1392 = vmatpush1.bf16.msra.mxu0 0
    %1393 = vmatprep.mubr.bf16.mxu0 0
    %1394 = vmatmul.mubr.bf16.gmra.mrb[0].mxu0 %v1095
    %v1395 = vpop.f32.mrb[0].mxu0
    %v1396 = vadd.f32 0.0, %v1395
    %v1397 = vpop.f32.mrb[0].mxu0
    %v1398 = vadd.f32 0.0, %v1397
    %v1399 = vpop.f32.mrb[0].mxu0
    %v1400 = vpop.f32.mrb[0].mxu0
    %1401 = vdwg.mxu0
    %1402 = vmatprep.subr.bf16.mxu0 %v641
    %1403 = vmatpush1.bf16.msra.mxu0 %v640
    %1404 = vmatprep.subr.bf16.mxu0 %v645
    %1405 = vmatpush1.bf16.msra.mxu0 %v644
    %1406 = vmatprep.subr.bf16.mxu0 %v649
    %1407 = vmatpush1.bf16.msra.mxu0 %v648
    %1408 = vmatprep.subr.bf16.mxu0 %v653
    %1409 = vmatpush1.bf16.msra.mxu0 %v652
    %1410 = vmatprep.subr.bf16.mxu0 %v657
    %1411 = vmatpush1.bf16.msra.mxu0 %v656
    %1412 = vmatprep.subr.bf16.mxu0 %v661
    %1413 = vmatpush1.bf16.msra.mxu0 %v660
    %1414 = vmatprep.subr.bf16.mxu0 %v665
    %1415 = vmatpush1.bf16.msra.mxu0 %v664
    %1416 = vmatprep.subr.bf16.mxu0 %v669
    %1417 = vmatpush1.bf16.msra.mxu0 %v668
    %1418 = vmatprep.subr.bf16.mxu0 0
    %1419 = vmatpush1.bf16.msra.mxu0 0
    %1420 = vmatprep.subr.bf16.mxu0 0
    %1421 = vmatpush1.bf16.msra.mxu0 0
    %1422 = vmatprep.subr.bf16.mxu0 0
    %1423 = vmatpush1.bf16.msra.mxu0 0
    %1424 = vmatprep.subr.bf16.mxu0 0
    %1425 = vmatpush1.bf16.msra.mxu0 0
    %1426 = vmatprep.subr.bf16.mxu0 0
    %1427 = vmatpush1.bf16.msra.mxu0 0
    %1428 = vmatprep.subr.bf16.mxu0 0
    %1429 = vmatpush1.bf16.msra.mxu0 0
    %1430 = vmatprep.subr.bf16.mxu0 0
    %1431 = vmatpush1.bf16.msra.mxu0 0
    %1432 = vmatprep.subr.bf16.mxu0 0
    %1433 = vmatpush1.bf16.msra.mxu0 0
    %1434 = vmatprep.mubr.bf16.mxu0 0
    %1435 = vmatmul.mubr.bf16.gmra.mrb[0].mxu0 %v1095
    %v1436 = vpop.f32.mrb[0].mxu0
    %v1437 = vadd.f32 0.0, %v1436
    %v1438 = vpop.f32.mrb[0].mxu0
    %v1439 = vadd.f32 0.0, %v1438
    %v1440 = vpop.f32.mrb[0].mxu0
    %v1441 = vpop.f32.mrb[0].mxu0
    %1442 = vdwg.mxu0
    %v1447 = vrot.slane %v1396, 7
    %v1448 = vrot.slane %v1398, 7
    %v1449 = vrot.slane %v1437, 7
    %v1450 = vrot.slane %v1439, 7
    %v1459 = vadd.f32 %v353, %v1447
    %v1460 = vadd.f32 %v355, %v1448
    %v1461 = vadd.f32 %v406, %v1449
    %v1462 = vadd.f32 %v408, %v1450
    %v1463 = vadd.f32 %v363, %v1396
    %v1464 = vadd.f32 %v365, %v1398
    %v1465 = vadd.f32 %v416, %v1437
    %v1466 = vadd.f32 %v418, %v1439
    %v1467 = vxor.u32 %v1459, 2147483648
    %v1468 = vxor.u32 %v1460, 2147483648
    %v1469 = vxor.u32 %v1463, 2147483648
    %v1470 = vxor.u32 %v1464, 2147483648
    %v1471 = vmul.f32 %v1467, 1.442695
    %v1472 = vpow.pop %v1471
    %v1473 = vmul.f32 %v1468, 1.442695
    %v1474 = vpow.pop %v1473
    %v1475 = vmul.f32 %v1469, 1.442695
    %v1476 = vpow.pop %v1475
    %v1477 = vmul.f32 %v1470, 1.442695
    %v1478 = vpow.pop %v1477
    %v1479 = vadd.f32 %v1472, 1.0
    %v1480 = vadd.f32 %v1474, 1.0
    %v1481 = vadd.f32 %v1476, 1.0
    %v1482 = vadd.f32 %v1478, 1.0
    %v1483 = vrcp.pop %v1479
    %v1484 = vmul.f32 1.0, %v1483
    %v1485 = vrcp.pop %v1480
    %v1486 = vmul.f32 1.0, %v1485
    %v1487 = vrcp.pop %v1481
    %v1488 = vmul.f32 1.0, %v1487
    %v1489 = vrcp.pop %v1482
    %v1490 = vmul.f32 1.0, %v1489
    %v1491 = vmul.f32 %v1484, %v1462
    %v1492 = vmul.f32 %v1488, %v1466
    %v1493 = vadd.f32 %v1461, %v1491
    %v1494 = vadd.f32 %v1465, %v1492
    %v1495 = vtanh.pop %v1493
    %v1496 = vtanh.pop %v1494
    %v1499 = vrot.slane %v1495, 1
    %v1500 = vrot.slane %v1496, 1
    %v1503 = vsub.f32 %v842, %v1499
    %v1504 = vsub.f32 %v843, %v1500
    %v1507 = vrot.slane %v1503, 7
    %v1508 = vrot.slane %v1504, 7
    %v1511 = vmul.f32 %v1486, %v1507
    %v1512 = vmul.f32 %v1490, %v1508
    %v1513 = vadd.f32 %v1495, %v1511
    %v1514 = vadd.f32 %v1496, %v1512
    %v1515 = vpack.c.bf16 %v1513, %v1513
    %v1516 = vpack.c.bf16 %v1514, %v1514
    %v1517 = vpack.c.bf16 %v1360, %v1360
    %1518 = vmatprep.subr.bf16.mxu0 %v943
    %1519 = vmatpush1.bf16.msra.mxu0 %v942
    %1520 = vmatprep.subr.bf16.mxu0 %v947
    %1521 = vmatpush1.bf16.msra.mxu0 %v946
    %1522 = vmatprep.subr.bf16.mxu0 %v951
    %1523 = vmatpush1.bf16.msra.mxu0 %v950
    %1524 = vmatprep.subr.bf16.mxu0 %v955
    %1525 = vmatpush1.bf16.msra.mxu0 %v954
    %1526 = vmatprep.subr.bf16.mxu0 %v959
    %1527 = vmatpush1.bf16.msra.mxu0 %v958
    %1528 = vmatprep.subr.bf16.mxu0 %v963
    %1529 = vmatpush1.bf16.msra.mxu0 %v962
    %1530 = vmatprep.subr.bf16.mxu0 %v967
    %1531 = vmatpush1.bf16.msra.mxu0 %v966
    %1532 = vmatprep.subr.bf16.mxu0 %v971
    %1533 = vmatpush1.bf16.msra.mxu0 %v970
    %1534 = vmatprep.subr.bf16.mxu0 0
    %1535 = vmatpush1.bf16.msra.mxu0 0
    %1536 = vmatprep.subr.bf16.mxu0 0
    %1537 = vmatpush1.bf16.msra.mxu0 0
    %1538 = vmatprep.subr.bf16.mxu0 0
    %1539 = vmatpush1.bf16.msra.mxu0 0
    %1540 = vmatprep.subr.bf16.mxu0 0
    %1541 = vmatpush1.bf16.msra.mxu0 0
    %1542 = vmatprep.subr.bf16.mxu0 0
    %1543 = vmatpush1.bf16.msra.mxu0 0
    %1544 = vmatprep.subr.bf16.mxu0 0
    %1545 = vmatpush1.bf16.msra.mxu0 0
    %1546 = vmatprep.subr.bf16.mxu0 0
    %1547 = vmatpush1.bf16.msra.mxu0 0
    %1548 = vmatprep.subr.bf16.mxu0 0
    %1549 = vmatpush1.bf16.msra.mxu0 0
    %1550 = vmatprep.mubr.bf16.mxu0 0
    %1551 = vmatmul.mubr.bf16.gmra.mrb[0].mxu0 %v1517
    %v1552 = vpop.f32.mrb[0].mxu0
    %v1553 = vadd.f32 0.0, %v1552
    %v1554 = vpop.f32.mrb[0].mxu0
    %v1555 = vadd.f32 0.0, %v1554
    %v1556 = vpop.f32.mrb[0].mxu0
    %v1557 = vpop.f32.mrb[0].mxu0
    %1558 = vdwg.mxu0
    %1559 = vmatprep.subr.bf16.mxu0 %v945
    %1560 = vmatpush1.bf16.msra.mxu0 %v944
    %1561 = vmatprep.subr.bf16.mxu0 %v949
    %1562 = vmatpush1.bf16.msra.mxu0 %v948
    %1563 = vmatprep.subr.bf16.mxu0 %v953
    %1564 = vmatpush1.bf16.msra.mxu0 %v952
    %1565 = vmatprep.subr.bf16.mxu0 %v957
    %1566 = vmatpush1.bf16.msra.mxu0 %v956
    %1567 = vmatprep.subr.bf16.mxu0 %v961
    %1568 = vmatpush1.bf16.msra.mxu0 %v960
    %1569 = vmatprep.subr.bf16.mxu0 %v965
    %1570 = vmatpush1.bf16.msra.mxu0 %v964
    %1571 = vmatprep.subr.bf16.mxu0 %v969
    %1572 = vmatpush1.bf16.msra.mxu0 %v968
    %1573 = vmatprep.subr.bf16.mxu0 %v973
    %1574 = vmatpush1.bf16.msra.mxu0 %v972
    %1575 = vmatprep.subr.bf16.mxu0 0
    %1576 = vmatpush1.bf16.msra.mxu0 0
    %1577 = vmatprep.subr.bf16.mxu0 0
    %1578 = vmatpush1.bf16.msra.mxu0 0
    %1579 = vmatprep.subr.bf16.mxu0 0
    %1580 = vmatpush1.bf16.msra.mxu0 0
    %1581 = vmatprep.subr.bf16.mxu0 0
    %1582 = vmatpush1.bf16.msra.mxu0 0
    %1583 = vmatprep.subr.bf16.mxu0 0
    %1584 = vmatpush1.bf16.msra.mxu0 0
    %1585 = vmatprep.subr.bf16.mxu0 0
    %1586 = vmatpush1.bf16.msra.mxu0 0
    %1587 = vmatprep.subr.bf16.mxu0 0
    %1588 = vmatpush1.bf16.msra.mxu0 0
    %1589 = vmatprep.subr.bf16.mxu0 0
    %1590 = vmatpush1.bf16.msra.mxu0 0
    %1591 = vmatprep.mubr.bf16.mxu0 0
    %1592 = vmatmul.mubr.bf16.gmra.mrb[0].mxu0 %v1517
    %v1593 = vpop.f32.mrb[0].mxu0
    %v1594 = vadd.f32 0.0, %v1593
    %v1595 = vpop.f32.mrb[0].mxu0
    %v1596 = vadd.f32 0.0, %v1595
    %v1597 = vpop.f32.mrb[0].mxu0
    %v1598 = vpop.f32.mrb[0].mxu0
    %1599 = vdwg.mxu0
    %v1602 = vunpack.c.l.b16 %v1515
    %v1603 = vunpack.c.l.b16 %v1516
    %v1604 = vrot.slane %v1602, 1
    %v1605 = vsel %vm1093, %v1603, %v1604
    %v1606 = vpack.c.b16 %v1605, %v1605
    %1608 = vmatprep.subr.bf16.mxu0 %v1194
    %1609 = vmatpush1.bf16.msra.mxu0 %v1193
    %1610 = vmatprep.subr.bf16.mxu0 %v1198
    %1611 = vmatpush1.bf16.msra.mxu0 %v1197
    %1612 = vmatprep.subr.bf16.mxu0 %v1202
    %1613 = vmatpush1.bf16.msra.mxu0 %v1201
    %1614 = vmatprep.subr.bf16.mxu0 %v1206
    %1615 = vmatpush1.bf16.msra.mxu0 %v1205
    %1616 = vmatprep.subr.bf16.mxu0 %v1210
    %1617 = vmatpush1.bf16.msra.mxu0 %v1209
    %1618 = vmatprep.subr.bf16.mxu0 %v1214
    %1619 = vmatpush1.bf16.msra.mxu0 %v1213
    %1620 = vmatprep.subr.bf16.mxu0 %v1218
    %1621 = vmatpush1.bf16.msra.mxu0 %v1217
    %1622 = vmatprep.subr.bf16.mxu0 %v1222
    %1623 = vmatpush1.bf16.msra.mxu0 %v1221
    %1624 = vmatprep.subr.bf16.mxu0 0
    %1625 = vmatpush1.bf16.msra.mxu0 0
    %1626 = vmatprep.subr.bf16.mxu0 0
    %1627 = vmatpush1.bf16.msra.mxu0 0
    %1628 = vmatprep.subr.bf16.mxu0 0
    %1629 = vmatpush1.bf16.msra.mxu0 0
    %1630 = vmatprep.subr.bf16.mxu0 0
    %1631 = vmatpush1.bf16.msra.mxu0 0
    %1632 = vmatprep.subr.bf16.mxu0 0
    %1633 = vmatpush1.bf16.msra.mxu0 0
    %1634 = vmatprep.subr.bf16.mxu0 0
    %1635 = vmatpush1.bf16.msra.mxu0 0
    %1636 = vmatprep.subr.bf16.mxu0 0
    %1637 = vmatpush1.bf16.msra.mxu0 0
    %1638 = vmatprep.subr.bf16.mxu0 0
    %1639 = vmatpush1.bf16.msra.mxu0 0
    %1640 = vmatprep.mubr.bf16.mxu0 0
    %1641 = vmatmul.mubr.bf16.gmra.mrb[0].mxu0 %v1606
    %v1642 = vpop.f32.mrb[0].mxu0
    %v1643 = vadd.f32 %v1553, %v1642
    %v1644 = vpop.f32.mrb[0].mxu0
    %v1645 = vadd.f32 %v1555, %v1644
    %v1646 = vpop.f32.mrb[0].mxu0
    %v1647 = vpop.f32.mrb[0].mxu0
    %1648 = vdwg.mxu0
    %1649 = vmatprep.subr.bf16.mxu0 %v1196
    %1650 = vmatpush1.bf16.msra.mxu0 %v1195
    %1651 = vmatprep.subr.bf16.mxu0 %v1200
    %1652 = vmatpush1.bf16.msra.mxu0 %v1199
    %1653 = vmatprep.subr.bf16.mxu0 %v1204
    %1654 = vmatpush1.bf16.msra.mxu0 %v1203
    %1655 = vmatprep.subr.bf16.mxu0 %v1208
    %1656 = vmatpush1.bf16.msra.mxu0 %v1207
    %1657 = vmatprep.subr.bf16.mxu0 %v1212
    %1658 = vmatpush1.bf16.msra.mxu0 %v1211
    %1659 = vmatprep.subr.bf16.mxu0 %v1216
    %1660 = vmatpush1.bf16.msra.mxu0 %v1215
    %1661 = vmatprep.subr.bf16.mxu0 %v1220
    %1662 = vmatpush1.bf16.msra.mxu0 %v1219
    %1663 = vmatprep.subr.bf16.mxu0 %v1224
    %1664 = vmatpush1.bf16.msra.mxu0 %v1223
    %1665 = vmatprep.subr.bf16.mxu0 0
    %1666 = vmatpush1.bf16.msra.mxu0 0
    %1667 = vmatprep.subr.bf16.mxu0 0
    %1668 = vmatpush1.bf16.msra.mxu0 0
    %1669 = vmatprep.subr.bf16.mxu0 0
    %1670 = vmatpush1.bf16.msra.mxu0 0
    %1671 = vmatprep.subr.bf16.mxu0 0
    %1672 = vmatpush1.bf16.msra.mxu0 0
    %1673 = vmatprep.subr.bf16.mxu0 0
    %1674 = vmatpush1.bf16.msra.mxu0 0
    %1675 = vmatprep.subr.bf16.mxu0 0
    %1676 = vmatpush1.bf16.msra.mxu0 0
    %1677 = vmatprep.subr.bf16.mxu0 0
    %1678 = vmatpush1.bf16.msra.mxu0 0
    %1679 = vmatprep.subr.bf16.mxu0 0
    %1680 = vmatpush1.bf16.msra.mxu0 0
    %1681 = vmatprep.mubr.bf16.mxu0 0
    %1682 = vmatmul.mubr.bf16.gmra.mrb[0].mxu0 %v1606
    %v1683 = vpop.f32.mrb[0].mxu0
    %v1684 = vadd.f32 %v1594, %v1683
    %v1685 = vpop.f32.mrb[0].mxu0
    %v1686 = vadd.f32 %v1596, %v1685
    %v1687 = vpop.f32.mrb[0].mxu0
    %v1688 = vpop.f32.mrb[0].mxu0
    %1689 = vdwg.mxu0
    %v1690 = vadd.f32 %v1643, %v525
    %v1691 = vadd.f32 %v1645, %v529
    %v1692 = vadd.f32 %v1684, %v533
    %v1693 = vadd.f32 %v1686, %v537
    %v1694 = vxor.u32 %v1690, 2147483648
    %v1695 = vxor.u32 %v1691, 2147483648
    %v1696 = vmul.f32 %v1694, 1.442695
    %v1697 = vpow.pop %v1696
    %v1698 = vmul.f32 %v1695, 1.442695
    %v1699 = vpow.pop %v1698
    %v1700 = vadd.f32 %v1697, 1.0
    %v1701 = vadd.f32 %v1699, 1.0
    %v1702 = vrcp.pop %v1700
    %v1703 = vmul.f32 1.0, %v1702
    %v1704 = vrcp.pop %v1701
    %v1705 = vmul.f32 1.0, %v1704
    %v1706 = vmul.f32 %v1703, %v1693
    %v1707 = vadd.f32 %v1692, %v1706
    %v1708 = vtanh.pop %v1707
    %v1709 = vsub.f32 %v1360, %v1708
    %v1710 = vmul.f32 %v1705, %v1709
    %v1711 = vadd.f32 %v1708, %v1710
    %1712 = vmatprep.subr.bf16.mxu0 %v639
    %1713 = vmatpush1.bf16.msra.mxu0 %v638
    %1714 = vmatprep.subr.bf16.mxu0 %v643
    %1715 = vmatpush1.bf16.msra.mxu0 %v642
    %1716 = vmatprep.subr.bf16.mxu0 %v647
    %1717 = vmatpush1.bf16.msra.mxu0 %v646
    %1718 = vmatprep.subr.bf16.mxu0 %v651
    %1719 = vmatpush1.bf16.msra.mxu0 %v650
    %1720 = vmatprep.subr.bf16.mxu0 %v655
    %1721 = vmatpush1.bf16.msra.mxu0 %v654
    %1722 = vmatprep.subr.bf16.mxu0 %v659
    %1723 = vmatpush1.bf16.msra.mxu0 %v658
    %1724 = vmatprep.subr.bf16.mxu0 %v663
    %1725 = vmatpush1.bf16.msra.mxu0 %v662
    %1726 = vmatprep.subr.bf16.mxu0 %v667
    %1727 = vmatpush1.bf16.msra.mxu0 %v666
    %1728 = vmatprep.subr.bf16.mxu0 0
    %1729 = vmatpush1.bf16.msra.mxu0 0
    %1730 = vmatprep.subr.bf16.mxu0 0
    %1731 = vmatpush1.bf16.msra.mxu0 0
    %1732 = vmatprep.subr.bf16.mxu0 0
    %1733 = vmatpush1.bf16.msra.mxu0 0
    %1734 = vmatprep.subr.bf16.mxu0 0
    %1735 = vmatpush1.bf16.msra.mxu0 0
    %1736 = vmatprep.subr.bf16.mxu0 0
    %1737 = vmatpush1.bf16.msra.mxu0 0
    %1738 = vmatprep.subr.bf16.mxu0 0
    %1739 = vmatpush1.bf16.msra.mxu0 0
    %1740 = vmatprep.subr.bf16.mxu0 0
    %1741 = vmatpush1.bf16.msra.mxu0 0
    %1742 = vmatprep.subr.bf16.mxu0 0
    %1743 = vmatpush1.bf16.msra.mxu0 0
    %1744 = vmatprep.mubr.bf16.mxu0 0
    %1745 = vmatmul.mubr.bf16.gmra.mrb[0].mxu0 %v1606
    %v1746 = vpop.f32.mrb[0].mxu0
    %v1747 = vadd.f32 0.0, %v1746
    %v1748 = vpop.f32.mrb[0].mxu0
    %v1749 = vadd.f32 0.0, %v1748
    %v1750 = vpop.f32.mrb[0].mxu0
    %v1751 = vpop.f32.mrb[0].mxu0
    %1752 = vdwg.mxu0
    %1753 = vmatprep.subr.bf16.mxu0 %v641
    %1754 = vmatpush1.bf16.msra.mxu0 %v640
    %1755 = vmatprep.subr.bf16.mxu0 %v645
    %1756 = vmatpush1.bf16.msra.mxu0 %v644
    %1757 = vmatprep.subr.bf16.mxu0 %v649
    %1758 = vmatpush1.bf16.msra.mxu0 %v648
    %1759 = vmatprep.subr.bf16.mxu0 %v653
    %1760 = vmatpush1.bf16.msra.mxu0 %v652
    %1761 = vmatprep.subr.bf16.mxu0 %v657
    %1762 = vmatpush1.bf16.msra.mxu0 %v656
    %1763 = vmatprep.subr.bf16.mxu0 %v661
    %1764 = vmatpush1.bf16.msra.mxu0 %v660
    %1765 = vmatprep.subr.bf16.mxu0 %v665
    %1766 = vmatpush1.bf16.msra.mxu0 %v664
    %1767 = vmatprep.subr.bf16.mxu0 %v669
    %1768 = vmatpush1.bf16.msra.mxu0 %v668
    %1769 = vmatprep.subr.bf16.mxu0 0
    %1770 = vmatpush1.bf16.msra.mxu0 0
    %1771 = vmatprep.subr.bf16.mxu0 0
    %1772 = vmatpush1.bf16.msra.mxu0 0
    %1773 = vmatprep.subr.bf16.mxu0 0
    %1774 = vmatpush1.bf16.msra.mxu0 0
    %1775 = vmatprep.subr.bf16.mxu0 0
    %1776 = vmatpush1.bf16.msra.mxu0 0
    %1777 = vmatprep.subr.bf16.mxu0 0
    %1778 = vmatpush1.bf16.msra.mxu0 0
    %1779 = vmatprep.subr.bf16.mxu0 0
    %1780 = vmatpush1.bf16.msra.mxu0 0
    %1781 = vmatprep.subr.bf16.mxu0 0
    %1782 = vmatpush1.bf16.msra.mxu0 0
    %1783 = vmatprep.subr.bf16.mxu0 0
    %1784 = vmatpush1.bf16.msra.mxu0 0
    %1785 = vmatprep.mubr.bf16.mxu0 0
    %1786 = vmatmul.mubr.bf16.gmra.mrb[0].mxu0 %v1606
    %v1787 = vpop.f32.mrb[0].mxu0
    %v1788 = vadd.f32 0.0, %v1787
    %v1789 = vpop.f32.mrb[0].mxu0
    %v1790 = vadd.f32 0.0, %v1789
    %v1791 = vpop.f32.mrb[0].mxu0
    %v1792 = vpop.f32.mrb[0].mxu0
    %1793 = vdwg.mxu0
    %v1798 = vrot.slane %v1747, 6
    %v1799 = vrot.slane %v1749, 6
    %v1800 = vrot.slane %v1788, 6
    %v1801 = vrot.slane %v1790, 6
    %v1802 = vrot.slane %v1747, 7
    %v1803 = vrot.slane %v1749, 7
    %v1804 = vrot.slane %v1788, 7
    %v1805 = vrot.slane %v1790, 7
    %v1814 = vadd.f32 %v353, %v1798
    %v1815 = vadd.f32 %v355, %v1799
    %v1816 = vadd.f32 %v406, %v1800
    %v1817 = vadd.f32 %v408, %v1801
    %v1818 = vadd.f32 %v363, %v1802
    %v1819 = vadd.f32 %v365, %v1803
    %v1820 = vadd.f32 %v416, %v1804
    %v1821 = vadd.f32 %v418, %v1805
    %v1822 = vxor.u32 %v1814, 2147483648
    %v1823 = vxor.u32 %v1815, 2147483648
    %v1824 = vxor.u32 %v1818, 2147483648
    %v1825 = vxor.u32 %v1819, 2147483648
    %v1826 = vmul.f32 %v1822, 1.442695
    %v1827 = vpow.pop %v1826
    %v1828 = vmul.f32 %v1823, 1.442695
    %v1829 = vpow.pop %v1828
    %v1830 = vmul.f32 %v1824, 1.442695
    %v1831 = vpow.pop %v1830
    %v1832 = vmul.f32 %v1825, 1.442695
    %v1833 = vpow.pop %v1832
    %v1834 = vadd.f32 %v1827, 1.0
    %v1835 = vadd.f32 %v1829, 1.0
    %v1836 = vadd.f32 %v1831, 1.0
    %v1837 = vadd.f32 %v1833, 1.0
    %v1838 = vrcp.pop %v1834
    %v1839 = vmul.f32 1.0, %v1838
    %v1840 = vrcp.pop %v1835
    %v1841 = vmul.f32 1.0, %v1840
    %v1842 = vrcp.pop %v1836
    %v1843 = vmul.f32 1.0, %v1842
    %v1844 = vrcp.pop %v1837
    %v1845 = vmul.f32 1.0, %v1844
    %v1846 = vmul.f32 %v1839, %v1817
    %v1847 = vmul.f32 %v1843, %v1821
    %v1848 = vadd.f32 %v1816, %v1846
    %v1849 = vadd.f32 %v1820, %v1847
    %v1850 = vtanh.pop %v1848
    %v1851 = vtanh.pop %v1849
    %v1854 = vrot.slane %v1850, 1
    %v1855 = vrot.slane %v1851, 1
    %v1858 = vsub.f32 %v1513, %v1854
    %v1859 = vsub.f32 %v1514, %v1855
    %v1862 = vrot.slane %v1858, 7
    %v1863 = vrot.slane %v1859, 7
    %v1866 = vmul.f32 %v1841, %v1862
    %v1867 = vmul.f32 %v1845, %v1863
    %v1868 = vadd.f32 %v1850, %v1866
    %v1869 = vadd.f32 %v1851, %v1867
    %v1870 = vpack.c.bf16 %v1868, %v1868
    %v1871 = vpack.c.bf16 %v1869, %v1869
    %v1872 = vpack.c.bf16 %v1711, %v1711
    %1873 = vmatprep.subr.bf16.mxu0 %v943
    %1874 = vmatpush1.bf16.msra.mxu0 %v942
    %1875 = vmatprep.subr.bf16.mxu0 %v947
    %1876 = vmatpush1.bf16.msra.mxu0 %v946
    %1877 = vmatprep.subr.bf16.mxu0 %v951
    %1878 = vmatpush1.bf16.msra.mxu0 %v950
    %1879 = vmatprep.subr.bf16.mxu0 %v955
    %1880 = vmatpush1.bf16.msra.mxu0 %v954
    %1881 = vmatprep.subr.bf16.mxu0 %v959
    %1882 = vmatpush1.bf16.msra.mxu0 %v958
    %1883 = vmatprep.subr.bf16.mxu0 %v963
    %1884 = vmatpush1.bf16.msra.mxu0 %v962
    %1885 = vmatprep.subr.bf16.mxu0 %v967
    %1886 = vmatpush1.bf16.msra.mxu0 %v966
    %1887 = vmatprep.subr.bf16.mxu0 %v971
    %1888 = vmatpush1.bf16.msra.mxu0 %v970
    %1889 = vmatprep.subr.bf16.mxu0 0
    %1890 = vmatpush1.bf16.msra.mxu0 0
    %1891 = vmatprep.subr.bf16.mxu0 0
    %1892 = vmatpush1.bf16.msra.mxu0 0
    %1893 = vmatprep.subr.bf16.mxu0 0
    %1894 = vmatpush1.bf16.msra.mxu0 0
    %1895 = vmatprep.subr.bf16.mxu0 0
    %1896 = vmatpush1.bf16.msra.mxu0 0
    %1897 = vmatprep.subr.bf16.mxu0 0
    %1898 = vmatpush1.bf16.msra.mxu0 0
    %1899 = vmatprep.subr.bf16.mxu0 0
    %1900 = vmatpush1.bf16.msra.mxu0 0
    %1901 = vmatprep.subr.bf16.mxu0 0
    %1902 = vmatpush1.bf16.msra.mxu0 0
    %1903 = vmatprep.subr.bf16.mxu0 0
    %1904 = vmatpush1.bf16.msra.mxu0 0
    %1905 = vmatprep.mubr.bf16.mxu0 0
    %1906 = vmatmul.mubr.bf16.gmra.mrb[0].mxu0 %v1872
    %v1907 = vpop.f32.mrb[0].mxu0
    %v1908 = vadd.f32 0.0, %v1907
    %v1909 = vpop.f32.mrb[0].mxu0
    %v1910 = vadd.f32 0.0, %v1909
    %v1911 = vpop.f32.mrb[0].mxu0
    %v1912 = vpop.f32.mrb[0].mxu0
    %1913 = vdwg.mxu0
    %1914 = vmatprep.subr.bf16.mxu0 %v945
    %1915 = vmatpush1.bf16.msra.mxu0 %v944
    %1916 = vmatprep.subr.bf16.mxu0 %v949
    %1917 = vmatpush1.bf16.msra.mxu0 %v948
    %1918 = vmatprep.subr.bf16.mxu0 %v953
    %1919 = vmatpush1.bf16.msra.mxu0 %v952
    %1920 = vmatprep.subr.bf16.mxu0 %v957
    %1921 = vmatpush1.bf16.msra.mxu0 %v956
    %1922 = vmatprep.subr.bf16.mxu0 %v961
    %1923 = vmatpush1.bf16.msra.mxu0 %v960
    %1924 = vmatprep.subr.bf16.mxu0 %v965
    %1925 = vmatpush1.bf16.msra.mxu0 %v964
    %1926 = vmatprep.subr.bf16.mxu0 %v969
    %1927 = vmatpush1.bf16.msra.mxu0 %v968
    %1928 = vmatprep.subr.bf16.mxu0 %v973
    %1929 = vmatpush1.bf16.msra.mxu0 %v972
    %1930 = vmatprep.subr.bf16.mxu0 0
    %1931 = vmatpush1.bf16.msra.mxu0 0
    %1932 = vmatprep.subr.bf16.mxu0 0
    %1933 = vmatpush1.bf16.msra.mxu0 0
    %1934 = vmatprep.subr.bf16.mxu0 0
    %1935 = vmatpush1.bf16.msra.mxu0 0
    %1936 = vmatprep.subr.bf16.mxu0 0
    %1937 = vmatpush1.bf16.msra.mxu0 0
    %1938 = vmatprep.subr.bf16.mxu0 0
    %1939 = vmatpush1.bf16.msra.mxu0 0
    %1940 = vmatprep.subr.bf16.mxu0 0
    %1941 = vmatpush1.bf16.msra.mxu0 0
    %1942 = vmatprep.subr.bf16.mxu0 0
    %1943 = vmatpush1.bf16.msra.mxu0 0
    %1944 = vmatprep.subr.bf16.mxu0 0
    %1945 = vmatpush1.bf16.msra.mxu0 0
    %1946 = vmatprep.mubr.bf16.mxu0 0
    %1947 = vmatmul.mubr.bf16.gmra.mrb[0].mxu0 %v1872
    %v1948 = vpop.f32.mrb[0].mxu0
    %v1949 = vadd.f32 0.0, %v1948
    %v1950 = vpop.f32.mrb[0].mxu0
    %v1951 = vadd.f32 0.0, %v1950
    %v1952 = vpop.f32.mrb[0].mxu0
    %v1953 = vpop.f32.mrb[0].mxu0
    %1954 = vdwg.mxu0
    %v1957 = vunpack.c.l.b16 %v1870
    %v1958 = vunpack.c.l.b16 %v1871
    %v1959 = vrot.slane %v1957, 2
    %v1960 = vrot.slane %v1958, 1
    %v1961 = vsel %vm1093, %v1960, %v1959
    %v1962 = vpack.c.b16 %v1961, %v1961
    %1964 = vmatprep.subr.bf16.mxu0 %v1194
    %1965 = vmatpush1.bf16.msra.mxu0 %v1193
    %1966 = vmatprep.subr.bf16.mxu0 %v1198
    %1967 = vmatpush1.bf16.msra.mxu0 %v1197
    %1968 = vmatprep.subr.bf16.mxu0 %v1202
    %1969 = vmatpush1.bf16.msra.mxu0 %v1201
    %1970 = vmatprep.subr.bf16.mxu0 %v1206
    %1971 = vmatpush1.bf16.msra.mxu0 %v1205
    %1972 = vmatprep.subr.bf16.mxu0 %v1210
    %1973 = vmatpush1.bf16.msra.mxu0 %v1209
    %1974 = vmatprep.subr.bf16.mxu0 %v1214
    %1975 = vmatpush1.bf16.msra.mxu0 %v1213
    %1976 = vmatprep.subr.bf16.mxu0 %v1218
    %1977 = vmatpush1.bf16.msra.mxu0 %v1217
    %1978 = vmatprep.subr.bf16.mxu0 %v1222
    %1979 = vmatpush1.bf16.msra.mxu0 %v1221
    %1980 = vmatprep.subr.bf16.mxu0 0
    %1981 = vmatpush1.bf16.msra.mxu0 0
    %1982 = vmatprep.subr.bf16.mxu0 0
    %1983 = vmatpush1.bf16.msra.mxu0 0
    %1984 = vmatprep.subr.bf16.mxu0 0
    %1985 = vmatpush1.bf16.msra.mxu0 0
    %1986 = vmatprep.subr.bf16.mxu0 0
    %1987 = vmatpush1.bf16.msra.mxu0 0
    %1988 = vmatprep.subr.bf16.mxu0 0
    %1989 = vmatpush1.bf16.msra.mxu0 0
    %1990 = vmatprep.subr.bf16.mxu0 0
    %1991 = vmatpush1.bf16.msra.mxu0 0
    %1992 = vmatprep.subr.bf16.mxu0 0
    %1993 = vmatpush1.bf16.msra.mxu0 0
    %1994 = vmatprep.subr.bf16.mxu0 0
    %1995 = vmatpush1.bf16.msra.mxu0 0
    %1996 = vmatprep.mubr.bf16.mxu0 0
    %1997 = vmatmul.mubr.bf16.gmra.mrb[0].mxu0 %v1962
    %v1998 = vpop.f32.mrb[0].mxu0
    %v1999 = vadd.f32 %v1908, %v1998
    %v2000 = vpop.f32.mrb[0].mxu0
    %v2001 = vadd.f32 %v1910, %v2000
    %v2002 = vpop.f32.mrb[0].mxu0
    %v2003 = vpop.f32.mrb[0].mxu0
    %2004 = vdwg.mxu0
    %2005 = vmatprep.subr.bf16.mxu0 %v1196
    %2006 = vmatpush1.bf16.msra.mxu0 %v1195
    %2007 = vmatprep.subr.bf16.mxu0 %v1200
    %2008 = vmatpush1.bf16.msra.mxu0 %v1199
    %2009 = vmatprep.subr.bf16.mxu0 %v1204
    %2010 = vmatpush1.bf16.msra.mxu0 %v1203
    %2011 = vmatprep.subr.bf16.mxu0 %v1208
    %2012 = vmatpush1.bf16.msra.mxu0 %v1207
    %2013 = vmatprep.subr.bf16.mxu0 %v1212
    %2014 = vmatpush1.bf16.msra.mxu0 %v1211
    %2015 = vmatprep.subr.bf16.mxu0 %v1216
    %2016 = vmatpush1.bf16.msra.mxu0 %v1215
    %2017 = vmatprep.subr.bf16.mxu0 %v1220
    %2018 = vmatpush1.bf16.msra.mxu0 %v1219
    %2019 = vmatprep.subr.bf16.mxu0 %v1224
    %2020 = vmatpush1.bf16.msra.mxu0 %v1223
    %2021 = vmatprep.subr.bf16.mxu0 0
    %2022 = vmatpush1.bf16.msra.mxu0 0
    %2023 = vmatprep.subr.bf16.mxu0 0
    %2024 = vmatpush1.bf16.msra.mxu0 0
    %2025 = vmatprep.subr.bf16.mxu0 0
    %2026 = vmatpush1.bf16.msra.mxu0 0
    %2027 = vmatprep.subr.bf16.mxu0 0
    %2028 = vmatpush1.bf16.msra.mxu0 0
    %2029 = vmatprep.subr.bf16.mxu0 0
    %2030 = vmatpush1.bf16.msra.mxu0 0
    %2031 = vmatprep.subr.bf16.mxu0 0
    %2032 = vmatpush1.bf16.msra.mxu0 0
    %2033 = vmatprep.subr.bf16.mxu0 0
    %2034 = vmatpush1.bf16.msra.mxu0 0
    %2035 = vmatprep.subr.bf16.mxu0 0
    %2036 = vmatpush1.bf16.msra.mxu0 0
    %2037 = vmatprep.mubr.bf16.mxu0 0
    %2038 = vmatmul.mubr.bf16.gmra.mrb[0].mxu0 %v1962
    %v2039 = vpop.f32.mrb[0].mxu0
    %v2040 = vadd.f32 %v1949, %v2039
    %v2041 = vpop.f32.mrb[0].mxu0
    %v2042 = vadd.f32 %v1951, %v2041
    %v2043 = vpop.f32.mrb[0].mxu0
    %v2044 = vpop.f32.mrb[0].mxu0
    %2045 = vdwg.mxu0
    %v2046 = vadd.f32 %v1999, %v525
    %v2047 = vadd.f32 %v2001, %v529
    %v2048 = vadd.f32 %v2040, %v533
    %v2049 = vadd.f32 %v2042, %v537
    %v2050 = vxor.u32 %v2046, 2147483648
    %v2051 = vxor.u32 %v2047, 2147483648
    %v2052 = vmul.f32 %v2050, 1.442695
    %v2053 = vpow.pop %v2052
    %v2054 = vmul.f32 %v2051, 1.442695
    %v2055 = vpow.pop %v2054
    %v2056 = vadd.f32 %v2053, 1.0
    %v2057 = vadd.f32 %v2055, 1.0
    %v2058 = vrcp.pop %v2056
    %v2059 = vmul.f32 1.0, %v2058
    %v2060 = vrcp.pop %v2057
    %v2061 = vmul.f32 1.0, %v2060
    %v2062 = vmul.f32 %v2059, %v2049
    %v2063 = vadd.f32 %v2048, %v2062
    %v2064 = vtanh.pop %v2063
    %v2065 = vsub.f32 %v1711, %v2064
    %v2066 = vmul.f32 %v2061, %v2065
    %v2067 = vadd.f32 %v2064, %v2066
    %2068 = vmatprep.subr.bf16.mxu0 %v639
    %2069 = vmatpush1.bf16.msra.mxu0 %v638
    %2070 = vmatprep.subr.bf16.mxu0 %v643
    %2071 = vmatpush1.bf16.msra.mxu0 %v642
    %2072 = vmatprep.subr.bf16.mxu0 %v647
    %2073 = vmatpush1.bf16.msra.mxu0 %v646
    %2074 = vmatprep.subr.bf16.mxu0 %v651
    %2075 = vmatpush1.bf16.msra.mxu0 %v650
    %2076 = vmatprep.subr.bf16.mxu0 %v655
    %2077 = vmatpush1.bf16.msra.mxu0 %v654
    %2078 = vmatprep.subr.bf16.mxu0 %v659
    %2079 = vmatpush1.bf16.msra.mxu0 %v658
    %2080 = vmatprep.subr.bf16.mxu0 %v663
    %2081 = vmatpush1.bf16.msra.mxu0 %v662
    %2082 = vmatprep.subr.bf16.mxu0 %v667
    %2083 = vmatpush1.bf16.msra.mxu0 %v666
    %2084 = vmatprep.subr.bf16.mxu0 0
    %2085 = vmatpush1.bf16.msra.mxu0 0
    %2086 = vmatprep.subr.bf16.mxu0 0
    %2087 = vmatpush1.bf16.msra.mxu0 0
    %2088 = vmatprep.subr.bf16.mxu0 0
    %2089 = vmatpush1.bf16.msra.mxu0 0
    %2090 = vmatprep.subr.bf16.mxu0 0
    %2091 = vmatpush1.bf16.msra.mxu0 0
    %2092 = vmatprep.subr.bf16.mxu0 0
    %2093 = vmatpush1.bf16.msra.mxu0 0
    %2094 = vmatprep.subr.bf16.mxu0 0
    %2095 = vmatpush1.bf16.msra.mxu0 0
    %2096 = vmatprep.subr.bf16.mxu0 0
    %2097 = vmatpush1.bf16.msra.mxu0 0
    %2098 = vmatprep.subr.bf16.mxu0 0
    %2099 = vmatpush1.bf16.msra.mxu0 0
    %2100 = vmatprep.mubr.bf16.mxu0 0
    %2101 = vmatmul.mubr.bf16.gmra.mrb[0].mxu0 %v1962
    %v2102 = vpop.f32.mrb[0].mxu0
    %v2103 = vadd.f32 0.0, %v2102
    %v2104 = vpop.f32.mrb[0].mxu0
    %v2105 = vadd.f32 0.0, %v2104
    %v2106 = vpop.f32.mrb[0].mxu0
    %v2107 = vpop.f32.mrb[0].mxu0
    %2108 = vdwg.mxu0
    %2109 = vmatprep.subr.bf16.mxu0 %v641
    %2110 = vmatpush1.bf16.msra.mxu0 %v640
    %2111 = vmatprep.subr.bf16.mxu0 %v645
    %2112 = vmatpush1.bf16.msra.mxu0 %v644
    %2113 = vmatprep.subr.bf16.mxu0 %v649
    %2114 = vmatpush1.bf16.msra.mxu0 %v648
    %2115 = vmatprep.subr.bf16.mxu0 %v653
    %2116 = vmatpush1.bf16.msra.mxu0 %v652
    %2117 = vmatprep.subr.bf16.mxu0 %v657
    %2118 = vmatpush1.bf16.msra.mxu0 %v656
    %2119 = vmatprep.subr.bf16.mxu0 %v661
    %2120 = vmatpush1.bf16.msra.mxu0 %v660
    %2121 = vmatprep.subr.bf16.mxu0 %v665
    %2122 = vmatpush1.bf16.msra.mxu0 %v664
    %2123 = vmatprep.subr.bf16.mxu0 %v669
    %2124 = vmatpush1.bf16.msra.mxu0 %v668
    %2125 = vmatprep.subr.bf16.mxu0 0
    %2126 = vmatpush1.bf16.msra.mxu0 0
    %2127 = vmatprep.subr.bf16.mxu0 0
    %2128 = vmatpush1.bf16.msra.mxu0 0
    %2129 = vmatprep.subr.bf16.mxu0 0
    %2130 = vmatpush1.bf16.msra.mxu0 0
    %2131 = vmatprep.subr.bf16.mxu0 0
    %2132 = vmatpush1.bf16.msra.mxu0 0
    %2133 = vmatprep.subr.bf16.mxu0 0
    %2134 = vmatpush1.bf16.msra.mxu0 0
    %2135 = vmatprep.subr.bf16.mxu0 0
    %2136 = vmatpush1.bf16.msra.mxu0 0
    %2137 = vmatprep.subr.bf16.mxu0 0
    %2138 = vmatpush1.bf16.msra.mxu0 0
    %2139 = vmatprep.subr.bf16.mxu0 0
    %2140 = vmatpush1.bf16.msra.mxu0 0
    %2141 = vmatprep.mubr.bf16.mxu0 0
    %2142 = vmatmul.mubr.bf16.gmra.mrb[0].mxu0 %v1962
    %v2143 = vpop.f32.mrb[0].mxu0
    %v2144 = vadd.f32 0.0, %v2143
    %v2145 = vpop.f32.mrb[0].mxu0
    %v2146 = vadd.f32 0.0, %v2145
    %v2147 = vpop.f32.mrb[0].mxu0
    %v2148 = vpop.f32.mrb[0].mxu0
    %2149 = vdwg.mxu0
    %v2154 = vrot.slane %v2103, 5
    %v2155 = vrot.slane %v2105, 5
    %v2156 = vrot.slane %v2144, 5
    %v2157 = vrot.slane %v2146, 5
    %v2158 = vrot.slane %v2103, 6
    %v2159 = vrot.slane %v2105, 6
    %v2160 = vrot.slane %v2144, 6
    %v2161 = vrot.slane %v2146, 6
    %v2170 = vadd.f32 %v353, %v2154
    %v2171 = vadd.f32 %v355, %v2155
    %v2172 = vadd.f32 %v406, %v2156
    %v2173 = vadd.f32 %v408, %v2157
    %v2174 = vadd.f32 %v363, %v2158
    %v2175 = vadd.f32 %v365, %v2159
    %v2176 = vadd.f32 %v416, %v2160
    %v2177 = vadd.f32 %v418, %v2161
    %v2178 = vxor.u32 %v2170, 2147483648
    %v2179 = vxor.u32 %v2171, 2147483648
    %v2180 = vxor.u32 %v2174, 2147483648
    %v2181 = vxor.u32 %v2175, 2147483648
    %v2182 = vmul.f32 %v2178, 1.442695
    %v2183 = vpow.pop %v2182
    %v2184 = vmul.f32 %v2179, 1.442695
    %v2185 = vpow.pop %v2184
    %v2186 = vmul.f32 %v2180, 1.442695
    %v2187 = vpow.pop %v2186
    %v2188 = vmul.f32 %v2181, 1.442695
    %v2189 = vpow.pop %v2188
    %v2190 = vadd.f32 %v2183, 1.0
    %v2191 = vadd.f32 %v2185, 1.0
    %v2192 = vadd.f32 %v2187, 1.0
    %v2193 = vadd.f32 %v2189, 1.0
    %v2194 = vrcp.pop %v2190
    %v2195 = vmul.f32 1.0, %v2194
    %v2196 = vrcp.pop %v2191
    %v2197 = vmul.f32 1.0, %v2196
    %v2198 = vrcp.pop %v2192
    %v2199 = vmul.f32 1.0, %v2198
    %v2200 = vrcp.pop %v2193
    %v2201 = vmul.f32 1.0, %v2200
    %v2202 = vmul.f32 %v2195, %v2173
    %v2203 = vmul.f32 %v2199, %v2177
    %v2204 = vadd.f32 %v2172, %v2202
    %v2205 = vadd.f32 %v2176, %v2203
    %v2206 = vtanh.pop %v2204
    %v2207 = vtanh.pop %v2205
    %v2210 = vrot.slane %v2206, 1
    %v2211 = vrot.slane %v2207, 1
    %v2214 = vsub.f32 %v1868, %v2210
    %v2215 = vsub.f32 %v1869, %v2211
    %v2218 = vrot.slane %v2214, 7
    %v2219 = vrot.slane %v2215, 7
    %v2222 = vmul.f32 %v2197, %v2218
    %v2223 = vmul.f32 %v2201, %v2219
    %v2224 = vadd.f32 %v2206, %v2222
    %v2225 = vadd.f32 %v2207, %v2223
    %v2226 = vpack.c.bf16 %v2224, %v2224
    %v2227 = vpack.c.bf16 %v2225, %v2225
    %v2228 = vpack.c.bf16 %v2067, %v2067
    %2229 = vmatprep.subr.bf16.mxu0 %v943
    %2230 = vmatpush1.bf16.msra.mxu0 %v942
    %2231 = vmatprep.subr.bf16.mxu0 %v947
    %2232 = vmatpush1.bf16.msra.mxu0 %v946
    %2233 = vmatprep.subr.bf16.mxu0 %v951
    %2234 = vmatpush1.bf16.msra.mxu0 %v950
    %2235 = vmatprep.subr.bf16.mxu0 %v955
    %2236 = vmatpush1.bf16.msra.mxu0 %v954
    %2237 = vmatprep.subr.bf16.mxu0 %v959
    %2238 = vmatpush1.bf16.msra.mxu0 %v958
    %2239 = vmatprep.subr.bf16.mxu0 %v963
    %2240 = vmatpush1.bf16.msra.mxu0 %v962
    %2241 = vmatprep.subr.bf16.mxu0 %v967
    %2242 = vmatpush1.bf16.msra.mxu0 %v966
    %2243 = vmatprep.subr.bf16.mxu0 %v971
    %2244 = vmatpush1.bf16.msra.mxu0 %v970
    %2245 = vmatprep.subr.bf16.mxu0 0
    %2246 = vmatpush1.bf16.msra.mxu0 0
    %2247 = vmatprep.subr.bf16.mxu0 0
    %2248 = vmatpush1.bf16.msra.mxu0 0
    %2249 = vmatprep.subr.bf16.mxu0 0
    %2250 = vmatpush1.bf16.msra.mxu0 0
    %2251 = vmatprep.subr.bf16.mxu0 0
    %2252 = vmatpush1.bf16.msra.mxu0 0
    %2253 = vmatprep.subr.bf16.mxu0 0
    %2254 = vmatpush1.bf16.msra.mxu0 0
    %2255 = vmatprep.subr.bf16.mxu0 0
    %2256 = vmatpush1.bf16.msra.mxu0 0
    %2257 = vmatprep.subr.bf16.mxu0 0
    %2258 = vmatpush1.bf16.msra.mxu0 0
    %2259 = vmatprep.subr.bf16.mxu0 0
    %2260 = vmatpush1.bf16.msra.mxu0 0
    %2261 = vmatprep.mubr.bf16.mxu0 0
    %2262 = vmatmul.mubr.bf16.gmra.mrb[0].mxu0 %v2228
    %v2263 = vpop.f32.mrb[0].mxu0
    %v2264 = vadd.f32 0.0, %v2263
    %v2265 = vpop.f32.mrb[0].mxu0
    %v2266 = vadd.f32 0.0, %v2265
    %v2267 = vpop.f32.mrb[0].mxu0
    %v2268 = vpop.f32.mrb[0].mxu0
    %2269 = vdwg.mxu0
    %2270 = vmatprep.subr.bf16.mxu0 %v945
    %2271 = vmatpush1.bf16.msra.mxu0 %v944
    %2272 = vmatprep.subr.bf16.mxu0 %v949
    %2273 = vmatpush1.bf16.msra.mxu0 %v948
    %2274 = vmatprep.subr.bf16.mxu0 %v953
    %2275 = vmatpush1.bf16.msra.mxu0 %v952
    %2276 = vmatprep.subr.bf16.mxu0 %v957
    %2277 = vmatpush1.bf16.msra.mxu0 %v956
    %2278 = vmatprep.subr.bf16.mxu0 %v961
    %2279 = vmatpush1.bf16.msra.mxu0 %v960
    %2280 = vmatprep.subr.bf16.mxu0 %v965
    %2281 = vmatpush1.bf16.msra.mxu0 %v964
    %2282 = vmatprep.subr.bf16.mxu0 %v969
    %2283 = vmatpush1.bf16.msra.mxu0 %v968
    %2284 = vmatprep.subr.bf16.mxu0 %v973
    %2285 = vmatpush1.bf16.msra.mxu0 %v972
    %2286 = vmatprep.subr.bf16.mxu0 0
    %2287 = vmatpush1.bf16.msra.mxu0 0
    %2288 = vmatprep.subr.bf16.mxu0 0
    %2289 = vmatpush1.bf16.msra.mxu0 0
    %2290 = vmatprep.subr.bf16.mxu0 0
    %2291 = vmatpush1.bf16.msra.mxu0 0
    %2292 = vmatprep.subr.bf16.mxu0 0
    %2293 = vmatpush1.bf16.msra.mxu0 0
    %2294 = vmatprep.subr.bf16.mxu0 0
    %2295 = vmatpush1.bf16.msra.mxu0 0
    %2296 = vmatprep.subr.bf16.mxu0 0
    %2297 = vmatpush1.bf16.msra.mxu0 0
    %2298 = vmatprep.subr.bf16.mxu0 0
    %2299 = vmatpush1.bf16.msra.mxu0 0
    %2300 = vmatprep.subr.bf16.mxu0 0
    %2301 = vmatpush1.bf16.msra.mxu0 0
    %2302 = vmatprep.mubr.bf16.mxu0 0
    %2303 = vmatmul.mubr.bf16.gmra.mrb[0].mxu0 %v2228
    %v2304 = vpop.f32.mrb[0].mxu0
    %v2305 = vadd.f32 0.0, %v2304
    %v2306 = vpop.f32.mrb[0].mxu0
    %v2307 = vadd.f32 0.0, %v2306
    %v2308 = vpop.f32.mrb[0].mxu0
    %v2309 = vpop.f32.mrb[0].mxu0
    %2310 = vdwg.mxu0
    %v2313 = vunpack.c.l.b16 %v2226
    %v2314 = vunpack.c.l.b16 %v2227
    %v2315 = vrot.slane %v2313, 3
    %v2316 = vrot.slane %v2314, 2
    %v2317 = vsel %vm1093, %v2316, %v2315
    %v2318 = vpack.c.b16 %v2317, %v2317
    %2320 = vmatprep.subr.bf16.mxu0 %v1194
    %2321 = vmatpush1.bf16.msra.mxu0 %v1193
    %2322 = vmatprep.subr.bf16.mxu0 %v1198
    %2323 = vmatpush1.bf16.msra.mxu0 %v1197
    %2324 = vmatprep.subr.bf16.mxu0 %v1202
    %2325 = vmatpush1.bf16.msra.mxu0 %v1201
    %2326 = vmatprep.subr.bf16.mxu0 %v1206
    %2327 = vmatpush1.bf16.msra.mxu0 %v1205
    %2328 = vmatprep.subr.bf16.mxu0 %v1210
    %2329 = vmatpush1.bf16.msra.mxu0 %v1209
    %2330 = vmatprep.subr.bf16.mxu0 %v1214
    %2331 = vmatpush1.bf16.msra.mxu0 %v1213
    %2332 = vmatprep.subr.bf16.mxu0 %v1218
    %2333 = vmatpush1.bf16.msra.mxu0 %v1217
    %2334 = vmatprep.subr.bf16.mxu0 %v1222
    %2335 = vmatpush1.bf16.msra.mxu0 %v1221
    %2336 = vmatprep.subr.bf16.mxu0 0
    %2337 = vmatpush1.bf16.msra.mxu0 0
    %2338 = vmatprep.subr.bf16.mxu0 0
    %2339 = vmatpush1.bf16.msra.mxu0 0
    %2340 = vmatprep.subr.bf16.mxu0 0
    %2341 = vmatpush1.bf16.msra.mxu0 0
    %2342 = vmatprep.subr.bf16.mxu0 0
    %2343 = vmatpush1.bf16.msra.mxu0 0
    %2344 = vmatprep.subr.bf16.mxu0 0
    %2345 = vmatpush1.bf16.msra.mxu0 0
    %2346 = vmatprep.subr.bf16.mxu0 0
    %2347 = vmatpush1.bf16.msra.mxu0 0
    %2348 = vmatprep.subr.bf16.mxu0 0
    %2349 = vmatpush1.bf16.msra.mxu0 0
    %2350 = vmatprep.subr.bf16.mxu0 0
    %2351 = vmatpush1.bf16.msra.mxu0 0
    %2352 = vmatprep.mubr.bf16.mxu0 0
    %2353 = vmatmul.mubr.bf16.gmra.mrb[0].mxu0 %v2318
    %v2354 = vpop.f32.mrb[0].mxu0
    %v2355 = vadd.f32 %v2264, %v2354
    %v2356 = vpop.f32.mrb[0].mxu0
    %v2357 = vadd.f32 %v2266, %v2356
    %v2358 = vpop.f32.mrb[0].mxu0
    %v2359 = vpop.f32.mrb[0].mxu0
    %2360 = vdwg.mxu0
    %2361 = vmatprep.subr.bf16.mxu0 %v1196
    %2362 = vmatpush1.bf16.msra.mxu0 %v1195
    %2363 = vmatprep.subr.bf16.mxu0 %v1200
    %2364 = vmatpush1.bf16.msra.mxu0 %v1199
    %2365 = vmatprep.subr.bf16.mxu0 %v1204
    %2366 = vmatpush1.bf16.msra.mxu0 %v1203
    %2367 = vmatprep.subr.bf16.mxu0 %v1208
    %2368 = vmatpush1.bf16.msra.mxu0 %v1207
    %2369 = vmatprep.subr.bf16.mxu0 %v1212
    %2370 = vmatpush1.bf16.msra.mxu0 %v1211
    %2371 = vmatprep.subr.bf16.mxu0 %v1216
    %2372 = vmatpush1.bf16.msra.mxu0 %v1215
    %2373 = vmatprep.subr.bf16.mxu0 %v1220
    %2374 = vmatpush1.bf16.msra.mxu0 %v1219
    %2375 = vmatprep.subr.bf16.mxu0 %v1224
    %2376 = vmatpush1.bf16.msra.mxu0 %v1223
    %2377 = vmatprep.subr.bf16.mxu0 0
    %2378 = vmatpush1.bf16.msra.mxu0 0
    %2379 = vmatprep.subr.bf16.mxu0 0
    %2380 = vmatpush1.bf16.msra.mxu0 0
    %2381 = vmatprep.subr.bf16.mxu0 0
    %2382 = vmatpush1.bf16.msra.mxu0 0
    %2383 = vmatprep.subr.bf16.mxu0 0
    %2384 = vmatpush1.bf16.msra.mxu0 0
    %2385 = vmatprep.subr.bf16.mxu0 0
    %2386 = vmatpush1.bf16.msra.mxu0 0
    %2387 = vmatprep.subr.bf16.mxu0 0
    %2388 = vmatpush1.bf16.msra.mxu0 0
    %2389 = vmatprep.subr.bf16.mxu0 0
    %2390 = vmatpush1.bf16.msra.mxu0 0
    %2391 = vmatprep.subr.bf16.mxu0 0
    %2392 = vmatpush1.bf16.msra.mxu0 0
    %2393 = vmatprep.mubr.bf16.mxu0 0
    %2394 = vmatmul.mubr.bf16.gmra.mrb[0].mxu0 %v2318
    %v2395 = vpop.f32.mrb[0].mxu0
    %v2396 = vadd.f32 %v2305, %v2395
    %v2397 = vpop.f32.mrb[0].mxu0
    %v2398 = vadd.f32 %v2307, %v2397
    %v2399 = vpop.f32.mrb[0].mxu0
    %v2400 = vpop.f32.mrb[0].mxu0
    %2401 = vdwg.mxu0
    %v2402 = vadd.f32 %v2355, %v525
    %v2403 = vadd.f32 %v2357, %v529
    %v2404 = vadd.f32 %v2396, %v533
    %v2405 = vadd.f32 %v2398, %v537
    %v2406 = vxor.u32 %v2402, 2147483648
    %v2407 = vxor.u32 %v2403, 2147483648
    %v2408 = vmul.f32 %v2406, 1.442695
    %v2409 = vpow.pop %v2408
    %v2410 = vmul.f32 %v2407, 1.442695
    %v2411 = vpow.pop %v2410
    %v2412 = vadd.f32 %v2409, 1.0
    %v2413 = vadd.f32 %v2411, 1.0
    %v2414 = vrcp.pop %v2412
    %v2415 = vmul.f32 1.0, %v2414
    %v2416 = vrcp.pop %v2413
    %v2417 = vmul.f32 1.0, %v2416
    %v2418 = vmul.f32 %v2415, %v2405
    %v2419 = vadd.f32 %v2404, %v2418
    %v2420 = vtanh.pop %v2419
    %v2421 = vsub.f32 %v2067, %v2420
    %v2422 = vmul.f32 %v2417, %v2421
    %v2423 = vadd.f32 %v2420, %v2422
    %2424 = vmatprep.subr.bf16.mxu0 %v639
    %2425 = vmatpush1.bf16.msra.mxu0 %v638
    %2426 = vmatprep.subr.bf16.mxu0 %v643
    %2427 = vmatpush1.bf16.msra.mxu0 %v642
    %2428 = vmatprep.subr.bf16.mxu0 %v647
    %2429 = vmatpush1.bf16.msra.mxu0 %v646
    %2430 = vmatprep.subr.bf16.mxu0 %v651
    %2431 = vmatpush1.bf16.msra.mxu0 %v650
    %2432 = vmatprep.subr.bf16.mxu0 %v655
    %2433 = vmatpush1.bf16.msra.mxu0 %v654
    %2434 = vmatprep.subr.bf16.mxu0 %v659
    %2435 = vmatpush1.bf16.msra.mxu0 %v658
    %2436 = vmatprep.subr.bf16.mxu0 %v663
    %2437 = vmatpush1.bf16.msra.mxu0 %v662
    %2438 = vmatprep.subr.bf16.mxu0 %v667
    %2439 = vmatpush1.bf16.msra.mxu0 %v666
    %2440 = vmatprep.subr.bf16.mxu0 0
    %2441 = vmatpush1.bf16.msra.mxu0 0
    %2442 = vmatprep.subr.bf16.mxu0 0
    %2443 = vmatpush1.bf16.msra.mxu0 0
    %2444 = vmatprep.subr.bf16.mxu0 0
    %2445 = vmatpush1.bf16.msra.mxu0 0
    %2446 = vmatprep.subr.bf16.mxu0 0
    %2447 = vmatpush1.bf16.msra.mxu0 0
    %2448 = vmatprep.subr.bf16.mxu0 0
    %2449 = vmatpush1.bf16.msra.mxu0 0
    %2450 = vmatprep.subr.bf16.mxu0 0
    %2451 = vmatpush1.bf16.msra.mxu0 0
    %2452 = vmatprep.subr.bf16.mxu0 0
    %2453 = vmatpush1.bf16.msra.mxu0 0
    %2454 = vmatprep.subr.bf16.mxu0 0
    %2455 = vmatpush1.bf16.msra.mxu0 0
    %2456 = vmatprep.mubr.bf16.mxu0 0
    %2457 = vmatmul.mubr.bf16.gmra.mrb[0].mxu0 %v2318
    %v2458 = vpop.f32.mrb[0].mxu0
    %v2459 = vadd.f32 0.0, %v2458
    %v2460 = vpop.f32.mrb[0].mxu0
    %v2461 = vadd.f32 0.0, %v2460
    %v2462 = vpop.f32.mrb[0].mxu0
    %v2463 = vpop.f32.mrb[0].mxu0
    %2464 = vdwg.mxu0
    %2465 = vmatprep.subr.bf16.mxu0 %v641
    %2466 = vmatpush1.bf16.msra.mxu0 %v640
    %2467 = vmatprep.subr.bf16.mxu0 %v645
    %2468 = vmatpush1.bf16.msra.mxu0 %v644
    %2469 = vmatprep.subr.bf16.mxu0 %v649
    %2470 = vmatpush1.bf16.msra.mxu0 %v648
    %2471 = vmatprep.subr.bf16.mxu0 %v653
    %2472 = vmatpush1.bf16.msra.mxu0 %v652
    %2473 = vmatprep.subr.bf16.mxu0 %v657
    %2474 = vmatpush1.bf16.msra.mxu0 %v656
    %2475 = vmatprep.subr.bf16.mxu0 %v661
    %2476 = vmatpush1.bf16.msra.mxu0 %v660
    %2477 = vmatprep.subr.bf16.mxu0 %v665
    %2478 = vmatpush1.bf16.msra.mxu0 %v664
    %2479 = vmatprep.subr.bf16.mxu0 %v669
    %2480 = vmatpush1.bf16.msra.mxu0 %v668
    %2481 = vmatprep.subr.bf16.mxu0 0
    %2482 = vmatpush1.bf16.msra.mxu0 0
    %2483 = vmatprep.subr.bf16.mxu0 0
    %2484 = vmatpush1.bf16.msra.mxu0 0
    %2485 = vmatprep.subr.bf16.mxu0 0
    %2486 = vmatpush1.bf16.msra.mxu0 0
    %2487 = vmatprep.subr.bf16.mxu0 0
    %2488 = vmatpush1.bf16.msra.mxu0 0
    %2489 = vmatprep.subr.bf16.mxu0 0
    %2490 = vmatpush1.bf16.msra.mxu0 0
    %2491 = vmatprep.subr.bf16.mxu0 0
    %2492 = vmatpush1.bf16.msra.mxu0 0
    %2493 = vmatprep.subr.bf16.mxu0 0
    %2494 = vmatpush1.bf16.msra.mxu0 0
    %2495 = vmatprep.subr.bf16.mxu0 0
    %2496 = vmatpush1.bf16.msra.mxu0 0
    %2497 = vmatprep.mubr.bf16.mxu0 0
    %2498 = vmatmul.mubr.bf16.gmra.mrb[0].mxu0 %v2318
    %v2499 = vpop.f32.mrb[0].mxu0
    %v2500 = vadd.f32 0.0, %v2499
    %v2501 = vpop.f32.mrb[0].mxu0
    %v2502 = vadd.f32 0.0, %v2501
    %v2503 = vpop.f32.mrb[0].mxu0
    %v2504 = vpop.f32.mrb[0].mxu0
    %2505 = vdwg.mxu0
    %v2510 = vrot.slane %v2459, 4
    %v2511 = vrot.slane %v2461, 4
    %v2512 = vrot.slane %v2500, 4
    %v2513 = vrot.slane %v2502, 4
    %v2514 = vrot.slane %v2459, 5
    %v2515 = vrot.slane %v2461, 5
    %v2516 = vrot.slane %v2500, 5
    %v2517 = vrot.slane %v2502, 5
    %v2526 = vadd.f32 %v353, %v2510
    %v2527 = vadd.f32 %v355, %v2511
    %v2528 = vadd.f32 %v406, %v2512
    %v2529 = vadd.f32 %v408, %v2513
    %v2530 = vadd.f32 %v363, %v2514
    %v2531 = vadd.f32 %v365, %v2515
    %v2532 = vadd.f32 %v416, %v2516
    %v2533 = vadd.f32 %v418, %v2517
    %v2534 = vxor.u32 %v2526, 2147483648
    %v2535 = vxor.u32 %v2527, 2147483648
    %v2536 = vxor.u32 %v2530, 2147483648
    %v2537 = vxor.u32 %v2531, 2147483648
    %v2538 = vmul.f32 %v2534, 1.442695
    %v2539 = vpow.pop %v2538
    %v2540 = vmul.f32 %v2535, 1.442695
    %v2541 = vpow.pop %v2540
    %v2542 = vmul.f32 %v2536, 1.442695
    %v2543 = vpow.pop %v2542
    %v2544 = vmul.f32 %v2537, 1.442695
    %v2545 = vpow.pop %v2544
    %v2546 = vadd.f32 %v2539, 1.0
    %v2547 = vadd.f32 %v2541, 1.0
    %v2548 = vadd.f32 %v2543, 1.0
    %v2549 = vadd.f32 %v2545, 1.0
    %v2550 = vrcp.pop %v2546
    %v2551 = vmul.f32 1.0, %v2550
    %v2552 = vrcp.pop %v2547
    %v2553 = vmul.f32 1.0, %v2552
    %v2554 = vrcp.pop %v2548
    %v2555 = vmul.f32 1.0, %v2554
    %v2556 = vrcp.pop %v2549
    %v2557 = vmul.f32 1.0, %v2556
    %v2558 = vmul.f32 %v2551, %v2529
    %v2559 = vmul.f32 %v2555, %v2533
    %v2560 = vadd.f32 %v2528, %v2558
    %v2561 = vadd.f32 %v2532, %v2559
    %v2562 = vtanh.pop %v2560
    %v2563 = vtanh.pop %v2561
    %v2566 = vrot.slane %v2562, 1
    %v2567 = vrot.slane %v2563, 1
    %v2570 = vsub.f32 %v2224, %v2566
    %v2571 = vsub.f32 %v2225, %v2567
    %v2574 = vrot.slane %v2570, 7
    %v2575 = vrot.slane %v2571, 7
    %v2578 = vmul.f32 %v2553, %v2574
    %v2579 = vmul.f32 %v2557, %v2575
    %v2580 = vadd.f32 %v2562, %v2578
    %v2581 = vadd.f32 %v2563, %v2579
    %v2582 = vpack.c.bf16 %v2580, %v2580
    %v2583 = vpack.c.bf16 %v2581, %v2581
    %v2584 = vpack.c.bf16 %v2423, %v2423
    %2585 = vmatprep.subr.bf16.mxu0 %v943
    %2586 = vmatpush1.bf16.msra.mxu0 %v942
    %2587 = vmatprep.subr.bf16.mxu0 %v947
    %2588 = vmatpush1.bf16.msra.mxu0 %v946
    %2589 = vmatprep.subr.bf16.mxu0 %v951
    %2590 = vmatpush1.bf16.msra.mxu0 %v950
    %2591 = vmatprep.subr.bf16.mxu0 %v955
    %2592 = vmatpush1.bf16.msra.mxu0 %v954
    %2593 = vmatprep.subr.bf16.mxu0 %v959
    %2594 = vmatpush1.bf16.msra.mxu0 %v958
    %2595 = vmatprep.subr.bf16.mxu0 %v963
    %2596 = vmatpush1.bf16.msra.mxu0 %v962
    %2597 = vmatprep.subr.bf16.mxu0 %v967
    %2598 = vmatpush1.bf16.msra.mxu0 %v966
    %2599 = vmatprep.subr.bf16.mxu0 %v971
    %2600 = vmatpush1.bf16.msra.mxu0 %v970
    %2601 = vmatprep.subr.bf16.mxu0 0
    %2602 = vmatpush1.bf16.msra.mxu0 0
    %2603 = vmatprep.subr.bf16.mxu0 0
    %2604 = vmatpush1.bf16.msra.mxu0 0
    %2605 = vmatprep.subr.bf16.mxu0 0
    %2606 = vmatpush1.bf16.msra.mxu0 0
    %2607 = vmatprep.subr.bf16.mxu0 0
    %2608 = vmatpush1.bf16.msra.mxu0 0
    %2609 = vmatprep.subr.bf16.mxu0 0
    %2610 = vmatpush1.bf16.msra.mxu0 0
    %2611 = vmatprep.subr.bf16.mxu0 0
    %2612 = vmatpush1.bf16.msra.mxu0 0
    %2613 = vmatprep.subr.bf16.mxu0 0
    %2614 = vmatpush1.bf16.msra.mxu0 0
    %2615 = vmatprep.subr.bf16.mxu0 0
    %2616 = vmatpush1.bf16.msra.mxu0 0
    %2617 = vmatprep.mubr.bf16.mxu0 0
    %2618 = vmatmul.mubr.bf16.gmra.mrb[0].mxu0 %v2584
    %v2619 = vpop.f32.mrb[0].mxu0
    %v2620 = vadd.f32 0.0, %v2619
    %v2621 = vpop.f32.mrb[0].mxu0
    %v2622 = vadd.f32 0.0, %v2621
    %v2623 = vpop.f32.mrb[0].mxu0
    %v2624 = vpop.f32.mrb[0].mxu0
    %2625 = vdwg.mxu0
    %2626 = vmatprep.subr.bf16.mxu0 %v945
    %2627 = vmatpush1.bf16.msra.mxu0 %v944
    %2628 = vmatprep.subr.bf16.mxu0 %v949
    %2629 = vmatpush1.bf16.msra.mxu0 %v948
    %2630 = vmatprep.subr.bf16.mxu0 %v953
    %2631 = vmatpush1.bf16.msra.mxu0 %v952
    %2632 = vmatprep.subr.bf16.mxu0 %v957
    %2633 = vmatpush1.bf16.msra.mxu0 %v956
    %2634 = vmatprep.subr.bf16.mxu0 %v961
    %2635 = vmatpush1.bf16.msra.mxu0 %v960
    %2636 = vmatprep.subr.bf16.mxu0 %v965
    %2637 = vmatpush1.bf16.msra.mxu0 %v964
    %2638 = vmatprep.subr.bf16.mxu0 %v969
    %2639 = vmatpush1.bf16.msra.mxu0 %v968
    %2640 = vmatprep.subr.bf16.mxu0 %v973
    %2641 = vmatpush1.bf16.msra.mxu0 %v972
    %2642 = vmatprep.subr.bf16.mxu0 0
    %2643 = vmatpush1.bf16.msra.mxu0 0
    %2644 = vmatprep.subr.bf16.mxu0 0
    %2645 = vmatpush1.bf16.msra.mxu0 0
    %2646 = vmatprep.subr.bf16.mxu0 0
    %2647 = vmatpush1.bf16.msra.mxu0 0
    %2648 = vmatprep.subr.bf16.mxu0 0
    %2649 = vmatpush1.bf16.msra.mxu0 0
    %2650 = vmatprep.subr.bf16.mxu0 0
    %2651 = vmatpush1.bf16.msra.mxu0 0
    %2652 = vmatprep.subr.bf16.mxu0 0
    %2653 = vmatpush1.bf16.msra.mxu0 0
    %2654 = vmatprep.subr.bf16.mxu0 0
    %2655 = vmatpush1.bf16.msra.mxu0 0
    %2656 = vmatprep.subr.bf16.mxu0 0
    %2657 = vmatpush1.bf16.msra.mxu0 0
    %2658 = vmatprep.mubr.bf16.mxu0 0
    %2659 = vmatmul.mubr.bf16.gmra.mrb[0].mxu0 %v2584
    %v2660 = vpop.f32.mrb[0].mxu0
    %v2661 = vadd.f32 0.0, %v2660
    %v2662 = vpop.f32.mrb[0].mxu0
    %v2663 = vadd.f32 0.0, %v2662
    %v2664 = vpop.f32.mrb[0].mxu0
    %v2665 = vpop.f32.mrb[0].mxu0
    %2666 = vdwg.mxu0
    %v2669 = vunpack.c.l.b16 %v2582
    %v2670 = vunpack.c.l.b16 %v2583
    %v2671 = vrot.slane %v2669, 4
    %v2672 = vrot.slane %v2670, 3
    %v2673 = vsel %vm1093, %v2672, %v2671
    %v2674 = vpack.c.b16 %v2673, %v2673
    %2676 = vmatprep.subr.bf16.mxu0 %v1194
    %2677 = vmatpush1.bf16.msra.mxu0 %v1193
    %2678 = vmatprep.subr.bf16.mxu0 %v1198
    %2679 = vmatpush1.bf16.msra.mxu0 %v1197
    %2680 = vmatprep.subr.bf16.mxu0 %v1202
    %2681 = vmatpush1.bf16.msra.mxu0 %v1201
    %2682 = vmatprep.subr.bf16.mxu0 %v1206
    %2683 = vmatpush1.bf16.msra.mxu0 %v1205
    %2684 = vmatprep.subr.bf16.mxu0 %v1210
    %2685 = vmatpush1.bf16.msra.mxu0 %v1209
    %2686 = vmatprep.subr.bf16.mxu0 %v1214
    %2687 = vmatpush1.bf16.msra.mxu0 %v1213
    %2688 = vmatprep.subr.bf16.mxu0 %v1218
    %2689 = vmatpush1.bf16.msra.mxu0 %v1217
    %2690 = vmatprep.subr.bf16.mxu0 %v1222
    %2691 = vmatpush1.bf16.msra.mxu0 %v1221
    %2692 = vmatprep.subr.bf16.mxu0 0
    %2693 = vmatpush1.bf16.msra.mxu0 0
    %2694 = vmatprep.subr.bf16.mxu0 0
    %2695 = vmatpush1.bf16.msra.mxu0 0
    %2696 = vmatprep.subr.bf16.mxu0 0
    %2697 = vmatpush1.bf16.msra.mxu0 0
    %2698 = vmatprep.subr.bf16.mxu0 0
    %2699 = vmatpush1.bf16.msra.mxu0 0
    %2700 = vmatprep.subr.bf16.mxu0 0
    %2701 = vmatpush1.bf16.msra.mxu0 0
    %2702 = vmatprep.subr.bf16.mxu0 0
    %2703 = vmatpush1.bf16.msra.mxu0 0
    %2704 = vmatprep.subr.bf16.mxu0 0
    %2705 = vmatpush1.bf16.msra.mxu0 0
    %2706 = vmatprep.subr.bf16.mxu0 0
    %2707 = vmatpush1.bf16.msra.mxu0 0
    %2708 = vmatprep.mubr.bf16.mxu0 0
    %2709 = vmatmul.mubr.bf16.gmra.mrb[0].mxu0 %v2674
    %v2710 = vpop.f32.mrb[0].mxu0
    %v2711 = vadd.f32 %v2620, %v2710
    %v2712 = vpop.f32.mrb[0].mxu0
    %v2713 = vadd.f32 %v2622, %v2712
    %v2714 = vpop.f32.mrb[0].mxu0
    %v2715 = vpop.f32.mrb[0].mxu0
    %2716 = vdwg.mxu0
    %2717 = vmatprep.subr.bf16.mxu0 %v1196
    %2718 = vmatpush1.bf16.msra.mxu0 %v1195
    %2719 = vmatprep.subr.bf16.mxu0 %v1200
    %2720 = vmatpush1.bf16.msra.mxu0 %v1199
    %2721 = vmatprep.subr.bf16.mxu0 %v1204
    %2722 = vmatpush1.bf16.msra.mxu0 %v1203
    %2723 = vmatprep.subr.bf16.mxu0 %v1208
    %2724 = vmatpush1.bf16.msra.mxu0 %v1207
    %2725 = vmatprep.subr.bf16.mxu0 %v1212
    %2726 = vmatpush1.bf16.msra.mxu0 %v1211
    %2727 = vmatprep.subr.bf16.mxu0 %v1216
    %2728 = vmatpush1.bf16.msra.mxu0 %v1215
    %2729 = vmatprep.subr.bf16.mxu0 %v1220
    %2730 = vmatpush1.bf16.msra.mxu0 %v1219
    %2731 = vmatprep.subr.bf16.mxu0 %v1224
    %2732 = vmatpush1.bf16.msra.mxu0 %v1223
    %2733 = vmatprep.subr.bf16.mxu0 0
    %2734 = vmatpush1.bf16.msra.mxu0 0
    %2735 = vmatprep.subr.bf16.mxu0 0
    %2736 = vmatpush1.bf16.msra.mxu0 0
    %2737 = vmatprep.subr.bf16.mxu0 0
    %2738 = vmatpush1.bf16.msra.mxu0 0
    %2739 = vmatprep.subr.bf16.mxu0 0
    %2740 = vmatpush1.bf16.msra.mxu0 0
    %2741 = vmatprep.subr.bf16.mxu0 0
    %2742 = vmatpush1.bf16.msra.mxu0 0
    %2743 = vmatprep.subr.bf16.mxu0 0
    %2744 = vmatpush1.bf16.msra.mxu0 0
    %2745 = vmatprep.subr.bf16.mxu0 0
    %2746 = vmatpush1.bf16.msra.mxu0 0
    %2747 = vmatprep.subr.bf16.mxu0 0
    %2748 = vmatpush1.bf16.msra.mxu0 0
    %2749 = vmatprep.mubr.bf16.mxu0 0
    %2750 = vmatmul.mubr.bf16.gmra.mrb[0].mxu0 %v2674
    %v2751 = vpop.f32.mrb[0].mxu0
    %v2752 = vadd.f32 %v2661, %v2751
    %v2753 = vpop.f32.mrb[0].mxu0
    %v2754 = vadd.f32 %v2663, %v2753
    %v2755 = vpop.f32.mrb[0].mxu0
    %v2756 = vpop.f32.mrb[0].mxu0
    %2757 = vdwg.mxu0
    %v2758 = vadd.f32 %v2711, %v525
    %v2759 = vadd.f32 %v2713, %v529
    %v2760 = vadd.f32 %v2752, %v533
    %v2761 = vadd.f32 %v2754, %v537
    %v2762 = vxor.u32 %v2758, 2147483648
    %v2763 = vxor.u32 %v2759, 2147483648
    %v2764 = vmul.f32 %v2762, 1.442695
    %v2765 = vpow.pop %v2764
    %v2766 = vmul.f32 %v2763, 1.442695
    %v2767 = vpow.pop %v2766
    %v2768 = vadd.f32 %v2765, 1.0
    %v2769 = vadd.f32 %v2767, 1.0
    %v2770 = vrcp.pop %v2768
    %v2771 = vmul.f32 1.0, %v2770
    %v2772 = vrcp.pop %v2769
    %v2773 = vmul.f32 1.0, %v2772
    %v2774 = vmul.f32 %v2771, %v2761
    %v2775 = vadd.f32 %v2760, %v2774
    %v2776 = vtanh.pop %v2775
    %v2777 = vsub.f32 %v2423, %v2776
    %v2778 = vmul.f32 %v2773, %v2777
    %v2779 = vadd.f32 %v2776, %v2778
    %2780 = vmatprep.subr.bf16.mxu0 %v639
    %2781 = vmatpush1.bf16.msra.mxu0 %v638
    %2782 = vmatprep.subr.bf16.mxu0 %v643
    %2783 = vmatpush1.bf16.msra.mxu0 %v642
    %2784 = vmatprep.subr.bf16.mxu0 %v647
    %2785 = vmatpush1.bf16.msra.mxu0 %v646
    %2786 = vmatprep.subr.bf16.mxu0 %v651
    %2787 = vmatpush1.bf16.msra.mxu0 %v650
    %2788 = vmatprep.subr.bf16.mxu0 %v655
    %2789 = vmatpush1.bf16.msra.mxu0 %v654
    %2790 = vmatprep.subr.bf16.mxu0 %v659
    %2791 = vmatpush1.bf16.msra.mxu0 %v658
    %2792 = vmatprep.subr.bf16.mxu0 %v663
    %2793 = vmatpush1.bf16.msra.mxu0 %v662
    %2794 = vmatprep.subr.bf16.mxu0 %v667
    %2795 = vmatpush1.bf16.msra.mxu0 %v666
    %2796 = vmatprep.subr.bf16.mxu0 0
    %2797 = vmatpush1.bf16.msra.mxu0 0
    %2798 = vmatprep.subr.bf16.mxu0 0
    %2799 = vmatpush1.bf16.msra.mxu0 0
    %2800 = vmatprep.subr.bf16.mxu0 0
    %2801 = vmatpush1.bf16.msra.mxu0 0
    %2802 = vmatprep.subr.bf16.mxu0 0
    %2803 = vmatpush1.bf16.msra.mxu0 0
    %2804 = vmatprep.subr.bf16.mxu0 0
    %2805 = vmatpush1.bf16.msra.mxu0 0
    %2806 = vmatprep.subr.bf16.mxu0 0
    %2807 = vmatpush1.bf16.msra.mxu0 0
    %2808 = vmatprep.subr.bf16.mxu0 0
    %2809 = vmatpush1.bf16.msra.mxu0 0
    %2810 = vmatprep.subr.bf16.mxu0 0
    %2811 = vmatpush1.bf16.msra.mxu0 0
    %2812 = vmatprep.mubr.bf16.mxu0 0
    %2813 = vmatmul.mubr.bf16.gmra.mrb[0].mxu0 %v2674
    %v2814 = vpop.f32.mrb[0].mxu0
    %v2815 = vadd.f32 0.0, %v2814
    %v2816 = vpop.f32.mrb[0].mxu0
    %v2817 = vadd.f32 0.0, %v2816
    %v2818 = vpop.f32.mrb[0].mxu0
    %v2819 = vpop.f32.mrb[0].mxu0
    %2820 = vdwg.mxu0
    %2821 = vmatprep.subr.bf16.mxu0 %v641
    %2822 = vmatpush1.bf16.msra.mxu0 %v640
    %2823 = vmatprep.subr.bf16.mxu0 %v645
    %2824 = vmatpush1.bf16.msra.mxu0 %v644
    %2825 = vmatprep.subr.bf16.mxu0 %v649
    %2826 = vmatpush1.bf16.msra.mxu0 %v648
    %2827 = vmatprep.subr.bf16.mxu0 %v653
    %2828 = vmatpush1.bf16.msra.mxu0 %v652
    %2829 = vmatprep.subr.bf16.mxu0 %v657
    %2830 = vmatpush1.bf16.msra.mxu0 %v656
    %2831 = vmatprep.subr.bf16.mxu0 %v661
    %2832 = vmatpush1.bf16.msra.mxu0 %v660
    %2833 = vmatprep.subr.bf16.mxu0 %v665
    %2834 = vmatpush1.bf16.msra.mxu0 %v664
    %2835 = vmatprep.subr.bf16.mxu0 %v669
    %2836 = vmatpush1.bf16.msra.mxu0 %v668
    %2837 = vmatprep.subr.bf16.mxu0 0
    %2838 = vmatpush1.bf16.msra.mxu0 0
    %2839 = vmatprep.subr.bf16.mxu0 0
    %2840 = vmatpush1.bf16.msra.mxu0 0
    %2841 = vmatprep.subr.bf16.mxu0 0
    %2842 = vmatpush1.bf16.msra.mxu0 0
    %2843 = vmatprep.subr.bf16.mxu0 0
    %2844 = vmatpush1.bf16.msra.mxu0 0
    %2845 = vmatprep.subr.bf16.mxu0 0
    %2846 = vmatpush1.bf16.msra.mxu0 0
    %2847 = vmatprep.subr.bf16.mxu0 0
    %2848 = vmatpush1.bf16.msra.mxu0 0
    %2849 = vmatprep.subr.bf16.mxu0 0
    %2850 = vmatpush1.bf16.msra.mxu0 0
    %2851 = vmatprep.subr.bf16.mxu0 0
    %2852 = vmatpush1.bf16.msra.mxu0 0
    %2853 = vmatprep.mubr.bf16.mxu0 0
    %2854 = vmatmul.mubr.bf16.gmra.mrb[0].mxu0 %v2674
    %v2855 = vpop.f32.mrb[0].mxu0
    %v2856 = vadd.f32 0.0, %v2855
    %v2857 = vpop.f32.mrb[0].mxu0
    %v2858 = vadd.f32 0.0, %v2857
    %v2859 = vpop.f32.mrb[0].mxu0
    %v2860 = vpop.f32.mrb[0].mxu0
    %2861 = vdwg.mxu0
    %v2866 = vrot.slane %v2815, 3
    %v2867 = vrot.slane %v2817, 3
    %v2868 = vrot.slane %v2856, 3
    %v2869 = vrot.slane %v2858, 3
    %v2870 = vrot.slane %v2815, 4
    %v2871 = vrot.slane %v2817, 4
    %v2872 = vrot.slane %v2856, 4
    %v2873 = vrot.slane %v2858, 4
    %v2882 = vadd.f32 %v353, %v2866
    %v2883 = vadd.f32 %v355, %v2867
    %v2884 = vadd.f32 %v406, %v2868
    %v2885 = vadd.f32 %v408, %v2869
    %v2886 = vadd.f32 %v363, %v2870
    %v2887 = vadd.f32 %v365, %v2871
    %v2888 = vadd.f32 %v416, %v2872
    %v2889 = vadd.f32 %v418, %v2873
    %v2890 = vxor.u32 %v2882, 2147483648
    %v2891 = vxor.u32 %v2883, 2147483648
    %v2892 = vxor.u32 %v2886, 2147483648
    %v2893 = vxor.u32 %v2887, 2147483648
    %v2894 = vmul.f32 %v2890, 1.442695
    %v2895 = vpow.pop %v2894
    %v2896 = vmul.f32 %v2891, 1.442695
    %v2897 = vpow.pop %v2896
    %v2898 = vmul.f32 %v2892, 1.442695
    %v2899 = vpow.pop %v2898
    %v2900 = vmul.f32 %v2893, 1.442695
    %v2901 = vpow.pop %v2900
    %v2902 = vadd.f32 %v2895, 1.0
    %v2903 = vadd.f32 %v2897, 1.0
    %v2904 = vadd.f32 %v2899, 1.0
    %v2905 = vadd.f32 %v2901, 1.0
    %v2906 = vrcp.pop %v2902
    %v2907 = vmul.f32 1.0, %v2906
    %v2908 = vrcp.pop %v2903
    %v2909 = vmul.f32 1.0, %v2908
    %v2910 = vrcp.pop %v2904
    %v2911 = vmul.f32 1.0, %v2910
    %v2912 = vrcp.pop %v2905
    %v2913 = vmul.f32 1.0, %v2912
    %v2914 = vmul.f32 %v2907, %v2885
    %v2915 = vmul.f32 %v2911, %v2889
    %v2916 = vadd.f32 %v2884, %v2914
    %v2917 = vadd.f32 %v2888, %v2915
    %v2918 = vtanh.pop %v2916
    %v2919 = vtanh.pop %v2917
    %v2922 = vrot.slane %v2918, 1
    %v2923 = vrot.slane %v2919, 1
    %v2926 = vsub.f32 %v2580, %v2922
    %v2927 = vsub.f32 %v2581, %v2923
    %v2930 = vrot.slane %v2926, 7
    %v2931 = vrot.slane %v2927, 7
    %v2934 = vmul.f32 %v2909, %v2930
    %v2935 = vmul.f32 %v2913, %v2931
    %v2936 = vadd.f32 %v2918, %v2934
    %v2937 = vadd.f32 %v2919, %v2935
    %v2938 = vpack.c.bf16 %v2936, %v2936
    %v2939 = vpack.c.bf16 %v2937, %v2937
    %v2940 = vpack.c.bf16 %v2779, %v2779
    %2941 = vmatprep.subr.bf16.mxu0 %v943
    %2942 = vmatpush1.bf16.msra.mxu0 %v942
    %2943 = vmatprep.subr.bf16.mxu0 %v947
    %2944 = vmatpush1.bf16.msra.mxu0 %v946
    %2945 = vmatprep.subr.bf16.mxu0 %v951
    %2946 = vmatpush1.bf16.msra.mxu0 %v950
    %2947 = vmatprep.subr.bf16.mxu0 %v955
    %2948 = vmatpush1.bf16.msra.mxu0 %v954
    %2949 = vmatprep.subr.bf16.mxu0 %v959
    %2950 = vmatpush1.bf16.msra.mxu0 %v958
    %2951 = vmatprep.subr.bf16.mxu0 %v963
    %2952 = vmatpush1.bf16.msra.mxu0 %v962
    %2953 = vmatprep.subr.bf16.mxu0 %v967
    %2954 = vmatpush1.bf16.msra.mxu0 %v966
    %2955 = vmatprep.subr.bf16.mxu0 %v971
    %2956 = vmatpush1.bf16.msra.mxu0 %v970
    %2957 = vmatprep.subr.bf16.mxu0 0
    %2958 = vmatpush1.bf16.msra.mxu0 0
    %2959 = vmatprep.subr.bf16.mxu0 0
    %2960 = vmatpush1.bf16.msra.mxu0 0
    %2961 = vmatprep.subr.bf16.mxu0 0
    %2962 = vmatpush1.bf16.msra.mxu0 0
    %2963 = vmatprep.subr.bf16.mxu0 0
    %2964 = vmatpush1.bf16.msra.mxu0 0
    %2965 = vmatprep.subr.bf16.mxu0 0
    %2966 = vmatpush1.bf16.msra.mxu0 0
    %2967 = vmatprep.subr.bf16.mxu0 0
    %2968 = vmatpush1.bf16.msra.mxu0 0
    %2969 = vmatprep.subr.bf16.mxu0 0
    %2970 = vmatpush1.bf16.msra.mxu0 0
    %2971 = vmatprep.subr.bf16.mxu0 0
    %2972 = vmatpush1.bf16.msra.mxu0 0
    %2973 = vmatprep.mubr.bf16.mxu0 0
    %2974 = vmatmul.mubr.bf16.gmra.mrb[0].mxu0 %v2940
    %v2975 = vpop.f32.mrb[0].mxu0
    %v2976 = vadd.f32 0.0, %v2975
    %v2977 = vpop.f32.mrb[0].mxu0
    %v2978 = vadd.f32 0.0, %v2977
    %v2979 = vpop.f32.mrb[0].mxu0
    %v2980 = vpop.f32.mrb[0].mxu0
    %2981 = vdwg.mxu0
    %2982 = vmatprep.subr.bf16.mxu0 %v945
    %2983 = vmatpush1.bf16.msra.mxu0 %v944
    %2984 = vmatprep.subr.bf16.mxu0 %v949
    %2985 = vmatpush1.bf16.msra.mxu0 %v948
    %2986 = vmatprep.subr.bf16.mxu0 %v953
    %2987 = vmatpush1.bf16.msra.mxu0 %v952
    %2988 = vmatprep.subr.bf16.mxu0 %v957
    %2989 = vmatpush1.bf16.msra.mxu0 %v956
    %2990 = vmatprep.subr.bf16.mxu0 %v961
    %2991 = vmatpush1.bf16.msra.mxu0 %v960
    %2992 = vmatprep.subr.bf16.mxu0 %v965
    %2993 = vmatpush1.bf16.msra.mxu0 %v964
    %2994 = vmatprep.subr.bf16.mxu0 %v969
    %2995 = vmatpush1.bf16.msra.mxu0 %v968
    %2996 = vmatprep.subr.bf16.mxu0 %v973
    %2997 = vmatpush1.bf16.msra.mxu0 %v972
    %2998 = vmatprep.subr.bf16.mxu0 0
    %2999 = vmatpush1.bf16.msra.mxu0 0
    %3000 = vmatprep.subr.bf16.mxu0 0
    %3001 = vmatpush1.bf16.msra.mxu0 0
    %3002 = vmatprep.subr.bf16.mxu0 0
    %3003 = vmatpush1.bf16.msra.mxu0 0
    %3004 = vmatprep.subr.bf16.mxu0 0
    %3005 = vmatpush1.bf16.msra.mxu0 0
    %3006 = vmatprep.subr.bf16.mxu0 0
    %3007 = vmatpush1.bf16.msra.mxu0 0
    %3008 = vmatprep.subr.bf16.mxu0 0
    %3009 = vmatpush1.bf16.msra.mxu0 0
    %3010 = vmatprep.subr.bf16.mxu0 0
    %3011 = vmatpush1.bf16.msra.mxu0 0
    %3012 = vmatprep.subr.bf16.mxu0 0
    %3013 = vmatpush1.bf16.msra.mxu0 0
    %3014 = vmatprep.mubr.bf16.mxu0 0
    %3015 = vmatmul.mubr.bf16.gmra.mrb[0].mxu0 %v2940
    %v3016 = vpop.f32.mrb[0].mxu0
    %v3017 = vadd.f32 0.0, %v3016
    %v3018 = vpop.f32.mrb[0].mxu0
    %v3019 = vadd.f32 0.0, %v3018
    %v3020 = vpop.f32.mrb[0].mxu0
    %v3021 = vpop.f32.mrb[0].mxu0
    %3022 = vdwg.mxu0
    %v3025 = vunpack.c.l.b16 %v2938
    %v3026 = vunpack.c.l.b16 %v2939
    %v3027 = vrot.slane %v3025, 5
    %v3028 = vrot.slane %v3026, 4
    %v3029 = vsel %vm1093, %v3028, %v3027
    %v3030 = vpack.c.b16 %v3029, %v3029
    %3032 = vmatprep.subr.bf16.mxu0 %v1194
    %3033 = vmatpush1.bf16.msra.mxu0 %v1193
    %3034 = vmatprep.subr.bf16.mxu0 %v1198
    %3035 = vmatpush1.bf16.msra.mxu0 %v1197
    %3036 = vmatprep.subr.bf16.mxu0 %v1202
    %3037 = vmatpush1.bf16.msra.mxu0 %v1201
    %3038 = vmatprep.subr.bf16.mxu0 %v1206
    %3039 = vmatpush1.bf16.msra.mxu0 %v1205
    %3040 = vmatprep.subr.bf16.mxu0 %v1210
    %3041 = vmatpush1.bf16.msra.mxu0 %v1209
    %3042 = vmatprep.subr.bf16.mxu0 %v1214
    %3043 = vmatpush1.bf16.msra.mxu0 %v1213
    %3044 = vmatprep.subr.bf16.mxu0 %v1218
    %3045 = vmatpush1.bf16.msra.mxu0 %v1217
    %3046 = vmatprep.subr.bf16.mxu0 %v1222
    %3047 = vmatpush1.bf16.msra.mxu0 %v1221
    %3048 = vmatprep.subr.bf16.mxu0 0
    %3049 = vmatpush1.bf16.msra.mxu0 0
    %3050 = vmatprep.subr.bf16.mxu0 0
    %3051 = vmatpush1.bf16.msra.mxu0 0
    %3052 = vmatprep.subr.bf16.mxu0 0
    %3053 = vmatpush1.bf16.msra.mxu0 0
    %3054 = vmatprep.subr.bf16.mxu0 0
    %3055 = vmatpush1.bf16.msra.mxu0 0
    %3056 = vmatprep.subr.bf16.mxu0 0
    %3057 = vmatpush1.bf16.msra.mxu0 0
    %3058 = vmatprep.subr.bf16.mxu0 0
    %3059 = vmatpush1.bf16.msra.mxu0 0
    %3060 = vmatprep.subr.bf16.mxu0 0
    %3061 = vmatpush1.bf16.msra.mxu0 0
    %3062 = vmatprep.subr.bf16.mxu0 0
    %3063 = vmatpush1.bf16.msra.mxu0 0
    %3064 = vmatprep.mubr.bf16.mxu0 0
    %3065 = vmatmul.mubr.bf16.gmra.mrb[0].mxu0 %v3030
    %v3066 = vpop.f32.mrb[0].mxu0
    %v3067 = vadd.f32 %v2976, %v3066
    %v3068 = vpop.f32.mrb[0].mxu0
    %v3069 = vadd.f32 %v2978, %v3068
    %v3070 = vpop.f32.mrb[0].mxu0
    %v3071 = vpop.f32.mrb[0].mxu0
    %3072 = vdwg.mxu0
    %3073 = vmatprep.subr.bf16.mxu0 %v1196
    %3074 = vmatpush1.bf16.msra.mxu0 %v1195
    %3075 = vmatprep.subr.bf16.mxu0 %v1200
    %3076 = vmatpush1.bf16.msra.mxu0 %v1199
    %3077 = vmatprep.subr.bf16.mxu0 %v1204
    %3078 = vmatpush1.bf16.msra.mxu0 %v1203
    %3079 = vmatprep.subr.bf16.mxu0 %v1208
    %3080 = vmatpush1.bf16.msra.mxu0 %v1207
    %3081 = vmatprep.subr.bf16.mxu0 %v1212
    %3082 = vmatpush1.bf16.msra.mxu0 %v1211
    %3083 = vmatprep.subr.bf16.mxu0 %v1216
    %3084 = vmatpush1.bf16.msra.mxu0 %v1215
    %3085 = vmatprep.subr.bf16.mxu0 %v1220
    %3086 = vmatpush1.bf16.msra.mxu0 %v1219
    %3087 = vmatprep.subr.bf16.mxu0 %v1224
    %3088 = vmatpush1.bf16.msra.mxu0 %v1223
    %3089 = vmatprep.subr.bf16.mxu0 0
    %3090 = vmatpush1.bf16.msra.mxu0 0
    %3091 = vmatprep.subr.bf16.mxu0 0
    %3092 = vmatpush1.bf16.msra.mxu0 0
    %3093 = vmatprep.subr.bf16.mxu0 0
    %3094 = vmatpush1.bf16.msra.mxu0 0
    %3095 = vmatprep.subr.bf16.mxu0 0
    %3096 = vmatpush1.bf16.msra.mxu0 0
    %3097 = vmatprep.subr.bf16.mxu0 0
    %3098 = vmatpush1.bf16.msra.mxu0 0
    %3099 = vmatprep.subr.bf16.mxu0 0
    %3100 = vmatpush1.bf16.msra.mxu0 0
    %3101 = vmatprep.subr.bf16.mxu0 0
    %3102 = vmatpush1.bf16.msra.mxu0 0
    %3103 = vmatprep.subr.bf16.mxu0 0
    %3104 = vmatpush1.bf16.msra.mxu0 0
    %3105 = vmatprep.mubr.bf16.mxu0 0
    %3106 = vmatmul.mubr.bf16.gmra.mrb[0].mxu0 %v3030
    %v3107 = vpop.f32.mrb[0].mxu0
    %v3108 = vadd.f32 %v3017, %v3107
    %v3109 = vpop.f32.mrb[0].mxu0
    %v3110 = vadd.f32 %v3019, %v3109
    %v3111 = vpop.f32.mrb[0].mxu0
    %v3112 = vpop.f32.mrb[0].mxu0
    %3113 = vdwg.mxu0
    %v3114 = vadd.f32 %v3067, %v525
    %v3115 = vadd.f32 %v3069, %v529
    %v3116 = vadd.f32 %v3108, %v533
    %v3117 = vadd.f32 %v3110, %v537
    %v3118 = vxor.u32 %v3114, 2147483648
    %v3119 = vxor.u32 %v3115, 2147483648
    %v3120 = vmul.f32 %v3118, 1.442695
    %v3121 = vpow.pop %v3120
    %v3122 = vmul.f32 %v3119, 1.442695
    %v3123 = vpow.pop %v3122
    %v3124 = vadd.f32 %v3121, 1.0
    %v3125 = vadd.f32 %v3123, 1.0
    %v3126 = vrcp.pop %v3124
    %v3127 = vmul.f32 1.0, %v3126
    %v3128 = vrcp.pop %v3125
    %v3129 = vmul.f32 1.0, %v3128
    %v3130 = vmul.f32 %v3127, %v3117
    %v3131 = vadd.f32 %v3116, %v3130
    %v3132 = vtanh.pop %v3131
    %v3133 = vsub.f32 %v2779, %v3132
    %v3134 = vmul.f32 %v3129, %v3133
    %v3135 = vadd.f32 %v3132, %v3134
    %3136 = vmatprep.subr.bf16.mxu0 %v639
    %3137 = vmatpush1.bf16.msra.mxu0 %v638
    %3138 = vmatprep.subr.bf16.mxu0 %v643
    %3139 = vmatpush1.bf16.msra.mxu0 %v642
    %3140 = vmatprep.subr.bf16.mxu0 %v647
    %3141 = vmatpush1.bf16.msra.mxu0 %v646
    %3142 = vmatprep.subr.bf16.mxu0 %v651
    %3143 = vmatpush1.bf16.msra.mxu0 %v650
    %3144 = vmatprep.subr.bf16.mxu0 %v655
    %3145 = vmatpush1.bf16.msra.mxu0 %v654
    %3146 = vmatprep.subr.bf16.mxu0 %v659
    %3147 = vmatpush1.bf16.msra.mxu0 %v658
    %3148 = vmatprep.subr.bf16.mxu0 %v663
    %3149 = vmatpush1.bf16.msra.mxu0 %v662
    %3150 = vmatprep.subr.bf16.mxu0 %v667
    %3151 = vmatpush1.bf16.msra.mxu0 %v666
    %3152 = vmatprep.subr.bf16.mxu0 0
    %3153 = vmatpush1.bf16.msra.mxu0 0
    %3154 = vmatprep.subr.bf16.mxu0 0
    %3155 = vmatpush1.bf16.msra.mxu0 0
    %3156 = vmatprep.subr.bf16.mxu0 0
    %3157 = vmatpush1.bf16.msra.mxu0 0
    %3158 = vmatprep.subr.bf16.mxu0 0
    %3159 = vmatpush1.bf16.msra.mxu0 0
    %3160 = vmatprep.subr.bf16.mxu0 0
    %3161 = vmatpush1.bf16.msra.mxu0 0
    %3162 = vmatprep.subr.bf16.mxu0 0
    %3163 = vmatpush1.bf16.msra.mxu0 0
    %3164 = vmatprep.subr.bf16.mxu0 0
    %3165 = vmatpush1.bf16.msra.mxu0 0
    %3166 = vmatprep.subr.bf16.mxu0 0
    %3167 = vmatpush1.bf16.msra.mxu0 0
    %3168 = vmatprep.mubr.bf16.mxu0 0
    %3169 = vmatmul.mubr.bf16.gmra.mrb[0].mxu0 %v3030
    %v3170 = vpop.f32.mrb[0].mxu0
    %v3171 = vadd.f32 0.0, %v3170
    %v3172 = vpop.f32.mrb[0].mxu0
    %v3173 = vadd.f32 0.0, %v3172
    %v3174 = vpop.f32.mrb[0].mxu0
    %v3175 = vpop.f32.mrb[0].mxu0
    %3176 = vdwg.mxu0
    %3177 = vmatprep.subr.bf16.mxu0 %v641
    %3178 = vmatpush1.bf16.msra.mxu0 %v640
    %3179 = vmatprep.subr.bf16.mxu0 %v645
    %3180 = vmatpush1.bf16.msra.mxu0 %v644
    %3181 = vmatprep.subr.bf16.mxu0 %v649
    %3182 = vmatpush1.bf16.msra.mxu0 %v648
    %3183 = vmatprep.subr.bf16.mxu0 %v653
    %3184 = vmatpush1.bf16.msra.mxu0 %v652
    %3185 = vmatprep.subr.bf16.mxu0 %v657
    %3186 = vmatpush1.bf16.msra.mxu0 %v656
    %3187 = vmatprep.subr.bf16.mxu0 %v661
    %3188 = vmatpush1.bf16.msra.mxu0 %v660
    %3189 = vmatprep.subr.bf16.mxu0 %v665
    %3190 = vmatpush1.bf16.msra.mxu0 %v664
    %3191 = vmatprep.subr.bf16.mxu0 %v669
    %3192 = vmatpush1.bf16.msra.mxu0 %v668
    %3193 = vmatprep.subr.bf16.mxu0 0
    %3194 = vmatpush1.bf16.msra.mxu0 0
    %3195 = vmatprep.subr.bf16.mxu0 0
    %3196 = vmatpush1.bf16.msra.mxu0 0
    %3197 = vmatprep.subr.bf16.mxu0 0
    %3198 = vmatpush1.bf16.msra.mxu0 0
    %3199 = vmatprep.subr.bf16.mxu0 0
    %3200 = vmatpush1.bf16.msra.mxu0 0
    %3201 = vmatprep.subr.bf16.mxu0 0
    %3202 = vmatpush1.bf16.msra.mxu0 0
    %3203 = vmatprep.subr.bf16.mxu0 0
    %3204 = vmatpush1.bf16.msra.mxu0 0
    %3205 = vmatprep.subr.bf16.mxu0 0
    %3206 = vmatpush1.bf16.msra.mxu0 0
    %3207 = vmatprep.subr.bf16.mxu0 0
    %3208 = vmatpush1.bf16.msra.mxu0 0
    %3209 = vmatprep.mubr.bf16.mxu0 0
    %3210 = vmatmul.mubr.bf16.gmra.mrb[0].mxu0 %v3030
    %v3211 = vpop.f32.mrb[0].mxu0
    %v3212 = vadd.f32 0.0, %v3211
    %v3213 = vpop.f32.mrb[0].mxu0
    %v3214 = vadd.f32 0.0, %v3213
    %v3215 = vpop.f32.mrb[0].mxu0
    %v3216 = vpop.f32.mrb[0].mxu0
    %3217 = vdwg.mxu0
    %v3222 = vrot.slane %v3171, 2
    %v3223 = vrot.slane %v3173, 2
    %v3224 = vrot.slane %v3212, 2
    %v3225 = vrot.slane %v3214, 2
    %v3226 = vrot.slane %v3171, 3
    %v3227 = vrot.slane %v3173, 3
    %v3228 = vrot.slane %v3212, 3
    %v3229 = vrot.slane %v3214, 3
    %v3238 = vadd.f32 %v353, %v3222
    %v3239 = vadd.f32 %v355, %v3223
    %v3240 = vadd.f32 %v406, %v3224
    %v3241 = vadd.f32 %v408, %v3225
    %v3242 = vadd.f32 %v363, %v3226
    %v3243 = vadd.f32 %v365, %v3227
    %v3244 = vadd.f32 %v416, %v3228
    %v3245 = vadd.f32 %v418, %v3229
    %v3246 = vxor.u32 %v3238, 2147483648
    %v3247 = vxor.u32 %v3239, 2147483648
    %v3248 = vxor.u32 %v3242, 2147483648
    %v3249 = vxor.u32 %v3243, 2147483648
    %v3250 = vmul.f32 %v3246, 1.442695
    %v3251 = vpow.pop %v3250
    %v3252 = vmul.f32 %v3247, 1.442695
    %v3253 = vpow.pop %v3252
    %v3254 = vmul.f32 %v3248, 1.442695
    %v3255 = vpow.pop %v3254
    %v3256 = vmul.f32 %v3249, 1.442695
    %v3257 = vpow.pop %v3256
    %v3258 = vadd.f32 %v3251, 1.0
    %v3259 = vadd.f32 %v3253, 1.0
    %v3260 = vadd.f32 %v3255, 1.0
    %v3261 = vadd.f32 %v3257, 1.0
    %v3262 = vrcp.pop %v3258
    %v3263 = vmul.f32 1.0, %v3262
    %v3264 = vrcp.pop %v3259
    %v3265 = vmul.f32 1.0, %v3264
    %v3266 = vrcp.pop %v3260
    %v3267 = vmul.f32 1.0, %v3266
    %v3268 = vrcp.pop %v3261
    %v3269 = vmul.f32 1.0, %v3268
    %v3270 = vmul.f32 %v3263, %v3241
    %v3271 = vmul.f32 %v3267, %v3245
    %v3272 = vadd.f32 %v3240, %v3270
    %v3273 = vadd.f32 %v3244, %v3271
    %v3274 = vtanh.pop %v3272
    %v3275 = vtanh.pop %v3273
    %v3278 = vrot.slane %v3274, 1
    %v3279 = vrot.slane %v3275, 1
    %v3282 = vsub.f32 %v2936, %v3278
    %v3283 = vsub.f32 %v2937, %v3279
    %v3286 = vrot.slane %v3282, 7
    %v3287 = vrot.slane %v3283, 7
    %v3290 = vmul.f32 %v3265, %v3286
    %v3291 = vmul.f32 %v3269, %v3287
    %v3292 = vadd.f32 %v3274, %v3290
    %v3293 = vadd.f32 %v3275, %v3291
    %v3294 = vpack.c.bf16 %v3292, %v3292
    %v3295 = vpack.c.bf16 %v3293, %v3293
    %v3296 = vpack.c.bf16 %v3135, %v3135
    %3297 = vmatprep.subr.bf16.mxu0 %v943
    %3298 = vmatpush1.bf16.msra.mxu0 %v942
    %3299 = vmatprep.subr.bf16.mxu0 %v947
    %3300 = vmatpush1.bf16.msra.mxu0 %v946
    %3301 = vmatprep.subr.bf16.mxu0 %v951
    %3302 = vmatpush1.bf16.msra.mxu0 %v950
    %3303 = vmatprep.subr.bf16.mxu0 %v955
    %3304 = vmatpush1.bf16.msra.mxu0 %v954
    %3305 = vmatprep.subr.bf16.mxu0 %v959
    %3306 = vmatpush1.bf16.msra.mxu0 %v958
    %3307 = vmatprep.subr.bf16.mxu0 %v963
    %3308 = vmatpush1.bf16.msra.mxu0 %v962
    %3309 = vmatprep.subr.bf16.mxu0 %v967
    %3310 = vmatpush1.bf16.msra.mxu0 %v966
    %3311 = vmatprep.subr.bf16.mxu0 %v971
    %3312 = vmatpush1.bf16.msra.mxu0 %v970
    %3313 = vmatprep.subr.bf16.mxu0 0
    %3314 = vmatpush1.bf16.msra.mxu0 0
    %3315 = vmatprep.subr.bf16.mxu0 0
    %3316 = vmatpush1.bf16.msra.mxu0 0
    %3317 = vmatprep.subr.bf16.mxu0 0
    %3318 = vmatpush1.bf16.msra.mxu0 0
    %3319 = vmatprep.subr.bf16.mxu0 0
    %3320 = vmatpush1.bf16.msra.mxu0 0
    %3321 = vmatprep.subr.bf16.mxu0 0
    %3322 = vmatpush1.bf16.msra.mxu0 0
    %3323 = vmatprep.subr.bf16.mxu0 0
    %3324 = vmatpush1.bf16.msra.mxu0 0
    %3325 = vmatprep.subr.bf16.mxu0 0
    %3326 = vmatpush1.bf16.msra.mxu0 0
    %3327 = vmatprep.subr.bf16.mxu0 0
    %3328 = vmatpush1.bf16.msra.mxu0 0
    %3329 = vmatprep.mubr.bf16.mxu0 0
    %3330 = vmatmul.mubr.bf16.gmra.mrb[0].mxu0 %v3296
    %v3331 = vpop.f32.mrb[0].mxu0
    %v3332 = vadd.f32 0.0, %v3331
    %v3333 = vpop.f32.mrb[0].mxu0
    %v3334 = vadd.f32 0.0, %v3333
    %v3335 = vpop.f32.mrb[0].mxu0
    %v3336 = vpop.f32.mrb[0].mxu0
    %3337 = vdwg.mxu0
    %3338 = vmatprep.subr.bf16.mxu0 %v945
    %3339 = vmatpush1.bf16.msra.mxu0 %v944
    %3340 = vmatprep.subr.bf16.mxu0 %v949
    %3341 = vmatpush1.bf16.msra.mxu0 %v948
    %3342 = vmatprep.subr.bf16.mxu0 %v953
    %3343 = vmatpush1.bf16.msra.mxu0 %v952
    %3344 = vmatprep.subr.bf16.mxu0 %v957
    %3345 = vmatpush1.bf16.msra.mxu0 %v956
    %3346 = vmatprep.subr.bf16.mxu0 %v961
    %3347 = vmatpush1.bf16.msra.mxu0 %v960
    %3348 = vmatprep.subr.bf16.mxu0 %v965
    %3349 = vmatpush1.bf16.msra.mxu0 %v964
    %3350 = vmatprep.subr.bf16.mxu0 %v969
    %3351 = vmatpush1.bf16.msra.mxu0 %v968
    %3352 = vmatprep.subr.bf16.mxu0 %v973
    %3353 = vmatpush1.bf16.msra.mxu0 %v972
    %3354 = vmatprep.subr.bf16.mxu0 0
    %3355 = vmatpush1.bf16.msra.mxu0 0
    %3356 = vmatprep.subr.bf16.mxu0 0
    %3357 = vmatpush1.bf16.msra.mxu0 0
    %3358 = vmatprep.subr.bf16.mxu0 0
    %3359 = vmatpush1.bf16.msra.mxu0 0
    %3360 = vmatprep.subr.bf16.mxu0 0
    %3361 = vmatpush1.bf16.msra.mxu0 0
    %3362 = vmatprep.subr.bf16.mxu0 0
    %3363 = vmatpush1.bf16.msra.mxu0 0
    %3364 = vmatprep.subr.bf16.mxu0 0
    %3365 = vmatpush1.bf16.msra.mxu0 0
    %3366 = vmatprep.subr.bf16.mxu0 0
    %3367 = vmatpush1.bf16.msra.mxu0 0
    %3368 = vmatprep.subr.bf16.mxu0 0
    %3369 = vmatpush1.bf16.msra.mxu0 0
    %3370 = vmatprep.mubr.bf16.mxu0 0
    %3371 = vmatmul.mubr.bf16.gmra.mrb[0].mxu0 %v3296
    %v3372 = vpop.f32.mrb[0].mxu0
    %v3373 = vadd.f32 0.0, %v3372
    %v3374 = vpop.f32.mrb[0].mxu0
    %v3375 = vadd.f32 0.0, %v3374
    %v3376 = vpop.f32.mrb[0].mxu0
    %v3377 = vpop.f32.mrb[0].mxu0
    %3378 = vdwg.mxu0
    %v3381 = vunpack.c.l.b16 %v3294
    %v3382 = vunpack.c.l.b16 %v3295
    %v3383 = vrot.slane %v3381, 6
    %v3384 = vrot.slane %v3382, 5
    %v3385 = vsel %vm1093, %v3384, %v3383
    %v3386 = vpack.c.b16 %v3385, %v3385
    %3388 = vmatprep.subr.bf16.mxu0 %v1194
    %3389 = vmatpush1.bf16.msra.mxu0 %v1193
    %3390 = vmatprep.subr.bf16.mxu0 %v1198
    %3391 = vmatpush1.bf16.msra.mxu0 %v1197
    %3392 = vmatprep.subr.bf16.mxu0 %v1202
    %3393 = vmatpush1.bf16.msra.mxu0 %v1201
    %3394 = vmatprep.subr.bf16.mxu0 %v1206
    %3395 = vmatpush1.bf16.msra.mxu0 %v1205
    %3396 = vmatprep.subr.bf16.mxu0 %v1210
    %3397 = vmatpush1.bf16.msra.mxu0 %v1209
    %3398 = vmatprep.subr.bf16.mxu0 %v1214
    %3399 = vmatpush1.bf16.msra.mxu0 %v1213
    %3400 = vmatprep.subr.bf16.mxu0 %v1218
    %3401 = vmatpush1.bf16.msra.mxu0 %v1217
    %3402 = vmatprep.subr.bf16.mxu0 %v1222
    %3403 = vmatpush1.bf16.msra.mxu0 %v1221
    %3404 = vmatprep.subr.bf16.mxu0 0
    %3405 = vmatpush1.bf16.msra.mxu0 0
    %3406 = vmatprep.subr.bf16.mxu0 0
    %3407 = vmatpush1.bf16.msra.mxu0 0
    %3408 = vmatprep.subr.bf16.mxu0 0
    %3409 = vmatpush1.bf16.msra.mxu0 0
    %3410 = vmatprep.subr.bf16.mxu0 0
    %3411 = vmatpush1.bf16.msra.mxu0 0
    %3412 = vmatprep.subr.bf16.mxu0 0
    %3413 = vmatpush1.bf16.msra.mxu0 0
    %3414 = vmatprep.subr.bf16.mxu0 0
    %3415 = vmatpush1.bf16.msra.mxu0 0
    %3416 = vmatprep.subr.bf16.mxu0 0
    %3417 = vmatpush1.bf16.msra.mxu0 0
    %3418 = vmatprep.subr.bf16.mxu0 0
    %3419 = vmatpush1.bf16.msra.mxu0 0
    %3420 = vmatprep.mubr.bf16.mxu0 0
    %3421 = vmatmul.mubr.bf16.gmra.mrb[0].mxu0 %v3386
    %v3422 = vpop.f32.mrb[0].mxu0
    %v3423 = vadd.f32 %v3332, %v3422
    %v3424 = vpop.f32.mrb[0].mxu0
    %v3425 = vadd.f32 %v3334, %v3424
    %v3426 = vpop.f32.mrb[0].mxu0
    %v3427 = vpop.f32.mrb[0].mxu0
    %3428 = vdwg.mxu0
    %3429 = vmatprep.subr.bf16.mxu0 %v1196
    %3430 = vmatpush1.bf16.msra.mxu0 %v1195
    %3431 = vmatprep.subr.bf16.mxu0 %v1200
    %3432 = vmatpush1.bf16.msra.mxu0 %v1199
    %3433 = vmatprep.subr.bf16.mxu0 %v1204
    %3434 = vmatpush1.bf16.msra.mxu0 %v1203
    %3435 = vmatprep.subr.bf16.mxu0 %v1208
    %3436 = vmatpush1.bf16.msra.mxu0 %v1207
    %3437 = vmatprep.subr.bf16.mxu0 %v1212
    %3438 = vmatpush1.bf16.msra.mxu0 %v1211
    %3439 = vmatprep.subr.bf16.mxu0 %v1216
    %3440 = vmatpush1.bf16.msra.mxu0 %v1215
    %3441 = vmatprep.subr.bf16.mxu0 %v1220
    %3442 = vmatpush1.bf16.msra.mxu0 %v1219
    %3443 = vmatprep.subr.bf16.mxu0 %v1224
    %3444 = vmatpush1.bf16.msra.mxu0 %v1223
    %3445 = vmatprep.subr.bf16.mxu0 0
    %3446 = vmatpush1.bf16.msra.mxu0 0
    %3447 = vmatprep.subr.bf16.mxu0 0
    %3448 = vmatpush1.bf16.msra.mxu0 0
    %3449 = vmatprep.subr.bf16.mxu0 0
    %3450 = vmatpush1.bf16.msra.mxu0 0
    %3451 = vmatprep.subr.bf16.mxu0 0
    %3452 = vmatpush1.bf16.msra.mxu0 0
    %3453 = vmatprep.subr.bf16.mxu0 0
    %3454 = vmatpush1.bf16.msra.mxu0 0
    %3455 = vmatprep.subr.bf16.mxu0 0
    %3456 = vmatpush1.bf16.msra.mxu0 0
    %3457 = vmatprep.subr.bf16.mxu0 0
    %3458 = vmatpush1.bf16.msra.mxu0 0
    %3459 = vmatprep.subr.bf16.mxu0 0
    %3460 = vmatpush1.bf16.msra.mxu0 0
    %3461 = vmatprep.mubr.bf16.mxu0 0
    %3462 = vmatmul.mubr.bf16.gmra.mrb[0].mxu0 %v3386
    %v3463 = vpop.f32.mrb[0].mxu0
    %v3464 = vadd.f32 %v3373, %v3463
    %v3465 = vpop.f32.mrb[0].mxu0
    %v3466 = vadd.f32 %v3375, %v3465
    %v3467 = vpop.f32.mrb[0].mxu0
    %v3468 = vpop.f32.mrb[0].mxu0
    %3469 = vdwg.mxu0
    %v3470 = vadd.f32 %v3423, %v525
    %v3471 = vadd.f32 %v3425, %v529
    %v3472 = vadd.f32 %v3464, %v533
    %v3473 = vadd.f32 %v3466, %v537
    %v3474 = vxor.u32 %v3470, 2147483648
    %v3475 = vxor.u32 %v3471, 2147483648
    %v3476 = vmul.f32 %v3474, 1.442695
    %v3477 = vpow.pop %v3476
    %v3478 = vmul.f32 %v3475, 1.442695
    %v3479 = vpow.pop %v3478
    %v3480 = vadd.f32 %v3477, 1.0
    %v3481 = vadd.f32 %v3479, 1.0
    %v3482 = vrcp.pop %v3480
    %v3483 = vmul.f32 1.0, %v3482
    %v3484 = vrcp.pop %v3481
    %v3485 = vmul.f32 1.0, %v3484
    %v3486 = vmul.f32 %v3483, %v3473
    %v3487 = vadd.f32 %v3472, %v3486
    %v3488 = vtanh.pop %v3487
    %v3489 = vsub.f32 %v3135, %v3488
    %v3490 = vmul.f32 %v3485, %v3489
    %v3491 = vadd.f32 %v3488, %v3490
    %3492 = vmatprep.subr.bf16.mxu0 %v639
    %3493 = vmatpush1.bf16.msra.mxu0 %v638
    %3494 = vmatprep.subr.bf16.mxu0 %v643
    %3495 = vmatpush1.bf16.msra.mxu0 %v642
    %3496 = vmatprep.subr.bf16.mxu0 %v647
    %3497 = vmatpush1.bf16.msra.mxu0 %v646
    %3498 = vmatprep.subr.bf16.mxu0 %v651
    %3499 = vmatpush1.bf16.msra.mxu0 %v650
    %3500 = vmatprep.subr.bf16.mxu0 %v655
    %3501 = vmatpush1.bf16.msra.mxu0 %v654
    %3502 = vmatprep.subr.bf16.mxu0 %v659
    %3503 = vmatpush1.bf16.msra.mxu0 %v658
    %3504 = vmatprep.subr.bf16.mxu0 %v663
    %3505 = vmatpush1.bf16.msra.mxu0 %v662
    %3506 = vmatprep.subr.bf16.mxu0 %v667
    %3507 = vmatpush1.bf16.msra.mxu0 %v666
    %3508 = vmatprep.subr.bf16.mxu0 0
    %3509 = vmatpush1.bf16.msra.mxu0 0
    %3510 = vmatprep.subr.bf16.mxu0 0
    %3511 = vmatpush1.bf16.msra.mxu0 0
    %3512 = vmatprep.subr.bf16.mxu0 0
    %3513 = vmatpush1.bf16.msra.mxu0 0
    %3514 = vmatprep.subr.bf16.mxu0 0
    %3515 = vmatpush1.bf16.msra.mxu0 0
    %3516 = vmatprep.subr.bf16.mxu0 0
    %3517 = vmatpush1.bf16.msra.mxu0 0
    %3518 = vmatprep.subr.bf16.mxu0 0
    %3519 = vmatpush1.bf16.msra.mxu0 0
    %3520 = vmatprep.subr.bf16.mxu0 0
    %3521 = vmatpush1.bf16.msra.mxu0 0
    %3522 = vmatprep.subr.bf16.mxu0 0
    %3523 = vmatpush1.bf16.msra.mxu0 0
    %3524 = vmatprep.mubr.bf16.mxu0 0
    %3525 = vmatmul.mubr.bf16.gmra.mrb[0].mxu0 %v3386
    %v3526 = vpop.f32.mrb[0].mxu0
    %v3527 = vadd.f32 0.0, %v3526
    %v3528 = vpop.f32.mrb[0].mxu0
    %v3529 = vadd.f32 0.0, %v3528
    %v3530 = vpop.f32.mrb[0].mxu0
    %v3531 = vpop.f32.mrb[0].mxu0
    %3532 = vdwg.mxu0
    %3533 = vmatprep.subr.bf16.mxu0 %v641
    %3534 = vmatpush1.bf16.msra.mxu0 %v640
    %3535 = vmatprep.subr.bf16.mxu0 %v645
    %3536 = vmatpush1.bf16.msra.mxu0 %v644
    %3537 = vmatprep.subr.bf16.mxu0 %v649
    %3538 = vmatpush1.bf16.msra.mxu0 %v648
    %3539 = vmatprep.subr.bf16.mxu0 %v653
    %3540 = vmatpush1.bf16.msra.mxu0 %v652
    %3541 = vmatprep.subr.bf16.mxu0 %v657
    %3542 = vmatpush1.bf16.msra.mxu0 %v656
    %3543 = vmatprep.subr.bf16.mxu0 %v661
    %3544 = vmatpush1.bf16.msra.mxu0 %v660
    %3545 = vmatprep.subr.bf16.mxu0 %v665
    %3546 = vmatpush1.bf16.msra.mxu0 %v664
    %3547 = vmatprep.subr.bf16.mxu0 %v669
    %3548 = vmatpush1.bf16.msra.mxu0 %v668
    %3549 = vmatprep.subr.bf16.mxu0 0
    %3550 = vmatpush1.bf16.msra.mxu0 0
    %3551 = vmatprep.subr.bf16.mxu0 0
    %3552 = vmatpush1.bf16.msra.mxu0 0
    %3553 = vmatprep.subr.bf16.mxu0 0
    %3554 = vmatpush1.bf16.msra.mxu0 0
    %3555 = vmatprep.subr.bf16.mxu0 0
    %3556 = vmatpush1.bf16.msra.mxu0 0
    %3557 = vmatprep.subr.bf16.mxu0 0
    %3558 = vmatpush1.bf16.msra.mxu0 0
    %3559 = vmatprep.subr.bf16.mxu0 0
    %3560 = vmatpush1.bf16.msra.mxu0 0
    %3561 = vmatprep.subr.bf16.mxu0 0
    %3562 = vmatpush1.bf16.msra.mxu0 0
    %3563 = vmatprep.subr.bf16.mxu0 0
    %3564 = vmatpush1.bf16.msra.mxu0 0
    %3565 = vmatprep.mubr.bf16.mxu0 0
    %3566 = vmatmul.mubr.bf16.gmra.mrb[0].mxu0 %v3386
    %v3567 = vpop.f32.mrb[0].mxu0
    %v3568 = vadd.f32 0.0, %v3567
    %v3569 = vpop.f32.mrb[0].mxu0
    %v3570 = vadd.f32 0.0, %v3569
    %v3571 = vpop.f32.mrb[0].mxu0
    %v3572 = vpop.f32.mrb[0].mxu0
    %3573 = vdwg.mxu0
    %v3578 = vrot.slane %v3527, 1
    %v3579 = vrot.slane %v3529, 1
    %v3580 = vrot.slane %v3568, 1
    %v3581 = vrot.slane %v3570, 1
    %v3582 = vrot.slane %v3527, 2
    %v3583 = vrot.slane %v3529, 2
    %v3584 = vrot.slane %v3568, 2
    %v3585 = vrot.slane %v3570, 2
    %v3594 = vadd.f32 %v353, %v3578
    %v3595 = vadd.f32 %v355, %v3579
    %v3596 = vadd.f32 %v406, %v3580
    %v3597 = vadd.f32 %v408, %v3581
    %v3598 = vadd.f32 %v363, %v3582
    %v3599 = vadd.f32 %v365, %v3583
    %v3600 = vadd.f32 %v416, %v3584
    %v3601 = vadd.f32 %v418, %v3585
    %v3602 = vxor.u32 %v3594, 2147483648
    %v3603 = vxor.u32 %v3595, 2147483648
    %v3604 = vxor.u32 %v3598, 2147483648
    %v3605 = vxor.u32 %v3599, 2147483648
    %v3606 = vmul.f32 %v3602, 1.442695
    %v3607 = vpow.pop %v3606
    %v3608 = vmul.f32 %v3603, 1.442695
    %v3609 = vpow.pop %v3608
    %v3610 = vmul.f32 %v3604, 1.442695
    %v3611 = vpow.pop %v3610
    %v3612 = vmul.f32 %v3605, 1.442695
    %v3613 = vpow.pop %v3612
    %v3614 = vadd.f32 %v3607, 1.0
    %v3615 = vadd.f32 %v3609, 1.0
    %v3616 = vadd.f32 %v3611, 1.0
    %v3617 = vadd.f32 %v3613, 1.0
    %v3618 = vrcp.pop %v3614
    %v3619 = vmul.f32 1.0, %v3618
    %v3620 = vrcp.pop %v3615
    %v3621 = vmul.f32 1.0, %v3620
    %v3622 = vrcp.pop %v3616
    %v3623 = vmul.f32 1.0, %v3622
    %v3624 = vrcp.pop %v3617
    %v3625 = vmul.f32 1.0, %v3624
    %v3626 = vmul.f32 %v3619, %v3597
    %v3627 = vmul.f32 %v3623, %v3601
    %v3628 = vadd.f32 %v3596, %v3626
    %v3629 = vadd.f32 %v3600, %v3627
    %v3630 = vtanh.pop %v3628
    %v3631 = vtanh.pop %v3629
    %v3634 = vrot.slane %v3630, 1
    %v3635 = vrot.slane %v3631, 1
    %v3638 = vsub.f32 %v3292, %v3634
    %v3639 = vsub.f32 %v3293, %v3635
    %v3642 = vrot.slane %v3638, 7
    %v3643 = vrot.slane %v3639, 7
    %v3646 = vmul.f32 %v3621, %v3642
    %v3647 = vmul.f32 %v3625, %v3643
    %v3648 = vadd.f32 %v3630, %v3646
    %v3649 = vadd.f32 %v3631, %v3647
    %v3650 = vpack.c.bf16 %v3648, %v3648
    %v3651 = vpack.c.bf16 %v3649, %v3649
    %v3652 = vpack.c.bf16 %v3491, %v3491
    %3653 = vmatprep.subr.bf16.mxu0 %v943
    %3654 = vmatpush1.bf16.msra.mxu0 %v942
    %3655 = vmatprep.subr.bf16.mxu0 %v947
    %3656 = vmatpush1.bf16.msra.mxu0 %v946
    %3657 = vmatprep.subr.bf16.mxu0 %v951
    %3658 = vmatpush1.bf16.msra.mxu0 %v950
    %3659 = vmatprep.subr.bf16.mxu0 %v955
    %3660 = vmatpush1.bf16.msra.mxu0 %v954
    %3661 = vmatprep.subr.bf16.mxu0 %v959
    %3662 = vmatpush1.bf16.msra.mxu0 %v958
    %3663 = vmatprep.subr.bf16.mxu0 %v963
    %3664 = vmatpush1.bf16.msra.mxu0 %v962
    %3665 = vmatprep.subr.bf16.mxu0 %v967
    %3666 = vmatpush1.bf16.msra.mxu0 %v966
    %3667 = vmatprep.subr.bf16.mxu0 %v971
    %3668 = vmatpush1.bf16.msra.mxu0 %v970
    %3669 = vmatprep.subr.bf16.mxu0 0
    %3670 = vmatpush1.bf16.msra.mxu0 0
    %3671 = vmatprep.subr.bf16.mxu0 0
    %3672 = vmatpush1.bf16.msra.mxu0 0
    %3673 = vmatprep.subr.bf16.mxu0 0
    %3674 = vmatpush1.bf16.msra.mxu0 0
    %3675 = vmatprep.subr.bf16.mxu0 0
    %3676 = vmatpush1.bf16.msra.mxu0 0
    %3677 = vmatprep.subr.bf16.mxu0 0
    %3678 = vmatpush1.bf16.msra.mxu0 0
    %3679 = vmatprep.subr.bf16.mxu0 0
    %3680 = vmatpush1.bf16.msra.mxu0 0
    %3681 = vmatprep.subr.bf16.mxu0 0
    %3682 = vmatpush1.bf16.msra.mxu0 0
    %3683 = vmatprep.subr.bf16.mxu0 0
    %3684 = vmatpush1.bf16.msra.mxu0 0
    %3685 = vmatprep.mubr.bf16.mxu0 0
    %3686 = vmatmul.mubr.bf16.gmra.mrb[0].mxu0 %v3652
    %v3687 = vpop.f32.mrb[0].mxu0
    %v3688 = vadd.f32 0.0, %v3687
    %v3689 = vpop.f32.mrb[0].mxu0
    %v3690 = vadd.f32 0.0, %v3689
    %v3691 = vpop.f32.mrb[0].mxu0
    %v3692 = vpop.f32.mrb[0].mxu0
    %3693 = vdwg.mxu0
    %3694 = vmatprep.subr.bf16.mxu0 %v945
    %3695 = vmatpush1.bf16.msra.mxu0 %v944
    %3696 = vmatprep.subr.bf16.mxu0 %v949
    %3697 = vmatpush1.bf16.msra.mxu0 %v948
    %3698 = vmatprep.subr.bf16.mxu0 %v953
    %3699 = vmatpush1.bf16.msra.mxu0 %v952
    %3700 = vmatprep.subr.bf16.mxu0 %v957
    %3701 = vmatpush1.bf16.msra.mxu0 %v956
    %3702 = vmatprep.subr.bf16.mxu0 %v961
    %3703 = vmatpush1.bf16.msra.mxu0 %v960
    %3704 = vmatprep.subr.bf16.mxu0 %v965
    %3705 = vmatpush1.bf16.msra.mxu0 %v964
    %3706 = vmatprep.subr.bf16.mxu0 %v969
    %3707 = vmatpush1.bf16.msra.mxu0 %v968
    %3708 = vmatprep.subr.bf16.mxu0 %v973
    %3709 = vmatpush1.bf16.msra.mxu0 %v972
    %3710 = vmatprep.subr.bf16.mxu0 0
    %3711 = vmatpush1.bf16.msra.mxu0 0
    %3712 = vmatprep.subr.bf16.mxu0 0
    %3713 = vmatpush1.bf16.msra.mxu0 0
    %3714 = vmatprep.subr.bf16.mxu0 0
    %3715 = vmatpush1.bf16.msra.mxu0 0
    %3716 = vmatprep.subr.bf16.mxu0 0
    %3717 = vmatpush1.bf16.msra.mxu0 0
    %3718 = vmatprep.subr.bf16.mxu0 0
    %3719 = vmatpush1.bf16.msra.mxu0 0
    %3720 = vmatprep.subr.bf16.mxu0 0
    %3721 = vmatpush1.bf16.msra.mxu0 0
    %3722 = vmatprep.subr.bf16.mxu0 0
    %3723 = vmatpush1.bf16.msra.mxu0 0
    %3724 = vmatprep.subr.bf16.mxu0 0
    %3725 = vmatpush1.bf16.msra.mxu0 0
    %3726 = vmatprep.mubr.bf16.mxu0 0
    %3727 = vmatmul.mubr.bf16.gmra.mrb[0].mxu0 %v3652
    %v3728 = vpop.f32.mrb[0].mxu0
    %v3729 = vadd.f32 0.0, %v3728
    %v3730 = vpop.f32.mrb[0].mxu0
    %v3731 = vadd.f32 0.0, %v3730
    %v3732 = vpop.f32.mrb[0].mxu0
    %v3733 = vpop.f32.mrb[0].mxu0
    %3734 = vdwg.mxu0
    %v3737 = vunpack.c.l.b16 %v3650
    %v3738 = vunpack.c.l.b16 %v3651
    %v3739 = vrot.slane %v3737, 7
    %v3740 = vrot.slane %v3738, 6
    %v3741 = vsel %vm1093, %v3740, %v3739
    %v3742 = vpack.c.b16 %v3741, %v3741
    %3744 = vmatprep.subr.bf16.mxu0 %v1194
    %3745 = vmatpush1.bf16.msra.mxu0 %v1193
    %3746 = vmatprep.subr.bf16.mxu0 %v1198
    %3747 = vmatpush1.bf16.msra.mxu0 %v1197
    %3748 = vmatprep.subr.bf16.mxu0 %v1202
    %3749 = vmatpush1.bf16.msra.mxu0 %v1201
    %3750 = vmatprep.subr.bf16.mxu0 %v1206
    %3751 = vmatpush1.bf16.msra.mxu0 %v1205
    %3752 = vmatprep.subr.bf16.mxu0 %v1210
    %3753 = vmatpush1.bf16.msra.mxu0 %v1209
    %3754 = vmatprep.subr.bf16.mxu0 %v1214
    %3755 = vmatpush1.bf16.msra.mxu0 %v1213
    %3756 = vmatprep.subr.bf16.mxu0 %v1218
    %3757 = vmatpush1.bf16.msra.mxu0 %v1217
    %3758 = vmatprep.subr.bf16.mxu0 %v1222
    %3759 = vmatpush1.bf16.msra.mxu0 %v1221
    %3760 = vmatprep.subr.bf16.mxu0 0
    %3761 = vmatpush1.bf16.msra.mxu0 0
    %3762 = vmatprep.subr.bf16.mxu0 0
    %3763 = vmatpush1.bf16.msra.mxu0 0
    %3764 = vmatprep.subr.bf16.mxu0 0
    %3765 = vmatpush1.bf16.msra.mxu0 0
    %3766 = vmatprep.subr.bf16.mxu0 0
    %3767 = vmatpush1.bf16.msra.mxu0 0
    %3768 = vmatprep.subr.bf16.mxu0 0
    %3769 = vmatpush1.bf16.msra.mxu0 0
    %3770 = vmatprep.subr.bf16.mxu0 0
    %3771 = vmatpush1.bf16.msra.mxu0 0
    %3772 = vmatprep.subr.bf16.mxu0 0
    %3773 = vmatpush1.bf16.msra.mxu0 0
    %3774 = vmatprep.subr.bf16.mxu0 0
    %3775 = vmatpush1.bf16.msra.mxu0 0
    %3776 = vmatprep.mubr.bf16.mxu0 0
    %3777 = vmatmul.mubr.bf16.gmra.mrb[0].mxu0 %v3742
    %v3778 = vpop.f32.mrb[0].mxu0
    %v3779 = vadd.f32 %v3688, %v3778
    %v3780 = vpop.f32.mrb[0].mxu0
    %v3781 = vadd.f32 %v3690, %v3780
    %v3782 = vpop.f32.mrb[0].mxu0
    %v3783 = vpop.f32.mrb[0].mxu0
    %3784 = vdwg.mxu0
    %3785 = vmatprep.subr.bf16.mxu0 %v1196
    %3786 = vmatpush1.bf16.msra.mxu0 %v1195
    %3787 = vmatprep.subr.bf16.mxu0 %v1200
    %3788 = vmatpush1.bf16.msra.mxu0 %v1199
    %3789 = vmatprep.subr.bf16.mxu0 %v1204
    %3790 = vmatpush1.bf16.msra.mxu0 %v1203
    %3791 = vmatprep.subr.bf16.mxu0 %v1208
    %3792 = vmatpush1.bf16.msra.mxu0 %v1207
    %3793 = vmatprep.subr.bf16.mxu0 %v1212
    %3794 = vmatpush1.bf16.msra.mxu0 %v1211
    %3795 = vmatprep.subr.bf16.mxu0 %v1216
    %3796 = vmatpush1.bf16.msra.mxu0 %v1215
    %3797 = vmatprep.subr.bf16.mxu0 %v1220
    %3798 = vmatpush1.bf16.msra.mxu0 %v1219
    %3799 = vmatprep.subr.bf16.mxu0 %v1224
    %3800 = vmatpush1.bf16.msra.mxu0 %v1223
    %3801 = vmatprep.subr.bf16.mxu0 0
    %3802 = vmatpush1.bf16.msra.mxu0 0
    %3803 = vmatprep.subr.bf16.mxu0 0
    %3804 = vmatpush1.bf16.msra.mxu0 0
    %3805 = vmatprep.subr.bf16.mxu0 0
    %3806 = vmatpush1.bf16.msra.mxu0 0
    %3807 = vmatprep.subr.bf16.mxu0 0
    %3808 = vmatpush1.bf16.msra.mxu0 0
    %3809 = vmatprep.subr.bf16.mxu0 0
    %3810 = vmatpush1.bf16.msra.mxu0 0
    %3811 = vmatprep.subr.bf16.mxu0 0
    %3812 = vmatpush1.bf16.msra.mxu0 0
    %3813 = vmatprep.subr.bf16.mxu0 0
    %3814 = vmatpush1.bf16.msra.mxu0 0
    %3815 = vmatprep.subr.bf16.mxu0 0
    %3816 = vmatpush1.bf16.msra.mxu0 0
    %3817 = vmatprep.mubr.bf16.mxu0 0
    %3818 = vmatmul.mubr.bf16.gmra.mrb[0].mxu0 %v3742
    %v3819 = vpop.f32.mrb[0].mxu0
    %v3820 = vadd.f32 %v3729, %v3819
    %v3821 = vpop.f32.mrb[0].mxu0
    %v3822 = vadd.f32 %v3731, %v3821
    %v3823 = vpop.f32.mrb[0].mxu0
    %v3824 = vpop.f32.mrb[0].mxu0
    %3825 = vdwg.mxu0
    %v3826 = vadd.f32 %v3779, %v525
    %v3827 = vadd.f32 %v3781, %v529
    %v3828 = vadd.f32 %v3820, %v533
    %v3829 = vadd.f32 %v3822, %v537
    %v3830 = vxor.u32 %v3826, 2147483648
    %v3831 = vxor.u32 %v3827, 2147483648
    %v3832 = vmul.f32 %v3830, 1.442695
    %v3833 = vpow.pop %v3832
    %v3834 = vmul.f32 %v3831, 1.442695
    %v3835 = vpow.pop %v3834
    %v3836 = vadd.f32 %v3833, 1.0
    %v3837 = vadd.f32 %v3835, 1.0
    %v3838 = vrcp.pop %v3836
    %v3839 = vmul.f32 1.0, %v3838
    %v3840 = vrcp.pop %v3837
    %v3841 = vmul.f32 1.0, %v3840
    %v3842 = vmul.f32 %v3839, %v3829
    %v3843 = vadd.f32 %v3828, %v3842
    %v3844 = vtanh.pop %v3843
    %v3845 = vsub.f32 %v3491, %v3844
    %v3846 = vmul.f32 %v3841, %v3845
    %v3847 = vadd.f32 %v3844, %v3846
    %3848 = vmatprep.subr.bf16.mxu0 %v639
    %3849 = vmatpush1.bf16.msra.mxu0 %v638
    %3850 = vmatprep.subr.bf16.mxu0 %v643
    %3851 = vmatpush1.bf16.msra.mxu0 %v642
    %3852 = vmatprep.subr.bf16.mxu0 %v647
    %3853 = vmatpush1.bf16.msra.mxu0 %v646
    %3854 = vmatprep.subr.bf16.mxu0 %v651
    %3855 = vmatpush1.bf16.msra.mxu0 %v650
    %3856 = vmatprep.subr.bf16.mxu0 %v655
    %3857 = vmatpush1.bf16.msra.mxu0 %v654
    %3858 = vmatprep.subr.bf16.mxu0 %v659
    %3859 = vmatpush1.bf16.msra.mxu0 %v658
    %3860 = vmatprep.subr.bf16.mxu0 %v663
    %3861 = vmatpush1.bf16.msra.mxu0 %v662
    %3862 = vmatprep.subr.bf16.mxu0 %v667
    %3863 = vmatpush1.bf16.msra.mxu0 %v666
    %3864 = vmatprep.subr.bf16.mxu0 0
    %3865 = vmatpush1.bf16.msra.mxu0 0
    %3866 = vmatprep.subr.bf16.mxu0 0
    %3867 = vmatpush1.bf16.msra.mxu0 0
    %3868 = vmatprep.subr.bf16.mxu0 0
    %3869 = vmatpush1.bf16.msra.mxu0 0
    %3870 = vmatprep.subr.bf16.mxu0 0
    %3871 = vmatpush1.bf16.msra.mxu0 0
    %3872 = vmatprep.subr.bf16.mxu0 0
    %3873 = vmatpush1.bf16.msra.mxu0 0
    %3874 = vmatprep.subr.bf16.mxu0 0
    %3875 = vmatpush1.bf16.msra.mxu0 0
    %3876 = vmatprep.subr.bf16.mxu0 0
    %3877 = vmatpush1.bf16.msra.mxu0 0
    %3878 = vmatprep.subr.bf16.mxu0 0
    %3879 = vmatpush1.bf16.msra.mxu0 0
    %3880 = vmatprep.mubr.bf16.mxu0 0
    %3881 = vmatmul.mubr.bf16.gmra.mrb[0].mxu0 %v3742
    %v3882 = vpop.f32.mrb[0].mxu0
    %v3883 = vadd.f32 0.0, %v3882
    %v3884 = vpop.f32.mrb[0].mxu0
    %v3885 = vadd.f32 0.0, %v3884
    %v3886 = vpop.f32.mrb[0].mxu0
    %v3887 = vpop.f32.mrb[0].mxu0
    %3888 = vdwg.mxu0
    %3889 = vmatprep.subr.bf16.mxu0 %v641
    %3890 = vmatpush1.bf16.msra.mxu0 %v640
    %3891 = vmatprep.subr.bf16.mxu0 %v645
    %3892 = vmatpush1.bf16.msra.mxu0 %v644
    %3893 = vmatprep.subr.bf16.mxu0 %v649
    %3894 = vmatpush1.bf16.msra.mxu0 %v648
    %3895 = vmatprep.subr.bf16.mxu0 %v653
    %3896 = vmatpush1.bf16.msra.mxu0 %v652
    %3897 = vmatprep.subr.bf16.mxu0 %v657
    %3898 = vmatpush1.bf16.msra.mxu0 %v656
    %3899 = vmatprep.subr.bf16.mxu0 %v661
    %3900 = vmatpush1.bf16.msra.mxu0 %v660
    %3901 = vmatprep.subr.bf16.mxu0 %v665
    %3902 = vmatpush1.bf16.msra.mxu0 %v664
    %3903 = vmatprep.subr.bf16.mxu0 %v669
    %3904 = vmatpush1.bf16.msra.mxu0 %v668
    %3905 = vmatprep.subr.bf16.mxu0 0
    %3906 = vmatpush1.bf16.msra.mxu0 0
    %3907 = vmatprep.subr.bf16.mxu0 0
    %3908 = vmatpush1.bf16.msra.mxu0 0
    %3909 = vmatprep.subr.bf16.mxu0 0
    %3910 = vmatpush1.bf16.msra.mxu0 0
    %3911 = vmatprep.subr.bf16.mxu0 0
    %3912 = vmatpush1.bf16.msra.mxu0 0
    %3913 = vmatprep.subr.bf16.mxu0 0
    %3914 = vmatpush1.bf16.msra.mxu0 0
    %3915 = vmatprep.subr.bf16.mxu0 0
    %3916 = vmatpush1.bf16.msra.mxu0 0
    %3917 = vmatprep.subr.bf16.mxu0 0
    %3918 = vmatpush1.bf16.msra.mxu0 0
    %3919 = vmatprep.subr.bf16.mxu0 0
    %3920 = vmatpush1.bf16.msra.mxu0 0
    %3921 = vmatprep.mubr.bf16.mxu0 0
    %3922 = vmatmul.mubr.bf16.gmra.mrb[0].mxu0 %v3742
    %v3923 = vpop.f32.mrb[0].mxu0
    %v3924 = vadd.f32 0.0, %v3923
    %v3925 = vpop.f32.mrb[0].mxu0
    %v3926 = vadd.f32 0.0, %v3925
    %v3927 = vpop.f32.mrb[0].mxu0
    %v3928 = vpop.f32.mrb[0].mxu0
    %3929 = vdwg.mxu0
    %v3934 = vrot.slane %v3883, 1
    %v3935 = vrot.slane %v3885, 1
    %v3936 = vrot.slane %v3924, 1
    %v3937 = vrot.slane %v3926, 1
    %v3946 = vadd.f32 %v357, %v3883
    %v3947 = vadd.f32 %v359, %v3885
    %v3948 = vadd.f32 %v410, %v3924
    %v3949 = vadd.f32 %v412, %v3926
    %v3950 = vadd.f32 %v367, %v3934
    %v3951 = vadd.f32 %v369, %v3935
    %v3952 = vadd.f32 %v420, %v3936
    %v3953 = vadd.f32 %v422, %v3937
    %v3954 = vxor.u32 %v3946, 2147483648
    %v3955 = vxor.u32 %v3947, 2147483648
    %v3956 = vxor.u32 %v3950, 2147483648
    %v3957 = vxor.u32 %v3951, 2147483648
    %v3958 = vmul.f32 %v3954, 1.442695
    %v3959 = vpow.pop %v3958
    %v3960 = vmul.f32 %v3955, 1.442695
    %v3961 = vpow.pop %v3960
    %v3962 = vmul.f32 %v3956, 1.442695
    %v3963 = vpow.pop %v3962
    %v3964 = vmul.f32 %v3957, 1.442695
    %v3965 = vpow.pop %v3964
    %v3966 = vadd.f32 %v3959, 1.0
    %v3967 = vadd.f32 %v3961, 1.0
    %v3968 = vadd.f32 %v3963, 1.0
    %v3969 = vadd.f32 %v3965, 1.0
    %v3970 = vrcp.pop %v3966
    %v3971 = vmul.f32 1.0, %v3970
    %v3972 = vrcp.pop %v3967
    %v3973 = vmul.f32 1.0, %v3972
    %v3974 = vrcp.pop %v3968
    %v3975 = vmul.f32 1.0, %v3974
    %v3976 = vrcp.pop %v3969
    %v3977 = vmul.f32 1.0, %v3976
    %v3978 = vmul.f32 %v3971, %v3949
    %v3979 = vmul.f32 %v3975, %v3953
    %v3980 = vadd.f32 %v3948, %v3978
    %v3981 = vadd.f32 %v3952, %v3979
    %v3982 = vtanh.pop %v3980
    %v3983 = vtanh.pop %v3981
    %v3986 = vrot.slane %v3982, 1
    %v3987 = vrot.slane %v3983, 1
    %v3990 = vsub.f32 %v3648, %v3986
    %v3991 = vsub.f32 %v3649, %v3987
    %v3994 = vrot.slane %v3990, 7
    %v3995 = vrot.slane %v3991, 7
    %v3998 = vmul.f32 %v3973, %v3994
    %v3999 = vmul.f32 %v3977, %v3995
    %v4000 = vadd.f32 %v3982, %v3998
    %v4001 = vadd.f32 %v3983, %v3999
    %v4002 = vpack.c.bf16 %v4000, %v4000
    %v4003 = vpack.c.bf16 %v4001, %v4001
    %v4004 = vpack.c.bf16 %v3847, %v3847
    %4005 = vmatprep.subr.bf16.mxu0 %v943
    %4006 = vmatpush1.bf16.msra.mxu0 %v942
    %4007 = vmatprep.subr.bf16.mxu0 %v947
    %4008 = vmatpush1.bf16.msra.mxu0 %v946
    %4009 = vmatprep.subr.bf16.mxu0 %v951
    %4010 = vmatpush1.bf16.msra.mxu0 %v950
    %4011 = vmatprep.subr.bf16.mxu0 %v955
    %4012 = vmatpush1.bf16.msra.mxu0 %v954
    %4013 = vmatprep.subr.bf16.mxu0 %v959
    %4014 = vmatpush1.bf16.msra.mxu0 %v958
    %4015 = vmatprep.subr.bf16.mxu0 %v963
    %4016 = vmatpush1.bf16.msra.mxu0 %v962
    %4017 = vmatprep.subr.bf16.mxu0 %v967
    %4018 = vmatpush1.bf16.msra.mxu0 %v966
    %4019 = vmatprep.subr.bf16.mxu0 %v971
    %4020 = vmatpush1.bf16.msra.mxu0 %v970
    %4021 = vmatprep.subr.bf16.mxu0 0
    %4022 = vmatpush1.bf16.msra.mxu0 0
    %4023 = vmatprep.subr.bf16.mxu0 0
    %4024 = vmatpush1.bf16.msra.mxu0 0
    %4025 = vmatprep.subr.bf16.mxu0 0
    %4026 = vmatpush1.bf16.msra.mxu0 0
    %4027 = vmatprep.subr.bf16.mxu0 0
    %4028 = vmatpush1.bf16.msra.mxu0 0
    %4029 = vmatprep.subr.bf16.mxu0 0
    %4030 = vmatpush1.bf16.msra.mxu0 0
    %4031 = vmatprep.subr.bf16.mxu0 0
    %4032 = vmatpush1.bf16.msra.mxu0 0
    %4033 = vmatprep.subr.bf16.mxu0 0
    %4034 = vmatpush1.bf16.msra.mxu0 0
    %4035 = vmatprep.subr.bf16.mxu0 0
    %4036 = vmatpush1.bf16.msra.mxu0 0
    %4037 = vmatprep.mubr.bf16.mxu0 0
    %4038 = vmatmul.mubr.bf16.gmra.mrb[0].mxu0 %v4004
    %v4039 = vpop.f32.mrb[0].mxu0
    %v4040 = vadd.f32 0.0, %v4039
    %v4041 = vpop.f32.mrb[0].mxu0
    %v4042 = vadd.f32 0.0, %v4041
    %v4043 = vpop.f32.mrb[0].mxu0
    %v4044 = vpop.f32.mrb[0].mxu0
    %4045 = vdwg.mxu0
    %4046 = vmatprep.subr.bf16.mxu0 %v945
    %4047 = vmatpush1.bf16.msra.mxu0 %v944
    %4048 = vmatprep.subr.bf16.mxu0 %v949
    %4049 = vmatpush1.bf16.msra.mxu0 %v948
    %4050 = vmatprep.subr.bf16.mxu0 %v953
    %4051 = vmatpush1.bf16.msra.mxu0 %v952
    %4052 = vmatprep.subr.bf16.mxu0 %v957
    %4053 = vmatpush1.bf16.msra.mxu0 %v956
    %4054 = vmatprep.subr.bf16.mxu0 %v961
    %4055 = vmatpush1.bf16.msra.mxu0 %v960
    %4056 = vmatprep.subr.bf16.mxu0 %v965
    %4057 = vmatpush1.bf16.msra.mxu0 %v964
    %4058 = vmatprep.subr.bf16.mxu0 %v969
    %4059 = vmatpush1.bf16.msra.mxu0 %v968
    %4060 = vmatprep.subr.bf16.mxu0 %v973
    %4061 = vmatpush1.bf16.msra.mxu0 %v972
    %4062 = vmatprep.subr.bf16.mxu0 0
    %4063 = vmatpush1.bf16.msra.mxu0 0
    %4064 = vmatprep.subr.bf16.mxu0 0
    %4065 = vmatpush1.bf16.msra.mxu0 0
    %4066 = vmatprep.subr.bf16.mxu0 0
    %4067 = vmatpush1.bf16.msra.mxu0 0
    %4068 = vmatprep.subr.bf16.mxu0 0
    %4069 = vmatpush1.bf16.msra.mxu0 0
    %4070 = vmatprep.subr.bf16.mxu0 0
    %4071 = vmatpush1.bf16.msra.mxu0 0
    %4072 = vmatprep.subr.bf16.mxu0 0
    %4073 = vmatpush1.bf16.msra.mxu0 0
    %4074 = vmatprep.subr.bf16.mxu0 0
    %4075 = vmatpush1.bf16.msra.mxu0 0
    %4076 = vmatprep.subr.bf16.mxu0 0
    %4077 = vmatpush1.bf16.msra.mxu0 0
    %4078 = vmatprep.mubr.bf16.mxu0 0
    %4079 = vmatmul.mubr.bf16.gmra.mrb[0].mxu0 %v4004
    %v4080 = vpop.f32.mrb[0].mxu0
    %v4081 = vadd.f32 0.0, %v4080
    %v4082 = vpop.f32.mrb[0].mxu0
    %v4083 = vadd.f32 0.0, %v4082
    %v4084 = vpop.f32.mrb[0].mxu0
    %v4085 = vpop.f32.mrb[0].mxu0
    %4086 = vdwg.mxu0
    %v4089 = vunpack.c.l.b16 %v4002
    %v4090 = vunpack.c.l.b16 %v4003
    %v4091 = vrot.slane %v4090, 7
    %v4092 = vsel %vm1093, %v4091, %v4089
    %v4093 = vpack.c.b16 %v4092, %v4092
    %4095 = vmatprep.subr.bf16.mxu0 %v1194
    %4096 = vmatpush1.bf16.msra.mxu0 %v1193
    %4097 = vmatprep.subr.bf16.mxu0 %v1198
    %4098 = vmatpush1.bf16.msra.mxu0 %v1197
    %4099 = vmatprep.subr.bf16.mxu0 %v1202
    %4100 = vmatpush1.bf16.msra.mxu0 %v1201
    %4101 = vmatprep.subr.bf16.mxu0 %v1206
    %4102 = vmatpush1.bf16.msra.mxu0 %v1205
    %4103 = vmatprep.subr.bf16.mxu0 %v1210
    %4104 = vmatpush1.bf16.msra.mxu0 %v1209
    %4105 = vmatprep.subr.bf16.mxu0 %v1214
    %4106 = vmatpush1.bf16.msra.mxu0 %v1213
    %4107 = vmatprep.subr.bf16.mxu0 %v1218
    %4108 = vmatpush1.bf16.msra.mxu0 %v1217
    %4109 = vmatprep.subr.bf16.mxu0 %v1222
    %4110 = vmatpush1.bf16.msra.mxu0 %v1221
    %4111 = vmatprep.subr.bf16.mxu0 0
    %4112 = vmatpush1.bf16.msra.mxu0 0
    %4113 = vmatprep.subr.bf16.mxu0 0
    %4114 = vmatpush1.bf16.msra.mxu0 0
    %4115 = vmatprep.subr.bf16.mxu0 0
    %4116 = vmatpush1.bf16.msra.mxu0 0
    %4117 = vmatprep.subr.bf16.mxu0 0
    %4118 = vmatpush1.bf16.msra.mxu0 0
    %4119 = vmatprep.subr.bf16.mxu0 0
    %4120 = vmatpush1.bf16.msra.mxu0 0
    %4121 = vmatprep.subr.bf16.mxu0 0
    %4122 = vmatpush1.bf16.msra.mxu0 0
    %4123 = vmatprep.subr.bf16.mxu0 0
    %4124 = vmatpush1.bf16.msra.mxu0 0
    %4125 = vmatprep.subr.bf16.mxu0 0
    %4126 = vmatpush1.bf16.msra.mxu0 0
    %4127 = vmatprep.mubr.bf16.mxu0 0
    %4128 = vmatmul.mubr.bf16.gmra.mrb[0].mxu0 %v4093
    %v4129 = vpop.f32.mrb[0].mxu0
    %v4130 = vadd.f32 %v4040, %v4129
    %v4131 = vpop.f32.mrb[0].mxu0
    %v4132 = vadd.f32 %v4042, %v4131
    %v4133 = vpop.f32.mrb[0].mxu0
    %v4134 = vpop.f32.mrb[0].mxu0
    %4135 = vdwg.mxu0
    %4136 = vmatprep.subr.bf16.mxu0 %v1196
    %4137 = vmatpush1.bf16.msra.mxu0 %v1195
    %4138 = vmatprep.subr.bf16.mxu0 %v1200
    %4139 = vmatpush1.bf16.msra.mxu0 %v1199
    %4140 = vmatprep.subr.bf16.mxu0 %v1204
    %4141 = vmatpush1.bf16.msra.mxu0 %v1203
    %4142 = vmatprep.subr.bf16.mxu0 %v1208
    %4143 = vmatpush1.bf16.msra.mxu0 %v1207
    %4144 = vmatprep.subr.bf16.mxu0 %v1212
    %4145 = vmatpush1.bf16.msra.mxu0 %v1211
    %4146 = vmatprep.subr.bf16.mxu0 %v1216
    %4147 = vmatpush1.bf16.msra.mxu0 %v1215
    %4148 = vmatprep.subr.bf16.mxu0 %v1220
    %4149 = vmatpush1.bf16.msra.mxu0 %v1219
    %4150 = vmatprep.subr.bf16.mxu0 %v1224
    %4151 = vmatpush1.bf16.msra.mxu0 %v1223
    %4152 = vmatprep.subr.bf16.mxu0 0
    %4153 = vmatpush1.bf16.msra.mxu0 0
    %4154 = vmatprep.subr.bf16.mxu0 0
    %4155 = vmatpush1.bf16.msra.mxu0 0
    %4156 = vmatprep.subr.bf16.mxu0 0
    %4157 = vmatpush1.bf16.msra.mxu0 0
    %4158 = vmatprep.subr.bf16.mxu0 0
    %4159 = vmatpush1.bf16.msra.mxu0 0
    %4160 = vmatprep.subr.bf16.mxu0 0
    %4161 = vmatpush1.bf16.msra.mxu0 0
    %4162 = vmatprep.subr.bf16.mxu0 0
    %4163 = vmatpush1.bf16.msra.mxu0 0
    %4164 = vmatprep.subr.bf16.mxu0 0
    %4165 = vmatpush1.bf16.msra.mxu0 0
    %4166 = vmatprep.subr.bf16.mxu0 0
    %4167 = vmatpush1.bf16.msra.mxu0 0
    %4168 = vmatprep.mubr.bf16.mxu0 0
    %4169 = vmatmul.mubr.bf16.gmra.mrb[0].mxu0 %v4093
    %v4170 = vpop.f32.mrb[0].mxu0
    %v4171 = vadd.f32 %v4081, %v4170
    %v4172 = vpop.f32.mrb[0].mxu0
    %v4173 = vadd.f32 %v4083, %v4172
    %v4174 = vpop.f32.mrb[0].mxu0
    %v4175 = vpop.f32.mrb[0].mxu0
    %4176 = vdwg.mxu0
    %v4177 = vadd.f32 %v4130, %v525
    %v4178 = vadd.f32 %v4132, %v529
    %v4179 = vadd.f32 %v4171, %v533
    %v4180 = vadd.f32 %v4173, %v537
    %v4181 = vxor.u32 %v4177, 2147483648
    %v4182 = vxor.u32 %v4178, 2147483648
    %v4183 = vmul.f32 %v4181, 1.442695
    %v4184 = vpow.pop %v4183
    %v4185 = vmul.f32 %v4182, 1.442695
    %v4186 = vpow.pop %v4185
    %v4187 = vadd.f32 %v4184, 1.0
    %v4188 = vadd.f32 %v4186, 1.0
    %v4189 = vrcp.pop %v4187
    %v4190 = vmul.f32 1.0, %v4189
    %v4191 = vrcp.pop %v4188
    %v4192 = vmul.f32 1.0, %v4191
    %v4193 = vmul.f32 %v4190, %v4180
    %v4194 = vadd.f32 %v4179, %v4193
    %v4195 = vtanh.pop %v4194
    %v4196 = vsub.f32 %v3847, %v4195
    %v4197 = vmul.f32 %v4192, %v4196
    %v4198 = vadd.f32 %v4195, %v4197
    %4199 = vmatprep.subr.bf16.mxu0 %v639
    %4200 = vmatpush1.bf16.msra.mxu0 %v638
    %4201 = vmatprep.subr.bf16.mxu0 %v643
    %4202 = vmatpush1.bf16.msra.mxu0 %v642
    %4203 = vmatprep.subr.bf16.mxu0 %v647
    %4204 = vmatpush1.bf16.msra.mxu0 %v646
    %4205 = vmatprep.subr.bf16.mxu0 %v651
    %4206 = vmatpush1.bf16.msra.mxu0 %v650
    %4207 = vmatprep.subr.bf16.mxu0 %v655
    %4208 = vmatpush1.bf16.msra.mxu0 %v654
    %4209 = vmatprep.subr.bf16.mxu0 %v659
    %4210 = vmatpush1.bf16.msra.mxu0 %v658
    %4211 = vmatprep.subr.bf16.mxu0 %v663
    %4212 = vmatpush1.bf16.msra.mxu0 %v662
    %4213 = vmatprep.subr.bf16.mxu0 %v667
    %4214 = vmatpush1.bf16.msra.mxu0 %v666
    %4215 = vmatprep.subr.bf16.mxu0 0
    %4216 = vmatpush1.bf16.msra.mxu0 0
    %4217 = vmatprep.subr.bf16.mxu0 0
    %4218 = vmatpush1.bf16.msra.mxu0 0
    %4219 = vmatprep.subr.bf16.mxu0 0
    %4220 = vmatpush1.bf16.msra.mxu0 0
    %4221 = vmatprep.subr.bf16.mxu0 0
    %4222 = vmatpush1.bf16.msra.mxu0 0
    %4223 = vmatprep.subr.bf16.mxu0 0
    %4224 = vmatpush1.bf16.msra.mxu0 0
    %4225 = vmatprep.subr.bf16.mxu0 0
    %4226 = vmatpush1.bf16.msra.mxu0 0
    %4227 = vmatprep.subr.bf16.mxu0 0
    %4228 = vmatpush1.bf16.msra.mxu0 0
    %4229 = vmatprep.subr.bf16.mxu0 0
    %4230 = vmatpush1.bf16.msra.mxu0 0
    %4231 = vmatprep.mubr.bf16.mxu0 0
    %4232 = vmatmul.mubr.bf16.gmra.mrb[0].mxu0 %v4093
    %v4233 = vpop.f32.mrb[0].mxu0
    %v4234 = vadd.f32 0.0, %v4233
    %v4235 = vpop.f32.mrb[0].mxu0
    %v4236 = vadd.f32 0.0, %v4235
    %v4237 = vpop.f32.mrb[0].mxu0
    %v4238 = vpop.f32.mrb[0].mxu0
    %4239 = vdwg.mxu0
    %4240 = vmatprep.subr.bf16.mxu0 %v641
    %4241 = vmatpush1.bf16.msra.mxu0 %v640
    %4242 = vmatprep.subr.bf16.mxu0 %v645
    %4243 = vmatpush1.bf16.msra.mxu0 %v644
    %4244 = vmatprep.subr.bf16.mxu0 %v649
    %4245 = vmatpush1.bf16.msra.mxu0 %v648
    %4246 = vmatprep.subr.bf16.mxu0 %v653
    %4247 = vmatpush1.bf16.msra.mxu0 %v652
    %4248 = vmatprep.subr.bf16.mxu0 %v657
    %4249 = vmatpush1.bf16.msra.mxu0 %v656
    %4250 = vmatprep.subr.bf16.mxu0 %v661
    %4251 = vmatpush1.bf16.msra.mxu0 %v660
    %4252 = vmatprep.subr.bf16.mxu0 %v665
    %4253 = vmatpush1.bf16.msra.mxu0 %v664
    %4254 = vmatprep.subr.bf16.mxu0 %v669
    %4255 = vmatpush1.bf16.msra.mxu0 %v668
    %4256 = vmatprep.subr.bf16.mxu0 0
    %4257 = vmatpush1.bf16.msra.mxu0 0
    %4258 = vmatprep.subr.bf16.mxu0 0
    %4259 = vmatpush1.bf16.msra.mxu0 0
    %4260 = vmatprep.subr.bf16.mxu0 0
    %4261 = vmatpush1.bf16.msra.mxu0 0
    %4262 = vmatprep.subr.bf16.mxu0 0
    %4263 = vmatpush1.bf16.msra.mxu0 0
    %4264 = vmatprep.subr.bf16.mxu0 0
    %4265 = vmatpush1.bf16.msra.mxu0 0
    %4266 = vmatprep.subr.bf16.mxu0 0
    %4267 = vmatpush1.bf16.msra.mxu0 0
    %4268 = vmatprep.subr.bf16.mxu0 0
    %4269 = vmatpush1.bf16.msra.mxu0 0
    %4270 = vmatprep.subr.bf16.mxu0 0
    %4271 = vmatpush1.bf16.msra.mxu0 0
    %4272 = vmatprep.mubr.bf16.mxu0 0
    %4273 = vmatmul.mubr.bf16.gmra.mrb[0].mxu0 %v4093
    %v4274 = vpop.f32.mrb[0].mxu0
    %v4275 = vadd.f32 0.0, %v4274
    %v4276 = vpop.f32.mrb[0].mxu0
    %v4277 = vadd.f32 0.0, %v4276
    %v4278 = vpop.f32.mrb[0].mxu0
    %v4279 = vpop.f32.mrb[0].mxu0
    %4280 = vdwg.mxu0
    %v4285 = vrot.slane %v4234, 7
    %v4286 = vrot.slane %v4236, 7
    %v4287 = vrot.slane %v4275, 7
    %v4288 = vrot.slane %v4277, 7
    %v4297 = vadd.f32 %v357, %v4285
    %v4298 = vadd.f32 %v359, %v4286
    %v4299 = vadd.f32 %v410, %v4287
    %v4300 = vadd.f32 %v412, %v4288
    %v4301 = vadd.f32 %v367, %v4234
    %v4302 = vadd.f32 %v369, %v4236
    %v4303 = vadd.f32 %v420, %v4275
    %v4304 = vadd.f32 %v422, %v4277
    %v4305 = vxor.u32 %v4297, 2147483648
    %v4306 = vxor.u32 %v4298, 2147483648
    %v4307 = vxor.u32 %v4301, 2147483648
    %v4308 = vxor.u32 %v4302, 2147483648
    %v4309 = vmul.f32 %v4305, 1.442695
    %v4310 = vpow.pop %v4309
    %v4311 = vmul.f32 %v4306, 1.442695
    %v4312 = vpow.pop %v4311
    %v4313 = vmul.f32 %v4307, 1.442695
    %v4314 = vpow.pop %v4313
    %v4315 = vmul.f32 %v4308, 1.442695
    %v4316 = vpow.pop %v4315
    %v4317 = vadd.f32 %v4310, 1.0
    %v4318 = vadd.f32 %v4312, 1.0
    %v4319 = vadd.f32 %v4314, 1.0
    %v4320 = vadd.f32 %v4316, 1.0
    %v4321 = vrcp.pop %v4317
    %v4322 = vmul.f32 1.0, %v4321
    %v4323 = vrcp.pop %v4318
    %v4324 = vmul.f32 1.0, %v4323
    %v4325 = vrcp.pop %v4319
    %v4326 = vmul.f32 1.0, %v4325
    %v4327 = vrcp.pop %v4320
    %v4328 = vmul.f32 1.0, %v4327
    %v4329 = vmul.f32 %v4322, %v4300
    %v4330 = vmul.f32 %v4326, %v4304
    %v4331 = vadd.f32 %v4299, %v4329
    %v4332 = vadd.f32 %v4303, %v4330
    %v4333 = vtanh.pop %v4331
    %v4334 = vtanh.pop %v4332
    %v4337 = vrot.slane %v4333, 1
    %v4338 = vrot.slane %v4334, 1
    %v4341 = vsub.f32 %v4000, %v4337
    %v4342 = vsub.f32 %v4001, %v4338
    %v4345 = vrot.slane %v4341, 7
    %v4346 = vrot.slane %v4342, 7
    %v4349 = vmul.f32 %v4324, %v4345
    %v4350 = vmul.f32 %v4328, %v4346
    %v4351 = vadd.f32 %v4333, %v4349
    %v4352 = vadd.f32 %v4334, %v4350
    %v4353 = vpack.c.bf16 %v4351, %v4351
    %v4354 = vpack.c.bf16 %v4352, %v4352
    %v4355 = vpack.c.bf16 %v4198, %v4198
    %4356 = vmatprep.subr.bf16.mxu0 %v943
    %4357 = vmatpush1.bf16.msra.mxu0 %v942
    %4358 = vmatprep.subr.bf16.mxu0 %v947
    %4359 = vmatpush1.bf16.msra.mxu0 %v946
    %4360 = vmatprep.subr.bf16.mxu0 %v951
    %4361 = vmatpush1.bf16.msra.mxu0 %v950
    %4362 = vmatprep.subr.bf16.mxu0 %v955
    %4363 = vmatpush1.bf16.msra.mxu0 %v954
    %4364 = vmatprep.subr.bf16.mxu0 %v959
    %4365 = vmatpush1.bf16.msra.mxu0 %v958
    %4366 = vmatprep.subr.bf16.mxu0 %v963
    %4367 = vmatpush1.bf16.msra.mxu0 %v962
    %4368 = vmatprep.subr.bf16.mxu0 %v967
    %4369 = vmatpush1.bf16.msra.mxu0 %v966
    %4370 = vmatprep.subr.bf16.mxu0 %v971
    %4371 = vmatpush1.bf16.msra.mxu0 %v970
    %4372 = vmatprep.subr.bf16.mxu0 0
    %4373 = vmatpush1.bf16.msra.mxu0 0
    %4374 = vmatprep.subr.bf16.mxu0 0
    %4375 = vmatpush1.bf16.msra.mxu0 0
    %4376 = vmatprep.subr.bf16.mxu0 0
    %4377 = vmatpush1.bf16.msra.mxu0 0
    %4378 = vmatprep.subr.bf16.mxu0 0
    %4379 = vmatpush1.bf16.msra.mxu0 0
    %4380 = vmatprep.subr.bf16.mxu0 0
    %4381 = vmatpush1.bf16.msra.mxu0 0
    %4382 = vmatprep.subr.bf16.mxu0 0
    %4383 = vmatpush1.bf16.msra.mxu0 0
    %4384 = vmatprep.subr.bf16.mxu0 0
    %4385 = vmatpush1.bf16.msra.mxu0 0
    %4386 = vmatprep.subr.bf16.mxu0 0
    %4387 = vmatpush1.bf16.msra.mxu0 0
    %4388 = vmatprep.mubr.bf16.mxu0 0
    %4389 = vmatmul.mubr.bf16.gmra.mrb[0].mxu0 %v4355
    %v4390 = vpop.f32.mrb[0].mxu0
    %v4391 = vadd.f32 0.0, %v4390
    %v4392 = vpop.f32.mrb[0].mxu0
    %v4393 = vadd.f32 0.0, %v4392
    %v4394 = vpop.f32.mrb[0].mxu0
    %v4395 = vpop.f32.mrb[0].mxu0
    %4396 = vdwg.mxu0
    %4397 = vmatprep.subr.bf16.mxu0 %v945
    %4398 = vmatpush1.bf16.msra.mxu0 %v944
    %4399 = vmatprep.subr.bf16.mxu0 %v949
    %4400 = vmatpush1.bf16.msra.mxu0 %v948
    %4401 = vmatprep.subr.bf16.mxu0 %v953
    %4402 = vmatpush1.bf16.msra.mxu0 %v952
    %4403 = vmatprep.subr.bf16.mxu0 %v957
    %4404 = vmatpush1.bf16.msra.mxu0 %v956
    %4405 = vmatprep.subr.bf16.mxu0 %v961
    %4406 = vmatpush1.bf16.msra.mxu0 %v960
    %4407 = vmatprep.subr.bf16.mxu0 %v965
    %4408 = vmatpush1.bf16.msra.mxu0 %v964
    %4409 = vmatprep.subr.bf16.mxu0 %v969
    %4410 = vmatpush1.bf16.msra.mxu0 %v968
    %4411 = vmatprep.subr.bf16.mxu0 %v973
    %4412 = vmatpush1.bf16.msra.mxu0 %v972
    %4413 = vmatprep.subr.bf16.mxu0 0
    %4414 = vmatpush1.bf16.msra.mxu0 0
    %4415 = vmatprep.subr.bf16.mxu0 0
    %4416 = vmatpush1.bf16.msra.mxu0 0
    %4417 = vmatprep.subr.bf16.mxu0 0
    %4418 = vmatpush1.bf16.msra.mxu0 0
    %4419 = vmatprep.subr.bf16.mxu0 0
    %4420 = vmatpush1.bf16.msra.mxu0 0
    %4421 = vmatprep.subr.bf16.mxu0 0
    %4422 = vmatpush1.bf16.msra.mxu0 0
    %4423 = vmatprep.subr.bf16.mxu0 0
    %4424 = vmatpush1.bf16.msra.mxu0 0
    %4425 = vmatprep.subr.bf16.mxu0 0
    %4426 = vmatpush1.bf16.msra.mxu0 0
    %4427 = vmatprep.subr.bf16.mxu0 0
    %4428 = vmatpush1.bf16.msra.mxu0 0
    %4429 = vmatprep.mubr.bf16.mxu0 0
    %4430 = vmatmul.mubr.bf16.gmra.mrb[0].mxu0 %v4355
    %v4431 = vpop.f32.mrb[0].mxu0
    %v4432 = vadd.f32 0.0, %v4431
    %v4433 = vpop.f32.mrb[0].mxu0
    %v4434 = vadd.f32 0.0, %v4433
    %v4435 = vpop.f32.mrb[0].mxu0
    %v4436 = vpop.f32.mrb[0].mxu0
    %4437 = vdwg.mxu0
    %v4440 = vunpack.c.l.b16 %v4353
    %v4441 = vunpack.c.l.b16 %v4354
    %v4442 = vrot.slane %v4440, 1
    %v4443 = vsel %vm1093, %v4441, %v4442
    %v4444 = vpack.c.b16 %v4443, %v4443
    %4446 = vmatprep.subr.bf16.mxu0 %v1194
    %4447 = vmatpush1.bf16.msra.mxu0 %v1193
    %4448 = vmatprep.subr.bf16.mxu0 %v1198
    %4449 = vmatpush1.bf16.msra.mxu0 %v1197
    %4450 = vmatprep.subr.bf16.mxu0 %v1202
    %4451 = vmatpush1.bf16.msra.mxu0 %v1201
    %4452 = vmatprep.subr.bf16.mxu0 %v1206
    %4453 = vmatpush1.bf16.msra.mxu0 %v1205
    %4454 = vmatprep.subr.bf16.mxu0 %v1210
    %4455 = vmatpush1.bf16.msra.mxu0 %v1209
    %4456 = vmatprep.subr.bf16.mxu0 %v1214
    %4457 = vmatpush1.bf16.msra.mxu0 %v1213
    %4458 = vmatprep.subr.bf16.mxu0 %v1218
    %4459 = vmatpush1.bf16.msra.mxu0 %v1217
    %4460 = vmatprep.subr.bf16.mxu0 %v1222
    %4461 = vmatpush1.bf16.msra.mxu0 %v1221
    %4462 = vmatprep.subr.bf16.mxu0 0
    %4463 = vmatpush1.bf16.msra.mxu0 0
    %4464 = vmatprep.subr.bf16.mxu0 0
    %4465 = vmatpush1.bf16.msra.mxu0 0
    %4466 = vmatprep.subr.bf16.mxu0 0
    %4467 = vmatpush1.bf16.msra.mxu0 0
    %4468 = vmatprep.subr.bf16.mxu0 0
    %4469 = vmatpush1.bf16.msra.mxu0 0
    %4470 = vmatprep.subr.bf16.mxu0 0
    %4471 = vmatpush1.bf16.msra.mxu0 0
    %4472 = vmatprep.subr.bf16.mxu0 0
    %4473 = vmatpush1.bf16.msra.mxu0 0
    %4474 = vmatprep.subr.bf16.mxu0 0
    %4475 = vmatpush1.bf16.msra.mxu0 0
    %4476 = vmatprep.subr.bf16.mxu0 0
    %4477 = vmatpush1.bf16.msra.mxu0 0
    %4478 = vmatprep.mubr.bf16.mxu0 0
    %4479 = vmatmul.mubr.bf16.gmra.mrb[0].mxu0 %v4444
    %v4480 = vpop.f32.mrb[0].mxu0
    %v4481 = vadd.f32 %v4391, %v4480
    %v4482 = vpop.f32.mrb[0].mxu0
    %v4483 = vadd.f32 %v4393, %v4482
    %v4484 = vpop.f32.mrb[0].mxu0
    %v4485 = vpop.f32.mrb[0].mxu0
    %4486 = vdwg.mxu0
    %4487 = vmatprep.subr.bf16.mxu0 %v1196
    %4488 = vmatpush1.bf16.msra.mxu0 %v1195
    %4489 = vmatprep.subr.bf16.mxu0 %v1200
    %4490 = vmatpush1.bf16.msra.mxu0 %v1199
    %4491 = vmatprep.subr.bf16.mxu0 %v1204
    %4492 = vmatpush1.bf16.msra.mxu0 %v1203
    %4493 = vmatprep.subr.bf16.mxu0 %v1208
    %4494 = vmatpush1.bf16.msra.mxu0 %v1207
    %4495 = vmatprep.subr.bf16.mxu0 %v1212
    %4496 = vmatpush1.bf16.msra.mxu0 %v1211
    %4497 = vmatprep.subr.bf16.mxu0 %v1216
    %4498 = vmatpush1.bf16.msra.mxu0 %v1215
    %4499 = vmatprep.subr.bf16.mxu0 %v1220
    %4500 = vmatpush1.bf16.msra.mxu0 %v1219
    %4501 = vmatprep.subr.bf16.mxu0 %v1224
    %4502 = vmatpush1.bf16.msra.mxu0 %v1223
    %4503 = vmatprep.subr.bf16.mxu0 0
    %4504 = vmatpush1.bf16.msra.mxu0 0
    %4505 = vmatprep.subr.bf16.mxu0 0
    %4506 = vmatpush1.bf16.msra.mxu0 0
    %4507 = vmatprep.subr.bf16.mxu0 0
    %4508 = vmatpush1.bf16.msra.mxu0 0
    %4509 = vmatprep.subr.bf16.mxu0 0
    %4510 = vmatpush1.bf16.msra.mxu0 0
    %4511 = vmatprep.subr.bf16.mxu0 0
    %4512 = vmatpush1.bf16.msra.mxu0 0
    %4513 = vmatprep.subr.bf16.mxu0 0
    %4514 = vmatpush1.bf16.msra.mxu0 0
    %4515 = vmatprep.subr.bf16.mxu0 0
    %4516 = vmatpush1.bf16.msra.mxu0 0
    %4517 = vmatprep.subr.bf16.mxu0 0
    %4518 = vmatpush1.bf16.msra.mxu0 0
    %4519 = vmatprep.mubr.bf16.mxu0 0
    %4520 = vmatmul.mubr.bf16.gmra.mrb[0].mxu0 %v4444
    %v4521 = vpop.f32.mrb[0].mxu0
    %v4522 = vadd.f32 %v4432, %v4521
    %v4523 = vpop.f32.mrb[0].mxu0
    %v4524 = vadd.f32 %v4434, %v4523
    %v4525 = vpop.f32.mrb[0].mxu0
    %v4526 = vpop.f32.mrb[0].mxu0
    %4527 = vdwg.mxu0
    %v4528 = vadd.f32 %v4481, %v525
    %v4529 = vadd.f32 %v4483, %v529
    %v4530 = vadd.f32 %v4522, %v533
    %v4531 = vadd.f32 %v4524, %v537
    %v4532 = vxor.u32 %v4528, 2147483648
    %v4533 = vxor.u32 %v4529, 2147483648
    %v4534 = vmul.f32 %v4532, 1.442695
    %v4535 = vpow.pop %v4534
    %v4536 = vmul.f32 %v4533, 1.442695
    %v4537 = vpow.pop %v4536
    %v4538 = vadd.f32 %v4535, 1.0
    %v4539 = vadd.f32 %v4537, 1.0
    %v4540 = vrcp.pop %v4538
    %v4541 = vmul.f32 1.0, %v4540
    %v4542 = vrcp.pop %v4539
    %v4543 = vmul.f32 1.0, %v4542
    %v4544 = vmul.f32 %v4541, %v4531
    %v4545 = vadd.f32 %v4530, %v4544
    %v4546 = vtanh.pop %v4545
    %v4547 = vsub.f32 %v4198, %v4546
    %v4548 = vmul.f32 %v4543, %v4547
    %v4549 = vadd.f32 %v4546, %v4548
    %4550 = vmatprep.subr.bf16.mxu0 %v639
    %4551 = vmatpush1.bf16.msra.mxu0 %v638
    %4552 = vmatprep.subr.bf16.mxu0 %v643
    %4553 = vmatpush1.bf16.msra.mxu0 %v642
    %4554 = vmatprep.subr.bf16.mxu0 %v647
    %4555 = vmatpush1.bf16.msra.mxu0 %v646
    %4556 = vmatprep.subr.bf16.mxu0 %v651
    %4557 = vmatpush1.bf16.msra.mxu0 %v650
    %4558 = vmatprep.subr.bf16.mxu0 %v655
    %4559 = vmatpush1.bf16.msra.mxu0 %v654
    %4560 = vmatprep.subr.bf16.mxu0 %v659
    %4561 = vmatpush1.bf16.msra.mxu0 %v658
    %4562 = vmatprep.subr.bf16.mxu0 %v663
    %4563 = vmatpush1.bf16.msra.mxu0 %v662
    %4564 = vmatprep.subr.bf16.mxu0 %v667
    %4565 = vmatpush1.bf16.msra.mxu0 %v666
    %4566 = vmatprep.subr.bf16.mxu0 0
    %4567 = vmatpush1.bf16.msra.mxu0 0
    %4568 = vmatprep.subr.bf16.mxu0 0
    %4569 = vmatpush1.bf16.msra.mxu0 0
    %4570 = vmatprep.subr.bf16.mxu0 0
    %4571 = vmatpush1.bf16.msra.mxu0 0
    %4572 = vmatprep.subr.bf16.mxu0 0
    %4573 = vmatpush1.bf16.msra.mxu0 0
    %4574 = vmatprep.subr.bf16.mxu0 0
    %4575 = vmatpush1.bf16.msra.mxu0 0
    %4576 = vmatprep.subr.bf16.mxu0 0
    %4577 = vmatpush1.bf16.msra.mxu0 0
    %4578 = vmatprep.subr.bf16.mxu0 0
    %4579 = vmatpush1.bf16.msra.mxu0 0
    %4580 = vmatprep.subr.bf16.mxu0 0
    %4581 = vmatpush1.bf16.msra.mxu0 0
    %4582 = vmatprep.mubr.bf16.mxu0 0
    %4583 = vmatmul.mubr.bf16.gmra.mrb[0].mxu0 %v4444
    %v4584 = vpop.f32.mrb[0].mxu0
    %v4585 = vadd.f32 0.0, %v4584
    %v4586 = vpop.f32.mrb[0].mxu0
    %v4587 = vadd.f32 0.0, %v4586
    %v4588 = vpop.f32.mrb[0].mxu0
    %v4589 = vpop.f32.mrb[0].mxu0
    %4590 = vdwg.mxu0
    %4591 = vmatprep.subr.bf16.mxu0 %v641
    %4592 = vmatpush1.bf16.msra.mxu0 %v640
    %4593 = vmatprep.subr.bf16.mxu0 %v645
    %4594 = vmatpush1.bf16.msra.mxu0 %v644
    %4595 = vmatprep.subr.bf16.mxu0 %v649
    %4596 = vmatpush1.bf16.msra.mxu0 %v648
    %4597 = vmatprep.subr.bf16.mxu0 %v653
    %4598 = vmatpush1.bf16.msra.mxu0 %v652
    %4599 = vmatprep.subr.bf16.mxu0 %v657
    %4600 = vmatpush1.bf16.msra.mxu0 %v656
    %4601 = vmatprep.subr.bf16.mxu0 %v661
    %4602 = vmatpush1.bf16.msra.mxu0 %v660
    %4603 = vmatprep.subr.bf16.mxu0 %v665
    %4604 = vmatpush1.bf16.msra.mxu0 %v664
    %4605 = vmatprep.subr.bf16.mxu0 %v669
    %4606 = vmatpush1.bf16.msra.mxu0 %v668
    %4607 = vmatprep.subr.bf16.mxu0 0
    %4608 = vmatpush1.bf16.msra.mxu0 0
    %4609 = vmatprep.subr.bf16.mxu0 0
    %4610 = vmatpush1.bf16.msra.mxu0 0
    %4611 = vmatprep.subr.bf16.mxu0 0
    %4612 = vmatpush1.bf16.msra.mxu0 0
    %4613 = vmatprep.subr.bf16.mxu0 0
    %4614 = vmatpush1.bf16.msra.mxu0 0
    %4615 = vmatprep.subr.bf16.mxu0 0
    %4616 = vmatpush1.bf16.msra.mxu0 0
    %4617 = vmatprep.subr.bf16.mxu0 0
    %4618 = vmatpush1.bf16.msra.mxu0 0
    %4619 = vmatprep.subr.bf16.mxu0 0
    %4620 = vmatpush1.bf16.msra.mxu0 0
    %4621 = vmatprep.subr.bf16.mxu0 0
    %4622 = vmatpush1.bf16.msra.mxu0 0
    %4623 = vmatprep.mubr.bf16.mxu0 0
    %4624 = vmatmul.mubr.bf16.gmra.mrb[0].mxu0 %v4444
    %v4625 = vpop.f32.mrb[0].mxu0
    %v4626 = vadd.f32 0.0, %v4625
    %v4627 = vpop.f32.mrb[0].mxu0
    %v4628 = vadd.f32 0.0, %v4627
    %v4629 = vpop.f32.mrb[0].mxu0
    %v4630 = vpop.f32.mrb[0].mxu0
    %4631 = vdwg.mxu0
    %v4636 = vrot.slane %v4585, 6
    %v4637 = vrot.slane %v4587, 6
    %v4638 = vrot.slane %v4626, 6
    %v4639 = vrot.slane %v4628, 6
    %v4640 = vrot.slane %v4585, 7
    %v4641 = vrot.slane %v4587, 7
    %v4642 = vrot.slane %v4626, 7
    %v4643 = vrot.slane %v4628, 7
    %v4652 = vadd.f32 %v357, %v4636
    %v4653 = vadd.f32 %v359, %v4637
    %v4654 = vadd.f32 %v410, %v4638
    %v4655 = vadd.f32 %v412, %v4639
    %v4656 = vadd.f32 %v367, %v4640
    %v4657 = vadd.f32 %v369, %v4641
    %v4658 = vadd.f32 %v420, %v4642
    %v4659 = vadd.f32 %v422, %v4643
    %v4660 = vxor.u32 %v4652, 2147483648
    %v4661 = vxor.u32 %v4653, 2147483648
    %v4662 = vxor.u32 %v4656, 2147483648
    %v4663 = vxor.u32 %v4657, 2147483648
    %v4664 = vmul.f32 %v4660, 1.442695
    %v4665 = vpow.pop %v4664
    %v4666 = vmul.f32 %v4661, 1.442695
    %v4667 = vpow.pop %v4666
    %v4668 = vmul.f32 %v4662, 1.442695
    %v4669 = vpow.pop %v4668
    %v4670 = vmul.f32 %v4663, 1.442695
    %v4671 = vpow.pop %v4670
    %v4672 = vadd.f32 %v4665, 1.0
    %v4673 = vadd.f32 %v4667, 1.0
    %v4674 = vadd.f32 %v4669, 1.0
    %v4675 = vadd.f32 %v4671, 1.0
    %v4676 = vrcp.pop %v4672
    %v4677 = vmul.f32 1.0, %v4676
    %v4678 = vrcp.pop %v4673
    %v4679 = vmul.f32 1.0, %v4678
    %v4680 = vrcp.pop %v4674
    %v4681 = vmul.f32 1.0, %v4680
    %v4682 = vrcp.pop %v4675
    %v4683 = vmul.f32 1.0, %v4682
    %v4684 = vmul.f32 %v4677, %v4655
    %v4685 = vmul.f32 %v4681, %v4659
    %v4686 = vadd.f32 %v4654, %v4684
    %v4687 = vadd.f32 %v4658, %v4685
    %v4688 = vtanh.pop %v4686
    %v4689 = vtanh.pop %v4687
    %v4692 = vrot.slane %v4688, 1
    %v4693 = vrot.slane %v4689, 1
    %v4696 = vsub.f32 %v4351, %v4692
    %v4697 = vsub.f32 %v4352, %v4693
    %v4700 = vrot.slane %v4696, 7
    %v4701 = vrot.slane %v4697, 7
    %v4704 = vmul.f32 %v4679, %v4700
    %v4705 = vmul.f32 %v4683, %v4701
    %v4706 = vadd.f32 %v4688, %v4704
    %v4707 = vadd.f32 %v4689, %v4705
    %v4708 = vpack.c.bf16 %v4706, %v4706
    %v4709 = vpack.c.bf16 %v4707, %v4707
    %v4710 = vpack.c.bf16 %v4549, %v4549
    %4711 = vmatprep.subr.bf16.mxu0 %v943
    %4712 = vmatpush1.bf16.msra.mxu0 %v942
    %4713 = vmatprep.subr.bf16.mxu0 %v947
    %4714 = vmatpush1.bf16.msra.mxu0 %v946
    %4715 = vmatprep.subr.bf16.mxu0 %v951
    %4716 = vmatpush1.bf16.msra.mxu0 %v950
    %4717 = vmatprep.subr.bf16.mxu0 %v955
    %4718 = vmatpush1.bf16.msra.mxu0 %v954
    %4719 = vmatprep.subr.bf16.mxu0 %v959
    %4720 = vmatpush1.bf16.msra.mxu0 %v958
    %4721 = vmatprep.subr.bf16.mxu0 %v963
    %4722 = vmatpush1.bf16.msra.mxu0 %v962
    %4723 = vmatprep.subr.bf16.mxu0 %v967
    %4724 = vmatpush1.bf16.msra.mxu0 %v966
    %4725 = vmatprep.subr.bf16.mxu0 %v971
    %4726 = vmatpush1.bf16.msra.mxu0 %v970
    %4727 = vmatprep.subr.bf16.mxu0 0
    %4728 = vmatpush1.bf16.msra.mxu0 0
    %4729 = vmatprep.subr.bf16.mxu0 0
    %4730 = vmatpush1.bf16.msra.mxu0 0
    %4731 = vmatprep.subr.bf16.mxu0 0
    %4732 = vmatpush1.bf16.msra.mxu0 0
    %4733 = vmatprep.subr.bf16.mxu0 0
    %4734 = vmatpush1.bf16.msra.mxu0 0
    %4735 = vmatprep.subr.bf16.mxu0 0
    %4736 = vmatpush1.bf16.msra.mxu0 0
    %4737 = vmatprep.subr.bf16.mxu0 0
    %4738 = vmatpush1.bf16.msra.mxu0 0
    %4739 = vmatprep.subr.bf16.mxu0 0
    %4740 = vmatpush1.bf16.msra.mxu0 0
    %4741 = vmatprep.subr.bf16.mxu0 0
    %4742 = vmatpush1.bf16.msra.mxu0 0
    %4743 = vmatprep.mubr.bf16.mxu0 0
    %4744 = vmatmul.mubr.bf16.gmra.mrb[0].mxu0 %v4710
    %v4745 = vpop.f32.mrb[0].mxu0
    %v4746 = vadd.f32 0.0, %v4745
    %v4747 = vpop.f32.mrb[0].mxu0
    %v4748 = vadd.f32 0.0, %v4747
    %v4749 = vpop.f32.mrb[0].mxu0
    %v4750 = vpop.f32.mrb[0].mxu0
    %4751 = vdwg.mxu0
    %4752 = vmatprep.subr.bf16.mxu0 %v945
    %4753 = vmatpush1.bf16.msra.mxu0 %v944
    %4754 = vmatprep.subr.bf16.mxu0 %v949
    %4755 = vmatpush1.bf16.msra.mxu0 %v948
    %4756 = vmatprep.subr.bf16.mxu0 %v953
    %4757 = vmatpush1.bf16.msra.mxu0 %v952
    %4758 = vmatprep.subr.bf16.mxu0 %v957
    %4759 = vmatpush1.bf16.msra.mxu0 %v956
    %4760 = vmatprep.subr.bf16.mxu0 %v961
    %4761 = vmatpush1.bf16.msra.mxu0 %v960
    %4762 = vmatprep.subr.bf16.mxu0 %v965
    %4763 = vmatpush1.bf16.msra.mxu0 %v964
    %4764 = vmatprep.subr.bf16.mxu0 %v969
    %4765 = vmatpush1.bf16.msra.mxu0 %v968
    %4766 = vmatprep.subr.bf16.mxu0 %v973
    %4767 = vmatpush1.bf16.msra.mxu0 %v972
    %4768 = vmatprep.subr.bf16.mxu0 0
    %4769 = vmatpush1.bf16.msra.mxu0 0
    %4770 = vmatprep.subr.bf16.mxu0 0
    %4771 = vmatpush1.bf16.msra.mxu0 0
    %4772 = vmatprep.subr.bf16.mxu0 0
    %4773 = vmatpush1.bf16.msra.mxu0 0
    %4774 = vmatprep.subr.bf16.mxu0 0
    %4775 = vmatpush1.bf16.msra.mxu0 0
    %4776 = vmatprep.subr.bf16.mxu0 0
    %4777 = vmatpush1.bf16.msra.mxu0 0
    %4778 = vmatprep.subr.bf16.mxu0 0
    %4779 = vmatpush1.bf16.msra.mxu0 0
    %4780 = vmatprep.subr.bf16.mxu0 0
    %4781 = vmatpush1.bf16.msra.mxu0 0
    %4782 = vmatprep.subr.bf16.mxu0 0
    %4783 = vmatpush1.bf16.msra.mxu0 0
    %4784 = vmatprep.mubr.bf16.mxu0 0
    %4785 = vmatmul.mubr.bf16.gmra.mrb[0].mxu0 %v4710
    %v4786 = vpop.f32.mrb[0].mxu0
    %v4787 = vadd.f32 0.0, %v4786
    %v4788 = vpop.f32.mrb[0].mxu0
    %v4789 = vadd.f32 0.0, %v4788
    %v4790 = vpop.f32.mrb[0].mxu0
    %v4791 = vpop.f32.mrb[0].mxu0
    %4792 = vdwg.mxu0
    %v4795 = vunpack.c.l.b16 %v4708
    %v4796 = vunpack.c.l.b16 %v4709
    %v4797 = vrot.slane %v4795, 2
    %v4798 = vrot.slane %v4796, 1
    %v4799 = vsel %vm1093, %v4798, %v4797
    %v4800 = vpack.c.b16 %v4799, %v4799
    %4802 = vmatprep.subr.bf16.mxu0 %v1194
    %4803 = vmatpush1.bf16.msra.mxu0 %v1193
    %4804 = vmatprep.subr.bf16.mxu0 %v1198
    %4805 = vmatpush1.bf16.msra.mxu0 %v1197
    %4806 = vmatprep.subr.bf16.mxu0 %v1202
    %4807 = vmatpush1.bf16.msra.mxu0 %v1201
    %4808 = vmatprep.subr.bf16.mxu0 %v1206
    %4809 = vmatpush1.bf16.msra.mxu0 %v1205
    %4810 = vmatprep.subr.bf16.mxu0 %v1210
    %4811 = vmatpush1.bf16.msra.mxu0 %v1209
    %4812 = vmatprep.subr.bf16.mxu0 %v1214
    %4813 = vmatpush1.bf16.msra.mxu0 %v1213
    %4814 = vmatprep.subr.bf16.mxu0 %v1218
    %4815 = vmatpush1.bf16.msra.mxu0 %v1217
    %4816 = vmatprep.subr.bf16.mxu0 %v1222
    %4817 = vmatpush1.bf16.msra.mxu0 %v1221
    %4818 = vmatprep.subr.bf16.mxu0 0
    %4819 = vmatpush1.bf16.msra.mxu0 0
    %4820 = vmatprep.subr.bf16.mxu0 0
    %4821 = vmatpush1.bf16.msra.mxu0 0
    %4822 = vmatprep.subr.bf16.mxu0 0
    %4823 = vmatpush1.bf16.msra.mxu0 0
    %4824 = vmatprep.subr.bf16.mxu0 0
    %4825 = vmatpush1.bf16.msra.mxu0 0
    %4826 = vmatprep.subr.bf16.mxu0 0
    %4827 = vmatpush1.bf16.msra.mxu0 0
    %4828 = vmatprep.subr.bf16.mxu0 0
    %4829 = vmatpush1.bf16.msra.mxu0 0
    %4830 = vmatprep.subr.bf16.mxu0 0
    %4831 = vmatpush1.bf16.msra.mxu0 0
    %4832 = vmatprep.subr.bf16.mxu0 0
    %4833 = vmatpush1.bf16.msra.mxu0 0
    %4834 = vmatprep.mubr.bf16.mxu0 0
    %4835 = vmatmul.mubr.bf16.gmra.mrb[0].mxu0 %v4800
    %v4836 = vpop.f32.mrb[0].mxu0
    %v4837 = vadd.f32 %v4746, %v4836
    %v4838 = vpop.f32.mrb[0].mxu0
    %v4839 = vadd.f32 %v4748, %v4838
    %v4840 = vpop.f32.mrb[0].mxu0
    %v4841 = vpop.f32.mrb[0].mxu0
    %4842 = vdwg.mxu0
    %4843 = vmatprep.subr.bf16.mxu0 %v1196
    %4844 = vmatpush1.bf16.msra.mxu0 %v1195
    %4845 = vmatprep.subr.bf16.mxu0 %v1200
    %4846 = vmatpush1.bf16.msra.mxu0 %v1199
    %4847 = vmatprep.subr.bf16.mxu0 %v1204
    %4848 = vmatpush1.bf16.msra.mxu0 %v1203
    %4849 = vmatprep.subr.bf16.mxu0 %v1208
    %4850 = vmatpush1.bf16.msra.mxu0 %v1207
    %4851 = vmatprep.subr.bf16.mxu0 %v1212
    %4852 = vmatpush1.bf16.msra.mxu0 %v1211
    %4853 = vmatprep.subr.bf16.mxu0 %v1216
    %4854 = vmatpush1.bf16.msra.mxu0 %v1215
    %4855 = vmatprep.subr.bf16.mxu0 %v1220
    %4856 = vmatpush1.bf16.msra.mxu0 %v1219
    %4857 = vmatprep.subr.bf16.mxu0 %v1224
    %4858 = vmatpush1.bf16.msra.mxu0 %v1223
    %4859 = vmatprep.subr.bf16.mxu0 0
    %4860 = vmatpush1.bf16.msra.mxu0 0
    %4861 = vmatprep.subr.bf16.mxu0 0
    %4862 = vmatpush1.bf16.msra.mxu0 0
    %4863 = vmatprep.subr.bf16.mxu0 0
    %4864 = vmatpush1.bf16.msra.mxu0 0
    %4865 = vmatprep.subr.bf16.mxu0 0
    %4866 = vmatpush1.bf16.msra.mxu0 0
    %4867 = vmatprep.subr.bf16.mxu0 0
    %4868 = vmatpush1.bf16.msra.mxu0 0
    %4869 = vmatprep.subr.bf16.mxu0 0
    %4870 = vmatpush1.bf16.msra.mxu0 0
    %4871 = vmatprep.subr.bf16.mxu0 0
    %4872 = vmatpush1.bf16.msra.mxu0 0
    %4873 = vmatprep.subr.bf16.mxu0 0
    %4874 = vmatpush1.bf16.msra.mxu0 0
    %4875 = vmatprep.mubr.bf16.mxu0 0
    %4876 = vmatmul.mubr.bf16.gmra.mrb[0].mxu0 %v4800
    %v4877 = vpop.f32.mrb[0].mxu0
    %v4878 = vadd.f32 %v4787, %v4877
    %v4879 = vpop.f32.mrb[0].mxu0
    %v4880 = vadd.f32 %v4789, %v4879
    %v4881 = vpop.f32.mrb[0].mxu0
    %v4882 = vpop.f32.mrb[0].mxu0
    %4883 = vdwg.mxu0
    %v4884 = vadd.f32 %v4837, %v525
    %v4885 = vadd.f32 %v4839, %v529
    %v4886 = vadd.f32 %v4878, %v533
    %v4887 = vadd.f32 %v4880, %v537
    %v4888 = vxor.u32 %v4884, 2147483648
    %v4889 = vxor.u32 %v4885, 2147483648
    %v4890 = vmul.f32 %v4888, 1.442695
    %v4891 = vpow.pop %v4890
    %v4892 = vmul.f32 %v4889, 1.442695
    %v4893 = vpow.pop %v4892
    %v4894 = vadd.f32 %v4891, 1.0
    %v4895 = vadd.f32 %v4893, 1.0
    %v4896 = vrcp.pop %v4894
    %v4897 = vmul.f32 1.0, %v4896
    %v4898 = vrcp.pop %v4895
    %v4899 = vmul.f32 1.0, %v4898
    %v4900 = vmul.f32 %v4897, %v4887
    %v4901 = vadd.f32 %v4886, %v4900
    %v4902 = vtanh.pop %v4901
    %v4903 = vsub.f32 %v4549, %v4902
    %v4904 = vmul.f32 %v4899, %v4903
    %v4905 = vadd.f32 %v4902, %v4904
    %4906 = vmatprep.subr.bf16.mxu0 %v639
    %4907 = vmatpush1.bf16.msra.mxu0 %v638
    %4908 = vmatprep.subr.bf16.mxu0 %v643
    %4909 = vmatpush1.bf16.msra.mxu0 %v642
    %4910 = vmatprep.subr.bf16.mxu0 %v647
    %4911 = vmatpush1.bf16.msra.mxu0 %v646
    %4912 = vmatprep.subr.bf16.mxu0 %v651
    %4913 = vmatpush1.bf16.msra.mxu0 %v650
    %4914 = vmatprep.subr.bf16.mxu0 %v655
    %4915 = vmatpush1.bf16.msra.mxu0 %v654
    %4916 = vmatprep.subr.bf16.mxu0 %v659
    %4917 = vmatpush1.bf16.msra.mxu0 %v658
    %4918 = vmatprep.subr.bf16.mxu0 %v663
    %4919 = vmatpush1.bf16.msra.mxu0 %v662
    %4920 = vmatprep.subr.bf16.mxu0 %v667
    %4921 = vmatpush1.bf16.msra.mxu0 %v666
    %4922 = vmatprep.subr.bf16.mxu0 0
    %4923 = vmatpush1.bf16.msra.mxu0 0
    %4924 = vmatprep.subr.bf16.mxu0 0
    %4925 = vmatpush1.bf16.msra.mxu0 0
    %4926 = vmatprep.subr.bf16.mxu0 0
    %4927 = vmatpush1.bf16.msra.mxu0 0
    %4928 = vmatprep.subr.bf16.mxu0 0
    %4929 = vmatpush1.bf16.msra.mxu0 0
    %4930 = vmatprep.subr.bf16.mxu0 0
    %4931 = vmatpush1.bf16.msra.mxu0 0
    %4932 = vmatprep.subr.bf16.mxu0 0
    %4933 = vmatpush1.bf16.msra.mxu0 0
    %4934 = vmatprep.subr.bf16.mxu0 0
    %4935 = vmatpush1.bf16.msra.mxu0 0
    %4936 = vmatprep.subr.bf16.mxu0 0
    %4937 = vmatpush1.bf16.msra.mxu0 0
    %4938 = vmatprep.mubr.bf16.mxu0 0
    %4939 = vmatmul.mubr.bf16.gmra.mrb[0].mxu0 %v4800
    %v4940 = vpop.f32.mrb[0].mxu0
    %v4941 = vadd.f32 0.0, %v4940
    %v4942 = vpop.f32.mrb[0].mxu0
    %v4943 = vadd.f32 0.0, %v4942
    %v4944 = vpop.f32.mrb[0].mxu0
    %v4945 = vpop.f32.mrb[0].mxu0
    %4946 = vdwg.mxu0
    %4947 = vmatprep.subr.bf16.mxu0 %v641
    %4948 = vmatpush1.bf16.msra.mxu0 %v640
    %4949 = vmatprep.subr.bf16.mxu0 %v645
    %4950 = vmatpush1.bf16.msra.mxu0 %v644
    %4951 = vmatprep.subr.bf16.mxu0 %v649
    %4952 = vmatpush1.bf16.msra.mxu0 %v648
    %4953 = vmatprep.subr.bf16.mxu0 %v653
    %4954 = vmatpush1.bf16.msra.mxu0 %v652
    %4955 = vmatprep.subr.bf16.mxu0 %v657
    %4956 = vmatpush1.bf16.msra.mxu0 %v656
    %4957 = vmatprep.subr.bf16.mxu0 %v661
    %4958 = vmatpush1.bf16.msra.mxu0 %v660
    %4959 = vmatprep.subr.bf16.mxu0 %v665
    %4960 = vmatpush1.bf16.msra.mxu0 %v664
    %4961 = vmatprep.subr.bf16.mxu0 %v669
    %4962 = vmatpush1.bf16.msra.mxu0 %v668
    %4963 = vmatprep.subr.bf16.mxu0 0
    %4964 = vmatpush1.bf16.msra.mxu0 0
    %4965 = vmatprep.subr.bf16.mxu0 0
    %4966 = vmatpush1.bf16.msra.mxu0 0
    %4967 = vmatprep.subr.bf16.mxu0 0
    %4968 = vmatpush1.bf16.msra.mxu0 0
    %4969 = vmatprep.subr.bf16.mxu0 0
    %4970 = vmatpush1.bf16.msra.mxu0 0
    %4971 = vmatprep.subr.bf16.mxu0 0
    %4972 = vmatpush1.bf16.msra.mxu0 0
    %4973 = vmatprep.subr.bf16.mxu0 0
    %4974 = vmatpush1.bf16.msra.mxu0 0
    %4975 = vmatprep.subr.bf16.mxu0 0
    %4976 = vmatpush1.bf16.msra.mxu0 0
    %4977 = vmatprep.subr.bf16.mxu0 0
    %4978 = vmatpush1.bf16.msra.mxu0 0
    %4979 = vmatprep.mubr.bf16.mxu0 0
    %4980 = vmatmul.mubr.bf16.gmra.mrb[0].mxu0 %v4800
    %v4981 = vpop.f32.mrb[0].mxu0
    %v4982 = vadd.f32 0.0, %v4981
    %v4983 = vpop.f32.mrb[0].mxu0
    %v4984 = vadd.f32 0.0, %v4983
    %v4985 = vpop.f32.mrb[0].mxu0
    %v4986 = vpop.f32.mrb[0].mxu0
    %4987 = vdwg.mxu0
    %v4992 = vrot.slane %v4941, 5
    %v4993 = vrot.slane %v4943, 5
    %v4994 = vrot.slane %v4982, 5
    %v4995 = vrot.slane %v4984, 5
    %v4996 = vrot.slane %v4941, 6
    %v4997 = vrot.slane %v4943, 6
    %v4998 = vrot.slane %v4982, 6
    %v4999 = vrot.slane %v4984, 6
    %v5008 = vadd.f32 %v357, %v4992
    %v5009 = vadd.f32 %v359, %v4993
    %v5010 = vadd.f32 %v410, %v4994
    %v5011 = vadd.f32 %v412, %v4995
    %v5012 = vadd.f32 %v367, %v4996
    %v5013 = vadd.f32 %v369, %v4997
    %v5014 = vadd.f32 %v420, %v4998
    %v5015 = vadd.f32 %v422, %v4999
    %v5016 = vxor.u32 %v5008, 2147483648
    %v5017 = vxor.u32 %v5009, 2147483648
    %v5018 = vxor.u32 %v5012, 2147483648
    %v5019 = vxor.u32 %v5013, 2147483648
    %v5020 = vmul.f32 %v5016, 1.442695
    %v5021 = vpow.pop %v5020
    %v5022 = vmul.f32 %v5017, 1.442695
    %v5023 = vpow.pop %v5022
    %v5024 = vmul.f32 %v5018, 1.442695
    %v5025 = vpow.pop %v5024
    %v5026 = vmul.f32 %v5019, 1.442695
    %v5027 = vpow.pop %v5026
    %v5028 = vadd.f32 %v5021, 1.0
    %v5029 = vadd.f32 %v5023, 1.0
    %v5030 = vadd.f32 %v5025, 1.0
    %v5031 = vadd.f32 %v5027, 1.0
    %v5032 = vrcp.pop %v5028
    %v5033 = vmul.f32 1.0, %v5032
    %v5034 = vrcp.pop %v5029
    %v5035 = vmul.f32 1.0, %v5034
    %v5036 = vrcp.pop %v5030
    %v5037 = vmul.f32 1.0, %v5036
    %v5038 = vrcp.pop %v5031
    %v5039 = vmul.f32 1.0, %v5038
    %v5040 = vmul.f32 %v5033, %v5011
    %v5041 = vmul.f32 %v5037, %v5015
    %v5042 = vadd.f32 %v5010, %v5040
    %v5043 = vadd.f32 %v5014, %v5041
    %v5044 = vtanh.pop %v5042
    %v5045 = vtanh.pop %v5043
    %v5048 = vrot.slane %v5044, 1
    %v5049 = vrot.slane %v5045, 1
    %v5052 = vsub.f32 %v4706, %v5048
    %v5053 = vsub.f32 %v4707, %v5049
    %v5056 = vrot.slane %v5052, 7
    %v5057 = vrot.slane %v5053, 7
    %v5060 = vmul.f32 %v5035, %v5056
    %v5061 = vmul.f32 %v5039, %v5057
    %v5062 = vadd.f32 %v5044, %v5060
    %v5063 = vadd.f32 %v5045, %v5061
    %v5064 = vpack.c.bf16 %v5062, %v5062
    %v5065 = vpack.c.bf16 %v5063, %v5063
    %v5066 = vpack.c.bf16 %v4905, %v4905
    %5067 = vmatprep.subr.bf16.mxu0 %v943
    %5068 = vmatpush1.bf16.msra.mxu0 %v942
    %5069 = vmatprep.subr.bf16.mxu0 %v947
    %5070 = vmatpush1.bf16.msra.mxu0 %v946
    %5071 = vmatprep.subr.bf16.mxu0 %v951
    %5072 = vmatpush1.bf16.msra.mxu0 %v950
    %5073 = vmatprep.subr.bf16.mxu0 %v955
    %5074 = vmatpush1.bf16.msra.mxu0 %v954
    %5075 = vmatprep.subr.bf16.mxu0 %v959
    %5076 = vmatpush1.bf16.msra.mxu0 %v958
    %5077 = vmatprep.subr.bf16.mxu0 %v963
    %5078 = vmatpush1.bf16.msra.mxu0 %v962
    %5079 = vmatprep.subr.bf16.mxu0 %v967
    %5080 = vmatpush1.bf16.msra.mxu0 %v966
    %5081 = vmatprep.subr.bf16.mxu0 %v971
    %5082 = vmatpush1.bf16.msra.mxu0 %v970
    %5083 = vmatprep.subr.bf16.mxu0 0
    %5084 = vmatpush1.bf16.msra.mxu0 0
    %5085 = vmatprep.subr.bf16.mxu0 0
    %5086 = vmatpush1.bf16.msra.mxu0 0
    %5087 = vmatprep.subr.bf16.mxu0 0
    %5088 = vmatpush1.bf16.msra.mxu0 0
    %5089 = vmatprep.subr.bf16.mxu0 0
    %5090 = vmatpush1.bf16.msra.mxu0 0
    %5091 = vmatprep.subr.bf16.mxu0 0
    %5092 = vmatpush1.bf16.msra.mxu0 0
    %5093 = vmatprep.subr.bf16.mxu0 0
    %5094 = vmatpush1.bf16.msra.mxu0 0
    %5095 = vmatprep.subr.bf16.mxu0 0
    %5096 = vmatpush1.bf16.msra.mxu0 0
    %5097 = vmatprep.subr.bf16.mxu0 0
    %5098 = vmatpush1.bf16.msra.mxu0 0
    %5099 = vmatprep.mubr.bf16.mxu0 0
    %5100 = vmatmul.mubr.bf16.gmra.mrb[0].mxu0 %v5066
    %v5101 = vpop.f32.mrb[0].mxu0
    %v5102 = vadd.f32 0.0, %v5101
    %v5103 = vpop.f32.mrb[0].mxu0
    %v5104 = vadd.f32 0.0, %v5103
    %v5105 = vpop.f32.mrb[0].mxu0
    %v5106 = vpop.f32.mrb[0].mxu0
    %5107 = vdwg.mxu0
    %5108 = vmatprep.subr.bf16.mxu0 %v945
    %5109 = vmatpush1.bf16.msra.mxu0 %v944
    %5110 = vmatprep.subr.bf16.mxu0 %v949
    %5111 = vmatpush1.bf16.msra.mxu0 %v948
    %5112 = vmatprep.subr.bf16.mxu0 %v953
    %5113 = vmatpush1.bf16.msra.mxu0 %v952
    %5114 = vmatprep.subr.bf16.mxu0 %v957
    %5115 = vmatpush1.bf16.msra.mxu0 %v956
    %5116 = vmatprep.subr.bf16.mxu0 %v961
    %5117 = vmatpush1.bf16.msra.mxu0 %v960
    %5118 = vmatprep.subr.bf16.mxu0 %v965
    %5119 = vmatpush1.bf16.msra.mxu0 %v964
    %5120 = vmatprep.subr.bf16.mxu0 %v969
    %5121 = vmatpush1.bf16.msra.mxu0 %v968
    %5122 = vmatprep.subr.bf16.mxu0 %v973
    %5123 = vmatpush1.bf16.msra.mxu0 %v972
    %5124 = vmatprep.subr.bf16.mxu0 0
    %5125 = vmatpush1.bf16.msra.mxu0 0
    %5126 = vmatprep.subr.bf16.mxu0 0
    %5127 = vmatpush1.bf16.msra.mxu0 0
    %5128 = vmatprep.subr.bf16.mxu0 0
    %5129 = vmatpush1.bf16.msra.mxu0 0
    %5130 = vmatprep.subr.bf16.mxu0 0
    %5131 = vmatpush1.bf16.msra.mxu0 0
    %5132 = vmatprep.subr.bf16.mxu0 0
    %5133 = vmatpush1.bf16.msra.mxu0 0
    %5134 = vmatprep.subr.bf16.mxu0 0
    %5135 = vmatpush1.bf16.msra.mxu0 0
    %5136 = vmatprep.subr.bf16.mxu0 0
    %5137 = vmatpush1.bf16.msra.mxu0 0
    %5138 = vmatprep.subr.bf16.mxu0 0
    %5139 = vmatpush1.bf16.msra.mxu0 0
    %5140 = vmatprep.mubr.bf16.mxu0 0
    %5141 = vmatmul.mubr.bf16.gmra.mrb[0].mxu0 %v5066
    %v5142 = vpop.f32.mrb[0].mxu0
    %v5143 = vadd.f32 0.0, %v5142
    %v5144 = vpop.f32.mrb[0].mxu0
    %v5145 = vadd.f32 0.0, %v5144
    %v5146 = vpop.f32.mrb[0].mxu0
    %v5147 = vpop.f32.mrb[0].mxu0
    %5148 = vdwg.mxu0
    %v5151 = vunpack.c.l.b16 %v5064
    %v5152 = vunpack.c.l.b16 %v5065
    %v5153 = vrot.slane %v5151, 3
    %v5154 = vrot.slane %v5152, 2
    %v5155 = vsel %vm1093, %v5154, %v5153
    %v5156 = vpack.c.b16 %v5155, %v5155
    %5158 = vmatprep.subr.bf16.mxu0 %v1194
    %5159 = vmatpush1.bf16.msra.mxu0 %v1193
    %5160 = vmatprep.subr.bf16.mxu0 %v1198
    %5161 = vmatpush1.bf16.msra.mxu0 %v1197
    %5162 = vmatprep.subr.bf16.mxu0 %v1202
    %5163 = vmatpush1.bf16.msra.mxu0 %v1201
    %5164 = vmatprep.subr.bf16.mxu0 %v1206
    %5165 = vmatpush1.bf16.msra.mxu0 %v1205
    %5166 = vmatprep.subr.bf16.mxu0 %v1210
    %5167 = vmatpush1.bf16.msra.mxu0 %v1209
    %5168 = vmatprep.subr.bf16.mxu0 %v1214
    %5169 = vmatpush1.bf16.msra.mxu0 %v1213
    %5170 = vmatprep.subr.bf16.mxu0 %v1218
    %5171 = vmatpush1.bf16.msra.mxu0 %v1217
    %5172 = vmatprep.subr.bf16.mxu0 %v1222
    %5173 = vmatpush1.bf16.msra.mxu0 %v1221
    %5174 = vmatprep.subr.bf16.mxu0 0
    %5175 = vmatpush1.bf16.msra.mxu0 0
    %5176 = vmatprep.subr.bf16.mxu0 0
    %5177 = vmatpush1.bf16.msra.mxu0 0
    %5178 = vmatprep.subr.bf16.mxu0 0
    %5179 = vmatpush1.bf16.msra.mxu0 0
    %5180 = vmatprep.subr.bf16.mxu0 0
    %5181 = vmatpush1.bf16.msra.mxu0 0
    %5182 = vmatprep.subr.bf16.mxu0 0
    %5183 = vmatpush1.bf16.msra.mxu0 0
    %5184 = vmatprep.subr.bf16.mxu0 0
    %5185 = vmatpush1.bf16.msra.mxu0 0
    %5186 = vmatprep.subr.bf16.mxu0 0
    %5187 = vmatpush1.bf16.msra.mxu0 0
    %5188 = vmatprep.subr.bf16.mxu0 0
    %5189 = vmatpush1.bf16.msra.mxu0 0
    %5190 = vmatprep.mubr.bf16.mxu0 0
    %5191 = vmatmul.mubr.bf16.gmra.mrb[0].mxu0 %v5156
    %v5192 = vpop.f32.mrb[0].mxu0
    %v5193 = vadd.f32 %v5102, %v5192
    %v5194 = vpop.f32.mrb[0].mxu0
    %v5195 = vadd.f32 %v5104, %v5194
    %v5196 = vpop.f32.mrb[0].mxu0
    %v5197 = vpop.f32.mrb[0].mxu0
    %5198 = vdwg.mxu0
    %5199 = vmatprep.subr.bf16.mxu0 %v1196
    %5200 = vmatpush1.bf16.msra.mxu0 %v1195
    %5201 = vmatprep.subr.bf16.mxu0 %v1200
    %5202 = vmatpush1.bf16.msra.mxu0 %v1199
    %5203 = vmatprep.subr.bf16.mxu0 %v1204
    %5204 = vmatpush1.bf16.msra.mxu0 %v1203
    %5205 = vmatprep.subr.bf16.mxu0 %v1208
    %5206 = vmatpush1.bf16.msra.mxu0 %v1207
    %5207 = vmatprep.subr.bf16.mxu0 %v1212
    %5208 = vmatpush1.bf16.msra.mxu0 %v1211
    %5209 = vmatprep.subr.bf16.mxu0 %v1216
    %5210 = vmatpush1.bf16.msra.mxu0 %v1215
    %5211 = vmatprep.subr.bf16.mxu0 %v1220
    %5212 = vmatpush1.bf16.msra.mxu0 %v1219
    %5213 = vmatprep.subr.bf16.mxu0 %v1224
    %5214 = vmatpush1.bf16.msra.mxu0 %v1223
    %5215 = vmatprep.subr.bf16.mxu0 0
    %5216 = vmatpush1.bf16.msra.mxu0 0
    %5217 = vmatprep.subr.bf16.mxu0 0
    %5218 = vmatpush1.bf16.msra.mxu0 0
    %5219 = vmatprep.subr.bf16.mxu0 0
    %5220 = vmatpush1.bf16.msra.mxu0 0
    %5221 = vmatprep.subr.bf16.mxu0 0
    %5222 = vmatpush1.bf16.msra.mxu0 0
    %5223 = vmatprep.subr.bf16.mxu0 0
    %5224 = vmatpush1.bf16.msra.mxu0 0
    %5225 = vmatprep.subr.bf16.mxu0 0
    %5226 = vmatpush1.bf16.msra.mxu0 0
    %5227 = vmatprep.subr.bf16.mxu0 0
    %5228 = vmatpush1.bf16.msra.mxu0 0
    %5229 = vmatprep.subr.bf16.mxu0 0
    %5230 = vmatpush1.bf16.msra.mxu0 0
    %5231 = vmatprep.mubr.bf16.mxu0 0
    %5232 = vmatmul.mubr.bf16.gmra.mrb[0].mxu0 %v5156
    %v5233 = vpop.f32.mrb[0].mxu0
    %v5234 = vadd.f32 %v5143, %v5233
    %v5235 = vpop.f32.mrb[0].mxu0
    %v5236 = vadd.f32 %v5145, %v5235
    %v5237 = vpop.f32.mrb[0].mxu0
    %v5238 = vpop.f32.mrb[0].mxu0
    %5239 = vdwg.mxu0
    %v5240 = vadd.f32 %v5193, %v525
    %v5241 = vadd.f32 %v5195, %v529
    %v5242 = vadd.f32 %v5234, %v533
    %v5243 = vadd.f32 %v5236, %v537
    %v5244 = vxor.u32 %v5240, 2147483648
    %v5245 = vxor.u32 %v5241, 2147483648
    %v5246 = vmul.f32 %v5244, 1.442695
    %v5247 = vpow.pop %v5246
    %v5248 = vmul.f32 %v5245, 1.442695
    %v5249 = vpow.pop %v5248
    %v5250 = vadd.f32 %v5247, 1.0
    %v5251 = vadd.f32 %v5249, 1.0
    %v5252 = vrcp.pop %v5250
    %v5253 = vmul.f32 1.0, %v5252
    %v5254 = vrcp.pop %v5251
    %v5255 = vmul.f32 1.0, %v5254
    %v5256 = vmul.f32 %v5253, %v5243
    %v5257 = vadd.f32 %v5242, %v5256
    %v5258 = vtanh.pop %v5257
    %v5259 = vsub.f32 %v4905, %v5258
    %v5260 = vmul.f32 %v5255, %v5259
    %v5261 = vadd.f32 %v5258, %v5260
    %5262 = vmatprep.subr.bf16.mxu0 %v639
    %5263 = vmatpush1.bf16.msra.mxu0 %v638
    %5264 = vmatprep.subr.bf16.mxu0 %v643
    %5265 = vmatpush1.bf16.msra.mxu0 %v642
    %5266 = vmatprep.subr.bf16.mxu0 %v647
    %5267 = vmatpush1.bf16.msra.mxu0 %v646
    %5268 = vmatprep.subr.bf16.mxu0 %v651
    %5269 = vmatpush1.bf16.msra.mxu0 %v650
    %5270 = vmatprep.subr.bf16.mxu0 %v655
    %5271 = vmatpush1.bf16.msra.mxu0 %v654
    %5272 = vmatprep.subr.bf16.mxu0 %v659
    %5273 = vmatpush1.bf16.msra.mxu0 %v658
    %5274 = vmatprep.subr.bf16.mxu0 %v663
    %5275 = vmatpush1.bf16.msra.mxu0 %v662
    %5276 = vmatprep.subr.bf16.mxu0 %v667
    %5277 = vmatpush1.bf16.msra.mxu0 %v666
    %5278 = vmatprep.subr.bf16.mxu0 0
    %5279 = vmatpush1.bf16.msra.mxu0 0
    %5280 = vmatprep.subr.bf16.mxu0 0
    %5281 = vmatpush1.bf16.msra.mxu0 0
    %5282 = vmatprep.subr.bf16.mxu0 0
    %5283 = vmatpush1.bf16.msra.mxu0 0
    %5284 = vmatprep.subr.bf16.mxu0 0
    %5285 = vmatpush1.bf16.msra.mxu0 0
    %5286 = vmatprep.subr.bf16.mxu0 0
    %5287 = vmatpush1.bf16.msra.mxu0 0
    %5288 = vmatprep.subr.bf16.mxu0 0
    %5289 = vmatpush1.bf16.msra.mxu0 0
    %5290 = vmatprep.subr.bf16.mxu0 0
    %5291 = vmatpush1.bf16.msra.mxu0 0
    %5292 = vmatprep.subr.bf16.mxu0 0
    %5293 = vmatpush1.bf16.msra.mxu0 0
    %5294 = vmatprep.mubr.bf16.mxu0 0
    %5295 = vmatmul.mubr.bf16.gmra.mrb[0].mxu0 %v5156
    %v5296 = vpop.f32.mrb[0].mxu0
    %v5297 = vadd.f32 0.0, %v5296
    %v5298 = vpop.f32.mrb[0].mxu0
    %v5299 = vadd.f32 0.0, %v5298
    %v5300 = vpop.f32.mrb[0].mxu0
    %v5301 = vpop.f32.mrb[0].mxu0
    %5302 = vdwg.mxu0
    %5303 = vmatprep.subr.bf16.mxu0 %v641
    %5304 = vmatpush1.bf16.msra.mxu0 %v640
    %5305 = vmatprep.subr.bf16.mxu0 %v645
    %5306 = vmatpush1.bf16.msra.mxu0 %v644
    %5307 = vmatprep.subr.bf16.mxu0 %v649
    %5308 = vmatpush1.bf16.msra.mxu0 %v648
    %5309 = vmatprep.subr.bf16.mxu0 %v653
    %5310 = vmatpush1.bf16.msra.mxu0 %v652
    %5311 = vmatprep.subr.bf16.mxu0 %v657
    %5312 = vmatpush1.bf16.msra.mxu0 %v656
    %5313 = vmatprep.subr.bf16.mxu0 %v661
    %5314 = vmatpush1.bf16.msra.mxu0 %v660
    %5315 = vmatprep.subr.bf16.mxu0 %v665
    %5316 = vmatpush1.bf16.msra.mxu0 %v664
    %5317 = vmatprep.subr.bf16.mxu0 %v669
    %5318 = vmatpush1.bf16.msra.mxu0 %v668
    %5319 = vmatprep.subr.bf16.mxu0 0
    %5320 = vmatpush1.bf16.msra.mxu0 0
    %5321 = vmatprep.subr.bf16.mxu0 0
    %5322 = vmatpush1.bf16.msra.mxu0 0
    %5323 = vmatprep.subr.bf16.mxu0 0
    %5324 = vmatpush1.bf16.msra.mxu0 0
    %5325 = vmatprep.subr.bf16.mxu0 0
    %5326 = vmatpush1.bf16.msra.mxu0 0
    %5327 = vmatprep.subr.bf16.mxu0 0
    %5328 = vmatpush1.bf16.msra.mxu0 0
    %5329 = vmatprep.subr.bf16.mxu0 0
    %5330 = vmatpush1.bf16.msra.mxu0 0
    %5331 = vmatprep.subr.bf16.mxu0 0
    %5332 = vmatpush1.bf16.msra.mxu0 0
    %5333 = vmatprep.subr.bf16.mxu0 0
    %5334 = vmatpush1.bf16.msra.mxu0 0
    %5335 = vmatprep.mubr.bf16.mxu0 0
    %5336 = vmatmul.mubr.bf16.gmra.mrb[0].mxu0 %v5156
    %v5337 = vpop.f32.mrb[0].mxu0
    %v5338 = vadd.f32 0.0, %v5337
    %v5339 = vpop.f32.mrb[0].mxu0
    %v5340 = vadd.f32 0.0, %v5339
    %v5341 = vpop.f32.mrb[0].mxu0
    %v5342 = vpop.f32.mrb[0].mxu0
    %5343 = vdwg.mxu0
    %v5348 = vrot.slane %v5297, 4
    %v5349 = vrot.slane %v5299, 4
    %v5350 = vrot.slane %v5338, 4
    %v5351 = vrot.slane %v5340, 4
    %v5352 = vrot.slane %v5297, 5
    %v5353 = vrot.slane %v5299, 5
    %v5354 = vrot.slane %v5338, 5
    %v5355 = vrot.slane %v5340, 5
    %v5364 = vadd.f32 %v357, %v5348
    %v5365 = vadd.f32 %v359, %v5349
    %v5366 = vadd.f32 %v410, %v5350
    %v5367 = vadd.f32 %v412, %v5351
    %v5368 = vadd.f32 %v367, %v5352
    %v5369 = vadd.f32 %v369, %v5353
    %v5370 = vadd.f32 %v420, %v5354
    %v5371 = vadd.f32 %v422, %v5355
    %v5372 = vxor.u32 %v5364, 2147483648
    %v5373 = vxor.u32 %v5365, 2147483648
    %v5374 = vxor.u32 %v5368, 2147483648
    %v5375 = vxor.u32 %v5369, 2147483648
    %v5376 = vmul.f32 %v5372, 1.442695
    %v5377 = vpow.pop %v5376
    %v5378 = vmul.f32 %v5373, 1.442695
    %v5379 = vpow.pop %v5378
    %v5380 = vmul.f32 %v5374, 1.442695
    %v5381 = vpow.pop %v5380
    %v5382 = vmul.f32 %v5375, 1.442695
    %v5383 = vpow.pop %v5382
    %v5384 = vadd.f32 %v5377, 1.0
    %v5385 = vadd.f32 %v5379, 1.0
    %v5386 = vadd.f32 %v5381, 1.0
    %v5387 = vadd.f32 %v5383, 1.0
    %v5388 = vrcp.pop %v5384
    %v5389 = vmul.f32 1.0, %v5388
    %v5390 = vrcp.pop %v5385
    %v5391 = vmul.f32 1.0, %v5390
    %v5392 = vrcp.pop %v5386
    %v5393 = vmul.f32 1.0, %v5392
    %v5394 = vrcp.pop %v5387
    %v5395 = vmul.f32 1.0, %v5394
    %v5396 = vmul.f32 %v5389, %v5367
    %v5397 = vmul.f32 %v5393, %v5371
    %v5398 = vadd.f32 %v5366, %v5396
    %v5399 = vadd.f32 %v5370, %v5397
    %v5400 = vtanh.pop %v5398
    %v5401 = vtanh.pop %v5399
    %v5404 = vrot.slane %v5400, 1
    %v5405 = vrot.slane %v5401, 1
    %v5408 = vsub.f32 %v5062, %v5404
    %v5409 = vsub.f32 %v5063, %v5405
    %v5412 = vrot.slane %v5408, 7
    %v5413 = vrot.slane %v5409, 7
    %v5416 = vmul.f32 %v5391, %v5412
    %v5417 = vmul.f32 %v5395, %v5413
    %v5418 = vadd.f32 %v5400, %v5416
    %v5419 = vadd.f32 %v5401, %v5417
    %v5420 = vpack.c.bf16 %v5418, %v5418
    %v5421 = vpack.c.bf16 %v5419, %v5419
    %v5422 = vpack.c.bf16 %v5261, %v5261
    %5423 = vmatprep.subr.bf16.mxu0 %v943
    %5424 = vmatpush1.bf16.msra.mxu0 %v942
    %5425 = vmatprep.subr.bf16.mxu0 %v947
    %5426 = vmatpush1.bf16.msra.mxu0 %v946
    %5427 = vmatprep.subr.bf16.mxu0 %v951
    %5428 = vmatpush1.bf16.msra.mxu0 %v950
    %5429 = vmatprep.subr.bf16.mxu0 %v955
    %5430 = vmatpush1.bf16.msra.mxu0 %v954
    %5431 = vmatprep.subr.bf16.mxu0 %v959
    %5432 = vmatpush1.bf16.msra.mxu0 %v958
    %5433 = vmatprep.subr.bf16.mxu0 %v963
    %5434 = vmatpush1.bf16.msra.mxu0 %v962
    %5435 = vmatprep.subr.bf16.mxu0 %v967
    %5436 = vmatpush1.bf16.msra.mxu0 %v966
    %5437 = vmatprep.subr.bf16.mxu0 %v971
    %5438 = vmatpush1.bf16.msra.mxu0 %v970
    %5439 = vmatprep.subr.bf16.mxu0 0
    %5440 = vmatpush1.bf16.msra.mxu0 0
    %5441 = vmatprep.subr.bf16.mxu0 0
    %5442 = vmatpush1.bf16.msra.mxu0 0
    %5443 = vmatprep.subr.bf16.mxu0 0
    %5444 = vmatpush1.bf16.msra.mxu0 0
    %5445 = vmatprep.subr.bf16.mxu0 0
    %5446 = vmatpush1.bf16.msra.mxu0 0
    %5447 = vmatprep.subr.bf16.mxu0 0
    %5448 = vmatpush1.bf16.msra.mxu0 0
    %5449 = vmatprep.subr.bf16.mxu0 0
    %5450 = vmatpush1.bf16.msra.mxu0 0
    %5451 = vmatprep.subr.bf16.mxu0 0
    %5452 = vmatpush1.bf16.msra.mxu0 0
    %5453 = vmatprep.subr.bf16.mxu0 0
    %5454 = vmatpush1.bf16.msra.mxu0 0
    %5455 = vmatprep.mubr.bf16.mxu0 0
    %5456 = vmatmul.mubr.bf16.gmra.mrb[0].mxu0 %v5422
    %v5457 = vpop.f32.mrb[0].mxu0
    %v5458 = vadd.f32 0.0, %v5457
    %v5459 = vpop.f32.mrb[0].mxu0
    %v5460 = vadd.f32 0.0, %v5459
    %v5461 = vpop.f32.mrb[0].mxu0
    %v5462 = vpop.f32.mrb[0].mxu0
    %5463 = vdwg.mxu0
    %5464 = vmatprep.subr.bf16.mxu0 %v945
    %5465 = vmatpush1.bf16.msra.mxu0 %v944
    %5466 = vmatprep.subr.bf16.mxu0 %v949
    %5467 = vmatpush1.bf16.msra.mxu0 %v948
    %5468 = vmatprep.subr.bf16.mxu0 %v953
    %5469 = vmatpush1.bf16.msra.mxu0 %v952
    %5470 = vmatprep.subr.bf16.mxu0 %v957
    %5471 = vmatpush1.bf16.msra.mxu0 %v956
    %5472 = vmatprep.subr.bf16.mxu0 %v961
    %5473 = vmatpush1.bf16.msra.mxu0 %v960
    %5474 = vmatprep.subr.bf16.mxu0 %v965
    %5475 = vmatpush1.bf16.msra.mxu0 %v964
    %5476 = vmatprep.subr.bf16.mxu0 %v969
    %5477 = vmatpush1.bf16.msra.mxu0 %v968
    %5478 = vmatprep.subr.bf16.mxu0 %v973
    %5479 = vmatpush1.bf16.msra.mxu0 %v972
    %5480 = vmatprep.subr.bf16.mxu0 0
    %5481 = vmatpush1.bf16.msra.mxu0 0
    %5482 = vmatprep.subr.bf16.mxu0 0
    %5483 = vmatpush1.bf16.msra.mxu0 0
    %5484 = vmatprep.subr.bf16.mxu0 0
    %5485 = vmatpush1.bf16.msra.mxu0 0
    %5486 = vmatprep.subr.bf16.mxu0 0
    %5487 = vmatpush1.bf16.msra.mxu0 0
    %5488 = vmatprep.subr.bf16.mxu0 0
    %5489 = vmatpush1.bf16.msra.mxu0 0
    %5490 = vmatprep.subr.bf16.mxu0 0
    %5491 = vmatpush1.bf16.msra.mxu0 0
    %5492 = vmatprep.subr.bf16.mxu0 0
    %5493 = vmatpush1.bf16.msra.mxu0 0
    %5494 = vmatprep.subr.bf16.mxu0 0
    %5495 = vmatpush1.bf16.msra.mxu0 0
    %5496 = vmatprep.mubr.bf16.mxu0 0
    %5497 = vmatmul.mubr.bf16.gmra.mrb[0].mxu0 %v5422
    %v5498 = vpop.f32.mrb[0].mxu0
    %v5499 = vadd.f32 0.0, %v5498
    %v5500 = vpop.f32.mrb[0].mxu0
    %v5501 = vadd.f32 0.0, %v5500
    %v5502 = vpop.f32.mrb[0].mxu0
    %v5503 = vpop.f32.mrb[0].mxu0
    %5504 = vdwg.mxu0
    %v5507 = vunpack.c.l.b16 %v5420
    %v5508 = vunpack.c.l.b16 %v5421
    %v5509 = vrot.slane %v5507, 4
    %v5510 = vrot.slane %v5508, 3
    %v5511 = vsel %vm1093, %v5510, %v5509
    %v5512 = vpack.c.b16 %v5511, %v5511
    %5514 = vmatprep.subr.bf16.mxu0 %v1194
    %5515 = vmatpush1.bf16.msra.mxu0 %v1193
    %5516 = vmatprep.subr.bf16.mxu0 %v1198
    %5517 = vmatpush1.bf16.msra.mxu0 %v1197
    %5518 = vmatprep.subr.bf16.mxu0 %v1202
    %5519 = vmatpush1.bf16.msra.mxu0 %v1201
    %5520 = vmatprep.subr.bf16.mxu0 %v1206
    %5521 = vmatpush1.bf16.msra.mxu0 %v1205
    %5522 = vmatprep.subr.bf16.mxu0 %v1210
    %5523 = vmatpush1.bf16.msra.mxu0 %v1209
    %5524 = vmatprep.subr.bf16.mxu0 %v1214
    %5525 = vmatpush1.bf16.msra.mxu0 %v1213
    %5526 = vmatprep.subr.bf16.mxu0 %v1218
    %5527 = vmatpush1.bf16.msra.mxu0 %v1217
    %5528 = vmatprep.subr.bf16.mxu0 %v1222
    %5529 = vmatpush1.bf16.msra.mxu0 %v1221
    %5530 = vmatprep.subr.bf16.mxu0 0
    %5531 = vmatpush1.bf16.msra.mxu0 0
    %5532 = vmatprep.subr.bf16.mxu0 0
    %5533 = vmatpush1.bf16.msra.mxu0 0
    %5534 = vmatprep.subr.bf16.mxu0 0
    %5535 = vmatpush1.bf16.msra.mxu0 0
    %5536 = vmatprep.subr.bf16.mxu0 0
    %5537 = vmatpush1.bf16.msra.mxu0 0
    %5538 = vmatprep.subr.bf16.mxu0 0
    %5539 = vmatpush1.bf16.msra.mxu0 0
    %5540 = vmatprep.subr.bf16.mxu0 0
    %5541 = vmatpush1.bf16.msra.mxu0 0
    %5542 = vmatprep.subr.bf16.mxu0 0
    %5543 = vmatpush1.bf16.msra.mxu0 0
    %5544 = vmatprep.subr.bf16.mxu0 0
    %5545 = vmatpush1.bf16.msra.mxu0 0
    %5546 = vmatprep.mubr.bf16.mxu0 0
    %5547 = vmatmul.mubr.bf16.gmra.mrb[0].mxu0 %v5512
    %v5548 = vpop.f32.mrb[0].mxu0
    %v5549 = vadd.f32 %v5458, %v5548
    %v5550 = vpop.f32.mrb[0].mxu0
    %v5551 = vadd.f32 %v5460, %v5550
    %v5552 = vpop.f32.mrb[0].mxu0
    %v5553 = vpop.f32.mrb[0].mxu0
    %5554 = vdwg.mxu0
    %5555 = vmatprep.subr.bf16.mxu0 %v1196
    %5556 = vmatpush1.bf16.msra.mxu0 %v1195
    %5557 = vmatprep.subr.bf16.mxu0 %v1200
    %5558 = vmatpush1.bf16.msra.mxu0 %v1199
    %5559 = vmatprep.subr.bf16.mxu0 %v1204
    %5560 = vmatpush1.bf16.msra.mxu0 %v1203
    %5561 = vmatprep.subr.bf16.mxu0 %v1208
    %5562 = vmatpush1.bf16.msra.mxu0 %v1207
    %5563 = vmatprep.subr.bf16.mxu0 %v1212
    %5564 = vmatpush1.bf16.msra.mxu0 %v1211
    %5565 = vmatprep.subr.bf16.mxu0 %v1216
    %5566 = vmatpush1.bf16.msra.mxu0 %v1215
    %5567 = vmatprep.subr.bf16.mxu0 %v1220
    %5568 = vmatpush1.bf16.msra.mxu0 %v1219
    %5569 = vmatprep.subr.bf16.mxu0 %v1224
    %5570 = vmatpush1.bf16.msra.mxu0 %v1223
    %5571 = vmatprep.subr.bf16.mxu0 0
    %5572 = vmatpush1.bf16.msra.mxu0 0
    %5573 = vmatprep.subr.bf16.mxu0 0
    %5574 = vmatpush1.bf16.msra.mxu0 0
    %5575 = vmatprep.subr.bf16.mxu0 0
    %5576 = vmatpush1.bf16.msra.mxu0 0
    %5577 = vmatprep.subr.bf16.mxu0 0
    %5578 = vmatpush1.bf16.msra.mxu0 0
    %5579 = vmatprep.subr.bf16.mxu0 0
    %5580 = vmatpush1.bf16.msra.mxu0 0
    %5581 = vmatprep.subr.bf16.mxu0 0
    %5582 = vmatpush1.bf16.msra.mxu0 0
    %5583 = vmatprep.subr.bf16.mxu0 0
    %5584 = vmatpush1.bf16.msra.mxu0 0
    %5585 = vmatprep.subr.bf16.mxu0 0
    %5586 = vmatpush1.bf16.msra.mxu0 0
    %5587 = vmatprep.mubr.bf16.mxu0 0
    %5588 = vmatmul.mubr.bf16.gmra.mrb[0].mxu0 %v5512
    %v5589 = vpop.f32.mrb[0].mxu0
    %v5590 = vadd.f32 %v5499, %v5589
    %v5591 = vpop.f32.mrb[0].mxu0
    %v5592 = vadd.f32 %v5501, %v5591
    %v5593 = vpop.f32.mrb[0].mxu0
    %v5594 = vpop.f32.mrb[0].mxu0
    %5595 = vdwg.mxu0
    %v5596 = vadd.f32 %v5549, %v525
    %v5597 = vadd.f32 %v5551, %v529
    %v5598 = vadd.f32 %v5590, %v533
    %v5599 = vadd.f32 %v5592, %v537
    %v5600 = vxor.u32 %v5596, 2147483648
    %v5601 = vxor.u32 %v5597, 2147483648
    %v5602 = vmul.f32 %v5600, 1.442695
    %v5603 = vpow.pop %v5602
    %v5604 = vmul.f32 %v5601, 1.442695
    %v5605 = vpow.pop %v5604
    %v5606 = vadd.f32 %v5603, 1.0
    %v5607 = vadd.f32 %v5605, 1.0
    %v5608 = vrcp.pop %v5606
    %v5609 = vmul.f32 1.0, %v5608
    %v5610 = vrcp.pop %v5607
    %v5611 = vmul.f32 1.0, %v5610
    %v5612 = vmul.f32 %v5609, %v5599
    %v5613 = vadd.f32 %v5598, %v5612
    %v5614 = vtanh.pop %v5613
    %v5615 = vsub.f32 %v5261, %v5614
    %v5616 = vmul.f32 %v5611, %v5615
    %v5617 = vadd.f32 %v5614, %v5616
    %5618 = vmatprep.subr.bf16.mxu0 %v639
    %5619 = vmatpush1.bf16.msra.mxu0 %v638
    %5620 = vmatprep.subr.bf16.mxu0 %v643
    %5621 = vmatpush1.bf16.msra.mxu0 %v642
    %5622 = vmatprep.subr.bf16.mxu0 %v647
    %5623 = vmatpush1.bf16.msra.mxu0 %v646
    %5624 = vmatprep.subr.bf16.mxu0 %v651
    %5625 = vmatpush1.bf16.msra.mxu0 %v650
    %5626 = vmatprep.subr.bf16.mxu0 %v655
    %5627 = vmatpush1.bf16.msra.mxu0 %v654
    %5628 = vmatprep.subr.bf16.mxu0 %v659
    %5629 = vmatpush1.bf16.msra.mxu0 %v658
    %5630 = vmatprep.subr.bf16.mxu0 %v663
    %5631 = vmatpush1.bf16.msra.mxu0 %v662
    %5632 = vmatprep.subr.bf16.mxu0 %v667
    %5633 = vmatpush1.bf16.msra.mxu0 %v666
    %5634 = vmatprep.subr.bf16.mxu0 0
    %5635 = vmatpush1.bf16.msra.mxu0 0
    %5636 = vmatprep.subr.bf16.mxu0 0
    %5637 = vmatpush1.bf16.msra.mxu0 0
    %5638 = vmatprep.subr.bf16.mxu0 0
    %5639 = vmatpush1.bf16.msra.mxu0 0
    %5640 = vmatprep.subr.bf16.mxu0 0
    %5641 = vmatpush1.bf16.msra.mxu0 0
    %5642 = vmatprep.subr.bf16.mxu0 0
    %5643 = vmatpush1.bf16.msra.mxu0 0
    %5644 = vmatprep.subr.bf16.mxu0 0
    %5645 = vmatpush1.bf16.msra.mxu0 0
    %5646 = vmatprep.subr.bf16.mxu0 0
    %5647 = vmatpush1.bf16.msra.mxu0 0
    %5648 = vmatprep.subr.bf16.mxu0 0
    %5649 = vmatpush1.bf16.msra.mxu0 0
    %5650 = vmatprep.mubr.bf16.mxu0 0
    %5651 = vmatmul.mubr.bf16.gmra.mrb[0].mxu0 %v5512
    %v5652 = vpop.f32.mrb[0].mxu0
    %v5653 = vadd.f32 0.0, %v5652
    %v5654 = vpop.f32.mrb[0].mxu0
    %v5655 = vadd.f32 0.0, %v5654
    %v5656 = vpop.f32.mrb[0].mxu0
    %v5657 = vpop.f32.mrb[0].mxu0
    %5658 = vdwg.mxu0
    %5659 = vmatprep.subr.bf16.mxu0 %v641
    %5660 = vmatpush1.bf16.msra.mxu0 %v640
    %5661 = vmatprep.subr.bf16.mxu0 %v645
    %5662 = vmatpush1.bf16.msra.mxu0 %v644
    %5663 = vmatprep.subr.bf16.mxu0 %v649
    %5664 = vmatpush1.bf16.msra.mxu0 %v648
    %5665 = vmatprep.subr.bf16.mxu0 %v653
    %5666 = vmatpush1.bf16.msra.mxu0 %v652
    %5667 = vmatprep.subr.bf16.mxu0 %v657
    %5668 = vmatpush1.bf16.msra.mxu0 %v656
    %5669 = vmatprep.subr.bf16.mxu0 %v661
    %5670 = vmatpush1.bf16.msra.mxu0 %v660
    %5671 = vmatprep.subr.bf16.mxu0 %v665
    %5672 = vmatpush1.bf16.msra.mxu0 %v664
    %5673 = vmatprep.subr.bf16.mxu0 %v669
    %5674 = vmatpush1.bf16.msra.mxu0 %v668
    %5675 = vmatprep.subr.bf16.mxu0 0
    %5676 = vmatpush1.bf16.msra.mxu0 0
    %5677 = vmatprep.subr.bf16.mxu0 0
    %5678 = vmatpush1.bf16.msra.mxu0 0
    %5679 = vmatprep.subr.bf16.mxu0 0
    %5680 = vmatpush1.bf16.msra.mxu0 0
    %5681 = vmatprep.subr.bf16.mxu0 0
    %5682 = vmatpush1.bf16.msra.mxu0 0
    %5683 = vmatprep.subr.bf16.mxu0 0
    %5684 = vmatpush1.bf16.msra.mxu0 0
    %5685 = vmatprep.subr.bf16.mxu0 0
    %5686 = vmatpush1.bf16.msra.mxu0 0
    %5687 = vmatprep.subr.bf16.mxu0 0
    %5688 = vmatpush1.bf16.msra.mxu0 0
    %5689 = vmatprep.subr.bf16.mxu0 0
    %5690 = vmatpush1.bf16.msra.mxu0 0
    %5691 = vmatprep.mubr.bf16.mxu0 0
    %5692 = vmatmul.mubr.bf16.gmra.mrb[0].mxu0 %v5512
    %v5693 = vpop.f32.mrb[0].mxu0
    %v5694 = vadd.f32 0.0, %v5693
    %v5695 = vpop.f32.mrb[0].mxu0
    %v5696 = vadd.f32 0.0, %v5695
    %v5697 = vpop.f32.mrb[0].mxu0
    %v5698 = vpop.f32.mrb[0].mxu0
    %5699 = vdwg.mxu0
    %v5704 = vrot.slane %v5653, 3
    %v5705 = vrot.slane %v5655, 3
    %v5706 = vrot.slane %v5694, 3
    %v5707 = vrot.slane %v5696, 3
    %v5708 = vrot.slane %v5653, 4
    %v5709 = vrot.slane %v5655, 4
    %v5710 = vrot.slane %v5694, 4
    %v5711 = vrot.slane %v5696, 4
    %v5720 = vadd.f32 %v357, %v5704
    %v5721 = vadd.f32 %v359, %v5705
    %v5722 = vadd.f32 %v410, %v5706
    %v5723 = vadd.f32 %v412, %v5707
    %v5724 = vadd.f32 %v367, %v5708
    %v5725 = vadd.f32 %v369, %v5709
    %v5726 = vadd.f32 %v420, %v5710
    %v5727 = vadd.f32 %v422, %v5711
    %v5728 = vxor.u32 %v5720, 2147483648
    %v5729 = vxor.u32 %v5721, 2147483648
    %v5730 = vxor.u32 %v5724, 2147483648
    %v5731 = vxor.u32 %v5725, 2147483648
    %v5732 = vmul.f32 %v5728, 1.442695
    %v5733 = vpow.pop %v5732
    %v5734 = vmul.f32 %v5729, 1.442695
    %v5735 = vpow.pop %v5734
    %v5736 = vmul.f32 %v5730, 1.442695
    %v5737 = vpow.pop %v5736
    %v5738 = vmul.f32 %v5731, 1.442695
    %v5739 = vpow.pop %v5738
    %v5740 = vadd.f32 %v5733, 1.0
    %v5741 = vadd.f32 %v5735, 1.0
    %v5742 = vadd.f32 %v5737, 1.0
    %v5743 = vadd.f32 %v5739, 1.0
    %v5744 = vrcp.pop %v5740
    %v5745 = vmul.f32 1.0, %v5744
    %v5746 = vrcp.pop %v5741
    %v5747 = vmul.f32 1.0, %v5746
    %v5748 = vrcp.pop %v5742
    %v5749 = vmul.f32 1.0, %v5748
    %v5750 = vrcp.pop %v5743
    %v5751 = vmul.f32 1.0, %v5750
    %v5752 = vmul.f32 %v5745, %v5723
    %v5753 = vmul.f32 %v5749, %v5727
    %v5754 = vadd.f32 %v5722, %v5752
    %v5755 = vadd.f32 %v5726, %v5753
    %v5756 = vtanh.pop %v5754
    %v5757 = vtanh.pop %v5755
    %v5760 = vrot.slane %v5756, 1
    %v5761 = vrot.slane %v5757, 1
    %v5764 = vsub.f32 %v5418, %v5760
    %v5765 = vsub.f32 %v5419, %v5761
    %v5768 = vrot.slane %v5764, 7
    %v5769 = vrot.slane %v5765, 7
    %v5772 = vmul.f32 %v5747, %v5768
    %v5773 = vmul.f32 %v5751, %v5769
    %v5774 = vadd.f32 %v5756, %v5772
    %v5775 = vadd.f32 %v5757, %v5773
    %v5776 = vpack.c.bf16 %v5774, %v5774
    %v5777 = vpack.c.bf16 %v5775, %v5775
    %v5778 = vpack.c.bf16 %v5617, %v5617
    %5779 = vmatprep.subr.bf16.mxu0 %v943
    %5780 = vmatpush1.bf16.msra.mxu0 %v942
    %5781 = vmatprep.subr.bf16.mxu0 %v947
    %5782 = vmatpush1.bf16.msra.mxu0 %v946
    %5783 = vmatprep.subr.bf16.mxu0 %v951
    %5784 = vmatpush1.bf16.msra.mxu0 %v950
    %5785 = vmatprep.subr.bf16.mxu0 %v955
    %5786 = vmatpush1.bf16.msra.mxu0 %v954
    %5787 = vmatprep.subr.bf16.mxu0 %v959
    %5788 = vmatpush1.bf16.msra.mxu0 %v958
    %5789 = vmatprep.subr.bf16.mxu0 %v963
    %5790 = vmatpush1.bf16.msra.mxu0 %v962
    %5791 = vmatprep.subr.bf16.mxu0 %v967
    %5792 = vmatpush1.bf16.msra.mxu0 %v966
    %5793 = vmatprep.subr.bf16.mxu0 %v971
    %5794 = vmatpush1.bf16.msra.mxu0 %v970
    %5795 = vmatprep.subr.bf16.mxu0 0
    %5796 = vmatpush1.bf16.msra.mxu0 0
    %5797 = vmatprep.subr.bf16.mxu0 0
    %5798 = vmatpush1.bf16.msra.mxu0 0
    %5799 = vmatprep.subr.bf16.mxu0 0
    %5800 = vmatpush1.bf16.msra.mxu0 0
    %5801 = vmatprep.subr.bf16.mxu0 0
    %5802 = vmatpush1.bf16.msra.mxu0 0
    %5803 = vmatprep.subr.bf16.mxu0 0
    %5804 = vmatpush1.bf16.msra.mxu0 0
    %5805 = vmatprep.subr.bf16.mxu0 0
    %5806 = vmatpush1.bf16.msra.mxu0 0
    %5807 = vmatprep.subr.bf16.mxu0 0
    %5808 = vmatpush1.bf16.msra.mxu0 0
    %5809 = vmatprep.subr.bf16.mxu0 0
    %5810 = vmatpush1.bf16.msra.mxu0 0
    %5811 = vmatprep.mubr.bf16.mxu0 0
    %5812 = vmatmul.mubr.bf16.gmra.mrb[0].mxu0 %v5778
    %v5813 = vpop.f32.mrb[0].mxu0
    %v5814 = vadd.f32 0.0, %v5813
    %v5815 = vpop.f32.mrb[0].mxu0
    %v5816 = vadd.f32 0.0, %v5815
    %v5817 = vpop.f32.mrb[0].mxu0
    %v5818 = vpop.f32.mrb[0].mxu0
    %5819 = vdwg.mxu0
    %5820 = vmatprep.subr.bf16.mxu0 %v945
    %5821 = vmatpush1.bf16.msra.mxu0 %v944
    %5822 = vmatprep.subr.bf16.mxu0 %v949
    %5823 = vmatpush1.bf16.msra.mxu0 %v948
    %5824 = vmatprep.subr.bf16.mxu0 %v953
    %5825 = vmatpush1.bf16.msra.mxu0 %v952
    %5826 = vmatprep.subr.bf16.mxu0 %v957
    %5827 = vmatpush1.bf16.msra.mxu0 %v956
    %5828 = vmatprep.subr.bf16.mxu0 %v961
    %5829 = vmatpush1.bf16.msra.mxu0 %v960
    %5830 = vmatprep.subr.bf16.mxu0 %v965
    %5831 = vmatpush1.bf16.msra.mxu0 %v964
    %5832 = vmatprep.subr.bf16.mxu0 %v969
    %5833 = vmatpush1.bf16.msra.mxu0 %v968
    %5834 = vmatprep.subr.bf16.mxu0 %v973
    %5835 = vmatpush1.bf16.msra.mxu0 %v972
    %5836 = vmatprep.subr.bf16.mxu0 0
    %5837 = vmatpush1.bf16.msra.mxu0 0
    %5838 = vmatprep.subr.bf16.mxu0 0
    %5839 = vmatpush1.bf16.msra.mxu0 0
    %5840 = vmatprep.subr.bf16.mxu0 0
    %5841 = vmatpush1.bf16.msra.mxu0 0
    %5842 = vmatprep.subr.bf16.mxu0 0
    %5843 = vmatpush1.bf16.msra.mxu0 0
    %5844 = vmatprep.subr.bf16.mxu0 0
    %5845 = vmatpush1.bf16.msra.mxu0 0
    %5846 = vmatprep.subr.bf16.mxu0 0
    %5847 = vmatpush1.bf16.msra.mxu0 0
    %5848 = vmatprep.subr.bf16.mxu0 0
    %5849 = vmatpush1.bf16.msra.mxu0 0
    %5850 = vmatprep.subr.bf16.mxu0 0
    %5851 = vmatpush1.bf16.msra.mxu0 0
    %5852 = vmatprep.mubr.bf16.mxu0 0
    %5853 = vmatmul.mubr.bf16.gmra.mrb[0].mxu0 %v5778
    %v5854 = vpop.f32.mrb[0].mxu0
    %v5855 = vadd.f32 0.0, %v5854
    %v5856 = vpop.f32.mrb[0].mxu0
    %v5857 = vadd.f32 0.0, %v5856
    %v5858 = vpop.f32.mrb[0].mxu0
    %v5859 = vpop.f32.mrb[0].mxu0
    %5860 = vdwg.mxu0
    %v5863 = vunpack.c.l.b16 %v5776
    %v5864 = vunpack.c.l.b16 %v5777
    %v5865 = vrot.slane %v5863, 5
    %v5866 = vrot.slane %v5864, 4
    %v5867 = vsel %vm1093, %v5866, %v5865
    %v5868 = vpack.c.b16 %v5867, %v5867
    %5870 = vmatprep.subr.bf16.mxu0 %v1194
    %5871 = vmatpush1.bf16.msra.mxu0 %v1193
    %5872 = vmatprep.subr.bf16.mxu0 %v1198
    %5873 = vmatpush1.bf16.msra.mxu0 %v1197
    %5874 = vmatprep.subr.bf16.mxu0 %v1202
    %5875 = vmatpush1.bf16.msra.mxu0 %v1201
    %5876 = vmatprep.subr.bf16.mxu0 %v1206
    %5877 = vmatpush1.bf16.msra.mxu0 %v1205
    %5878 = vmatprep.subr.bf16.mxu0 %v1210
    %5879 = vmatpush1.bf16.msra.mxu0 %v1209
    %5880 = vmatprep.subr.bf16.mxu0 %v1214
    %5881 = vmatpush1.bf16.msra.mxu0 %v1213
    %5882 = vmatprep.subr.bf16.mxu0 %v1218
    %5883 = vmatpush1.bf16.msra.mxu0 %v1217
    %5884 = vmatprep.subr.bf16.mxu0 %v1222
    %5885 = vmatpush1.bf16.msra.mxu0 %v1221
    %5886 = vmatprep.subr.bf16.mxu0 0
    %5887 = vmatpush1.bf16.msra.mxu0 0
    %5888 = vmatprep.subr.bf16.mxu0 0
    %5889 = vmatpush1.bf16.msra.mxu0 0
    %5890 = vmatprep.subr.bf16.mxu0 0
    %5891 = vmatpush1.bf16.msra.mxu0 0
    %5892 = vmatprep.subr.bf16.mxu0 0
    %5893 = vmatpush1.bf16.msra.mxu0 0
    %5894 = vmatprep.subr.bf16.mxu0 0
    %5895 = vmatpush1.bf16.msra.mxu0 0
    %5896 = vmatprep.subr.bf16.mxu0 0
    %5897 = vmatpush1.bf16.msra.mxu0 0
    %5898 = vmatprep.subr.bf16.mxu0 0
    %5899 = vmatpush1.bf16.msra.mxu0 0
    %5900 = vmatprep.subr.bf16.mxu0 0
    %5901 = vmatpush1.bf16.msra.mxu0 0
    %5902 = vmatprep.mubr.bf16.mxu0 0
    %5903 = vmatmul.mubr.bf16.gmra.mrb[0].mxu0 %v5868
    %v5904 = vpop.f32.mrb[0].mxu0
    %v5905 = vadd.f32 %v5814, %v5904
    %v5906 = vpop.f32.mrb[0].mxu0
    %v5907 = vadd.f32 %v5816, %v5906
    %v5908 = vpop.f32.mrb[0].mxu0
    %v5909 = vpop.f32.mrb[0].mxu0
    %5910 = vdwg.mxu0
    %5911 = vmatprep.subr.bf16.mxu0 %v1196
    %5912 = vmatpush1.bf16.msra.mxu0 %v1195
    %5913 = vmatprep.subr.bf16.mxu0 %v1200
    %5914 = vmatpush1.bf16.msra.mxu0 %v1199
    %5915 = vmatprep.subr.bf16.mxu0 %v1204
    %5916 = vmatpush1.bf16.msra.mxu0 %v1203
    %5917 = vmatprep.subr.bf16.mxu0 %v1208
    %5918 = vmatpush1.bf16.msra.mxu0 %v1207
    %5919 = vmatprep.subr.bf16.mxu0 %v1212
    %5920 = vmatpush1.bf16.msra.mxu0 %v1211
    %5921 = vmatprep.subr.bf16.mxu0 %v1216
    %5922 = vmatpush1.bf16.msra.mxu0 %v1215
    %5923 = vmatprep.subr.bf16.mxu0 %v1220
    %5924 = vmatpush1.bf16.msra.mxu0 %v1219
    %5925 = vmatprep.subr.bf16.mxu0 %v1224
    %5926 = vmatpush1.bf16.msra.mxu0 %v1223
    %5927 = vmatprep.subr.bf16.mxu0 0
    %5928 = vmatpush1.bf16.msra.mxu0 0
    %5929 = vmatprep.subr.bf16.mxu0 0
    %5930 = vmatpush1.bf16.msra.mxu0 0
    %5931 = vmatprep.subr.bf16.mxu0 0
    %5932 = vmatpush1.bf16.msra.mxu0 0
    %5933 = vmatprep.subr.bf16.mxu0 0
    %5934 = vmatpush1.bf16.msra.mxu0 0
    %5935 = vmatprep.subr.bf16.mxu0 0
    %5936 = vmatpush1.bf16.msra.mxu0 0
    %5937 = vmatprep.subr.bf16.mxu0 0
    %5938 = vmatpush1.bf16.msra.mxu0 0
    %5939 = vmatprep.subr.bf16.mxu0 0
    %5940 = vmatpush1.bf16.msra.mxu0 0
    %5941 = vmatprep.subr.bf16.mxu0 0
    %5942 = vmatpush1.bf16.msra.mxu0 0
    %5943 = vmatprep.mubr.bf16.mxu0 0
    %5944 = vmatmul.mubr.bf16.gmra.mrb[0].mxu0 %v5868
    %v5945 = vpop.f32.mrb[0].mxu0
    %v5946 = vadd.f32 %v5855, %v5945
    %v5947 = vpop.f32.mrb[0].mxu0
    %v5948 = vadd.f32 %v5857, %v5947
    %v5949 = vpop.f32.mrb[0].mxu0
    %v5950 = vpop.f32.mrb[0].mxu0
    %5951 = vdwg.mxu0
    %v5952 = vadd.f32 %v5905, %v525
    %v5953 = vadd.f32 %v5907, %v529
    %v5954 = vadd.f32 %v5946, %v533
    %v5955 = vadd.f32 %v5948, %v537
    %v5956 = vxor.u32 %v5952, 2147483648
    %v5957 = vxor.u32 %v5953, 2147483648
    %v5958 = vmul.f32 %v5956, 1.442695
    %v5959 = vpow.pop %v5958
    %v5960 = vmul.f32 %v5957, 1.442695
    %v5961 = vpow.pop %v5960
    %v5962 = vadd.f32 %v5959, 1.0
    %v5963 = vadd.f32 %v5961, 1.0
    %v5964 = vrcp.pop %v5962
    %v5965 = vmul.f32 1.0, %v5964
    %v5966 = vrcp.pop %v5963
    %v5967 = vmul.f32 1.0, %v5966
    %v5968 = vmul.f32 %v5965, %v5955
    %v5969 = vadd.f32 %v5954, %v5968
    %v5970 = vtanh.pop %v5969
    %v5971 = vsub.f32 %v5617, %v5970
    %v5972 = vmul.f32 %v5967, %v5971
    %v5973 = vadd.f32 %v5970, %v5972
    %5974 = vmatprep.subr.bf16.mxu0 %v639
    %5975 = vmatpush1.bf16.msra.mxu0 %v638
    %5976 = vmatprep.subr.bf16.mxu0 %v643
    %5977 = vmatpush1.bf16.msra.mxu0 %v642
    %5978 = vmatprep.subr.bf16.mxu0 %v647
    %5979 = vmatpush1.bf16.msra.mxu0 %v646
    %5980 = vmatprep.subr.bf16.mxu0 %v651
    %5981 = vmatpush1.bf16.msra.mxu0 %v650
    %5982 = vmatprep.subr.bf16.mxu0 %v655
    %5983 = vmatpush1.bf16.msra.mxu0 %v654
    %5984 = vmatprep.subr.bf16.mxu0 %v659
    %5985 = vmatpush1.bf16.msra.mxu0 %v658
    %5986 = vmatprep.subr.bf16.mxu0 %v663
    %5987 = vmatpush1.bf16.msra.mxu0 %v662
    %5988 = vmatprep.subr.bf16.mxu0 %v667
    %5989 = vmatpush1.bf16.msra.mxu0 %v666
    %5990 = vmatprep.subr.bf16.mxu0 0
    %5991 = vmatpush1.bf16.msra.mxu0 0
    %5992 = vmatprep.subr.bf16.mxu0 0
    %5993 = vmatpush1.bf16.msra.mxu0 0
    %5994 = vmatprep.subr.bf16.mxu0 0
    %5995 = vmatpush1.bf16.msra.mxu0 0
    %5996 = vmatprep.subr.bf16.mxu0 0
    %5997 = vmatpush1.bf16.msra.mxu0 0
    %5998 = vmatprep.subr.bf16.mxu0 0
    %5999 = vmatpush1.bf16.msra.mxu0 0
    %6000 = vmatprep.subr.bf16.mxu0 0
    %6001 = vmatpush1.bf16.msra.mxu0 0
    %6002 = vmatprep.subr.bf16.mxu0 0
    %6003 = vmatpush1.bf16.msra.mxu0 0
    %6004 = vmatprep.subr.bf16.mxu0 0
    %6005 = vmatpush1.bf16.msra.mxu0 0
    %6006 = vmatprep.mubr.bf16.mxu0 0
    %6007 = vmatmul.mubr.bf16.gmra.mrb[0].mxu0 %v5868
    %v6008 = vpop.f32.mrb[0].mxu0
    %v6009 = vadd.f32 0.0, %v6008
    %v6010 = vpop.f32.mrb[0].mxu0
    %v6011 = vadd.f32 0.0, %v6010
    %v6012 = vpop.f32.mrb[0].mxu0
    %v6013 = vpop.f32.mrb[0].mxu0
    %6014 = vdwg.mxu0
    %6015 = vmatprep.subr.bf16.mxu0 %v641
    %6016 = vmatpush1.bf16.msra.mxu0 %v640
    %6017 = vmatprep.subr.bf16.mxu0 %v645
    %6018 = vmatpush1.bf16.msra.mxu0 %v644
    %6019 = vmatprep.subr.bf16.mxu0 %v649
    %6020 = vmatpush1.bf16.msra.mxu0 %v648
    %6021 = vmatprep.subr.bf16.mxu0 %v653
    %6022 = vmatpush1.bf16.msra.mxu0 %v652
    %6023 = vmatprep.subr.bf16.mxu0 %v657
    %6024 = vmatpush1.bf16.msra.mxu0 %v656
    %6025 = vmatprep.subr.bf16.mxu0 %v661
    %6026 = vmatpush1.bf16.msra.mxu0 %v660
    %6027 = vmatprep.subr.bf16.mxu0 %v665
    %6028 = vmatpush1.bf16.msra.mxu0 %v664
    %6029 = vmatprep.subr.bf16.mxu0 %v669
    %6030 = vmatpush1.bf16.msra.mxu0 %v668
    %6031 = vmatprep.subr.bf16.mxu0 0
    %6032 = vmatpush1.bf16.msra.mxu0 0
    %6033 = vmatprep.subr.bf16.mxu0 0
    %6034 = vmatpush1.bf16.msra.mxu0 0
    %6035 = vmatprep.subr.bf16.mxu0 0
    %6036 = vmatpush1.bf16.msra.mxu0 0
    %6037 = vmatprep.subr.bf16.mxu0 0
    %6038 = vmatpush1.bf16.msra.mxu0 0
    %6039 = vmatprep.subr.bf16.mxu0 0
    %6040 = vmatpush1.bf16.msra.mxu0 0
    %6041 = vmatprep.subr.bf16.mxu0 0
    %6042 = vmatpush1.bf16.msra.mxu0 0
    %6043 = vmatprep.subr.bf16.mxu0 0
    %6044 = vmatpush1.bf16.msra.mxu0 0
    %6045 = vmatprep.subr.bf16.mxu0 0
    %6046 = vmatpush1.bf16.msra.mxu0 0
    %6047 = vmatprep.mubr.bf16.mxu0 0
    %6048 = vmatmul.mubr.bf16.gmra.mrb[0].mxu0 %v5868
    %v6049 = vpop.f32.mrb[0].mxu0
    %v6050 = vadd.f32 0.0, %v6049
    %v6051 = vpop.f32.mrb[0].mxu0
    %v6052 = vadd.f32 0.0, %v6051
    %v6053 = vpop.f32.mrb[0].mxu0
    %v6054 = vpop.f32.mrb[0].mxu0
    %6055 = vdwg.mxu0
    %v6060 = vrot.slane %v6009, 2
    %v6061 = vrot.slane %v6011, 2
    %v6062 = vrot.slane %v6050, 2
    %v6063 = vrot.slane %v6052, 2
    %v6064 = vrot.slane %v6009, 3
    %v6065 = vrot.slane %v6011, 3
    %v6066 = vrot.slane %v6050, 3
    %v6067 = vrot.slane %v6052, 3
    %v6076 = vadd.f32 %v357, %v6060
    %v6077 = vadd.f32 %v359, %v6061
    %v6078 = vadd.f32 %v410, %v6062
    %v6079 = vadd.f32 %v412, %v6063
    %v6080 = vadd.f32 %v367, %v6064
    %v6081 = vadd.f32 %v369, %v6065
    %v6082 = vadd.f32 %v420, %v6066
    %v6083 = vadd.f32 %v422, %v6067
    %v6084 = vxor.u32 %v6076, 2147483648
    %v6085 = vxor.u32 %v6077, 2147483648
    %v6086 = vxor.u32 %v6080, 2147483648
    %v6087 = vxor.u32 %v6081, 2147483648
    %v6088 = vmul.f32 %v6084, 1.442695
    %v6089 = vpow.pop %v6088
    %v6090 = vmul.f32 %v6085, 1.442695
    %v6091 = vpow.pop %v6090
    %v6092 = vmul.f32 %v6086, 1.442695
    %v6093 = vpow.pop %v6092
    %v6094 = vmul.f32 %v6087, 1.442695
    %v6095 = vpow.pop %v6094
    %v6096 = vadd.f32 %v6089, 1.0
    %v6097 = vadd.f32 %v6091, 1.0
    %v6098 = vadd.f32 %v6093, 1.0
    %v6099 = vadd.f32 %v6095, 1.0
    %v6100 = vrcp.pop %v6096
    %v6101 = vmul.f32 1.0, %v6100
    %v6102 = vrcp.pop %v6097
    %v6103 = vmul.f32 1.0, %v6102
    %v6104 = vrcp.pop %v6098
    %v6105 = vmul.f32 1.0, %v6104
    %v6106 = vrcp.pop %v6099
    %v6107 = vmul.f32 1.0, %v6106
    %v6108 = vmul.f32 %v6101, %v6079
    %v6109 = vmul.f32 %v6105, %v6083
    %v6110 = vadd.f32 %v6078, %v6108
    %v6111 = vadd.f32 %v6082, %v6109
    %v6112 = vtanh.pop %v6110
    %v6113 = vtanh.pop %v6111
    %v6116 = vrot.slane %v6112, 1
    %v6117 = vrot.slane %v6113, 1
    %v6120 = vsub.f32 %v5774, %v6116
    %v6121 = vsub.f32 %v5775, %v6117
    %v6124 = vrot.slane %v6120, 7
    %v6125 = vrot.slane %v6121, 7
    %v6128 = vmul.f32 %v6103, %v6124
    %v6129 = vmul.f32 %v6107, %v6125
    %v6130 = vadd.f32 %v6112, %v6128
    %v6131 = vadd.f32 %v6113, %v6129
    %v6132 = vpack.c.bf16 %v6130, %v6130
    %v6133 = vpack.c.bf16 %v6131, %v6131
    %v6134 = vpack.c.bf16 %v5973, %v5973
    %6135 = vmatprep.subr.bf16.mxu0 %v943
    %6136 = vmatpush1.bf16.msra.mxu0 %v942
    %6137 = vmatprep.subr.bf16.mxu0 %v947
    %6138 = vmatpush1.bf16.msra.mxu0 %v946
    %6139 = vmatprep.subr.bf16.mxu0 %v951
    %6140 = vmatpush1.bf16.msra.mxu0 %v950
    %6141 = vmatprep.subr.bf16.mxu0 %v955
    %6142 = vmatpush1.bf16.msra.mxu0 %v954
    %6143 = vmatprep.subr.bf16.mxu0 %v959
    %6144 = vmatpush1.bf16.msra.mxu0 %v958
    %6145 = vmatprep.subr.bf16.mxu0 %v963
    %6146 = vmatpush1.bf16.msra.mxu0 %v962
    %6147 = vmatprep.subr.bf16.mxu0 %v967
    %6148 = vmatpush1.bf16.msra.mxu0 %v966
    %6149 = vmatprep.subr.bf16.mxu0 %v971
    %6150 = vmatpush1.bf16.msra.mxu0 %v970
    %6151 = vmatprep.subr.bf16.mxu0 0
    %6152 = vmatpush1.bf16.msra.mxu0 0
    %6153 = vmatprep.subr.bf16.mxu0 0
    %6154 = vmatpush1.bf16.msra.mxu0 0
    %6155 = vmatprep.subr.bf16.mxu0 0
    %6156 = vmatpush1.bf16.msra.mxu0 0
    %6157 = vmatprep.subr.bf16.mxu0 0
    %6158 = vmatpush1.bf16.msra.mxu0 0
    %6159 = vmatprep.subr.bf16.mxu0 0
    %6160 = vmatpush1.bf16.msra.mxu0 0
    %6161 = vmatprep.subr.bf16.mxu0 0
    %6162 = vmatpush1.bf16.msra.mxu0 0
    %6163 = vmatprep.subr.bf16.mxu0 0
    %6164 = vmatpush1.bf16.msra.mxu0 0
    %6165 = vmatprep.subr.bf16.mxu0 0
    %6166 = vmatpush1.bf16.msra.mxu0 0
    %6167 = vmatprep.mubr.bf16.mxu0 0
    %6168 = vmatmul.mubr.bf16.gmra.mrb[0].mxu0 %v6134
    %v6169 = vpop.f32.mrb[0].mxu0
    %v6170 = vadd.f32 0.0, %v6169
    %v6171 = vpop.f32.mrb[0].mxu0
    %v6172 = vadd.f32 0.0, %v6171
    %v6173 = vpop.f32.mrb[0].mxu0
    %v6174 = vpop.f32.mrb[0].mxu0
    %6175 = vdwg.mxu0
    %6176 = vmatprep.subr.bf16.mxu0 %v945
    %6177 = vmatpush1.bf16.msra.mxu0 %v944
    %6178 = vmatprep.subr.bf16.mxu0 %v949
    %6179 = vmatpush1.bf16.msra.mxu0 %v948
    %6180 = vmatprep.subr.bf16.mxu0 %v953
    %6181 = vmatpush1.bf16.msra.mxu0 %v952
    %6182 = vmatprep.subr.bf16.mxu0 %v957
    %6183 = vmatpush1.bf16.msra.mxu0 %v956
    %6184 = vmatprep.subr.bf16.mxu0 %v961
    %6185 = vmatpush1.bf16.msra.mxu0 %v960
    %6186 = vmatprep.subr.bf16.mxu0 %v965
    %6187 = vmatpush1.bf16.msra.mxu0 %v964
    %6188 = vmatprep.subr.bf16.mxu0 %v969
    %6189 = vmatpush1.bf16.msra.mxu0 %v968
    %6190 = vmatprep.subr.bf16.mxu0 %v973
    %6191 = vmatpush1.bf16.msra.mxu0 %v972
    %6192 = vmatprep.subr.bf16.mxu0 0
    %6193 = vmatpush1.bf16.msra.mxu0 0
    %6194 = vmatprep.subr.bf16.mxu0 0
    %6195 = vmatpush1.bf16.msra.mxu0 0
    %6196 = vmatprep.subr.bf16.mxu0 0
    %6197 = vmatpush1.bf16.msra.mxu0 0
    %6198 = vmatprep.subr.bf16.mxu0 0
    %6199 = vmatpush1.bf16.msra.mxu0 0
    %6200 = vmatprep.subr.bf16.mxu0 0
    %6201 = vmatpush1.bf16.msra.mxu0 0
    %6202 = vmatprep.subr.bf16.mxu0 0
    %6203 = vmatpush1.bf16.msra.mxu0 0
    %6204 = vmatprep.subr.bf16.mxu0 0
    %6205 = vmatpush1.bf16.msra.mxu0 0
    %6206 = vmatprep.subr.bf16.mxu0 0
    %6207 = vmatpush1.bf16.msra.mxu0 0
    %6208 = vmatprep.mubr.bf16.mxu0 0
    %6209 = vmatmul.mubr.bf16.gmra.mrb[0].mxu0 %v6134
    %v6210 = vpop.f32.mrb[0].mxu0
    %v6211 = vadd.f32 0.0, %v6210
    %v6212 = vpop.f32.mrb[0].mxu0
    %v6213 = vadd.f32 0.0, %v6212
    %v6214 = vpop.f32.mrb[0].mxu0
    %v6215 = vpop.f32.mrb[0].mxu0
    %6216 = vdwg.mxu0
    %v6219 = vunpack.c.l.b16 %v6132
    %v6220 = vunpack.c.l.b16 %v6133
    %v6221 = vrot.slane %v6219, 6
    %v6222 = vrot.slane %v6220, 5
    %v6223 = vsel %vm1093, %v6222, %v6221
    %v6224 = vpack.c.b16 %v6223, %v6223
    %6226 = vmatprep.subr.bf16.mxu0 %v1194
    %6227 = vmatpush1.bf16.msra.mxu0 %v1193
    %6228 = vmatprep.subr.bf16.mxu0 %v1198
    %6229 = vmatpush1.bf16.msra.mxu0 %v1197
    %6230 = vmatprep.subr.bf16.mxu0 %v1202
    %6231 = vmatpush1.bf16.msra.mxu0 %v1201
    %6232 = vmatprep.subr.bf16.mxu0 %v1206
    %6233 = vmatpush1.bf16.msra.mxu0 %v1205
    %6234 = vmatprep.subr.bf16.mxu0 %v1210
    %6235 = vmatpush1.bf16.msra.mxu0 %v1209
    %6236 = vmatprep.subr.bf16.mxu0 %v1214
    %6237 = vmatpush1.bf16.msra.mxu0 %v1213
    %6238 = vmatprep.subr.bf16.mxu0 %v1218
    %6239 = vmatpush1.bf16.msra.mxu0 %v1217
    %6240 = vmatprep.subr.bf16.mxu0 %v1222
    %6241 = vmatpush1.bf16.msra.mxu0 %v1221
    %6242 = vmatprep.subr.bf16.mxu0 0
    %6243 = vmatpush1.bf16.msra.mxu0 0
    %6244 = vmatprep.subr.bf16.mxu0 0
    %6245 = vmatpush1.bf16.msra.mxu0 0
    %6246 = vmatprep.subr.bf16.mxu0 0
    %6247 = vmatpush1.bf16.msra.mxu0 0
    %6248 = vmatprep.subr.bf16.mxu0 0
    %6249 = vmatpush1.bf16.msra.mxu0 0
    %6250 = vmatprep.subr.bf16.mxu0 0
    %6251 = vmatpush1.bf16.msra.mxu0 0
    %6252 = vmatprep.subr.bf16.mxu0 0
    %6253 = vmatpush1.bf16.msra.mxu0 0
    %6254 = vmatprep.subr.bf16.mxu0 0
    %6255 = vmatpush1.bf16.msra.mxu0 0
    %6256 = vmatprep.subr.bf16.mxu0 0
    %6257 = vmatpush1.bf16.msra.mxu0 0
    %6258 = vmatprep.mubr.bf16.mxu0 0
    %6259 = vmatmul.mubr.bf16.gmra.mrb[0].mxu0 %v6224
    %v6260 = vpop.f32.mrb[0].mxu0
    %v6261 = vadd.f32 %v6170, %v6260
    %v6262 = vpop.f32.mrb[0].mxu0
    %v6263 = vadd.f32 %v6172, %v6262
    %v6264 = vpop.f32.mrb[0].mxu0
    %v6265 = vpop.f32.mrb[0].mxu0
    %6266 = vdwg.mxu0
    %6267 = vmatprep.subr.bf16.mxu0 %v1196
    %6268 = vmatpush1.bf16.msra.mxu0 %v1195
    %6269 = vmatprep.subr.bf16.mxu0 %v1200
    %6270 = vmatpush1.bf16.msra.mxu0 %v1199
    %6271 = vmatprep.subr.bf16.mxu0 %v1204
    %6272 = vmatpush1.bf16.msra.mxu0 %v1203
    %6273 = vmatprep.subr.bf16.mxu0 %v1208
    %6274 = vmatpush1.bf16.msra.mxu0 %v1207
    %6275 = vmatprep.subr.bf16.mxu0 %v1212
    %6276 = vmatpush1.bf16.msra.mxu0 %v1211
    %6277 = vmatprep.subr.bf16.mxu0 %v1216
    %6278 = vmatpush1.bf16.msra.mxu0 %v1215
    %6279 = vmatprep.subr.bf16.mxu0 %v1220
    %6280 = vmatpush1.bf16.msra.mxu0 %v1219
    %6281 = vmatprep.subr.bf16.mxu0 %v1224
    %6282 = vmatpush1.bf16.msra.mxu0 %v1223
    %6283 = vmatprep.subr.bf16.mxu0 0
    %6284 = vmatpush1.bf16.msra.mxu0 0
    %6285 = vmatprep.subr.bf16.mxu0 0
    %6286 = vmatpush1.bf16.msra.mxu0 0
    %6287 = vmatprep.subr.bf16.mxu0 0
    %6288 = vmatpush1.bf16.msra.mxu0 0
    %6289 = vmatprep.subr.bf16.mxu0 0
    %6290 = vmatpush1.bf16.msra.mxu0 0
    %6291 = vmatprep.subr.bf16.mxu0 0
    %6292 = vmatpush1.bf16.msra.mxu0 0
    %6293 = vmatprep.subr.bf16.mxu0 0
    %6294 = vmatpush1.bf16.msra.mxu0 0
    %6295 = vmatprep.subr.bf16.mxu0 0
    %6296 = vmatpush1.bf16.msra.mxu0 0
    %6297 = vmatprep.subr.bf16.mxu0 0
    %6298 = vmatpush1.bf16.msra.mxu0 0
    %6299 = vmatprep.mubr.bf16.mxu0 0
    %6300 = vmatmul.mubr.bf16.gmra.mrb[0].mxu0 %v6224
    %v6301 = vpop.f32.mrb[0].mxu0
    %v6302 = vadd.f32 %v6211, %v6301
    %v6303 = vpop.f32.mrb[0].mxu0
    %v6304 = vadd.f32 %v6213, %v6303
    %v6305 = vpop.f32.mrb[0].mxu0
    %v6306 = vpop.f32.mrb[0].mxu0
    %6307 = vdwg.mxu0
    %v6308 = vadd.f32 %v6261, %v525
    %v6309 = vadd.f32 %v6263, %v529
    %v6310 = vadd.f32 %v6302, %v533
    %v6311 = vadd.f32 %v6304, %v537
    %v6312 = vxor.u32 %v6308, 2147483648
    %v6313 = vxor.u32 %v6309, 2147483648
    %v6314 = vmul.f32 %v6312, 1.442695
    %v6315 = vpow.pop %v6314
    %v6316 = vmul.f32 %v6313, 1.442695
    %v6317 = vpow.pop %v6316
    %v6318 = vadd.f32 %v6315, 1.0
    %v6319 = vadd.f32 %v6317, 1.0
    %v6320 = vrcp.pop %v6318
    %v6321 = vmul.f32 1.0, %v6320
    %v6322 = vrcp.pop %v6319
    %v6323 = vmul.f32 1.0, %v6322
    %v6324 = vmul.f32 %v6321, %v6311
    %v6325 = vadd.f32 %v6310, %v6324
    %v6326 = vtanh.pop %v6325
    %v6327 = vsub.f32 %v5973, %v6326
    %v6328 = vmul.f32 %v6323, %v6327
    %v6329 = vadd.f32 %v6326, %v6328
    %v6332 = vunpack.c.l.s4 1966171168
    %v6333 = vunpack.c.0.s8 %v6332
    %v6334 = vlaneseq
    %v6335 = vshrl.u32 %v6334, 7
    %v6336 = vsub.s32 %v6333, %v6335
    %v6337 = vrot.slane %v3847, %v6336
    %v6338 = vcombine.high %v6337, %v6337
    %v6340 = vunpack.c.l.s4 1966171168
    %v6341 = vunpack.c.0.s8 %v6340
    %v6342 = vlaneseq
    %v6343 = vshrl.u32 %v6342, 7
    %v6344 = vsub.s32 %v6341, %v6343
    %v6345 = vrot.slane %v6337, %v6344
    %v6347 = vunpack.c.l.s4 1966171168
    %v6348 = vunpack.c.0.s8 %v6347
    %v6349 = vlaneseq
    %v6350 = vshrl.u32 %v6349, 7
    %v6351 = vsub.s32 %v6348, %v6350
    %v6352 = vrot.slane %v6338, %v6351
    %v6357 = vunpack.c.l.s4 1966171168
    %v6358 = vunpack.c.0.s8 %v6357
    %v6359 = vlaneseq
    %v6360 = vshrl.u32 %v6359, 7
    %v6361 = vsub.s32 %v6358, %v6360
    %v6362 = vrot.slane %v4198, %v6361
    %v6363 = vcombine.high %v6362, %v6362
    %v6365 = vunpack.c.l.s4 1966171168
    %v6366 = vunpack.c.0.s8 %v6365
    %v6367 = vlaneseq
    %v6368 = vshrl.u32 %v6367, 7
    %v6369 = vsub.s32 %v6366, %v6368
    %v6370 = vrot.slane %v6362, %v6369
    %v6372 = vunpack.c.l.s4 1966171168
    %v6373 = vunpack.c.0.s8 %v6372
    %v6374 = vlaneseq
    %v6375 = vshrl.u32 %v6374, 7
    %v6376 = vsub.s32 %v6373, %v6375
    %v6377 = vrot.slane %v6363, %v6376
    %v6380 = vunpack.c.l.s4 1966171168
    %v6381 = vunpack.c.0.s8 %v6380
    %v6382 = vlaneseq
    %v6383 = vshrl.u32 %v6382, 7
    %v6384 = vsub.s32 %v6381, %v6383
    %v6385 = vrot.slane %v4549, %v6384
    %v6386 = vcombine.high %v6385, %v6385
    %v6388 = vunpack.c.l.s4 1966171168
    %v6389 = vunpack.c.0.s8 %v6388
    %v6390 = vlaneseq
    %v6391 = vshrl.u32 %v6390, 7
    %v6392 = vsub.s32 %v6389, %v6391
    %v6393 = vrot.slane %v6385, %v6392
    %v6395 = vunpack.c.l.s4 1966171168
    %v6396 = vunpack.c.0.s8 %v6395
    %v6397 = vlaneseq
    %v6398 = vshrl.u32 %v6397, 7
    %v6399 = vsub.s32 %v6396, %v6398
    %v6400 = vrot.slane %v6386, %v6399
    %v6403 = vunpack.c.l.s4 1966171168
    %v6404 = vunpack.c.0.s8 %v6403
    %v6405 = vlaneseq
    %v6406 = vshrl.u32 %v6405, 7
    %v6407 = vsub.s32 %v6404, %v6406
    %v6408 = vrot.slane %v4905, %v6407
    %v6409 = vcombine.high %v6408, %v6408
    %v6411 = vunpack.c.l.s4 1966171168
    %v6412 = vunpack.c.0.s8 %v6411
    %v6413 = vlaneseq
    %v6414 = vshrl.u32 %v6413, 7
    %v6415 = vsub.s32 %v6412, %v6414
    %v6416 = vrot.slane %v6408, %v6415
    %v6418 = vunpack.c.l.s4 1966171168
    %v6419 = vunpack.c.0.s8 %v6418
    %v6420 = vlaneseq
    %v6421 = vshrl.u32 %v6420, 7
    %v6422 = vsub.s32 %v6419, %v6421
    %v6423 = vrot.slane %v6409, %v6422
    %v6426 = vunpack.c.l.s4 1966171168
    %v6427 = vunpack.c.0.s8 %v6426
    %v6428 = vlaneseq
    %v6429 = vshrl.u32 %v6428, 7
    %v6430 = vsub.s32 %v6427, %v6429
    %v6431 = vrot.slane %v5261, %v6430
    %v6432 = vcombine.high %v6431, %v6431
    %v6434 = vunpack.c.l.s4 1966171168
    %v6435 = vunpack.c.0.s8 %v6434
    %v6436 = vlaneseq
    %v6437 = vshrl.u32 %v6436, 7
    %v6438 = vsub.s32 %v6435, %v6437
    %v6439 = vrot.slane %v6431, %v6438
    %v6441 = vunpack.c.l.s4 1966171168
    %v6442 = vunpack.c.0.s8 %v6441
    %v6443 = vlaneseq
    %v6444 = vshrl.u32 %v6443, 7
    %v6445 = vsub.s32 %v6442, %v6444
    %v6446 = vrot.slane %v6432, %v6445
    %v6449 = vunpack.c.l.s4 1966171168
    %v6450 = vunpack.c.0.s8 %v6449
    %v6451 = vlaneseq
    %v6452 = vshrl.u32 %v6451, 7
    %v6453 = vsub.s32 %v6450, %v6452
    %v6454 = vrot.slane %v5617, %v6453
    %v6455 = vcombine.high %v6454, %v6454
    %v6457 = vunpack.c.l.s4 1966171168
    %v6458 = vunpack.c.0.s8 %v6457
    %v6459 = vlaneseq
    %v6460 = vshrl.u32 %v6459, 7
    %v6461 = vsub.s32 %v6458, %v6460
    %v6462 = vrot.slane %v6454, %v6461
    %v6464 = vunpack.c.l.s4 1966171168
    %v6465 = vunpack.c.0.s8 %v6464
    %v6466 = vlaneseq
    %v6467 = vshrl.u32 %v6466, 7
    %v6468 = vsub.s32 %v6465, %v6467
    %v6469 = vrot.slane %v6455, %v6468
    %v6472 = vunpack.c.l.s4 1966171168
    %v6473 = vunpack.c.0.s8 %v6472
    %v6474 = vlaneseq
    %v6475 = vshrl.u32 %v6474, 7
    %v6476 = vsub.s32 %v6473, %v6475
    %v6477 = vrot.slane %v5973, %v6476
    %v6478 = vcombine.high %v6477, %v6477
    %v6480 = vunpack.c.l.s4 1966171168
    %v6481 = vunpack.c.0.s8 %v6480
    %v6482 = vlaneseq
    %v6483 = vshrl.u32 %v6482, 7
    %v6484 = vsub.s32 %v6481, %v6483
    %v6485 = vrot.slane %v6477, %v6484
    %v6487 = vunpack.c.l.s4 1966171168
    %v6488 = vunpack.c.0.s8 %v6487
    %v6489 = vlaneseq
    %v6490 = vshrl.u32 %v6489, 7
    %v6491 = vsub.s32 %v6488, %v6490
    %v6492 = vrot.slane %v6478, %v6491
    %v6495 = vunpack.c.l.s4 1966171168
    %v6496 = vunpack.c.0.s8 %v6495
    %v6497 = vlaneseq
    %v6498 = vshrl.u32 %v6497, 7
    %v6499 = vsub.s32 %v6496, %v6498
    %v6500 = vrot.slane %v6329, %v6499
    %v6501 = vcombine.high %v6500, %v6500
    %v6503 = vunpack.c.l.s4 1966171168
    %v6504 = vunpack.c.0.s8 %v6503
    %v6505 = vlaneseq
    %v6506 = vshrl.u32 %v6505, 7
    %v6507 = vsub.s32 %v6504, %v6506
    %v6508 = vrot.slane %v6500, %v6507
    %v6510 = vunpack.c.l.s4 1966171168
    %v6511 = vunpack.c.0.s8 %v6510
    %v6512 = vlaneseq
    %v6513 = vshrl.u32 %v6512, 7
    %v6514 = vsub.s32 %v6511, %v6513
    %v6515 = vrot.slane %v6501, %v6514
    %v6516 = vlaneseq
    %v6517 = vshrl.u32 %v6516, 7
    %v6518 = vsub.s32 0, %v6517
    %v6519 = vrot.slane %v6370, %v6518
    %v6520 = vlaneseq
    %v6521 = vshrl.u32 %v6520, 7
    %v6522 = vsub.s32 0, %v6521
    %v6523 = vrot.slane %v6377, %v6522
    %v6526 = vlaneseq
    %v6527 = vshrl.u32 %v6526, 7
    %v6528 = vsub.s32 0, %v6527
    %v6529 = vrot.slane %v6393, %v6528
    %v6530 = vlaneseq
    %v6531 = vshrl.u32 %v6530, 7
    %v6532 = vsub.s32 0, %v6531
    %v6533 = vrot.slane %v6400, %v6532
    %v6536 = vlaneseq
    %v6537 = vshrl.u32 %v6536, 7
    %v6538 = vsub.s32 0, %v6537
    %v6539 = vrot.slane %v6416, %v6538
    %v6540 = vlaneseq
    %v6541 = vshrl.u32 %v6540, 7
    %v6542 = vsub.s32 0, %v6541
    %v6543 = vrot.slane %v6423, %v6542
    %v6546 = vlaneseq
    %v6547 = vshrl.u32 %v6546, 7
    %v6548 = vsub.s32 0, %v6547
    %v6549 = vrot.slane %v6439, %v6548
    %v6550 = vlaneseq
    %v6551 = vshrl.u32 %v6550, 7
    %v6552 = vsub.s32 0, %v6551
    %v6553 = vrot.slane %v6446, %v6552
    %v6556 = vlaneseq
    %v6557 = vshrl.u32 %v6556, 7
    %v6558 = vsub.s32 0, %v6557
    %v6559 = vrot.slane %v6462, %v6558
    %v6560 = vlaneseq
    %v6561 = vshrl.u32 %v6560, 7
    %v6562 = vsub.s32 0, %v6561
    %v6563 = vrot.slane %v6469, %v6562
    %v6566 = vlaneseq
    %v6567 = vshrl.u32 %v6566, 7
    %v6568 = vsub.s32 0, %v6567
    %v6569 = vrot.slane %v6485, %v6568
    %v6570 = vlaneseq
    %v6571 = vshrl.u32 %v6570, 7
    %v6572 = vsub.s32 0, %v6571
    %v6573 = vrot.slane %v6492, %v6572
    %v6576 = vlaneseq
    %v6577 = vshrl.u32 %v6576, 7
    %v6578 = vsub.s32 0, %v6577
    %v6579 = vrot.slane %v6508, %v6578
    %v6580 = vlaneseq
    %v6581 = vshrl.u32 %v6580, 7
    %v6582 = vsub.s32 0, %v6581
    %v6583 = vrot.slane %v6515, %v6582
    %vm6586 = vcmask 1040384
    %v6587 = vsel %vm6586, %v6345, %v6519
    %v6588 = vsel %vm6586, %v6352, %v6523
    %vm6589 = vcmask 1041408
    %v6590 = vsel %vm6589, %v6587, %v6529
    %v6591 = vsel %vm6589, %v6588, %v6533
    %vm6592 = vcmask 1042432
    %v6593 = vsel %vm6592, %v6590, %v6539
    %v6594 = vsel %vm6592, %v6591, %v6543
    %vm6595 = vcmask 1043456
    %v6596 = vsel %vm6595, %v6593, %v6549
    %v6597 = vsel %vm6595, %v6594, %v6553
    %vm6598 = vcmask 1044480
    %v6599 = vsel %vm6598, %v6596, %v6559
    %v6600 = vsel %vm6598, %v6597, %v6563
    %vm6601 = vcmask 1045504
    %v6602 = vsel %vm6601, %v6599, %v6569
    %v6603 = vsel %vm6601, %v6600, %v6573
    %vm6604 = vcmask 1046528
    %v6605 = vsel %vm6604, %v6602, %v6579
    %v6606 = vsel %vm6604, %v6603, %v6583
    %v6607 = vpack.c.bf16 %v6606, %v6605
    %v6608 = vld [vmem:[%s7] sm:$0xf]
    %v6609 = vld [vmem:[%s7 + $0x4] sm:$0xf]
    %v6610 = vld [vmem:[%s7 + $0x8] sm:$0xf]
    %v6611 = vld [vmem:[%s7 + $0xc] sm:$0xf]
    %v6612 = vld [vmem:[%s7 + $0x10] sm:$0xf]
    %v6613 = vld [vmem:[%s7 + $0x14] sm:$0xf]
    %v6614 = vld [vmem:[%s7 + $0x18] sm:$0xf]
    %v6615 = vld [vmem:[%s7 + $0x1c] sm:$0xf]
    %v6616 = vld [vmem:[%s7 + $0x20] sm:$0xf]
    %v6617 = vld [vmem:[%s7 + $0x24] sm:$0xf]
    %v6618 = vld [vmem:[%s7 + $0x28] sm:$0xf]
    %v6619 = vld [vmem:[%s7 + $0x2c] sm:$0xf]
    %v6620 = vld [vmem:[%s7 + $0x30] sm:$0xf]
    %v6621 = vld [vmem:[%s7 + $0x34] sm:$0xf]
    %v6622 = vld [vmem:[%s7 + $0x38] sm:$0xf]
    %v6623 = vld [vmem:[%s7 + $0x3c] sm:$0xf]
    %v6624 = vld [vmem:[%s8] sm:$0x1]
    %v6626 = vlaneseq
    %v6627 = vshrl.u32 %v6626, 7
    %v6628 = vsub.s32 0, %v6627
    %v6629 = vrot.slane %v6624, %v6628
    %v6647 = vunpack.c.l.b16 %v6608
    %v6648 = vunpack.c.l.b16 %v6609
    %v6649 = vunpack.c.l.b16 %v6610
    %v6650 = vunpack.c.l.b16 %v6611
    %v6651 = vunpack.c.l.b16 %v6612
    %v6652 = vunpack.c.l.b16 %v6613
    %v6653 = vunpack.c.l.b16 %v6614
    %v6654 = vunpack.c.l.b16 %v6615
    %v6655 = vunpack.c.l.b16 %v6616
    %v6656 = vunpack.c.l.b16 %v6617
    %v6657 = vunpack.c.l.b16 %v6618
    %v6658 = vunpack.c.l.b16 %v6619
    %v6659 = vunpack.c.l.b16 %v6620
    %v6660 = vunpack.c.l.b16 %v6621
    %v6661 = vunpack.c.l.b16 %v6622
    %v6662 = vunpack.c.l.b16 %v6623
    %v6663 = vpack.c.b16 %v6648, %v6647
    %v6664 = vpack.c.b16 %v6650, %v6649
    %v6665 = vpack.c.b16 %v6652, %v6651
    %v6666 = vpack.c.b16 %v6654, %v6653
    %v6667 = vpack.c.b16 %v6656, %v6655
    %v6668 = vpack.c.b16 %v6658, %v6657
    %v6669 = vpack.c.b16 %v6660, %v6659
    %v6670 = vpack.c.b16 %v6662, %v6661
    %6679 = vmatprep.subr.bf16.mxu0 0
    %6680 = vmatpush1.bf16.msra.mxu0 %v6663
    %6681 = vmatprep.subr.bf16.mxu0 0
    %6682 = vmatpush1.bf16.msra.mxu0 %v6664
    %6683 = vmatprep.subr.bf16.mxu0 0
    %6684 = vmatpush1.bf16.msra.mxu0 %v6665
    %6685 = vmatprep.subr.bf16.mxu0 0
    %6686 = vmatpush1.bf16.msra.mxu0 %v6666
    %6687 = vmatprep.subr.bf16.mxu0 0
    %6688 = vmatpush1.bf16.msra.mxu0 %v6667
    %6689 = vmatprep.subr.bf16.mxu0 0
    %6690 = vmatpush1.bf16.msra.mxu0 %v6668
    %6691 = vmatprep.subr.bf16.mxu0 0
    %6692 = vmatpush1.bf16.msra.mxu0 %v6669
    %6693 = vmatprep.subr.bf16.mxu0 0
    %6694 = vmatpush1.bf16.msra.mxu0 %v6670
    %6695 = vmatprep.subr.bf16.mxu0 0
    %6696 = vmatpush1.bf16.msra.mxu0 0
    %6697 = vmatprep.subr.bf16.mxu0 0
    %6698 = vmatpush1.bf16.msra.mxu0 0
    %6699 = vmatprep.subr.bf16.mxu0 0
    %6700 = vmatpush1.bf16.msra.mxu0 0
    %6701 = vmatprep.subr.bf16.mxu0 0
    %6702 = vmatpush1.bf16.msra.mxu0 0
    %6703 = vmatprep.subr.bf16.mxu0 0
    %6704 = vmatpush1.bf16.msra.mxu0 0
    %6705 = vmatprep.subr.bf16.mxu0 0
    %6706 = vmatpush1.bf16.msra.mxu0 0
    %6707 = vmatprep.subr.bf16.mxu0 0
    %6708 = vmatpush1.bf16.msra.mxu0 0
    %6709 = vmatprep.subr.bf16.mxu0 0
    %6710 = vmatpush1.bf16.msra.mxu0 0
    %6711 = vmatprep.mubr.bf16.mxu0 0
    %6712 = vmatmul.mubr.bf16.gmra.mrb[0].mxu0 %v6607
    %v6713 = vpop.f32.mrb[0].mxu0
    %v6714 = vadd.f32 %v6629, %v6713
    %v6715 = vpop.f32.mrb[0].mxu0
    %v6716 = vpop.f32.mrb[0].mxu0
    %v6717 = vadd.f32 %v6629, %v6716
    %v6718 = vpop.f32.mrb[0].mxu0
    %6719 = vdwg.mxu0
    %vm6720 = vcmask 31744
    %6721 = vst.msk [vmem:[%s9] sm:$0xff] %vm6720, %v6714
    %6722 = vst.msk [vmem:[%s9 + $0x8] sm:$0xff] %vm6720, %v6717
    // Predicated region
    $region54: #{gru_forward.1} parent=1 // pred_check
      _
    $region55: #{gru_forward.1} parent=1 // pred_check_branch
      %6724 = sbr.rel (0) target = $region57
    $region56: #{gru_forward.1} parent=1 // pred_region
      _
    $region57: #{gru_forward.1} parent=1 // pred_fallthru
      _
    // Predicated region
    $region58: #{gru_forward.1} parent=1 // pred_check
      _
    $region59: #{gru_forward.1} parent=1 // pred_check_branch
      %6726 = sbr.rel (0) target = $region61
    $region60: #{gru_forward.1} parent=1 // pred_region
      _
    $region61: #{gru_forward.1} parent=1 // pred_fallthru
      _
    %6727 = vsyncpa [#allocation3], 1
    %6728 = vsyncpa [#allocation5], 1
    %6729 = vsyncpa [#allocation8], 1

</llo_original>
